<compile_context>
chip_gen: v7x
topology: tpu7x:2x2x1
jax: 0.10.0
libtpu: 0.0.40
codegen_flags: <defaults>
</compile_context>

<pallas_src>
import jax
import jax.numpy as jnp
from jax.experimental import pallas as pl
from jax.experimental.pallas import tpu as pltpu


def _abs_pos_emb_kernel(q_ref, h_ref, w_ref, o_ref):
    """One grid step.

    q_ref : (tile_m, D)  flattened queries (rows = b*h*i positions)
    h_ref : (H, D)       height embedding (resident in VMEM, DMA'd once)
    w_ref : (W, D)       width embedding  (resident in VMEM, DMA'd once)
    o_ref : (tile_m, J)  logits tile, J = H*W (lane-dense, J >= 128)
    """
    Hf, D = h_ref.shape
    Wf, _ = w_ref.shape
    # emb[j, d] = height[j // W, d] + width[j % W, d].  Built in-kernel so the
    # wrapper emits no separate XLA fusion.  The collapsing reshape is
    # tile-aligned (W is a multiple of 8, lane dim unchanged) -> cheap.
    emb = (h_ref[...][:, None, :] + w_ref[...][None, :, :]).reshape(Hf * Wf, D)
    # (tile_m, D) x (J, D) contracting D with D  ==  q @ emb^T  on the MXU.
    o_ref[...] = jax.lax.dot_general(
        q_ref[...], emb,
        dimension_numbers=(((1,), (1,)), ((), ())),
        preferred_element_type=jnp.float32,
        precision=jax.lax.Precision.HIGHEST,
    ).astype(o_ref.dtype)


def _choose_tile_m(M, J):
    """Largest useful row tile: ~2 grid steps (v7x megacore), VMEM-capped."""
    round8 = lambda x: ((x + 7) // 8) * 8
    # Double-buffered VMEM per tile row (f32): q tile lane-padded 32->128 plus
    # the (tile_m, J) output tile.  Budget kept well under the smallest scoped
    # VMEM default (16 MiB on v5e) so no vmem_limit_bytes override is needed.
    per_row_bytes = 2 * (128 + J) * 4
    vmem_cap = max(8, ((12 << 20) // per_row_bytes) // 8 * 8)
    # Two steps rather than one so both v7x TensorCores get work on the
    # dominant writeback phase; never finer than that (0.35 us/step overhead).
    tile = round8(pl.cdiv(M, 2)) if M > 8 else round8(max(M, 1))
    return max(8, min(tile, vmem_cap, 2048))


def abs_pos_emb_forward(q, height, width, *, tile_m=None):
    """Forward of AbsPosEmb.

    q      : (B, heads, I, D)   queries
    height : (H, D)             learned height embedding
    width  : (W, D)             learned width embedding
    returns: (B, heads, I, H*W) logits (same dtype as q)
    """
    B, Hh, I, D = q.shape
    Hf, Dh = height.shape
    Wf, Dw = width.shape
    assert D == Dh == Dw, "dim_head mismatch between q and positional embeddings"
    J = Hf * Wf
    M = B * Hh * I

    # (B, heads, I, D) -> (M, D): contiguous reshape, free (no transpose/pad).
    q2 = q.reshape(M, D)

    if tile_m is None:
        tile_m = _choose_tile_m(M, J)
    # Keep tile_m a sublane multiple and no larger than (padded) M.
    tile_m = ((max(1, min(tile_m, M)) + 7) // 8) * 8

    # Pad rows instead of ever collapsing to one giant block (robust for any M).
    grid_m = pl.cdiv(M, tile_m)
    M_pad = grid_m * tile_m
    if M_pad != M:
        q2 = jnp.pad(q2, ((0, M_pad - M), (0, 0)))

    out2 = pl.pallas_call(
        _abs_pos_emb_kernel,
        out_shape=jax.ShapeDtypeStruct((M_pad, J), q.dtype),
        grid_spec=pltpu.PrefetchScalarGridSpec(
            num_scalar_prefetch=0,
            grid=(grid_m,),
            in_specs=[
                # Row tile of flattened queries.
                pl.BlockSpec((tile_m, D), lambda i: (i, 0)),
                # Constant block indices -> DMA'd once, resident in VMEM.
                pl.BlockSpec((Hf, D), lambda i: (0, 0)),
                pl.BlockSpec((Wf, D), lambda i: (0, 0)),
            ],
            out_specs=pl.BlockSpec((tile_m, J), lambda i: (i, 0)),
        ),
        compiler_params=pltpu.CompilerParams(
            dimension_semantics=("parallel",)),
    )(q2, height.astype(q.dtype), width.astype(q.dtype))

    if M_pad != M:
        out2 = out2[:M]
    # (M, J) -> (B, heads, I, J): contiguous reshape, free.
    return out2.reshape(B, Hh, I, J)


def _reference_forward(q, height, width):
    """Pure-JAX reference matching the PyTorch module."""
    Hf, D = height.shape
    Wf, _ = width.shape
    emb = (height[:, None, :] + width[None, :, :]).reshape(Hf * Wf, D)
    return jnp.einsum("bhid,jd->bhij", q, emb,
                      precision=jax.lax.Precision.HIGHEST)


if __name__ == "__main__":
    key = jax.random.PRNGKey(0)
    k_q, k_h, k_w = jax.random.split(key, 3)

    # Shapes implied by the module: fmap_size=16 -> i = H*W = 256, dim_head=32.
    fmap_size = 16
    dim_head = 32
    batch, heads = 2, 4
    Hf = Wf = fmap_size
    seq = Hf * Wf

    scale = dim_head ** (-0.5)
    height = jax.random.normal(k_h, (Hf, dim_head), dtype=jnp.float32) * scale
    width = jax.random.normal(k_w, (Wf, dim_head), dtype=jnp.float32) * scale
    q = jax.random.normal(k_q, (batch, heads, seq, dim_head), dtype=jnp.float32)

    out = abs_pos_emb_forward(q, height, width)
    out = jax.block_until_ready(out)

    ref = _reference_forward(q, height, width)
    ref = jax.block_until_ready(ref)

    assert out.shape == (batch, heads, seq, Hf * Wf)
    assert jnp.allclose(out, ref, atol=1e-4, rtol=1e-4), "mismatch vs reference"

    print("KERNEL_OK")
</pallas_src>

<mosaic_0001>
module attributes {stable_mosaic.version = 11 : i64} {
  func.func @_abs_pos_emb_kernel(%arg0: i32, %arg1: memref<1024x32xf32, #tpu.memory_space<vmem>>, %arg2: memref<16x32xf32, #tpu.memory_space<vmem>>, %arg3: memref<16x32xf32, #tpu.memory_space<vmem>>, %arg4: memref<1024x256xf32, #tpu.memory_space<vmem>>) attributes {dimension_semantics = [#tpu.dimension_semantics<parallel>], iteration_bounds = array<i64: 2>, scalar_prefetch = 0 : i64, scratch_operands = 0 : i64, tpu.core_type = #tpu.core_type<tc>, window_params = [{transform_indices = @transform_0, window_bounds = array<i64: 1024, 32>}, {pipeline_mode = #tpu.pipeline_mode<synchronous>, transform_indices = @transform_1, window_bounds = array<i64: 16, 32>}, {pipeline_mode = #tpu.pipeline_mode<synchronous>, transform_indices = @transform_2, window_bounds = array<i64: 16, 32>}, {transform_indices = @transform_3, window_bounds = array<i64: 1024, 256>}]} {
    %c0 = arith.constant 0 : index
    %c0_0 = arith.constant 0 : index
    %0 = vector.load %arg2[%c0, %c0_0] : memref<16x32xf32, #tpu.memory_space<vmem>>, vector<16x32xf32>
    %1 = vector.shape_cast %0 : vector<16x32xf32> to vector<16x1x32xf32>
    %c0_1 = arith.constant 0 : index
    %c0_2 = arith.constant 0 : index
    %2 = vector.load %arg3[%c0_1, %c0_2] : memref<16x32xf32, #tpu.memory_space<vmem>>, vector<16x32xf32>
    %3 = vector.shape_cast %2 : vector<16x32xf32> to vector<1x16x32xf32>
    %4 = vector.broadcast %1 : vector<16x1x32xf32> to vector<16x16x32xf32>
    %5 = vector.broadcast %3 : vector<1x16x32xf32> to vector<16x16x32xf32>
    %6 = arith.addf %4, %5 : vector<16x16x32xf32>
    %7 = vector.shape_cast %6 : vector<16x16x32xf32> to vector<256x32xf32>
    %c0_3 = arith.constant 0 : index
    %c0_4 = arith.constant 0 : index
    %8 = vector.load %arg1[%c0_3, %c0_4] : memref<1024x32xf32, #tpu.memory_space<vmem>>, vector<1024x32xf32>
    %cst = arith.constant dense<0.000000e+00> : vector<1024x256xf32>
    %9 = tpu.matmul %8, %7, %cst {dimension_numbers = #tpu.dot_dimension_numbers<[1], [1], [0], [0], [0, 0, 1, 0], [], []>, precision = #tpu.contract_precision<fp32>} : vector<1024x32xf32>, vector<256x32xf32>, vector<1024x256xf32> -> vector<1024x256xf32>
    %c0_5 = arith.constant 0 : index
    %c0_6 = arith.constant 0 : index
    %10 = vector.load %arg4[%c0_5, %c0_6] : memref<1024x256xf32, #tpu.memory_space<vmem>>, vector<1024x256xf32>
    tpu.vector_store %arg4[%c0_5, %c0_6], %9 {strides = array<i32>} : memref<1024x256xf32, #tpu.memory_space<vmem>>, vector<1024x256xf32>,
    return
  }
  func.func @transform_0(%arg0: i32) -> (i32, i32) {
    %c0_i32 = arith.constant 0 : i32
    %c0_i32_0 = arith.constant 0 : i32
    return %arg0, %c0_i32 : i32, i32
  }
  func.func @transform_1(%arg0: i32) -> (i32, i32) {
    %c0_i32 = arith.constant 0 : i32
    %c0_i32_0 = arith.constant 0 : i32
    %c0_i32_1 = arith.constant 0 : i32
    return %c0_i32, %c0_i32_0 : i32, i32
  }
  func.func @transform_2(%arg0: i32) -> (i32, i32) {
    %c0_i32 = arith.constant 0 : i32
    %c0_i32_0 = arith.constant 0 : i32
    %c0_i32_1 = arith.constant 0 : i32
    return %c0_i32, %c0_i32_0 : i32, i32
  }
  func.func @transform_3(%arg0: i32) -> (i32, i32) {
    %c0_i32 = arith.constant 0 : i32
    %c0_i32_0 = arith.constant 0 : i32
    return %arg0, %c0_i32 : i32, i32
  }
}

</mosaic_0001>

<llo_original>
// kernel: tpu_custom_call.1
$region0: #{tpu_custom_call.1}
  #allocation0 [shape = 'u32[]', space=smem, size = 0x4, offset = 0x4, fixed_abs, tag = 'smem constant byte address 0x4 - core index']
  #allocation1 [shape = 'u32[144,128]{1,0:T(1,128)}', space=vmem, size = 0x12000, scoped, tag = 'internal scratch']
  %s0 = inlined_call_operand.vmem [shape: f32[2048,32], index: 0, kind: input, shape index: {}]
  %s1 = inlined_call_operand.hbm [shape: f32[16,32], index: 1, kind: input, shape index: {}]
  %s2 = inlined_call_operand.hbm [shape: f32[16,32], index: 2, kind: input, shape index: {}]
  %s3 = inlined_call_operand.hbm [shape: f32[2048,256], index: 3, kind: output, shape index: {}]
  %s4 = sld [smem:[#allocation0]]
  $region53: #{tpu_custom_call.1} parent=0
    _
  %s6 = ssub.s32 1, %s4
  %s7 = scalar_select 0, %s6, %s4
  $region1: #{tpu_custom_call.1} parent=0
    #allocation2 [shape = 'u8[8192]{0}', space=vmem, size = 0x2000, scoped, tag = 'input window, operand 1, single buffered']
    #allocation3 [shape = 's32[2]{0}', space=sflag, size = 0x8, scoped, tag = 'scoped memory for tpu_custom_call.1']
    #allocation4 [shape = 's32[2]{0}', space=sflag, size = 0x8, scoped, tag = 'scoped memory for tpu_custom_call.1']
    #allocation5 [shape = 'u8[8192]{0}', space=vmem, size = 0x2000, scoped, tag = 'input window, operand 2, single buffered']
    #allocation6 [shape = 's32[1]{0}', space=sflag, size = 0x4, scoped, tag = 'scoped memory for tpu_custom_call.1']
    #allocation7 [shape = 'u8[2097152]{0}', space=vmem, size = 0x200000, scoped, tag = 'output window, operand 0']
    %8 = vsyncpa [#allocation3], 0
    %9 = vsyncpa [#allocation6], 0
    %10 = vsyncpa [#allocation4], 0
    %s11 = scalar_lea.sflag [#allocation4], 1
    %12 = vsyncpa %s11, 0
    loop: start=0, step=1, limit=4
    $region2: #{tpu_custom_call.1} parent=1 // loop_pre_header
      _
    $region3: #{tpu_custom_call.1} parent=1 // loop_header
      %s14 = sphi 0, %s18
      %p15 = scmp.ge.s32.totalorder %s14, 4
      %s24 = sphi 0, %s26
      %s27 = sphi 0, %s24
      %s28 = sphi 0, %s27
      %s44 = sphi 0, %s28
      %s48 = sphi 0, %s48
      %s50 = sphi 0, %s48
      %s51 = sphi 0, %s50
      %s65 = sphi 0, %s51
      %s69 = sphi 0, %s69
      %s71 = sphi 0, %s69
      %s72 = sphi 0, %s71
      %s86 = sphi 0, %s72
      %s92 = sphi 0, %s94
      %s95 = sphi 0, %s92
      %s96 = sphi 0, %s95
      %s112 = sphi 0, %s96
    $region4: #{tpu_custom_call.1} parent=1 // loop_header_branch
      %17 = sbr.rel (%p15) target = $region8
    $region5: #{tpu_custom_call.1} parent=1 // loop_body
      %s19 = ssub.s32 %s14, 1
      %s20 = ssub.s32 %s14, 2
      %s21 = sadd.s32 %s14, 1
      %s22 = ssub.s32 %s14, %s21
      %p23 = scmp.eq.s32.totalorder %s22, 0
      %s25 = sadd.s32 %s24, 1
      %s26 = scalar_select %p23, %s24, %s25
      %p29 = pneg %p23
      %p30 = scmp.eq.s32.totalorder %s14, 1
      %p31 = por %p29, %p30
      %p32 = scmp.ne.s32.totalorder %s24, %s27
      %p33 = scmp.eq.s32.totalorder %s14, 0
      %p34 = por %p32, %p33
      %p35 = scmp.ne.s32.totalorder %s24, %s27
      %p36 = scmp.eq.s32.totalorder %s19, 1
      %p37 = por %p35, %p36
      %p38 = scmp.ne.s32.totalorder %s27, %s28
      %p39 = scmp.eq.s32.totalorder %s19, 0
      %p40 = por %p38, %p39
      %p41 = scmp.ne.s32.totalorder %s27, %s28
      %p42 = scmp.eq.s32.totalorder %s20, 1
      %p43 = por %p41, %p42
      %p45 = scmp.ne.s32.totalorder %s28, %s44
      %p46 = scmp.eq.s32.totalorder %s20, 0
      %p47 = por %p45, %p46
      %s49 = sadd.s32 %s48, 1
      %p52 = scmp.eq.s32.totalorder %s14, 1
      %p53 = scmp.ne.s32.totalorder %s48, %s50
      %p54 = scmp.eq.s32.totalorder %s14, 0
      %p55 = por %p53, %p54
      %p56 = scmp.ne.s32.totalorder %s48, %s50
      %p57 = scmp.eq.s32.totalorder %s19, 1
      %p58 = por %p56, %p57
      %p59 = scmp.ne.s32.totalorder %s50, %s51
      %p60 = scmp.eq.s32.totalorder %s19, 0
      %p61 = por %p59, %p60
      %p62 = scmp.ne.s32.totalorder %s50, %s51
      %p63 = scmp.eq.s32.totalorder %s20, 1
      %p64 = por %p62, %p63
      %p66 = scmp.ne.s32.totalorder %s51, %s65
      %p67 = scmp.eq.s32.totalorder %s20, 0
      %p68 = por %p66, %p67
      %s70 = sadd.s32 %s69, 1
      %p73 = scmp.eq.s32.totalorder %s14, 1
      %p74 = scmp.ne.s32.totalorder %s69, %s71
      %p75 = scmp.eq.s32.totalorder %s14, 0
      %p76 = por %p74, %p75
      %p77 = scmp.ne.s32.totalorder %s69, %s71
      %p78 = scmp.eq.s32.totalorder %s19, 1
      %p79 = por %p77, %p78
      %p80 = scmp.ne.s32.totalorder %s71, %s72
      %p81 = scmp.eq.s32.totalorder %s19, 0
      %p82 = por %p80, %p81
      %p83 = scmp.ne.s32.totalorder %s71, %s72
      %p84 = scmp.eq.s32.totalorder %s20, 1
      %p85 = por %p83, %p84
      %p87 = scmp.ne.s32.totalorder %s72, %s86
      %p88 = scmp.eq.s32.totalorder %s20, 0
      %p89 = por %p87, %p88
      %s90 = ssub.s32 %s14, %s21
      %p91 = scmp.eq.s32.totalorder %s90, 0
      %s93 = sadd.s32 %s92, 1
      %s94 = scalar_select %p91, %s92, %s93
      %p97 = pneg %p91
      %p98 = scmp.eq.s32.totalorder %s14, 1
      %p99 = por %p97, %p98
      %p100 = scmp.ne.s32.totalorder %s92, %s95
      %p101 = scmp.eq.s32.totalorder %s14, 0
      %p102 = por %p100, %p101
      %p103 = scmp.ne.s32.totalorder %s92, %s95
      %p104 = scmp.eq.s32.totalorder %s19, 1
      %p105 = por %p103, %p104
      %p106 = scmp.ne.s32.totalorder %s95, %s96
      %p107 = scmp.eq.s32.totalorder %s19, 0
      %p108 = por %p106, %p107
      %p109 = scmp.ne.s32.totalorder %s95, %s96
      %p110 = scmp.eq.s32.totalorder %s20, 1
      %p111 = por %p109, %p110
      %p113 = scmp.ne.s32.totalorder %s96, %s112
      %p114 = scmp.eq.s32.totalorder %s20, 0
      %p115 = por %p113, %p114
      %p116 = scmp.le.s32.totalorder 1, %s14
      %p117 = scmp.lt.s32.totalorder %s14, 3
      %p118 = pnand %p116, %p117
      %p119 = pneg %p118
      // Predicated region
      $region9: #{tpu_custom_call.1} parent=5 // pred_check
        _
      $region10: #{tpu_custom_call.1} parent=5 // pred_check_branch
        %121 = sbr.rel (%p118) target = $region12
      $region11: #{tpu_custom_call.1} parent=5 // pred_region
        %s122 = ssub.s32 %s14, 1
        // Predicated region
        $region13: #{tpu_custom_call.1} parent=11 // pred_check
          %p123 = pneg %p61
        $region14: #{tpu_custom_call.1} parent=11 // pred_check_branch
          %125 = sbr.rel (%p123) target = $region16
        $region15: #{tpu_custom_call.1} parent=11 // pred_region
          %s127 = ssub.s32 256, 256
          %128 = vsyncadd [#allocation3], %s127
          %s129 = sshll.u32 [#allocation2], 4
          %s130 = int_to_ptr.vmem [resolvable:$true] %s129
          %135 = dma.hbm_to_vmem [thread:$0]  %s1, 256, %s130, [#allocation3], 128, 128, 8
        $region16: #{tpu_custom_call.1} parent=11 // pred_fallthru
          _
        // Predicated region
        $region17: #{tpu_custom_call.1} parent=11 // pred_check
          %p136 = pneg %p82
        $region18: #{tpu_custom_call.1} parent=11 // pred_check_branch
          %138 = sbr.rel (%p136) target = $region20
        $region19: #{tpu_custom_call.1} parent=11 // pred_region
          %s140 = ssub.s32 256, 256
          %141 = vsyncadd [#allocation6], %s140
          %s142 = sshll.u32 [#allocation5], 4
          %s143 = int_to_ptr.vmem [resolvable:$true] %s142
          %148 = dma.hbm_to_vmem [thread:$0]  %s2, 256, %s143, [#allocation6], 128, 128, 8
        $region20: #{tpu_custom_call.1} parent=11 // pred_fallthru
          _
      $region12: #{tpu_custom_call.1} parent=5 // pred_fallthru
        _
      %p149 = scmp.lt.s32.totalorder %s14, 2
      // Predicated region
      $region21: #{tpu_custom_call.1} parent=5 // pred_check
        %p150 = pneg %p149
      $region22: #{tpu_custom_call.1} parent=5 // pred_check_branch
        %152 = sbr.rel (%p150) target = $region24
      $region23: #{tpu_custom_call.1} parent=5 // pred_region
        // Predicated region
        $region25: #{tpu_custom_call.1} parent=23 // pred_check
          %p153 = pneg %p34
        $region26: #{tpu_custom_call.1} parent=23 // pred_check_branch
          %155 = sbr.rel (%p153) target = $region28
        $region27: #{tpu_custom_call.1} parent=23 // pred_region
          %s156 = smul.u32 128, %s14
          %p157 = scmp.lt.s32.totalorder %s156, 255
          %s158 = scalar_select %p157, %s156, 255
          %s159 = smul.addr %s158, 8
          %s160 = scalar_lea.vmem %s0, %s159
          %s161 = smul.u32 128, %s14
        $region28: #{tpu_custom_call.1} parent=23 // pred_fallthru
          _
      $region24: #{tpu_custom_call.1} parent=5 // pred_fallthru
        _
      %p162 = scmp.le.s32.totalorder 1, %s14
      %p163 = scmp.lt.s32.totalorder %s14, 3
      %p164 = pnand %p162, %p163
      %p165 = pneg %p164
      // Predicated region
      $region29: #{tpu_custom_call.1} parent=5 // pred_check
        _
      $region30: #{tpu_custom_call.1} parent=5 // pred_check_branch
        %167 = sbr.rel (%p164) target = $region32
      $region31: #{tpu_custom_call.1} parent=5 // pred_region
        %s168 = ssub.s32 %s14, 1
        // Predicated region
        $region33: #{tpu_custom_call.1} parent=31 // pred_check
          %p169 = pneg %p61
        $region34: #{tpu_custom_call.1} parent=31 // pred_check_branch
          %171 = sbr.rel (%p169) target = $region36
        $region35: #{tpu_custom_call.1} parent=31 // pred_region
          %172 = dma.done [#allocation3], 256
        $region36: #{tpu_custom_call.1} parent=31 // pred_fallthru
          _
        // Predicated region
        $region37: #{tpu_custom_call.1} parent=31 // pred_check
          %p173 = pneg %p82
        $region38: #{tpu_custom_call.1} parent=31 // pred_check_branch
          %175 = sbr.rel (%p173) target = $region40
        $region39: #{tpu_custom_call.1} parent=31 // pred_region
          %176 = dma.done [#allocation6], 256
        $region40: #{tpu_custom_call.1} parent=31 // pred_fallthru
          _
        %s177 = smul.u32 128, %s19
        %p178 = scmp.lt.s32.totalorder %s177, 255
        %s179 = scalar_select %p178, %s177, 255
        %s180 = smul.addr %s179, 8
        %s181 = scalar_lea.vmem %s0, %s180
        %p182 = pneg %p40
        %p183 = pneg %p37
        %p184 = pneg %p61
        %p185 = pneg %p58
        %p186 = pneg %p82
        %p187 = pneg %p79
        %p188 = pneg %p108
        %p189 = pneg %p105
        %s190 = sand.u32 %s95, 1
        %s191 = scalar_lea.sflag [#allocation4], %s190
        %s192 = sand.u32 %s95, 1
        %s193 = smul.addr %s192, 2048
        %s194 = scalar_lea.vmem [#allocation7], %s193
        %s195 = smul.u32 128, %s19
        %p196 = scmp.lt.s32.totalorder %s195, 255
        %s197 = scalar_select %p196, %s195, 255
        %s198 = smul.addr %s197, 8
        %s199 = scalar_lea.vmem %s0, %s198
        %s200 = smul.u32 128, %s19
        %s201 = smul.u32 128, %s19
        %v202 = vld [vmem:[#allocation2] sm:$0xff]
        %v203 = vld [vmem:[#allocation2 + $0x8] sm:$0xff]
        %v206 = vcombine.high %v202, %v202
        %v208 = vunpack.c.l.s4 1966171168
        %v209 = vunpack.c.0.s8 %v208
        %v210 = vlaneseq
        %v211 = vshrl.u32 %v210, 7
        %v212 = vsub.s32 %v209, %v211
        %v213 = vrot.slane %v202, %v212
        %v215 = vunpack.c.l.s4 1966171168
        %v216 = vunpack.c.0.s8 %v215
        %v217 = vlaneseq
        %v218 = vshrl.u32 %v217, 7
        %v219 = vsub.s32 %v216, %v218
        %v220 = vrot.slane %v206, %v219
        %v221 = vcombine.high %v213, %v213
        %v222 = vcombine.high %v220, %v220
        %v224 = vunpack.c.l.s4 1966171168
        %v225 = vunpack.c.0.s8 %v224
        %v226 = vlaneseq
        %v227 = vshrl.u32 %v226, 7
        %v228 = vsub.s32 %v225, %v227
        %v229 = vrot.slane %v213, %v228
        %v231 = vunpack.c.l.s4 1966171168
        %v232 = vunpack.c.0.s8 %v231
        %v233 = vlaneseq
        %v234 = vshrl.u32 %v233, 7
        %v235 = vsub.s32 %v232, %v234
        %v236 = vrot.slane %v220, %v235
        %v238 = vunpack.c.l.s4 1966171168
        %v239 = vunpack.c.0.s8 %v238
        %v240 = vlaneseq
        %v241 = vshrl.u32 %v240, 7
        %v242 = vsub.s32 %v239, %v241
        %v243 = vrot.slane %v221, %v242
        %v245 = vunpack.c.l.s4 1966171168
        %v246 = vunpack.c.0.s8 %v245
        %v247 = vlaneseq
        %v248 = vshrl.u32 %v247, 7
        %v249 = vsub.s32 %v246, %v248
        %v250 = vrot.slane %v222, %v249
        %v251 = vcombine.high %v229, %v229
        %v252 = vcombine.high %v236, %v236
        %v253 = vcombine.high %v243, %v243
        %v254 = vcombine.high %v250, %v250
        %v255 = vcombine.high %v203, %v203
        %v257 = vunpack.c.l.s4 1966171168
        %v258 = vunpack.c.0.s8 %v257
        %v259 = vlaneseq
        %v260 = vshrl.u32 %v259, 7
        %v261 = vsub.s32 %v258, %v260
        %v262 = vrot.slane %v203, %v261
        %v264 = vunpack.c.l.s4 1966171168
        %v265 = vunpack.c.0.s8 %v264
        %v266 = vlaneseq
        %v267 = vshrl.u32 %v266, 7
        %v268 = vsub.s32 %v265, %v267
        %v269 = vrot.slane %v255, %v268
        %v270 = vcombine.high %v262, %v262
        %v271 = vcombine.high %v269, %v269
        %v273 = vunpack.c.l.s4 1966171168
        %v274 = vunpack.c.0.s8 %v273
        %v275 = vlaneseq
        %v276 = vshrl.u32 %v275, 7
        %v277 = vsub.s32 %v274, %v276
        %v278 = vrot.slane %v262, %v277
        %v280 = vunpack.c.l.s4 1966171168
        %v281 = vunpack.c.0.s8 %v280
        %v282 = vlaneseq
        %v283 = vshrl.u32 %v282, 7
        %v284 = vsub.s32 %v281, %v283
        %v285 = vrot.slane %v269, %v284
        %v287 = vunpack.c.l.s4 1966171168
        %v288 = vunpack.c.0.s8 %v287
        %v289 = vlaneseq
        %v290 = vshrl.u32 %v289, 7
        %v291 = vsub.s32 %v288, %v290
        %v292 = vrot.slane %v270, %v291
        %v294 = vunpack.c.l.s4 1966171168
        %v295 = vunpack.c.0.s8 %v294
        %v296 = vlaneseq
        %v297 = vshrl.u32 %v296, 7
        %v298 = vsub.s32 %v295, %v297
        %v299 = vrot.slane %v271, %v298
        %v300 = vcombine.high %v278, %v278
        %v301 = vcombine.high %v285, %v285
        %v302 = vcombine.high %v292, %v292
        %v303 = vcombine.high %v299, %v299
        %v304 = vld [vmem:[#allocation5] sm:$0xff]
        %v305 = vld [vmem:[#allocation5 + $0x8] sm:$0xff]
        %v306 = vlaneseq
        %v307 = vshrl.u32 %v306, 7
        %v308 = vsub.s32 0, %v307
        %v309 = vrot.slane %v229, %v308
        %v310 = vlaneseq
        %v311 = vshrl.u32 %v310, 7
        %v312 = vsub.s32 0, %v311
        %v313 = vrot.slane %v243, %v312
        %v314 = vlaneseq
        %v315 = vshrl.u32 %v314, 7
        %v316 = vsub.s32 0, %v315
        %v317 = vrot.slane %v251, %v316
        %v318 = vlaneseq
        %v319 = vshrl.u32 %v318, 7
        %v320 = vsub.s32 0, %v319
        %v321 = vrot.slane %v253, %v320
        %v322 = vlaneseq
        %v323 = vshrl.u32 %v322, 7
        %v324 = vsub.s32 0, %v323
        %v325 = vrot.slane %v236, %v324
        %v326 = vlaneseq
        %v327 = vshrl.u32 %v326, 7
        %v328 = vsub.s32 0, %v327
        %v329 = vrot.slane %v250, %v328
        %v330 = vlaneseq
        %v331 = vshrl.u32 %v330, 7
        %v332 = vsub.s32 0, %v331
        %v333 = vrot.slane %v252, %v332
        %v334 = vlaneseq
        %v335 = vshrl.u32 %v334, 7
        %v336 = vsub.s32 0, %v335
        %v337 = vrot.slane %v254, %v336
        %v338 = vlaneseq
        %v339 = vshrl.u32 %v338, 7
        %v340 = vsub.s32 0, %v339
        %v341 = vrot.slane %v278, %v340
        %v342 = vlaneseq
        %v343 = vshrl.u32 %v342, 7
        %v344 = vsub.s32 0, %v343
        %v345 = vrot.slane %v292, %v344
        %v346 = vlaneseq
        %v347 = vshrl.u32 %v346, 7
        %v348 = vsub.s32 0, %v347
        %v349 = vrot.slane %v300, %v348
        %v350 = vlaneseq
        %v351 = vshrl.u32 %v350, 7
        %v352 = vsub.s32 0, %v351
        %v353 = vrot.slane %v302, %v352
        %v354 = vlaneseq
        %v355 = vshrl.u32 %v354, 7
        %v356 = vsub.s32 0, %v355
        %v357 = vrot.slane %v285, %v356
        %v358 = vlaneseq
        %v359 = vshrl.u32 %v358, 7
        %v360 = vsub.s32 0, %v359
        %v361 = vrot.slane %v299, %v360
        %v362 = vlaneseq
        %v363 = vshrl.u32 %v362, 7
        %v364 = vsub.s32 0, %v363
        %v365 = vrot.slane %v301, %v364
        %v366 = vlaneseq
        %v367 = vshrl.u32 %v366, 7
        %v368 = vsub.s32 0, %v367
        %v369 = vrot.slane %v303, %v368
        %v386 = vadd.f32 %v309, %v304
        %v387 = vadd.f32 %v309, %v305
        %v388 = vadd.f32 %v313, %v304
        %v389 = vadd.f32 %v313, %v305
        %v390 = vadd.f32 %v317, %v304
        %v391 = vadd.f32 %v317, %v305
        %v392 = vadd.f32 %v321, %v304
        %v393 = vadd.f32 %v321, %v305
        %v394 = vadd.f32 %v325, %v304
        %v395 = vadd.f32 %v325, %v305
        %v396 = vadd.f32 %v329, %v304
        %v397 = vadd.f32 %v329, %v305
        %v398 = vadd.f32 %v333, %v304
        %v399 = vadd.f32 %v333, %v305
        %v400 = vadd.f32 %v337, %v304
        %v401 = vadd.f32 %v337, %v305
        %v402 = vadd.f32 %v341, %v304
        %v403 = vadd.f32 %v341, %v305
        %v404 = vadd.f32 %v345, %v304
        %v405 = vadd.f32 %v345, %v305
        %v406 = vadd.f32 %v349, %v304
        %v407 = vadd.f32 %v349, %v305
        %v408 = vadd.f32 %v353, %v304
        %v409 = vadd.f32 %v353, %v305
        %v410 = vadd.f32 %v357, %v304
        %v411 = vadd.f32 %v357, %v305
        %v412 = vadd.f32 %v361, %v304
        %v413 = vadd.f32 %v361, %v305
        %v414 = vadd.f32 %v365, %v304
        %v415 = vadd.f32 %v365, %v305
        %v416 = vadd.f32 %v369, %v304
        %v417 = vadd.f32 %v369, %v305
        %v418 = vld [vmem:[%s199] sm:$0xff]
        %v419 = vld [vmem:[%s199 + $0x8] sm:$0xff]
        %v420 = vld [vmem:[%s199 + $0x10] sm:$0xff]
        %v421 = vld [vmem:[%s199 + $0x18] sm:$0xff]
        %v422 = vld [vmem:[%s199 + $0x20] sm:$0xff]
        %v423 = vld [vmem:[%s199 + $0x28] sm:$0xff]
        %v424 = vld [vmem:[%s199 + $0x30] sm:$0xff]
        %v425 = vld [vmem:[%s199 + $0x38] sm:$0xff]
        %v426 = vld [vmem:[%s199 + $0x40] sm:$0xff]
        %v427 = vld [vmem:[%s199 + $0x48] sm:$0xff]
        %v428 = vld [vmem:[%s199 + $0x50] sm:$0xff]
        %v429 = vld [vmem:[%s199 + $0x58] sm:$0xff]
        %v430 = vld [vmem:[%s199 + $0x60] sm:$0xff]
        %v431 = vld [vmem:[%s199 + $0x68] sm:$0xff]
        %v432 = vld [vmem:[%s199 + $0x70] sm:$0xff]
        %v433 = vld [vmem:[%s199 + $0x78] sm:$0xff]
        %v434 = vld [vmem:[%s199 + $0x80] sm:$0xff]
        %v435 = vld [vmem:[%s199 + $0x88] sm:$0xff]
        %v436 = vld [vmem:[%s199 + $0x90] sm:$0xff]
        %v437 = vld [vmem:[%s199 + $0x98] sm:$0xff]
        %v438 = vld [vmem:[%s199 + $0xa0] sm:$0xff]
        %v439 = vld [vmem:[%s199 + $0xa8] sm:$0xff]
        %v440 = vld [vmem:[%s199 + $0xb0] sm:$0xff]
        %v441 = vld [vmem:[%s199 + $0xb8] sm:$0xff]
        %v442 = vld [vmem:[%s199 + $0xc0] sm:$0xff]
        %v443 = vld [vmem:[%s199 + $0xc8] sm:$0xff]
        %v444 = vld [vmem:[%s199 + $0xd0] sm:$0xff]
        %v445 = vld [vmem:[%s199 + $0xd8] sm:$0xff]
        %v446 = vld [vmem:[%s199 + $0xe0] sm:$0xff]
        %v447 = vld [vmem:[%s199 + $0xe8] sm:$0xff]
        %v448 = vld [vmem:[%s199 + $0xf0] sm:$0xff]
        %v449 = vld [vmem:[%s199 + $0xf8] sm:$0xff]
        %v450 = vld [vmem:[%s199 + $0x100] sm:$0xff]
        %v451 = vld [vmem:[%s199 + $0x108] sm:$0xff]
        %v452 = vld [vmem:[%s199 + $0x110] sm:$0xff]
        %v453 = vld [vmem:[%s199 + $0x118] sm:$0xff]
        %v454 = vld [vmem:[%s199 + $0x120] sm:$0xff]
        %v455 = vld [vmem:[%s199 + $0x128] sm:$0xff]
        %v456 = vld [vmem:[%s199 + $0x130] sm:$0xff]
        %v457 = vld [vmem:[%s199 + $0x138] sm:$0xff]
        %v458 = vld [vmem:[%s199 + $0x140] sm:$0xff]
        %v459 = vld [vmem:[%s199 + $0x148] sm:$0xff]
        %v460 = vld [vmem:[%s199 + $0x150] sm:$0xff]
        %v461 = vld [vmem:[%s199 + $0x158] sm:$0xff]
        %v462 = vld [vmem:[%s199 + $0x160] sm:$0xff]
        %v463 = vld [vmem:[%s199 + $0x168] sm:$0xff]
        %v464 = vld [vmem:[%s199 + $0x170] sm:$0xff]
        %v465 = vld [vmem:[%s199 + $0x178] sm:$0xff]
        %v466 = vld [vmem:[%s199 + $0x180] sm:$0xff]
        %v467 = vld [vmem:[%s199 + $0x188] sm:$0xff]
        %v468 = vld [vmem:[%s199 + $0x190] sm:$0xff]
        %v469 = vld [vmem:[%s199 + $0x198] sm:$0xff]
        %v470 = vld [vmem:[%s199 + $0x1a0] sm:$0xff]
        %v471 = vld [vmem:[%s199 + $0x1a8] sm:$0xff]
        %v472 = vld [vmem:[%s199 + $0x1b0] sm:$0xff]
        %v473 = vld [vmem:[%s199 + $0x1b8] sm:$0xff]
        %v474 = vld [vmem:[%s199 + $0x1c0] sm:$0xff]
        %v475 = vld [vmem:[%s199 + $0x1c8] sm:$0xff]
        %v476 = vld [vmem:[%s199 + $0x1d0] sm:$0xff]
        %v477 = vld [vmem:[%s199 + $0x1d8] sm:$0xff]
        %v478 = vld [vmem:[%s199 + $0x1e0] sm:$0xff]
        %v479 = vld [vmem:[%s199 + $0x1e8] sm:$0xff]
        %v480 = vld [vmem:[%s199 + $0x1f0] sm:$0xff]
        %v481 = vld [vmem:[%s199 + $0x1f8] sm:$0xff]
        %v482 = vld [vmem:[%s199 + $0x200] sm:$0xff]
        %v483 = vld [vmem:[%s199 + $0x208] sm:$0xff]
        %v484 = vld [vmem:[%s199 + $0x210] sm:$0xff]
        %v485 = vld [vmem:[%s199 + $0x218] sm:$0xff]
        %v486 = vld [vmem:[%s199 + $0x220] sm:$0xff]
        %v487 = vld [vmem:[%s199 + $0x228] sm:$0xff]
        %v488 = vld [vmem:[%s199 + $0x230] sm:$0xff]
        %v489 = vld [vmem:[%s199 + $0x238] sm:$0xff]
        %v490 = vld [vmem:[%s199 + $0x240] sm:$0xff]
        %v491 = vld [vmem:[%s199 + $0x248] sm:$0xff]
        %v492 = vld [vmem:[%s199 + $0x250] sm:$0xff]
        %v493 = vld [vmem:[%s199 + $0x258] sm:$0xff]
        %v494 = vld [vmem:[%s199 + $0x260] sm:$0xff]
        %v495 = vld [vmem:[%s199 + $0x268] sm:$0xff]
        %v496 = vld [vmem:[%s199 + $0x270] sm:$0xff]
        %v497 = vld [vmem:[%s199 + $0x278] sm:$0xff]
        %v498 = vld [vmem:[%s199 + $0x280] sm:$0xff]
        %v499 = vld [vmem:[%s199 + $0x288] sm:$0xff]
        %v500 = vld [vmem:[%s199 + $0x290] sm:$0xff]
        %v501 = vld [vmem:[%s199 + $0x298] sm:$0xff]
        %v502 = vld [vmem:[%s199 + $0x2a0] sm:$0xff]
        %v503 = vld [vmem:[%s199 + $0x2a8] sm:$0xff]
        %v504 = vld [vmem:[%s199 + $0x2b0] sm:$0xff]
        %v505 = vld [vmem:[%s199 + $0x2b8] sm:$0xff]
        %v506 = vld [vmem:[%s199 + $0x2c0] sm:$0xff]
        %v507 = vld [vmem:[%s199 + $0x2c8] sm:$0xff]
        %v508 = vld [vmem:[%s199 + $0x2d0] sm:$0xff]
        %v509 = vld [vmem:[%s199 + $0x2d8] sm:$0xff]
        %v510 = vld [vmem:[%s199 + $0x2e0] sm:$0xff]
        %v511 = vld [vmem:[%s199 + $0x2e8] sm:$0xff]
        %v512 = vld [vmem:[%s199 + $0x2f0] sm:$0xff]
        %v513 = vld [vmem:[%s199 + $0x2f8] sm:$0xff]
        %v514 = vld [vmem:[%s199 + $0x300] sm:$0xff]
        %v515 = vld [vmem:[%s199 + $0x308] sm:$0xff]
        %v516 = vld [vmem:[%s199 + $0x310] sm:$0xff]
        %v517 = vld [vmem:[%s199 + $0x318] sm:$0xff]
        %v518 = vld [vmem:[%s199 + $0x320] sm:$0xff]
        %v519 = vld [vmem:[%s199 + $0x328] sm:$0xff]
        %v520 = vld [vmem:[%s199 + $0x330] sm:$0xff]
        %v521 = vld [vmem:[%s199 + $0x338] sm:$0xff]
        %v522 = vld [vmem:[%s199 + $0x340] sm:$0xff]
        %v523 = vld [vmem:[%s199 + $0x348] sm:$0xff]
        %v524 = vld [vmem:[%s199 + $0x350] sm:$0xff]
        %v525 = vld [vmem:[%s199 + $0x358] sm:$0xff]
        %v526 = vld [vmem:[%s199 + $0x360] sm:$0xff]
        %v527 = vld [vmem:[%s199 + $0x368] sm:$0xff]
        %v528 = vld [vmem:[%s199 + $0x370] sm:$0xff]
        %v529 = vld [vmem:[%s199 + $0x378] sm:$0xff]
        %v530 = vld [vmem:[%s199 + $0x380] sm:$0xff]
        %v531 = vld [vmem:[%s199 + $0x388] sm:$0xff]
        %v532 = vld [vmem:[%s199 + $0x390] sm:$0xff]
        %v533 = vld [vmem:[%s199 + $0x398] sm:$0xff]
        %v534 = vld [vmem:[%s199 + $0x3a0] sm:$0xff]
        %v535 = vld [vmem:[%s199 + $0x3a8] sm:$0xff]
        %v536 = vld [vmem:[%s199 + $0x3b0] sm:$0xff]
        %v537 = vld [vmem:[%s199 + $0x3b8] sm:$0xff]
        %v538 = vld [vmem:[%s199 + $0x3c0] sm:$0xff]
        %v539 = vld [vmem:[%s199 + $0x3c8] sm:$0xff]
        %v540 = vld [vmem:[%s199 + $0x3d0] sm:$0xff]
        %v541 = vld [vmem:[%s199 + $0x3d8] sm:$0xff]
        %v542 = vld [vmem:[%s199 + $0x3e0] sm:$0xff]
        %v543 = vld [vmem:[%s199 + $0x3e8] sm:$0xff]
        %v544 = vld [vmem:[%s199 + $0x3f0] sm:$0xff]
        %v545 = vld [vmem:[%s199 + $0x3f8] sm:$0xff]
        %vm546 = vcmask 261120
        %v548 = vsel %vm546, %v418, 0
        %v551 = vsel %vm546, %v419, 0
        %v554 = vsel %vm546, %v420, 0
        %v557 = vsel %vm546, %v421, 0
        %v560 = vsel %vm546, %v422, 0
        %v563 = vsel %vm546, %v423, 0
        %v566 = vsel %vm546, %v424, 0
        %v569 = vsel %vm546, %v425, 0
        %v572 = vsel %vm546, %v426, 0
        %v575 = vsel %vm546, %v427, 0
        %v578 = vsel %vm546, %v428, 0
        %v581 = vsel %vm546, %v429, 0
        %v584 = vsel %vm546, %v430, 0
        %v587 = vsel %vm546, %v431, 0
        %v590 = vsel %vm546, %v432, 0
        %v593 = vsel %vm546, %v433, 0
        %v596 = vsel %vm546, %v434, 0
        %v599 = vsel %vm546, %v435, 0
        %v602 = vsel %vm546, %v436, 0
        %v605 = vsel %vm546, %v437, 0
        %v608 = vsel %vm546, %v438, 0
        %v611 = vsel %vm546, %v439, 0
        %v614 = vsel %vm546, %v440, 0
        %v617 = vsel %vm546, %v441, 0
        %v620 = vsel %vm546, %v442, 0
        %v623 = vsel %vm546, %v443, 0
        %v626 = vsel %vm546, %v444, 0
        %v629 = vsel %vm546, %v445, 0
        %v632 = vsel %vm546, %v446, 0
        %v635 = vsel %vm546, %v447, 0
        %v638 = vsel %vm546, %v448, 0
        %v641 = vsel %vm546, %v449, 0
        %v644 = vsel %vm546, %v450, 0
        %v647 = vsel %vm546, %v451, 0
        %v650 = vsel %vm546, %v452, 0
        %v653 = vsel %vm546, %v453, 0
        %v656 = vsel %vm546, %v454, 0
        %v659 = vsel %vm546, %v455, 0
        %v662 = vsel %vm546, %v456, 0
        %v665 = vsel %vm546, %v457, 0
        %v668 = vsel %vm546, %v458, 0
        %v671 = vsel %vm546, %v459, 0
        %v674 = vsel %vm546, %v460, 0
        %v677 = vsel %vm546, %v461, 0
        %v680 = vsel %vm546, %v462, 0
        %v683 = vsel %vm546, %v463, 0
        %v686 = vsel %vm546, %v464, 0
        %v689 = vsel %vm546, %v465, 0
        %v692 = vsel %vm546, %v466, 0
        %v695 = vsel %vm546, %v467, 0
        %v698 = vsel %vm546, %v468, 0
        %v701 = vsel %vm546, %v469, 0
        %v704 = vsel %vm546, %v470, 0
        %v707 = vsel %vm546, %v471, 0
        %v710 = vsel %vm546, %v472, 0
        %v713 = vsel %vm546, %v473, 0
        %v716 = vsel %vm546, %v474, 0
        %v719 = vsel %vm546, %v475, 0
        %v722 = vsel %vm546, %v476, 0
        %v725 = vsel %vm546, %v477, 0
        %v728 = vsel %vm546, %v478, 0
        %v731 = vsel %vm546, %v479, 0
        %v734 = vsel %vm546, %v480, 0
        %v737 = vsel %vm546, %v481, 0
        %v740 = vsel %vm546, %v482, 0
        %v743 = vsel %vm546, %v483, 0
        %v746 = vsel %vm546, %v484, 0
        %v749 = vsel %vm546, %v485, 0
        %v752 = vsel %vm546, %v486, 0
        %v755 = vsel %vm546, %v487, 0
        %v758 = vsel %vm546, %v488, 0
        %v761 = vsel %vm546, %v489, 0
        %v764 = vsel %vm546, %v490, 0
        %v767 = vsel %vm546, %v491, 0
        %v770 = vsel %vm546, %v492, 0
        %v773 = vsel %vm546, %v493, 0
        %v776 = vsel %vm546, %v494, 0
        %v779 = vsel %vm546, %v495, 0
        %v782 = vsel %vm546, %v496, 0
        %v785 = vsel %vm546, %v497, 0
        %v788 = vsel %vm546, %v498, 0
        %v791 = vsel %vm546, %v499, 0
        %v794 = vsel %vm546, %v500, 0
        %v797 = vsel %vm546, %v501, 0
        %v800 = vsel %vm546, %v502, 0
        %v803 = vsel %vm546, %v503, 0
        %v806 = vsel %vm546, %v504, 0
        %v809 = vsel %vm546, %v505, 0
        %v812 = vsel %vm546, %v506, 0
        %v815 = vsel %vm546, %v507, 0
        %v818 = vsel %vm546, %v508, 0
        %v821 = vsel %vm546, %v509, 0
        %v824 = vsel %vm546, %v510, 0
        %v827 = vsel %vm546, %v511, 0
        %v830 = vsel %vm546, %v512, 0
        %v833 = vsel %vm546, %v513, 0
        %v836 = vsel %vm546, %v514, 0
        %v839 = vsel %vm546, %v515, 0
        %v842 = vsel %vm546, %v516, 0
        %v845 = vsel %vm546, %v517, 0
        %v848 = vsel %vm546, %v518, 0
        %v851 = vsel %vm546, %v519, 0
        %v854 = vsel %vm546, %v520, 0
        %v857 = vsel %vm546, %v521, 0
        %v860 = vsel %vm546, %v522, 0
        %v863 = vsel %vm546, %v523, 0
        %v866 = vsel %vm546, %v524, 0
        %v869 = vsel %vm546, %v525, 0
        %v872 = vsel %vm546, %v526, 0
        %v875 = vsel %vm546, %v527, 0
        %v878 = vsel %vm546, %v528, 0
        %v881 = vsel %vm546, %v529, 0
        %v884 = vsel %vm546, %v530, 0
        %v887 = vsel %vm546, %v531, 0
        %v890 = vsel %vm546, %v532, 0
        %v893 = vsel %vm546, %v533, 0
        %v896 = vsel %vm546, %v534, 0
        %v899 = vsel %vm546, %v535, 0
        %v902 = vsel %vm546, %v536, 0
        %v905 = vsel %vm546, %v537, 0
        %v908 = vsel %vm546, %v538, 0
        %v911 = vsel %vm546, %v539, 0
        %v914 = vsel %vm546, %v540, 0
        %v917 = vsel %vm546, %v541, 0
        %v920 = vsel %vm546, %v542, 0
        %v923 = vsel %vm546, %v543, 0
        %v926 = vsel %vm546, %v544, 0
        %v929 = vsel %vm546, %v545, 0
        %v932 = vsel %vm546, %v386, 0
        %v935 = vsel %vm546, %v387, 0
        %v938 = vsel %vm546, %v388, 0
        %v941 = vsel %vm546, %v389, 0
        %v944 = vsel %vm546, %v390, 0
        %v947 = vsel %vm546, %v391, 0
        %v950 = vsel %vm546, %v392, 0
        %v953 = vsel %vm546, %v393, 0
        %v956 = vsel %vm546, %v394, 0
        %v959 = vsel %vm546, %v395, 0
        %v962 = vsel %vm546, %v396, 0
        %v965 = vsel %vm546, %v397, 0
        %v968 = vsel %vm546, %v398, 0
        %v971 = vsel %vm546, %v399, 0
        %v974 = vsel %vm546, %v400, 0
        %v977 = vsel %vm546, %v401, 0
        %v980 = vsel %vm546, %v402, 0
        %v983 = vsel %vm546, %v403, 0
        %v986 = vsel %vm546, %v404, 0
        %v989 = vsel %vm546, %v405, 0
        %v992 = vsel %vm546, %v406, 0
        %v995 = vsel %vm546, %v407, 0
        %v998 = vsel %vm546, %v408, 0
        %v1001 = vsel %vm546, %v409, 0
        %v1004 = vsel %vm546, %v410, 0
        %v1007 = vsel %vm546, %v411, 0
        %v1010 = vsel %vm546, %v412, 0
        %v1013 = vsel %vm546, %v413, 0
        %v1016 = vsel %vm546, %v414, 0
        %v1019 = vsel %vm546, %v415, 0
        %v1022 = vsel %vm546, %v416, 0
        %v1025 = vsel %vm546, %v417, 0
        %1027 = vmatprep.subr.mxu0 0.0
        %v1028 = vand.u32 %v932, 4294901760
        %1029 = vmatpush1.xpose.msra.mxu0 %v1028
        %1030 = vmatprep.subr.mxu0 0.0
        %v1031 = vand.u32 %v935, 4294901760
        %1032 = vmatpush1.xpose.msra.mxu0 %v1031
        %1033 = vmatprep.subr.mxu0 0.0
        %v1034 = vand.u32 %v938, 4294901760
        %1035 = vmatpush1.xpose.msra.mxu0 %v1034
        %1036 = vmatprep.subr.mxu0 0.0
        %v1037 = vand.u32 %v941, 4294901760
        %1038 = vmatpush1.xpose.msra.mxu0 %v1037
        %1039 = vmatprep.subr.mxu0 0.0
        %v1040 = vand.u32 %v944, 4294901760
        %1041 = vmatpush1.xpose.msra.mxu0 %v1040
        %1042 = vmatprep.subr.mxu0 0.0
        %v1043 = vand.u32 %v947, 4294901760
        %1044 = vmatpush1.xpose.msra.mxu0 %v1043
        %1045 = vmatprep.subr.mxu0 0.0
        %v1046 = vand.u32 %v950, 4294901760
        %1047 = vmatpush1.xpose.msra.mxu0 %v1046
        %1048 = vmatprep.subr.mxu0 0.0
        %v1049 = vand.u32 %v953, 4294901760
        %1050 = vmatpush1.xpose.msra.mxu0 %v1049
        %1051 = vmatprep.subr.mxu0 0.0
        %v1052 = vand.u32 %v956, 4294901760
        %1053 = vmatpush1.xpose.msra.mxu0 %v1052
        %1054 = vmatprep.subr.mxu0 0.0
        %v1055 = vand.u32 %v959, 4294901760
        %1056 = vmatpush1.xpose.msra.mxu0 %v1055
        %1057 = vmatprep.subr.mxu0 0.0
        %v1058 = vand.u32 %v962, 4294901760
        %1059 = vmatpush1.xpose.msra.mxu0 %v1058
        %1060 = vmatprep.subr.mxu0 0.0
        %v1061 = vand.u32 %v965, 4294901760
        %1062 = vmatpush1.xpose.msra.mxu0 %v1061
        %1063 = vmatprep.subr.mxu0 0.0
        %v1064 = vand.u32 %v968, 4294901760
        %1065 = vmatpush1.xpose.msra.mxu0 %v1064
        %1066 = vmatprep.subr.mxu0 0.0
        %v1067 = vand.u32 %v971, 4294901760
        %1068 = vmatpush1.xpose.msra.mxu0 %v1067
        %1069 = vmatprep.subr.mxu0 0.0
        %v1070 = vand.u32 %v974, 4294901760
        %1071 = vmatpush1.xpose.msra.mxu0 %v1070
        %1072 = vmatprep.subr.mxu0 0.0
        %v1073 = vand.u32 %v977, 4294901760
        %1074 = vmatpush1.xpose.msra.mxu0 %v1073
        %1075 = vmatprep.subr.mxu0 0.0
        %v1076 = vand.u32 %v980, 4294901760
        %1077 = vmatpush1.xpose.msra.mxu0 %v1076
        %1078 = vmatprep.subr.mxu0 0.0
        %v1079 = vand.u32 %v983, 4294901760
        %1080 = vmatpush1.xpose.msra.mxu0 %v1079
        %1081 = vmatprep.subr.mxu0 0.0
        %v1082 = vand.u32 %v986, 4294901760
        %1083 = vmatpush1.xpose.msra.mxu0 %v1082
        %1084 = vmatprep.subr.mxu0 0.0
        %v1085 = vand.u32 %v989, 4294901760
        %1086 = vmatpush1.xpose.msra.mxu0 %v1085
        %1087 = vmatprep.subr.mxu0 0.0
        %v1088 = vand.u32 %v992, 4294901760
        %1089 = vmatpush1.xpose.msra.mxu0 %v1088
        %1090 = vmatprep.subr.mxu0 0.0
        %v1091 = vand.u32 %v995, 4294901760
        %1092 = vmatpush1.xpose.msra.mxu0 %v1091
        %1093 = vmatprep.subr.mxu0 0.0
        %v1094 = vand.u32 %v998, 4294901760
        %1095 = vmatpush1.xpose.msra.mxu0 %v1094
        %1096 = vmatprep.subr.mxu0 0.0
        %v1097 = vand.u32 %v1001, 4294901760
        %1098 = vmatpush1.xpose.msra.mxu0 %v1097
        %1099 = vmatprep.subr.mxu0 0.0
        %v1100 = vand.u32 %v1004, 4294901760
        %1101 = vmatpush1.xpose.msra.mxu0 %v1100
        %1102 = vmatprep.subr.mxu0 0.0
        %v1103 = vand.u32 %v1007, 4294901760
        %1104 = vmatpush1.xpose.msra.mxu0 %v1103
        %1105 = vmatprep.subr.mxu0 0.0
        %v1106 = vand.u32 %v1010, 4294901760
        %1107 = vmatpush1.xpose.msra.mxu0 %v1106
        %1108 = vmatprep.subr.mxu0 0.0
        %v1109 = vand.u32 %v1013, 4294901760
        %1110 = vmatpush1.xpose.msra.mxu0 %v1109
        %1111 = vmatprep.subr.mxu0 0.0
        %v1112 = vand.u32 %v1016, 4294901760
        %1113 = vmatpush1.xpose.msra.mxu0 %v1112
        %1114 = vmatprep.subr.mxu0 0.0
        %v1115 = vand.u32 %v1019, 4294901760
        %1116 = vmatpush1.xpose.msra.mxu0 %v1115
        %1117 = vmatprep.subr.mxu0 0.0
        %v1118 = vand.u32 %v1022, 4294901760
        %1119 = vmatpush1.xpose.msra.mxu0 %v1118
        %1120 = vmatprep.subr.mxu0 0.0
        %v1121 = vand.u32 %v1025, 4294901760
        %1122 = vmatpush1.xpose.msra.mxu0 %v1121
        %1123 = vmatprep.mubr.f32.mxu0 0.0
        %v1124 = vand.u32 %v548, 4294901760
        %v1125 = vsub.f32 %v548, %v1124
        %v1126 = vand.u32 %v1125, 4294901760
        %v1127 = vsub.f32 %v1125, %v1126
        %v1128 = vand.u32 %v1127, 4294901760
        %1129 = vmatmul.mubr.f32.gmra.mrb[0].mxu0 %v1128
        %v1130 = vpop.f32.mrb[0].mxu0
        %v1131 = vadd.f32 0.0, %v1130
        %v1132 = vpop.f32.mrb[0].mxu0
        %v1133 = vadd.f32 0.0, %v1132
        %1134 = vmatprep.mubr.f32.mxu0 0.0
        %v1135 = vand.u32 %v551, 4294901760
        %v1136 = vsub.f32 %v551, %v1135
        %v1137 = vand.u32 %v1136, 4294901760
        %v1138 = vsub.f32 %v1136, %v1137
        %v1139 = vand.u32 %v1138, 4294901760
        %1140 = vmatmul.mubr.f32.gmra.mrb[0].mxu0 %v1139
        %v1141 = vpop.f32.mrb[0].mxu0
        %v1142 = vadd.f32 0.0, %v1141
        %v1143 = vpop.f32.mrb[0].mxu0
        %v1144 = vadd.f32 0.0, %v1143
        %1145 = vmatprep.mubr.f32.mxu0 0.0
        %v1146 = vand.u32 %v554, 4294901760
        %v1147 = vsub.f32 %v554, %v1146
        %v1148 = vand.u32 %v1147, 4294901760
        %v1149 = vsub.f32 %v1147, %v1148
        %v1150 = vand.u32 %v1149, 4294901760
        %1151 = vmatmul.mubr.f32.gmra.mrb[0].mxu0 %v1150
        %v1152 = vpop.f32.mrb[0].mxu0
        %v1153 = vadd.f32 0.0, %v1152
        %v1154 = vpop.f32.mrb[0].mxu0
        %v1155 = vadd.f32 0.0, %v1154
        %1156 = vmatprep.mubr.f32.mxu0 0.0
        %v1157 = vand.u32 %v557, 4294901760
        %v1158 = vsub.f32 %v557, %v1157
        %v1159 = vand.u32 %v1158, 4294901760
        %v1160 = vsub.f32 %v1158, %v1159
        %v1161 = vand.u32 %v1160, 4294901760
        %1162 = vmatmul.mubr.f32.gmra.mrb[0].mxu0 %v1161
        %v1163 = vpop.f32.mrb[0].mxu0
        %v1164 = vadd.f32 0.0, %v1163
        %v1165 = vpop.f32.mrb[0].mxu0
        %v1166 = vadd.f32 0.0, %v1165
        %1167 = vmatprep.mubr.f32.mxu0 0.0
        %v1168 = vand.u32 %v560, 4294901760
        %v1169 = vsub.f32 %v560, %v1168
        %v1170 = vand.u32 %v1169, 4294901760
        %v1171 = vsub.f32 %v1169, %v1170
        %v1172 = vand.u32 %v1171, 4294901760
        %1173 = vmatmul.mubr.f32.gmra.mrb[0].mxu0 %v1172
        %v1174 = vpop.f32.mrb[0].mxu0
        %v1175 = vadd.f32 0.0, %v1174
        %v1176 = vpop.f32.mrb[0].mxu0
        %v1177 = vadd.f32 0.0, %v1176
        %1178 = vmatprep.mubr.f32.mxu0 0.0
        %v1179 = vand.u32 %v563, 4294901760
        %v1180 = vsub.f32 %v563, %v1179
        %v1181 = vand.u32 %v1180, 4294901760
        %v1182 = vsub.f32 %v1180, %v1181
        %v1183 = vand.u32 %v1182, 4294901760
        %1184 = vmatmul.mubr.f32.gmra.mrb[0].mxu0 %v1183
        %v1185 = vpop.f32.mrb[0].mxu0
        %v1186 = vadd.f32 0.0, %v1185
        %v1187 = vpop.f32.mrb[0].mxu0
        %v1188 = vadd.f32 0.0, %v1187
        %1189 = vmatprep.mubr.f32.mxu0 0.0
        %v1190 = vand.u32 %v566, 4294901760
        %v1191 = vsub.f32 %v566, %v1190
        %v1192 = vand.u32 %v1191, 4294901760
        %v1193 = vsub.f32 %v1191, %v1192
        %v1194 = vand.u32 %v1193, 4294901760
        %1195 = vmatmul.mubr.f32.gmra.mrb[0].mxu0 %v1194
        %v1196 = vpop.f32.mrb[0].mxu0
        %v1197 = vadd.f32 0.0, %v1196
        %v1198 = vpop.f32.mrb[0].mxu0
        %v1199 = vadd.f32 0.0, %v1198
        %1200 = vmatprep.mubr.f32.mxu0 0.0
        %v1201 = vand.u32 %v569, 4294901760
        %v1202 = vsub.f32 %v569, %v1201
        %v1203 = vand.u32 %v1202, 4294901760
        %v1204 = vsub.f32 %v1202, %v1203
        %v1205 = vand.u32 %v1204, 4294901760
        %1206 = vmatmul.mubr.f32.gmra.mrb[0].mxu0 %v1205
        %v1207 = vpop.f32.mrb[0].mxu0
        %v1208 = vadd.f32 0.0, %v1207
        %v1209 = vpop.f32.mrb[0].mxu0
        %v1210 = vadd.f32 0.0, %v1209
        %1211 = vmatprep.mubr.f32.mxu0 0.0
        %v1212 = vand.u32 %v572, 4294901760
        %v1213 = vsub.f32 %v572, %v1212
        %v1214 = vand.u32 %v1213, 4294901760
        %v1215 = vsub.f32 %v1213, %v1214
        %v1216 = vand.u32 %v1215, 4294901760
        %1217 = vmatmul.mubr.f32.gmra.mrb[0].mxu0 %v1216
        %v1218 = vpop.f32.mrb[0].mxu0
        %v1219 = vadd.f32 0.0, %v1218
        %v1220 = vpop.f32.mrb[0].mxu0
        %v1221 = vadd.f32 0.0, %v1220
        %1222 = vmatprep.mubr.f32.mxu0 0.0
        %v1223 = vand.u32 %v575, 4294901760
        %v1224 = vsub.f32 %v575, %v1223
        %v1225 = vand.u32 %v1224, 4294901760
        %v1226 = vsub.f32 %v1224, %v1225
        %v1227 = vand.u32 %v1226, 4294901760
        %1228 = vmatmul.mubr.f32.gmra.mrb[0].mxu0 %v1227
        %v1229 = vpop.f32.mrb[0].mxu0
        %v1230 = vadd.f32 0.0, %v1229
        %v1231 = vpop.f32.mrb[0].mxu0
        %v1232 = vadd.f32 0.0, %v1231
        %1233 = vmatprep.mubr.f32.mxu0 0.0
        %v1234 = vand.u32 %v578, 4294901760
        %v1235 = vsub.f32 %v578, %v1234
        %v1236 = vand.u32 %v1235, 4294901760
        %v1237 = vsub.f32 %v1235, %v1236
        %v1238 = vand.u32 %v1237, 4294901760
        %1239 = vmatmul.mubr.f32.gmra.mrb[0].mxu0 %v1238
        %v1240 = vpop.f32.mrb[0].mxu0
        %v1241 = vadd.f32 0.0, %v1240
        %v1242 = vpop.f32.mrb[0].mxu0
        %v1243 = vadd.f32 0.0, %v1242
        %1244 = vmatprep.mubr.f32.mxu0 0.0
        %v1245 = vand.u32 %v581, 4294901760
        %v1246 = vsub.f32 %v581, %v1245
        %v1247 = vand.u32 %v1246, 4294901760
        %v1248 = vsub.f32 %v1246, %v1247
        %v1249 = vand.u32 %v1248, 4294901760
        %1250 = vmatmul.mubr.f32.gmra.mrb[0].mxu0 %v1249
        %v1251 = vpop.f32.mrb[0].mxu0
        %v1252 = vadd.f32 0.0, %v1251
        %v1253 = vpop.f32.mrb[0].mxu0
        %v1254 = vadd.f32 0.0, %v1253
        %1255 = vmatprep.mubr.f32.mxu0 0.0
        %v1256 = vand.u32 %v584, 4294901760
        %v1257 = vsub.f32 %v584, %v1256
        %v1258 = vand.u32 %v1257, 4294901760
        %v1259 = vsub.f32 %v1257, %v1258
        %v1260 = vand.u32 %v1259, 4294901760
        %1261 = vmatmul.mubr.f32.gmra.mrb[0].mxu0 %v1260
        %v1262 = vpop.f32.mrb[0].mxu0
        %v1263 = vadd.f32 0.0, %v1262
        %v1264 = vpop.f32.mrb[0].mxu0
        %v1265 = vadd.f32 0.0, %v1264
        %1266 = vmatprep.mubr.f32.mxu0 0.0
        %v1267 = vand.u32 %v587, 4294901760
        %v1268 = vsub.f32 %v587, %v1267
        %v1269 = vand.u32 %v1268, 4294901760
        %v1270 = vsub.f32 %v1268, %v1269
        %v1271 = vand.u32 %v1270, 4294901760
        %1272 = vmatmul.mubr.f32.gmra.mrb[0].mxu0 %v1271
        %v1273 = vpop.f32.mrb[0].mxu0
        %v1274 = vadd.f32 0.0, %v1273
        %v1275 = vpop.f32.mrb[0].mxu0
        %v1276 = vadd.f32 0.0, %v1275
        %1277 = vmatprep.mubr.f32.mxu0 0.0
        %v1278 = vand.u32 %v590, 4294901760
        %v1279 = vsub.f32 %v590, %v1278
        %v1280 = vand.u32 %v1279, 4294901760
        %v1281 = vsub.f32 %v1279, %v1280
        %v1282 = vand.u32 %v1281, 4294901760
        %1283 = vmatmul.mubr.f32.gmra.mrb[0].mxu0 %v1282
        %v1284 = vpop.f32.mrb[0].mxu0
        %v1285 = vadd.f32 0.0, %v1284
        %v1286 = vpop.f32.mrb[0].mxu0
        %v1287 = vadd.f32 0.0, %v1286
        %1288 = vmatprep.mubr.f32.mxu0 0.0
        %v1289 = vand.u32 %v593, 4294901760
        %v1290 = vsub.f32 %v593, %v1289
        %v1291 = vand.u32 %v1290, 4294901760
        %v1292 = vsub.f32 %v1290, %v1291
        %v1293 = vand.u32 %v1292, 4294901760
        %1294 = vmatmul.mubr.f32.gmra.mrb[0].mxu0 %v1293
        %v1295 = vpop.f32.mrb[0].mxu0
        %v1296 = vadd.f32 0.0, %v1295
        %v1297 = vpop.f32.mrb[0].mxu0
        %v1298 = vadd.f32 0.0, %v1297
        %1299 = vmatprep.mubr.f32.mxu0 0.0
        %v1300 = vand.u32 %v596, 4294901760
        %v1301 = vsub.f32 %v596, %v1300
        %v1302 = vand.u32 %v1301, 4294901760
        %v1303 = vsub.f32 %v1301, %v1302
        %v1304 = vand.u32 %v1303, 4294901760
        %1305 = vmatmul.mubr.f32.gmra.mrb[0].mxu0 %v1304
        %v1306 = vpop.f32.mrb[0].mxu0
        %v1307 = vadd.f32 0.0, %v1306
        %v1308 = vpop.f32.mrb[0].mxu0
        %v1309 = vadd.f32 0.0, %v1308
        %1310 = vmatprep.mubr.f32.mxu0 0.0
        %v1311 = vand.u32 %v599, 4294901760
        %v1312 = vsub.f32 %v599, %v1311
        %v1313 = vand.u32 %v1312, 4294901760
        %v1314 = vsub.f32 %v1312, %v1313
        %v1315 = vand.u32 %v1314, 4294901760
        %1316 = vmatmul.mubr.f32.gmra.mrb[0].mxu0 %v1315
        %v1317 = vpop.f32.mrb[0].mxu0
        %v1318 = vadd.f32 0.0, %v1317
        %v1319 = vpop.f32.mrb[0].mxu0
        %v1320 = vadd.f32 0.0, %v1319
        %1321 = vmatprep.mubr.f32.mxu0 0.0
        %v1322 = vand.u32 %v602, 4294901760
        %v1323 = vsub.f32 %v602, %v1322
        %v1324 = vand.u32 %v1323, 4294901760
        %v1325 = vsub.f32 %v1323, %v1324
        %v1326 = vand.u32 %v1325, 4294901760
        %1327 = vmatmul.mubr.f32.gmra.mrb[0].mxu0 %v1326
        %v1328 = vpop.f32.mrb[0].mxu0
        %v1329 = vadd.f32 0.0, %v1328
        %v1330 = vpop.f32.mrb[0].mxu0
        %v1331 = vadd.f32 0.0, %v1330
        %1332 = vmatprep.mubr.f32.mxu0 0.0
        %v1333 = vand.u32 %v605, 4294901760
        %v1334 = vsub.f32 %v605, %v1333
        %v1335 = vand.u32 %v1334, 4294901760
        %v1336 = vsub.f32 %v1334, %v1335
        %v1337 = vand.u32 %v1336, 4294901760
        %1338 = vmatmul.mubr.f32.gmra.mrb[0].mxu0 %v1337
        %v1339 = vpop.f32.mrb[0].mxu0
        %v1340 = vadd.f32 0.0, %v1339
        %v1341 = vpop.f32.mrb[0].mxu0
        %v1342 = vadd.f32 0.0, %v1341
        %1343 = vmatprep.mubr.f32.mxu0 0.0
        %v1344 = vand.u32 %v608, 4294901760
        %v1345 = vsub.f32 %v608, %v1344
        %v1346 = vand.u32 %v1345, 4294901760
        %v1347 = vsub.f32 %v1345, %v1346
        %v1348 = vand.u32 %v1347, 4294901760
        %1349 = vmatmul.mubr.f32.gmra.mrb[0].mxu0 %v1348
        %v1350 = vpop.f32.mrb[0].mxu0
        %v1351 = vadd.f32 0.0, %v1350
        %v1352 = vpop.f32.mrb[0].mxu0
        %v1353 = vadd.f32 0.0, %v1352
        %1354 = vmatprep.mubr.f32.mxu0 0.0
        %v1355 = vand.u32 %v611, 4294901760
        %v1356 = vsub.f32 %v611, %v1355
        %v1357 = vand.u32 %v1356, 4294901760
        %v1358 = vsub.f32 %v1356, %v1357
        %v1359 = vand.u32 %v1358, 4294901760
        %1360 = vmatmul.mubr.f32.gmra.mrb[0].mxu0 %v1359
        %v1361 = vpop.f32.mrb[0].mxu0
        %v1362 = vadd.f32 0.0, %v1361
        %v1363 = vpop.f32.mrb[0].mxu0
        %v1364 = vadd.f32 0.0, %v1363
        %1365 = vmatprep.mubr.f32.mxu0 0.0
        %v1366 = vand.u32 %v614, 4294901760
        %v1367 = vsub.f32 %v614, %v1366
        %v1368 = vand.u32 %v1367, 4294901760
        %v1369 = vsub.f32 %v1367, %v1368
        %v1370 = vand.u32 %v1369, 4294901760
        %1371 = vmatmul.mubr.f32.gmra.mrb[0].mxu0 %v1370
        %v1372 = vpop.f32.mrb[0].mxu0
        %v1373 = vadd.f32 0.0, %v1372
        %v1374 = vpop.f32.mrb[0].mxu0
        %v1375 = vadd.f32 0.0, %v1374
        %1376 = vmatprep.mubr.f32.mxu0 0.0
        %v1377 = vand.u32 %v617, 4294901760
        %v1378 = vsub.f32 %v617, %v1377
        %v1379 = vand.u32 %v1378, 4294901760
        %v1380 = vsub.f32 %v1378, %v1379
        %v1381 = vand.u32 %v1380, 4294901760
        %1382 = vmatmul.mubr.f32.gmra.mrb[0].mxu0 %v1381
        %v1383 = vpop.f32.mrb[0].mxu0
        %v1384 = vadd.f32 0.0, %v1383
        %v1385 = vpop.f32.mrb[0].mxu0
        %v1386 = vadd.f32 0.0, %v1385
        %1387 = vmatprep.mubr.f32.mxu0 0.0
        %v1388 = vand.u32 %v620, 4294901760
        %v1389 = vsub.f32 %v620, %v1388
        %v1390 = vand.u32 %v1389, 4294901760
        %v1391 = vsub.f32 %v1389, %v1390
        %v1392 = vand.u32 %v1391, 4294901760
        %1393 = vmatmul.mubr.f32.gmra.mrb[0].mxu0 %v1392
        %v1394 = vpop.f32.mrb[0].mxu0
        %v1395 = vadd.f32 0.0, %v1394
        %v1396 = vpop.f32.mrb[0].mxu0
        %v1397 = vadd.f32 0.0, %v1396
        %1398 = vmatprep.mubr.f32.mxu0 0.0
        %v1399 = vand.u32 %v623, 4294901760
        %v1400 = vsub.f32 %v623, %v1399
        %v1401 = vand.u32 %v1400, 4294901760
        %v1402 = vsub.f32 %v1400, %v1401
        %v1403 = vand.u32 %v1402, 4294901760
        %1404 = vmatmul.mubr.f32.gmra.mrb[0].mxu0 %v1403
        %v1405 = vpop.f32.mrb[0].mxu0
        %v1406 = vadd.f32 0.0, %v1405
        %v1407 = vpop.f32.mrb[0].mxu0
        %v1408 = vadd.f32 0.0, %v1407
        %1409 = vmatprep.mubr.f32.mxu0 0.0
        %v1410 = vand.u32 %v626, 4294901760
        %v1411 = vsub.f32 %v626, %v1410
        %v1412 = vand.u32 %v1411, 4294901760
        %v1413 = vsub.f32 %v1411, %v1412
        %v1414 = vand.u32 %v1413, 4294901760
        %1415 = vmatmul.mubr.f32.gmra.mrb[0].mxu0 %v1414
        %v1416 = vpop.f32.mrb[0].mxu0
        %v1417 = vadd.f32 0.0, %v1416
        %v1418 = vpop.f32.mrb[0].mxu0
        %v1419 = vadd.f32 0.0, %v1418
        %1420 = vmatprep.mubr.f32.mxu0 0.0
        %v1421 = vand.u32 %v629, 4294901760
        %v1422 = vsub.f32 %v629, %v1421
        %v1423 = vand.u32 %v1422, 4294901760
        %v1424 = vsub.f32 %v1422, %v1423
        %v1425 = vand.u32 %v1424, 4294901760
        %1426 = vmatmul.mubr.f32.gmra.mrb[0].mxu0 %v1425
        %v1427 = vpop.f32.mrb[0].mxu0
        %v1428 = vadd.f32 0.0, %v1427
        %v1429 = vpop.f32.mrb[0].mxu0
        %v1430 = vadd.f32 0.0, %v1429
        %1431 = vmatprep.mubr.f32.mxu0 0.0
        %v1432 = vand.u32 %v632, 4294901760
        %v1433 = vsub.f32 %v632, %v1432
        %v1434 = vand.u32 %v1433, 4294901760
        %v1435 = vsub.f32 %v1433, %v1434
        %v1436 = vand.u32 %v1435, 4294901760
        %1437 = vmatmul.mubr.f32.gmra.mrb[0].mxu0 %v1436
        %v1438 = vpop.f32.mrb[0].mxu0
        %v1439 = vadd.f32 0.0, %v1438
        %v1440 = vpop.f32.mrb[0].mxu0
        %v1441 = vadd.f32 0.0, %v1440
        %1442 = vmatprep.mubr.f32.mxu0 0.0
        %v1443 = vand.u32 %v635, 4294901760
        %v1444 = vsub.f32 %v635, %v1443
        %v1445 = vand.u32 %v1444, 4294901760
        %v1446 = vsub.f32 %v1444, %v1445
        %v1447 = vand.u32 %v1446, 4294901760
        %1448 = vmatmul.mubr.f32.gmra.mrb[0].mxu0 %v1447
        %v1449 = vpop.f32.mrb[0].mxu0
        %v1450 = vadd.f32 0.0, %v1449
        %v1451 = vpop.f32.mrb[0].mxu0
        %v1452 = vadd.f32 0.0, %v1451
        %1453 = vmatprep.mubr.f32.mxu0 0.0
        %v1454 = vand.u32 %v638, 4294901760
        %v1455 = vsub.f32 %v638, %v1454
        %v1456 = vand.u32 %v1455, 4294901760
        %v1457 = vsub.f32 %v1455, %v1456
        %v1458 = vand.u32 %v1457, 4294901760
        %1459 = vmatmul.mubr.f32.gmra.mrb[0].mxu0 %v1458
        %v1460 = vpop.f32.mrb[0].mxu0
        %v1461 = vadd.f32 0.0, %v1460
        %v1462 = vpop.f32.mrb[0].mxu0
        %v1463 = vadd.f32 0.0, %v1462
        %1464 = vmatprep.mubr.f32.mxu0 0.0
        %v1465 = vand.u32 %v641, 4294901760
        %v1466 = vsub.f32 %v641, %v1465
        %v1467 = vand.u32 %v1466, 4294901760
        %v1468 = vsub.f32 %v1466, %v1467
        %v1469 = vand.u32 %v1468, 4294901760
        %1470 = vmatmul.mubr.f32.gmra.mrb[0].mxu0 %v1469
        %v1471 = vpop.f32.mrb[0].mxu0
        %v1472 = vadd.f32 0.0, %v1471
        %v1473 = vpop.f32.mrb[0].mxu0
        %v1474 = vadd.f32 0.0, %v1473
        %1475 = vmatprep.mubr.f32.mxu0 0.0
        %v1476 = vand.u32 %v644, 4294901760
        %v1477 = vsub.f32 %v644, %v1476
        %v1478 = vand.u32 %v1477, 4294901760
        %v1479 = vsub.f32 %v1477, %v1478
        %v1480 = vand.u32 %v1479, 4294901760
        %1481 = vmatmul.mubr.f32.gmra.mrb[0].mxu0 %v1480
        %v1482 = vpop.f32.mrb[0].mxu0
        %v1483 = vadd.f32 0.0, %v1482
        %v1484 = vpop.f32.mrb[0].mxu0
        %v1485 = vadd.f32 0.0, %v1484
        %1486 = vmatprep.mubr.f32.mxu0 0.0
        %v1487 = vand.u32 %v647, 4294901760
        %v1488 = vsub.f32 %v647, %v1487
        %v1489 = vand.u32 %v1488, 4294901760
        %v1490 = vsub.f32 %v1488, %v1489
        %v1491 = vand.u32 %v1490, 4294901760
        %1492 = vmatmul.mubr.f32.gmra.mrb[0].mxu0 %v1491
        %v1493 = vpop.f32.mrb[0].mxu0
        %v1494 = vadd.f32 0.0, %v1493
        %v1495 = vpop.f32.mrb[0].mxu0
        %v1496 = vadd.f32 0.0, %v1495
        %1497 = vmatprep.mubr.f32.mxu0 0.0
        %v1498 = vand.u32 %v650, 4294901760
        %v1499 = vsub.f32 %v650, %v1498
        %v1500 = vand.u32 %v1499, 4294901760
        %v1501 = vsub.f32 %v1499, %v1500
        %v1502 = vand.u32 %v1501, 4294901760
        %1503 = vmatmul.mubr.f32.gmra.mrb[0].mxu0 %v1502
        %v1504 = vpop.f32.mrb[0].mxu0
        %v1505 = vadd.f32 0.0, %v1504
        %v1506 = vpop.f32.mrb[0].mxu0
        %v1507 = vadd.f32 0.0, %v1506
        %1508 = vmatprep.mubr.f32.mxu0 0.0
        %v1509 = vand.u32 %v653, 4294901760
        %v1510 = vsub.f32 %v653, %v1509
        %v1511 = vand.u32 %v1510, 4294901760
        %v1512 = vsub.f32 %v1510, %v1511
        %v1513 = vand.u32 %v1512, 4294901760
        %1514 = vmatmul.mubr.f32.gmra.mrb[0].mxu0 %v1513
        %v1515 = vpop.f32.mrb[0].mxu0
        %v1516 = vadd.f32 0.0, %v1515
        %v1517 = vpop.f32.mrb[0].mxu0
        %v1518 = vadd.f32 0.0, %v1517
        %1519 = vmatprep.mubr.f32.mxu0 0.0
        %v1520 = vand.u32 %v656, 4294901760
        %v1521 = vsub.f32 %v656, %v1520
        %v1522 = vand.u32 %v1521, 4294901760
        %v1523 = vsub.f32 %v1521, %v1522
        %v1524 = vand.u32 %v1523, 4294901760
        %1525 = vmatmul.mubr.f32.gmra.mrb[0].mxu0 %v1524
        %v1526 = vpop.f32.mrb[0].mxu0
        %v1527 = vadd.f32 0.0, %v1526
        %v1528 = vpop.f32.mrb[0].mxu0
        %v1529 = vadd.f32 0.0, %v1528
        %1530 = vmatprep.mubr.f32.mxu0 0.0
        %v1531 = vand.u32 %v659, 4294901760
        %v1532 = vsub.f32 %v659, %v1531
        %v1533 = vand.u32 %v1532, 4294901760
        %v1534 = vsub.f32 %v1532, %v1533
        %v1535 = vand.u32 %v1534, 4294901760
        %1536 = vmatmul.mubr.f32.gmra.mrb[0].mxu0 %v1535
        %v1537 = vpop.f32.mrb[0].mxu0
        %v1538 = vadd.f32 0.0, %v1537
        %v1539 = vpop.f32.mrb[0].mxu0
        %v1540 = vadd.f32 0.0, %v1539
        %1541 = vmatprep.mubr.f32.mxu0 0.0
        %v1542 = vand.u32 %v662, 4294901760
        %v1543 = vsub.f32 %v662, %v1542
        %v1544 = vand.u32 %v1543, 4294901760
        %v1545 = vsub.f32 %v1543, %v1544
        %v1546 = vand.u32 %v1545, 4294901760
        %1547 = vmatmul.mubr.f32.gmra.mrb[0].mxu0 %v1546
        %v1548 = vpop.f32.mrb[0].mxu0
        %v1549 = vadd.f32 0.0, %v1548
        %v1550 = vpop.f32.mrb[0].mxu0
        %v1551 = vadd.f32 0.0, %v1550
        %1552 = vmatprep.mubr.f32.mxu0 0.0
        %v1553 = vand.u32 %v665, 4294901760
        %v1554 = vsub.f32 %v665, %v1553
        %v1555 = vand.u32 %v1554, 4294901760
        %v1556 = vsub.f32 %v1554, %v1555
        %v1557 = vand.u32 %v1556, 4294901760
        %1558 = vmatmul.mubr.f32.gmra.mrb[0].mxu0 %v1557
        %v1559 = vpop.f32.mrb[0].mxu0
        %v1560 = vadd.f32 0.0, %v1559
        %v1561 = vpop.f32.mrb[0].mxu0
        %v1562 = vadd.f32 0.0, %v1561
        %1563 = vmatprep.mubr.f32.mxu0 0.0
        %v1564 = vand.u32 %v668, 4294901760
        %v1565 = vsub.f32 %v668, %v1564
        %v1566 = vand.u32 %v1565, 4294901760
        %v1567 = vsub.f32 %v1565, %v1566
        %v1568 = vand.u32 %v1567, 4294901760
        %1569 = vmatmul.mubr.f32.gmra.mrb[0].mxu0 %v1568
        %v1570 = vpop.f32.mrb[0].mxu0
        %v1571 = vadd.f32 0.0, %v1570
        %v1572 = vpop.f32.mrb[0].mxu0
        %v1573 = vadd.f32 0.0, %v1572
        %1574 = vmatprep.mubr.f32.mxu0 0.0
        %v1575 = vand.u32 %v671, 4294901760
        %v1576 = vsub.f32 %v671, %v1575
        %v1577 = vand.u32 %v1576, 4294901760
        %v1578 = vsub.f32 %v1576, %v1577
        %v1579 = vand.u32 %v1578, 4294901760
        %1580 = vmatmul.mubr.f32.gmra.mrb[0].mxu0 %v1579
        %v1581 = vpop.f32.mrb[0].mxu0
        %v1582 = vadd.f32 0.0, %v1581
        %v1583 = vpop.f32.mrb[0].mxu0
        %v1584 = vadd.f32 0.0, %v1583
        %1585 = vmatprep.mubr.f32.mxu0 0.0
        %v1586 = vand.u32 %v674, 4294901760
        %v1587 = vsub.f32 %v674, %v1586
        %v1588 = vand.u32 %v1587, 4294901760
        %v1589 = vsub.f32 %v1587, %v1588
        %v1590 = vand.u32 %v1589, 4294901760
        %1591 = vmatmul.mubr.f32.gmra.mrb[0].mxu0 %v1590
        %v1592 = vpop.f32.mrb[0].mxu0
        %v1593 = vadd.f32 0.0, %v1592
        %v1594 = vpop.f32.mrb[0].mxu0
        %v1595 = vadd.f32 0.0, %v1594
        %1596 = vmatprep.mubr.f32.mxu0 0.0
        %v1597 = vand.u32 %v677, 4294901760
        %v1598 = vsub.f32 %v677, %v1597
        %v1599 = vand.u32 %v1598, 4294901760
        %v1600 = vsub.f32 %v1598, %v1599
        %v1601 = vand.u32 %v1600, 4294901760
        %1602 = vmatmul.mubr.f32.gmra.mrb[0].mxu0 %v1601
        %v1603 = vpop.f32.mrb[0].mxu0
        %v1604 = vadd.f32 0.0, %v1603
        %v1605 = vpop.f32.mrb[0].mxu0
        %v1606 = vadd.f32 0.0, %v1605
        %1607 = vmatprep.mubr.f32.mxu0 0.0
        %v1608 = vand.u32 %v680, 4294901760
        %v1609 = vsub.f32 %v680, %v1608
        %v1610 = vand.u32 %v1609, 4294901760
        %v1611 = vsub.f32 %v1609, %v1610
        %v1612 = vand.u32 %v1611, 4294901760
        %1613 = vmatmul.mubr.f32.gmra.mrb[0].mxu0 %v1612
        %v1614 = vpop.f32.mrb[0].mxu0
        %v1615 = vadd.f32 0.0, %v1614
        %v1616 = vpop.f32.mrb[0].mxu0
        %v1617 = vadd.f32 0.0, %v1616
        %1618 = vmatprep.mubr.f32.mxu0 0.0
        %v1619 = vand.u32 %v683, 4294901760
        %v1620 = vsub.f32 %v683, %v1619
        %v1621 = vand.u32 %v1620, 4294901760
        %v1622 = vsub.f32 %v1620, %v1621
        %v1623 = vand.u32 %v1622, 4294901760
        %1624 = vmatmul.mubr.f32.gmra.mrb[0].mxu0 %v1623
        %v1625 = vpop.f32.mrb[0].mxu0
        %v1626 = vadd.f32 0.0, %v1625
        %v1627 = vpop.f32.mrb[0].mxu0
        %v1628 = vadd.f32 0.0, %v1627
        %1629 = vmatprep.mubr.f32.mxu0 0.0
        %v1630 = vand.u32 %v686, 4294901760
        %v1631 = vsub.f32 %v686, %v1630
        %v1632 = vand.u32 %v1631, 4294901760
        %v1633 = vsub.f32 %v1631, %v1632
        %v1634 = vand.u32 %v1633, 4294901760
        %1635 = vmatmul.mubr.f32.gmra.mrb[0].mxu0 %v1634
        %v1636 = vpop.f32.mrb[0].mxu0
        %v1637 = vadd.f32 0.0, %v1636
        %v1638 = vpop.f32.mrb[0].mxu0
        %v1639 = vadd.f32 0.0, %v1638
        %1640 = vmatprep.mubr.f32.mxu0 0.0
        %v1641 = vand.u32 %v689, 4294901760
        %v1642 = vsub.f32 %v689, %v1641
        %v1643 = vand.u32 %v1642, 4294901760
        %v1644 = vsub.f32 %v1642, %v1643
        %v1645 = vand.u32 %v1644, 4294901760
        %1646 = vmatmul.mubr.f32.gmra.mrb[0].mxu0 %v1645
        %v1647 = vpop.f32.mrb[0].mxu0
        %v1648 = vadd.f32 0.0, %v1647
        %v1649 = vpop.f32.mrb[0].mxu0
        %v1650 = vadd.f32 0.0, %v1649
        %1651 = vmatprep.mubr.f32.mxu0 0.0
        %v1652 = vand.u32 %v692, 4294901760
        %v1653 = vsub.f32 %v692, %v1652
        %v1654 = vand.u32 %v1653, 4294901760
        %v1655 = vsub.f32 %v1653, %v1654
        %v1656 = vand.u32 %v1655, 4294901760
        %1657 = vmatmul.mubr.f32.gmra.mrb[0].mxu0 %v1656
        %v1658 = vpop.f32.mrb[0].mxu0
        %v1659 = vadd.f32 0.0, %v1658
        %v1660 = vpop.f32.mrb[0].mxu0
        %v1661 = vadd.f32 0.0, %v1660
        %1662 = vmatprep.mubr.f32.mxu0 0.0
        %v1663 = vand.u32 %v695, 4294901760
        %v1664 = vsub.f32 %v695, %v1663
        %v1665 = vand.u32 %v1664, 4294901760
        %v1666 = vsub.f32 %v1664, %v1665
        %v1667 = vand.u32 %v1666, 4294901760
        %1668 = vmatmul.mubr.f32.gmra.mrb[0].mxu0 %v1667
        %v1669 = vpop.f32.mrb[0].mxu0
        %v1670 = vadd.f32 0.0, %v1669
        %v1671 = vpop.f32.mrb[0].mxu0
        %v1672 = vadd.f32 0.0, %v1671
        %1673 = vmatprep.mubr.f32.mxu0 0.0
        %v1674 = vand.u32 %v698, 4294901760
        %v1675 = vsub.f32 %v698, %v1674
        %v1676 = vand.u32 %v1675, 4294901760
        %v1677 = vsub.f32 %v1675, %v1676
        %v1678 = vand.u32 %v1677, 4294901760
        %1679 = vmatmul.mubr.f32.gmra.mrb[0].mxu0 %v1678
        %v1680 = vpop.f32.mrb[0].mxu0
        %v1681 = vadd.f32 0.0, %v1680
        %v1682 = vpop.f32.mrb[0].mxu0
        %v1683 = vadd.f32 0.0, %v1682
        %1684 = vmatprep.mubr.f32.mxu0 0.0
        %v1685 = vand.u32 %v701, 4294901760
        %v1686 = vsub.f32 %v701, %v1685
        %v1687 = vand.u32 %v1686, 4294901760
        %v1688 = vsub.f32 %v1686, %v1687
        %v1689 = vand.u32 %v1688, 4294901760
        %1690 = vmatmul.mubr.f32.gmra.mrb[0].mxu0 %v1689
        %v1691 = vpop.f32.mrb[0].mxu0
        %v1692 = vadd.f32 0.0, %v1691
        %v1693 = vpop.f32.mrb[0].mxu0
        %v1694 = vadd.f32 0.0, %v1693
        %1695 = vmatprep.mubr.f32.mxu0 0.0
        %v1696 = vand.u32 %v704, 4294901760
        %v1697 = vsub.f32 %v704, %v1696
        %v1698 = vand.u32 %v1697, 4294901760
        %v1699 = vsub.f32 %v1697, %v1698
        %v1700 = vand.u32 %v1699, 4294901760
        %1701 = vmatmul.mubr.f32.gmra.mrb[0].mxu0 %v1700
        %v1702 = vpop.f32.mrb[0].mxu0
        %v1703 = vadd.f32 0.0, %v1702
        %v1704 = vpop.f32.mrb[0].mxu0
        %v1705 = vadd.f32 0.0, %v1704
        %1706 = vmatprep.mubr.f32.mxu0 0.0
        %v1707 = vand.u32 %v707, 4294901760
        %v1708 = vsub.f32 %v707, %v1707
        %v1709 = vand.u32 %v1708, 4294901760
        %v1710 = vsub.f32 %v1708, %v1709
        %v1711 = vand.u32 %v1710, 4294901760
        %1712 = vmatmul.mubr.f32.gmra.mrb[0].mxu0 %v1711
        %v1713 = vpop.f32.mrb[0].mxu0
        %v1714 = vadd.f32 0.0, %v1713
        %v1715 = vpop.f32.mrb[0].mxu0
        %v1716 = vadd.f32 0.0, %v1715
        %1717 = vmatprep.mubr.f32.mxu0 0.0
        %v1718 = vand.u32 %v710, 4294901760
        %v1719 = vsub.f32 %v710, %v1718
        %v1720 = vand.u32 %v1719, 4294901760
        %v1721 = vsub.f32 %v1719, %v1720
        %v1722 = vand.u32 %v1721, 4294901760
        %1723 = vmatmul.mubr.f32.gmra.mrb[0].mxu0 %v1722
        %v1724 = vpop.f32.mrb[0].mxu0
        %v1725 = vadd.f32 0.0, %v1724
        %v1726 = vpop.f32.mrb[0].mxu0
        %v1727 = vadd.f32 0.0, %v1726
        %1728 = vmatprep.mubr.f32.mxu0 0.0
        %v1729 = vand.u32 %v713, 4294901760
        %v1730 = vsub.f32 %v713, %v1729
        %v1731 = vand.u32 %v1730, 4294901760
        %v1732 = vsub.f32 %v1730, %v1731
        %v1733 = vand.u32 %v1732, 4294901760
        %1734 = vmatmul.mubr.f32.gmra.mrb[0].mxu0 %v1733
        %v1735 = vpop.f32.mrb[0].mxu0
        %v1736 = vadd.f32 0.0, %v1735
        %v1737 = vpop.f32.mrb[0].mxu0
        %v1738 = vadd.f32 0.0, %v1737
        %1739 = vmatprep.mubr.f32.mxu0 0.0
        %v1740 = vand.u32 %v716, 4294901760
        %v1741 = vsub.f32 %v716, %v1740
        %v1742 = vand.u32 %v1741, 4294901760
        %v1743 = vsub.f32 %v1741, %v1742
        %v1744 = vand.u32 %v1743, 4294901760
        %1745 = vmatmul.mubr.f32.gmra.mrb[0].mxu0 %v1744
        %v1746 = vpop.f32.mrb[0].mxu0
        %v1747 = vadd.f32 0.0, %v1746
        %v1748 = vpop.f32.mrb[0].mxu0
        %v1749 = vadd.f32 0.0, %v1748
        %1750 = vmatprep.mubr.f32.mxu0 0.0
        %v1751 = vand.u32 %v719, 4294901760
        %v1752 = vsub.f32 %v719, %v1751
        %v1753 = vand.u32 %v1752, 4294901760
        %v1754 = vsub.f32 %v1752, %v1753
        %v1755 = vand.u32 %v1754, 4294901760
        %1756 = vmatmul.mubr.f32.gmra.mrb[0].mxu0 %v1755
        %v1757 = vpop.f32.mrb[0].mxu0
        %v1758 = vadd.f32 0.0, %v1757
        %v1759 = vpop.f32.mrb[0].mxu0
        %v1760 = vadd.f32 0.0, %v1759
        %1761 = vmatprep.mubr.f32.mxu0 0.0
        %v1762 = vand.u32 %v722, 4294901760
        %v1763 = vsub.f32 %v722, %v1762
        %v1764 = vand.u32 %v1763, 4294901760
        %v1765 = vsub.f32 %v1763, %v1764
        %v1766 = vand.u32 %v1765, 4294901760
        %1767 = vmatmul.mubr.f32.gmra.mrb[0].mxu0 %v1766
        %v1768 = vpop.f32.mrb[0].mxu0
        %v1769 = vadd.f32 0.0, %v1768
        %v1770 = vpop.f32.mrb[0].mxu0
        %v1771 = vadd.f32 0.0, %v1770
        %1772 = vmatprep.mubr.f32.mxu0 0.0
        %v1773 = vand.u32 %v725, 4294901760
        %v1774 = vsub.f32 %v725, %v1773
        %v1775 = vand.u32 %v1774, 4294901760
        %v1776 = vsub.f32 %v1774, %v1775
        %v1777 = vand.u32 %v1776, 4294901760
        %1778 = vmatmul.mubr.f32.gmra.mrb[0].mxu0 %v1777
        %v1779 = vpop.f32.mrb[0].mxu0
        %v1780 = vadd.f32 0.0, %v1779
        %v1781 = vpop.f32.mrb[0].mxu0
        %v1782 = vadd.f32 0.0, %v1781
        %1783 = vmatprep.mubr.f32.mxu0 0.0
        %v1784 = vand.u32 %v728, 4294901760
        %v1785 = vsub.f32 %v728, %v1784
        %v1786 = vand.u32 %v1785, 4294901760
        %v1787 = vsub.f32 %v1785, %v1786
        %v1788 = vand.u32 %v1787, 4294901760
        %1789 = vmatmul.mubr.f32.gmra.mrb[0].mxu0 %v1788
        %v1790 = vpop.f32.mrb[0].mxu0
        %v1791 = vadd.f32 0.0, %v1790
        %v1792 = vpop.f32.mrb[0].mxu0
        %v1793 = vadd.f32 0.0, %v1792
        %1794 = vmatprep.mubr.f32.mxu0 0.0
        %v1795 = vand.u32 %v731, 4294901760
        %v1796 = vsub.f32 %v731, %v1795
        %v1797 = vand.u32 %v1796, 4294901760
        %v1798 = vsub.f32 %v1796, %v1797
        %v1799 = vand.u32 %v1798, 4294901760
        %1800 = vmatmul.mubr.f32.gmra.mrb[0].mxu0 %v1799
        %v1801 = vpop.f32.mrb[0].mxu0
        %v1802 = vadd.f32 0.0, %v1801
        %v1803 = vpop.f32.mrb[0].mxu0
        %v1804 = vadd.f32 0.0, %v1803
        %1805 = vmatprep.mubr.f32.mxu0 0.0
        %v1806 = vand.u32 %v734, 4294901760
        %v1807 = vsub.f32 %v734, %v1806
        %v1808 = vand.u32 %v1807, 4294901760
        %v1809 = vsub.f32 %v1807, %v1808
        %v1810 = vand.u32 %v1809, 4294901760
        %1811 = vmatmul.mubr.f32.gmra.mrb[0].mxu0 %v1810
        %v1812 = vpop.f32.mrb[0].mxu0
        %v1813 = vadd.f32 0.0, %v1812
        %v1814 = vpop.f32.mrb[0].mxu0
        %v1815 = vadd.f32 0.0, %v1814
        %1816 = vmatprep.mubr.f32.mxu0 0.0
        %v1817 = vand.u32 %v737, 4294901760
        %v1818 = vsub.f32 %v737, %v1817
        %v1819 = vand.u32 %v1818, 4294901760
        %v1820 = vsub.f32 %v1818, %v1819
        %v1821 = vand.u32 %v1820, 4294901760
        %1822 = vmatmul.mubr.f32.gmra.mrb[0].mxu0 %v1821
        %v1823 = vpop.f32.mrb[0].mxu0
        %v1824 = vadd.f32 0.0, %v1823
        %v1825 = vpop.f32.mrb[0].mxu0
        %v1826 = vadd.f32 0.0, %v1825
        %1827 = vmatprep.mubr.f32.mxu0 0.0
        %v1828 = vand.u32 %v740, 4294901760
        %v1829 = vsub.f32 %v740, %v1828
        %v1830 = vand.u32 %v1829, 4294901760
        %v1831 = vsub.f32 %v1829, %v1830
        %v1832 = vand.u32 %v1831, 4294901760
        %1833 = vmatmul.mubr.f32.gmra.mrb[0].mxu0 %v1832
        %v1834 = vpop.f32.mrb[0].mxu0
        %v1835 = vadd.f32 0.0, %v1834
        %v1836 = vpop.f32.mrb[0].mxu0
        %v1837 = vadd.f32 0.0, %v1836
        %1838 = vmatprep.mubr.f32.mxu0 0.0
        %v1839 = vand.u32 %v743, 4294901760
        %v1840 = vsub.f32 %v743, %v1839
        %v1841 = vand.u32 %v1840, 4294901760
        %v1842 = vsub.f32 %v1840, %v1841
        %v1843 = vand.u32 %v1842, 4294901760
        %1844 = vmatmul.mubr.f32.gmra.mrb[0].mxu0 %v1843
        %v1845 = vpop.f32.mrb[0].mxu0
        %v1846 = vadd.f32 0.0, %v1845
        %v1847 = vpop.f32.mrb[0].mxu0
        %v1848 = vadd.f32 0.0, %v1847
        %1849 = vmatprep.mubr.f32.mxu0 0.0
        %v1850 = vand.u32 %v746, 4294901760
        %v1851 = vsub.f32 %v746, %v1850
        %v1852 = vand.u32 %v1851, 4294901760
        %v1853 = vsub.f32 %v1851, %v1852
        %v1854 = vand.u32 %v1853, 4294901760
        %1855 = vmatmul.mubr.f32.gmra.mrb[0].mxu0 %v1854
        %v1856 = vpop.f32.mrb[0].mxu0
        %v1857 = vadd.f32 0.0, %v1856
        %v1858 = vpop.f32.mrb[0].mxu0
        %v1859 = vadd.f32 0.0, %v1858
        %1860 = vmatprep.mubr.f32.mxu0 0.0
        %v1861 = vand.u32 %v749, 4294901760
        %v1862 = vsub.f32 %v749, %v1861
        %v1863 = vand.u32 %v1862, 4294901760
        %v1864 = vsub.f32 %v1862, %v1863
        %v1865 = vand.u32 %v1864, 4294901760
        %1866 = vmatmul.mubr.f32.gmra.mrb[0].mxu0 %v1865
        %v1867 = vpop.f32.mrb[0].mxu0
        %v1868 = vadd.f32 0.0, %v1867
        %v1869 = vpop.f32.mrb[0].mxu0
        %v1870 = vadd.f32 0.0, %v1869
        %1871 = vmatprep.mubr.f32.mxu0 0.0
        %v1872 = vand.u32 %v752, 4294901760
        %v1873 = vsub.f32 %v752, %v1872
        %v1874 = vand.u32 %v1873, 4294901760
        %v1875 = vsub.f32 %v1873, %v1874
        %v1876 = vand.u32 %v1875, 4294901760
        %1877 = vmatmul.mubr.f32.gmra.mrb[0].mxu0 %v1876
        %v1878 = vpop.f32.mrb[0].mxu0
        %v1879 = vadd.f32 0.0, %v1878
        %v1880 = vpop.f32.mrb[0].mxu0
        %v1881 = vadd.f32 0.0, %v1880
        %1882 = vmatprep.mubr.f32.mxu0 0.0
        %v1883 = vand.u32 %v755, 4294901760
        %v1884 = vsub.f32 %v755, %v1883
        %v1885 = vand.u32 %v1884, 4294901760
        %v1886 = vsub.f32 %v1884, %v1885
        %v1887 = vand.u32 %v1886, 4294901760
        %1888 = vmatmul.mubr.f32.gmra.mrb[0].mxu0 %v1887
        %v1889 = vpop.f32.mrb[0].mxu0
        %v1890 = vadd.f32 0.0, %v1889
        %v1891 = vpop.f32.mrb[0].mxu0
        %v1892 = vadd.f32 0.0, %v1891
        %1893 = vmatprep.mubr.f32.mxu0 0.0
        %v1894 = vand.u32 %v758, 4294901760
        %v1895 = vsub.f32 %v758, %v1894
        %v1896 = vand.u32 %v1895, 4294901760
        %v1897 = vsub.f32 %v1895, %v1896
        %v1898 = vand.u32 %v1897, 4294901760
        %1899 = vmatmul.mubr.f32.gmra.mrb[0].mxu0 %v1898
        %v1900 = vpop.f32.mrb[0].mxu0
        %v1901 = vadd.f32 0.0, %v1900
        %v1902 = vpop.f32.mrb[0].mxu0
        %v1903 = vadd.f32 0.0, %v1902
        %1904 = vmatprep.mubr.f32.mxu0 0.0
        %v1905 = vand.u32 %v761, 4294901760
        %v1906 = vsub.f32 %v761, %v1905
        %v1907 = vand.u32 %v1906, 4294901760
        %v1908 = vsub.f32 %v1906, %v1907
        %v1909 = vand.u32 %v1908, 4294901760
        %1910 = vmatmul.mubr.f32.gmra.mrb[0].mxu0 %v1909
        %v1911 = vpop.f32.mrb[0].mxu0
        %v1912 = vadd.f32 0.0, %v1911
        %v1913 = vpop.f32.mrb[0].mxu0
        %v1914 = vadd.f32 0.0, %v1913
        %1915 = vmatprep.mubr.f32.mxu0 0.0
        %v1916 = vand.u32 %v764, 4294901760
        %v1917 = vsub.f32 %v764, %v1916
        %v1918 = vand.u32 %v1917, 4294901760
        %v1919 = vsub.f32 %v1917, %v1918
        %v1920 = vand.u32 %v1919, 4294901760
        %1921 = vmatmul.mubr.f32.gmra.mrb[0].mxu0 %v1920
        %v1922 = vpop.f32.mrb[0].mxu0
        %v1923 = vadd.f32 0.0, %v1922
        %v1924 = vpop.f32.mrb[0].mxu0
        %v1925 = vadd.f32 0.0, %v1924
        %1926 = vmatprep.mubr.f32.mxu0 0.0
        %v1927 = vand.u32 %v767, 4294901760
        %v1928 = vsub.f32 %v767, %v1927
        %v1929 = vand.u32 %v1928, 4294901760
        %v1930 = vsub.f32 %v1928, %v1929
        %v1931 = vand.u32 %v1930, 4294901760
        %1932 = vmatmul.mubr.f32.gmra.mrb[0].mxu0 %v1931
        %v1933 = vpop.f32.mrb[0].mxu0
        %v1934 = vadd.f32 0.0, %v1933
        %v1935 = vpop.f32.mrb[0].mxu0
        %v1936 = vadd.f32 0.0, %v1935
        %1937 = vmatprep.mubr.f32.mxu0 0.0
        %v1938 = vand.u32 %v770, 4294901760
        %v1939 = vsub.f32 %v770, %v1938
        %v1940 = vand.u32 %v1939, 4294901760
        %v1941 = vsub.f32 %v1939, %v1940
        %v1942 = vand.u32 %v1941, 4294901760
        %1943 = vmatmul.mubr.f32.gmra.mrb[0].mxu0 %v1942
        %v1944 = vpop.f32.mrb[0].mxu0
        %v1945 = vadd.f32 0.0, %v1944
        %v1946 = vpop.f32.mrb[0].mxu0
        %v1947 = vadd.f32 0.0, %v1946
        %1948 = vmatprep.mubr.f32.mxu0 0.0
        %v1949 = vand.u32 %v773, 4294901760
        %v1950 = vsub.f32 %v773, %v1949
        %v1951 = vand.u32 %v1950, 4294901760
        %v1952 = vsub.f32 %v1950, %v1951
        %v1953 = vand.u32 %v1952, 4294901760
        %1954 = vmatmul.mubr.f32.gmra.mrb[0].mxu0 %v1953
        %v1955 = vpop.f32.mrb[0].mxu0
        %v1956 = vadd.f32 0.0, %v1955
        %v1957 = vpop.f32.mrb[0].mxu0
        %v1958 = vadd.f32 0.0, %v1957
        %1959 = vmatprep.mubr.f32.mxu0 0.0
        %v1960 = vand.u32 %v776, 4294901760
        %v1961 = vsub.f32 %v776, %v1960
        %v1962 = vand.u32 %v1961, 4294901760
        %v1963 = vsub.f32 %v1961, %v1962
        %v1964 = vand.u32 %v1963, 4294901760
        %1965 = vmatmul.mubr.f32.gmra.mrb[0].mxu0 %v1964
        %v1966 = vpop.f32.mrb[0].mxu0
        %v1967 = vadd.f32 0.0, %v1966
        %v1968 = vpop.f32.mrb[0].mxu0
        %v1969 = vadd.f32 0.0, %v1968
        %1970 = vmatprep.mubr.f32.mxu0 0.0
        %v1971 = vand.u32 %v779, 4294901760
        %v1972 = vsub.f32 %v779, %v1971
        %v1973 = vand.u32 %v1972, 4294901760
        %v1974 = vsub.f32 %v1972, %v1973
        %v1975 = vand.u32 %v1974, 4294901760
        %1976 = vmatmul.mubr.f32.gmra.mrb[0].mxu0 %v1975
        %v1977 = vpop.f32.mrb[0].mxu0
        %v1978 = vadd.f32 0.0, %v1977
        %v1979 = vpop.f32.mrb[0].mxu0
        %v1980 = vadd.f32 0.0, %v1979
        %1981 = vmatprep.mubr.f32.mxu0 0.0
        %v1982 = vand.u32 %v782, 4294901760
        %v1983 = vsub.f32 %v782, %v1982
        %v1984 = vand.u32 %v1983, 4294901760
        %v1985 = vsub.f32 %v1983, %v1984
        %v1986 = vand.u32 %v1985, 4294901760
        %1987 = vmatmul.mubr.f32.gmra.mrb[0].mxu0 %v1986
        %v1988 = vpop.f32.mrb[0].mxu0
        %v1989 = vadd.f32 0.0, %v1988
        %v1990 = vpop.f32.mrb[0].mxu0
        %v1991 = vadd.f32 0.0, %v1990
        %1992 = vmatprep.mubr.f32.mxu0 0.0
        %v1993 = vand.u32 %v785, 4294901760
        %v1994 = vsub.f32 %v785, %v1993
        %v1995 = vand.u32 %v1994, 4294901760
        %v1996 = vsub.f32 %v1994, %v1995
        %v1997 = vand.u32 %v1996, 4294901760
        %1998 = vmatmul.mubr.f32.gmra.mrb[0].mxu0 %v1997
        %v1999 = vpop.f32.mrb[0].mxu0
        %v2000 = vadd.f32 0.0, %v1999
        %v2001 = vpop.f32.mrb[0].mxu0
        %v2002 = vadd.f32 0.0, %v2001
        %2003 = vmatprep.mubr.f32.mxu0 0.0
        %v2004 = vand.u32 %v788, 4294901760
        %v2005 = vsub.f32 %v788, %v2004
        %v2006 = vand.u32 %v2005, 4294901760
        %v2007 = vsub.f32 %v2005, %v2006
        %v2008 = vand.u32 %v2007, 4294901760
        %2009 = vmatmul.mubr.f32.gmra.mrb[0].mxu0 %v2008
        %v2010 = vpop.f32.mrb[0].mxu0
        %v2011 = vadd.f32 0.0, %v2010
        %v2012 = vpop.f32.mrb[0].mxu0
        %v2013 = vadd.f32 0.0, %v2012
        %2014 = vmatprep.mubr.f32.mxu0 0.0
        %v2015 = vand.u32 %v791, 4294901760
        %v2016 = vsub.f32 %v791, %v2015
        %v2017 = vand.u32 %v2016, 4294901760
        %v2018 = vsub.f32 %v2016, %v2017
        %v2019 = vand.u32 %v2018, 4294901760
        %2020 = vmatmul.mubr.f32.gmra.mrb[0].mxu0 %v2019
        %v2021 = vpop.f32.mrb[0].mxu0
        %v2022 = vadd.f32 0.0, %v2021
        %v2023 = vpop.f32.mrb[0].mxu0
        %v2024 = vadd.f32 0.0, %v2023
        %2025 = vmatprep.mubr.f32.mxu0 0.0
        %v2026 = vand.u32 %v794, 4294901760
        %v2027 = vsub.f32 %v794, %v2026
        %v2028 = vand.u32 %v2027, 4294901760
        %v2029 = vsub.f32 %v2027, %v2028
        %v2030 = vand.u32 %v2029, 4294901760
        %2031 = vmatmul.mubr.f32.gmra.mrb[0].mxu0 %v2030
        %v2032 = vpop.f32.mrb[0].mxu0
        %v2033 = vadd.f32 0.0, %v2032
        %v2034 = vpop.f32.mrb[0].mxu0
        %v2035 = vadd.f32 0.0, %v2034
        %2036 = vmatprep.mubr.f32.mxu0 0.0
        %v2037 = vand.u32 %v797, 4294901760
        %v2038 = vsub.f32 %v797, %v2037
        %v2039 = vand.u32 %v2038, 4294901760
        %v2040 = vsub.f32 %v2038, %v2039
        %v2041 = vand.u32 %v2040, 4294901760
        %2042 = vmatmul.mubr.f32.gmra.mrb[0].mxu0 %v2041
        %v2043 = vpop.f32.mrb[0].mxu0
        %v2044 = vadd.f32 0.0, %v2043
        %v2045 = vpop.f32.mrb[0].mxu0
        %v2046 = vadd.f32 0.0, %v2045
        %2047 = vmatprep.mubr.f32.mxu0 0.0
        %v2048 = vand.u32 %v800, 4294901760
        %v2049 = vsub.f32 %v800, %v2048
        %v2050 = vand.u32 %v2049, 4294901760
        %v2051 = vsub.f32 %v2049, %v2050
        %v2052 = vand.u32 %v2051, 4294901760
        %2053 = vmatmul.mubr.f32.gmra.mrb[0].mxu0 %v2052
        %v2054 = vpop.f32.mrb[0].mxu0
        %v2055 = vadd.f32 0.0, %v2054
        %v2056 = vpop.f32.mrb[0].mxu0
        %v2057 = vadd.f32 0.0, %v2056
        %2058 = vmatprep.mubr.f32.mxu0 0.0
        %v2059 = vand.u32 %v803, 4294901760
        %v2060 = vsub.f32 %v803, %v2059
        %v2061 = vand.u32 %v2060, 4294901760
        %v2062 = vsub.f32 %v2060, %v2061
        %v2063 = vand.u32 %v2062, 4294901760
        %2064 = vmatmul.mubr.f32.gmra.mrb[0].mxu0 %v2063
        %v2065 = vpop.f32.mrb[0].mxu0
        %v2066 = vadd.f32 0.0, %v2065
        %v2067 = vpop.f32.mrb[0].mxu0
        %v2068 = vadd.f32 0.0, %v2067
        %2069 = vmatprep.mubr.f32.mxu0 0.0
        %v2070 = vand.u32 %v806, 4294901760
        %v2071 = vsub.f32 %v806, %v2070
        %v2072 = vand.u32 %v2071, 4294901760
        %v2073 = vsub.f32 %v2071, %v2072
        %v2074 = vand.u32 %v2073, 4294901760
        %2075 = vmatmul.mubr.f32.gmra.mrb[0].mxu0 %v2074
        %v2076 = vpop.f32.mrb[0].mxu0
        %v2077 = vadd.f32 0.0, %v2076
        %v2078 = vpop.f32.mrb[0].mxu0
        %v2079 = vadd.f32 0.0, %v2078
        %2080 = vmatprep.mubr.f32.mxu0 0.0
        %v2081 = vand.u32 %v809, 4294901760
        %v2082 = vsub.f32 %v809, %v2081
        %v2083 = vand.u32 %v2082, 4294901760
        %v2084 = vsub.f32 %v2082, %v2083
        %v2085 = vand.u32 %v2084, 4294901760
        %2086 = vmatmul.mubr.f32.gmra.mrb[0].mxu0 %v2085
        %v2087 = vpop.f32.mrb[0].mxu0
        %v2088 = vadd.f32 0.0, %v2087
        %v2089 = vpop.f32.mrb[0].mxu0
        %v2090 = vadd.f32 0.0, %v2089
        %2091 = vmatprep.mubr.f32.mxu0 0.0
        %v2092 = vand.u32 %v812, 4294901760
        %v2093 = vsub.f32 %v812, %v2092
        %v2094 = vand.u32 %v2093, 4294901760
        %v2095 = vsub.f32 %v2093, %v2094
        %v2096 = vand.u32 %v2095, 4294901760
        %2097 = vmatmul.mubr.f32.gmra.mrb[0].mxu0 %v2096
        %v2098 = vpop.f32.mrb[0].mxu0
        %v2099 = vadd.f32 0.0, %v2098
        %v2100 = vpop.f32.mrb[0].mxu0
        %v2101 = vadd.f32 0.0, %v2100
        %2102 = vmatprep.mubr.f32.mxu0 0.0
        %v2103 = vand.u32 %v815, 4294901760
        %v2104 = vsub.f32 %v815, %v2103
        %v2105 = vand.u32 %v2104, 4294901760
        %v2106 = vsub.f32 %v2104, %v2105
        %v2107 = vand.u32 %v2106, 4294901760
        %2108 = vmatmul.mubr.f32.gmra.mrb[0].mxu0 %v2107
        %v2109 = vpop.f32.mrb[0].mxu0
        %v2110 = vadd.f32 0.0, %v2109
        %v2111 = vpop.f32.mrb[0].mxu0
        %v2112 = vadd.f32 0.0, %v2111
        %2113 = vmatprep.mubr.f32.mxu0 0.0
        %v2114 = vand.u32 %v818, 4294901760
        %v2115 = vsub.f32 %v818, %v2114
        %v2116 = vand.u32 %v2115, 4294901760
        %v2117 = vsub.f32 %v2115, %v2116
        %v2118 = vand.u32 %v2117, 4294901760
        %2119 = vmatmul.mubr.f32.gmra.mrb[0].mxu0 %v2118
        %v2120 = vpop.f32.mrb[0].mxu0
        %v2121 = vadd.f32 0.0, %v2120
        %v2122 = vpop.f32.mrb[0].mxu0
        %v2123 = vadd.f32 0.0, %v2122
        %2124 = vmatprep.mubr.f32.mxu0 0.0
        %v2125 = vand.u32 %v821, 4294901760
        %v2126 = vsub.f32 %v821, %v2125
        %v2127 = vand.u32 %v2126, 4294901760
        %v2128 = vsub.f32 %v2126, %v2127
        %v2129 = vand.u32 %v2128, 4294901760
        %2130 = vmatmul.mubr.f32.gmra.mrb[0].mxu0 %v2129
        %v2131 = vpop.f32.mrb[0].mxu0
        %v2132 = vadd.f32 0.0, %v2131
        %v2133 = vpop.f32.mrb[0].mxu0
        %v2134 = vadd.f32 0.0, %v2133
        %2135 = vmatprep.mubr.f32.mxu0 0.0
        %v2136 = vand.u32 %v824, 4294901760
        %v2137 = vsub.f32 %v824, %v2136
        %v2138 = vand.u32 %v2137, 4294901760
        %v2139 = vsub.f32 %v2137, %v2138
        %v2140 = vand.u32 %v2139, 4294901760
        %2141 = vmatmul.mubr.f32.gmra.mrb[0].mxu0 %v2140
        %v2142 = vpop.f32.mrb[0].mxu0
        %v2143 = vadd.f32 0.0, %v2142
        %v2144 = vpop.f32.mrb[0].mxu0
        %v2145 = vadd.f32 0.0, %v2144
        %2146 = vmatprep.mubr.f32.mxu0 0.0
        %v2147 = vand.u32 %v827, 4294901760
        %v2148 = vsub.f32 %v827, %v2147
        %v2149 = vand.u32 %v2148, 4294901760
        %v2150 = vsub.f32 %v2148, %v2149
        %v2151 = vand.u32 %v2150, 4294901760
        %2152 = vmatmul.mubr.f32.gmra.mrb[0].mxu0 %v2151
        %v2153 = vpop.f32.mrb[0].mxu0
        %v2154 = vadd.f32 0.0, %v2153
        %v2155 = vpop.f32.mrb[0].mxu0
        %v2156 = vadd.f32 0.0, %v2155
        %2157 = vmatprep.mubr.f32.mxu0 0.0
        %v2158 = vand.u32 %v830, 4294901760
        %v2159 = vsub.f32 %v830, %v2158
        %v2160 = vand.u32 %v2159, 4294901760
        %v2161 = vsub.f32 %v2159, %v2160
        %v2162 = vand.u32 %v2161, 4294901760
        %2163 = vmatmul.mubr.f32.gmra.mrb[0].mxu0 %v2162
        %v2164 = vpop.f32.mrb[0].mxu0
        %v2165 = vadd.f32 0.0, %v2164
        %v2166 = vpop.f32.mrb[0].mxu0
        %v2167 = vadd.f32 0.0, %v2166
        %2168 = vmatprep.mubr.f32.mxu0 0.0
        %v2169 = vand.u32 %v833, 4294901760
        %v2170 = vsub.f32 %v833, %v2169
        %v2171 = vand.u32 %v2170, 4294901760
        %v2172 = vsub.f32 %v2170, %v2171
        %v2173 = vand.u32 %v2172, 4294901760
        %2174 = vmatmul.mubr.f32.gmra.mrb[0].mxu0 %v2173
        %v2175 = vpop.f32.mrb[0].mxu0
        %v2176 = vadd.f32 0.0, %v2175
        %v2177 = vpop.f32.mrb[0].mxu0
        %v2178 = vadd.f32 0.0, %v2177
        %2179 = vmatprep.mubr.f32.mxu0 0.0
        %v2180 = vand.u32 %v836, 4294901760
        %v2181 = vsub.f32 %v836, %v2180
        %v2182 = vand.u32 %v2181, 4294901760
        %v2183 = vsub.f32 %v2181, %v2182
        %v2184 = vand.u32 %v2183, 4294901760
        %2185 = vmatmul.mubr.f32.gmra.mrb[0].mxu0 %v2184
        %v2186 = vpop.f32.mrb[0].mxu0
        %v2187 = vadd.f32 0.0, %v2186
        %v2188 = vpop.f32.mrb[0].mxu0
        %v2189 = vadd.f32 0.0, %v2188
        %2190 = vmatprep.mubr.f32.mxu0 0.0
        %v2191 = vand.u32 %v839, 4294901760
        %v2192 = vsub.f32 %v839, %v2191
        %v2193 = vand.u32 %v2192, 4294901760
        %v2194 = vsub.f32 %v2192, %v2193
        %v2195 = vand.u32 %v2194, 4294901760
        %2196 = vmatmul.mubr.f32.gmra.mrb[0].mxu0 %v2195
        %v2197 = vpop.f32.mrb[0].mxu0
        %v2198 = vadd.f32 0.0, %v2197
        %v2199 = vpop.f32.mrb[0].mxu0
        %v2200 = vadd.f32 0.0, %v2199
        %2201 = vmatprep.mubr.f32.mxu0 0.0
        %v2202 = vand.u32 %v842, 4294901760
        %v2203 = vsub.f32 %v842, %v2202
        %v2204 = vand.u32 %v2203, 4294901760
        %v2205 = vsub.f32 %v2203, %v2204
        %v2206 = vand.u32 %v2205, 4294901760
        %2207 = vmatmul.mubr.f32.gmra.mrb[0].mxu0 %v2206
        %v2208 = vpop.f32.mrb[0].mxu0
        %v2209 = vadd.f32 0.0, %v2208
        %v2210 = vpop.f32.mrb[0].mxu0
        %v2211 = vadd.f32 0.0, %v2210
        %2212 = vmatprep.mubr.f32.mxu0 0.0
        %v2213 = vand.u32 %v845, 4294901760
        %v2214 = vsub.f32 %v845, %v2213
        %v2215 = vand.u32 %v2214, 4294901760
        %v2216 = vsub.f32 %v2214, %v2215
        %v2217 = vand.u32 %v2216, 4294901760
        %2218 = vmatmul.mubr.f32.gmra.mrb[0].mxu0 %v2217
        %v2219 = vpop.f32.mrb[0].mxu0
        %v2220 = vadd.f32 0.0, %v2219
        %v2221 = vpop.f32.mrb[0].mxu0
        %v2222 = vadd.f32 0.0, %v2221
        %2223 = vmatprep.mubr.f32.mxu0 0.0
        %v2224 = vand.u32 %v848, 4294901760
        %v2225 = vsub.f32 %v848, %v2224
        %v2226 = vand.u32 %v2225, 4294901760
        %v2227 = vsub.f32 %v2225, %v2226
        %v2228 = vand.u32 %v2227, 4294901760
        %2229 = vmatmul.mubr.f32.gmra.mrb[0].mxu0 %v2228
        %v2230 = vpop.f32.mrb[0].mxu0
        %v2231 = vadd.f32 0.0, %v2230
        %v2232 = vpop.f32.mrb[0].mxu0
        %v2233 = vadd.f32 0.0, %v2232
        %2234 = vmatprep.mubr.f32.mxu0 0.0
        %v2235 = vand.u32 %v851, 4294901760
        %v2236 = vsub.f32 %v851, %v2235
        %v2237 = vand.u32 %v2236, 4294901760
        %v2238 = vsub.f32 %v2236, %v2237
        %v2239 = vand.u32 %v2238, 4294901760
        %2240 = vmatmul.mubr.f32.gmra.mrb[0].mxu0 %v2239
        %v2241 = vpop.f32.mrb[0].mxu0
        %v2242 = vadd.f32 0.0, %v2241
        %v2243 = vpop.f32.mrb[0].mxu0
        %v2244 = vadd.f32 0.0, %v2243
        %2245 = vmatprep.mubr.f32.mxu0 0.0
        %v2246 = vand.u32 %v854, 4294901760
        %v2247 = vsub.f32 %v854, %v2246
        %v2248 = vand.u32 %v2247, 4294901760
        %v2249 = vsub.f32 %v2247, %v2248
        %v2250 = vand.u32 %v2249, 4294901760
        %2251 = vmatmul.mubr.f32.gmra.mrb[0].mxu0 %v2250
        %v2252 = vpop.f32.mrb[0].mxu0
        %v2253 = vadd.f32 0.0, %v2252
        %v2254 = vpop.f32.mrb[0].mxu0
        %v2255 = vadd.f32 0.0, %v2254
        %2256 = vmatprep.mubr.f32.mxu0 0.0
        %v2257 = vand.u32 %v857, 4294901760
        %v2258 = vsub.f32 %v857, %v2257
        %v2259 = vand.u32 %v2258, 4294901760
        %v2260 = vsub.f32 %v2258, %v2259
        %v2261 = vand.u32 %v2260, 4294901760
        %2262 = vmatmul.mubr.f32.gmra.mrb[0].mxu0 %v2261
        %v2263 = vpop.f32.mrb[0].mxu0
        %v2264 = vadd.f32 0.0, %v2263
        %v2265 = vpop.f32.mrb[0].mxu0
        %v2266 = vadd.f32 0.0, %v2265
        %2267 = vmatprep.mubr.f32.mxu0 0.0
        %v2268 = vand.u32 %v860, 4294901760
        %v2269 = vsub.f32 %v860, %v2268
        %v2270 = vand.u32 %v2269, 4294901760
        %v2271 = vsub.f32 %v2269, %v2270
        %v2272 = vand.u32 %v2271, 4294901760
        %2273 = vmatmul.mubr.f32.gmra.mrb[0].mxu0 %v2272
        %v2274 = vpop.f32.mrb[0].mxu0
        %v2275 = vadd.f32 0.0, %v2274
        %v2276 = vpop.f32.mrb[0].mxu0
        %v2277 = vadd.f32 0.0, %v2276
        %2278 = vmatprep.mubr.f32.mxu0 0.0
        %v2279 = vand.u32 %v863, 4294901760
        %v2280 = vsub.f32 %v863, %v2279
        %v2281 = vand.u32 %v2280, 4294901760
        %v2282 = vsub.f32 %v2280, %v2281
        %v2283 = vand.u32 %v2282, 4294901760
        %2284 = vmatmul.mubr.f32.gmra.mrb[0].mxu0 %v2283
        %v2285 = vpop.f32.mrb[0].mxu0
        %v2286 = vadd.f32 0.0, %v2285
        %v2287 = vpop.f32.mrb[0].mxu0
        %v2288 = vadd.f32 0.0, %v2287
        %2289 = vmatprep.mubr.f32.mxu0 0.0
        %v2290 = vand.u32 %v866, 4294901760
        %v2291 = vsub.f32 %v866, %v2290
        %v2292 = vand.u32 %v2291, 4294901760
        %v2293 = vsub.f32 %v2291, %v2292
        %v2294 = vand.u32 %v2293, 4294901760
        %2295 = vmatmul.mubr.f32.gmra.mrb[0].mxu0 %v2294
        %v2296 = vpop.f32.mrb[0].mxu0
        %v2297 = vadd.f32 0.0, %v2296
        %v2298 = vpop.f32.mrb[0].mxu0
        %v2299 = vadd.f32 0.0, %v2298
        %2300 = vmatprep.mubr.f32.mxu0 0.0
        %v2301 = vand.u32 %v869, 4294901760
        %v2302 = vsub.f32 %v869, %v2301
        %v2303 = vand.u32 %v2302, 4294901760
        %v2304 = vsub.f32 %v2302, %v2303
        %v2305 = vand.u32 %v2304, 4294901760
        %2306 = vmatmul.mubr.f32.gmra.mrb[0].mxu0 %v2305
        %v2307 = vpop.f32.mrb[0].mxu0
        %v2308 = vadd.f32 0.0, %v2307
        %v2309 = vpop.f32.mrb[0].mxu0
        %v2310 = vadd.f32 0.0, %v2309
        %2311 = vmatprep.mubr.f32.mxu0 0.0
        %v2312 = vand.u32 %v872, 4294901760
        %v2313 = vsub.f32 %v872, %v2312
        %v2314 = vand.u32 %v2313, 4294901760
        %v2315 = vsub.f32 %v2313, %v2314
        %v2316 = vand.u32 %v2315, 4294901760
        %2317 = vmatmul.mubr.f32.gmra.mrb[0].mxu0 %v2316
        %v2318 = vpop.f32.mrb[0].mxu0
        %v2319 = vadd.f32 0.0, %v2318
        %v2320 = vpop.f32.mrb[0].mxu0
        %v2321 = vadd.f32 0.0, %v2320
        %2322 = vmatprep.mubr.f32.mxu0 0.0
        %v2323 = vand.u32 %v875, 4294901760
        %v2324 = vsub.f32 %v875, %v2323
        %v2325 = vand.u32 %v2324, 4294901760
        %v2326 = vsub.f32 %v2324, %v2325
        %v2327 = vand.u32 %v2326, 4294901760
        %2328 = vmatmul.mubr.f32.gmra.mrb[0].mxu0 %v2327
        %v2329 = vpop.f32.mrb[0].mxu0
        %v2330 = vadd.f32 0.0, %v2329
        %v2331 = vpop.f32.mrb[0].mxu0
        %v2332 = vadd.f32 0.0, %v2331
        %2333 = vmatprep.mubr.f32.mxu0 0.0
        %v2334 = vand.u32 %v878, 4294901760
        %v2335 = vsub.f32 %v878, %v2334
        %v2336 = vand.u32 %v2335, 4294901760
        %v2337 = vsub.f32 %v2335, %v2336
        %v2338 = vand.u32 %v2337, 4294901760
        %2339 = vmatmul.mubr.f32.gmra.mrb[0].mxu0 %v2338
        %v2340 = vpop.f32.mrb[0].mxu0
        %v2341 = vadd.f32 0.0, %v2340
        %v2342 = vpop.f32.mrb[0].mxu0
        %v2343 = vadd.f32 0.0, %v2342
        %2344 = vmatprep.mubr.f32.mxu0 0.0
        %v2345 = vand.u32 %v881, 4294901760
        %v2346 = vsub.f32 %v881, %v2345
        %v2347 = vand.u32 %v2346, 4294901760
        %v2348 = vsub.f32 %v2346, %v2347
        %v2349 = vand.u32 %v2348, 4294901760
        %2350 = vmatmul.mubr.f32.gmra.mrb[0].mxu0 %v2349
        %v2351 = vpop.f32.mrb[0].mxu0
        %v2352 = vadd.f32 0.0, %v2351
        %v2353 = vpop.f32.mrb[0].mxu0
        %v2354 = vadd.f32 0.0, %v2353
        %2355 = vmatprep.mubr.f32.mxu0 0.0
        %v2356 = vand.u32 %v884, 4294901760
        %v2357 = vsub.f32 %v884, %v2356
        %v2358 = vand.u32 %v2357, 4294901760
        %v2359 = vsub.f32 %v2357, %v2358
        %v2360 = vand.u32 %v2359, 4294901760
        %2361 = vmatmul.mubr.f32.gmra.mrb[0].mxu0 %v2360
        %v2362 = vpop.f32.mrb[0].mxu0
        %v2363 = vadd.f32 0.0, %v2362
        %v2364 = vpop.f32.mrb[0].mxu0
        %v2365 = vadd.f32 0.0, %v2364
        %2366 = vmatprep.mubr.f32.mxu0 0.0
        %v2367 = vand.u32 %v887, 4294901760
        %v2368 = vsub.f32 %v887, %v2367
        %v2369 = vand.u32 %v2368, 4294901760
        %v2370 = vsub.f32 %v2368, %v2369
        %v2371 = vand.u32 %v2370, 4294901760
        %2372 = vmatmul.mubr.f32.gmra.mrb[0].mxu0 %v2371
        %v2373 = vpop.f32.mrb[0].mxu0
        %v2374 = vadd.f32 0.0, %v2373
        %v2375 = vpop.f32.mrb[0].mxu0
        %v2376 = vadd.f32 0.0, %v2375
        %2377 = vmatprep.mubr.f32.mxu0 0.0
        %v2378 = vand.u32 %v890, 4294901760
        %v2379 = vsub.f32 %v890, %v2378
        %v2380 = vand.u32 %v2379, 4294901760
        %v2381 = vsub.f32 %v2379, %v2380
        %v2382 = vand.u32 %v2381, 4294901760
        %2383 = vmatmul.mubr.f32.gmra.mrb[0].mxu0 %v2382
        %v2384 = vpop.f32.mrb[0].mxu0
        %v2385 = vadd.f32 0.0, %v2384
        %v2386 = vpop.f32.mrb[0].mxu0
        %v2387 = vadd.f32 0.0, %v2386
        %2388 = vmatprep.mubr.f32.mxu0 0.0
        %v2389 = vand.u32 %v893, 4294901760
        %v2390 = vsub.f32 %v893, %v2389
        %v2391 = vand.u32 %v2390, 4294901760
        %v2392 = vsub.f32 %v2390, %v2391
        %v2393 = vand.u32 %v2392, 4294901760
        %2394 = vmatmul.mubr.f32.gmra.mrb[0].mxu0 %v2393
        %v2395 = vpop.f32.mrb[0].mxu0
        %v2396 = vadd.f32 0.0, %v2395
        %v2397 = vpop.f32.mrb[0].mxu0
        %v2398 = vadd.f32 0.0, %v2397
        %2399 = vmatprep.mubr.f32.mxu0 0.0
        %v2400 = vand.u32 %v896, 4294901760
        %v2401 = vsub.f32 %v896, %v2400
        %v2402 = vand.u32 %v2401, 4294901760
        %v2403 = vsub.f32 %v2401, %v2402
        %v2404 = vand.u32 %v2403, 4294901760
        %2405 = vmatmul.mubr.f32.gmra.mrb[0].mxu0 %v2404
        %v2406 = vpop.f32.mrb[0].mxu0
        %v2407 = vadd.f32 0.0, %v2406
        %v2408 = vpop.f32.mrb[0].mxu0
        %v2409 = vadd.f32 0.0, %v2408
        %2410 = vmatprep.mubr.f32.mxu0 0.0
        %v2411 = vand.u32 %v899, 4294901760
        %v2412 = vsub.f32 %v899, %v2411
        %v2413 = vand.u32 %v2412, 4294901760
        %v2414 = vsub.f32 %v2412, %v2413
        %v2415 = vand.u32 %v2414, 4294901760
        %2416 = vmatmul.mubr.f32.gmra.mrb[0].mxu0 %v2415
        %v2417 = vpop.f32.mrb[0].mxu0
        %v2418 = vadd.f32 0.0, %v2417
        %v2419 = vpop.f32.mrb[0].mxu0
        %v2420 = vadd.f32 0.0, %v2419
        %2421 = vmatprep.mubr.f32.mxu0 0.0
        %v2422 = vand.u32 %v902, 4294901760
        %v2423 = vsub.f32 %v902, %v2422
        %v2424 = vand.u32 %v2423, 4294901760
        %v2425 = vsub.f32 %v2423, %v2424
        %v2426 = vand.u32 %v2425, 4294901760
        %2427 = vmatmul.mubr.f32.gmra.mrb[0].mxu0 %v2426
        %v2428 = vpop.f32.mrb[0].mxu0
        %v2429 = vadd.f32 0.0, %v2428
        %v2430 = vpop.f32.mrb[0].mxu0
        %v2431 = vadd.f32 0.0, %v2430
        %2432 = vmatprep.mubr.f32.mxu0 0.0
        %v2433 = vand.u32 %v905, 4294901760
        %v2434 = vsub.f32 %v905, %v2433
        %v2435 = vand.u32 %v2434, 4294901760
        %v2436 = vsub.f32 %v2434, %v2435
        %v2437 = vand.u32 %v2436, 4294901760
        %2438 = vmatmul.mubr.f32.gmra.mrb[0].mxu0 %v2437
        %v2439 = vpop.f32.mrb[0].mxu0
        %v2440 = vadd.f32 0.0, %v2439
        %v2441 = vpop.f32.mrb[0].mxu0
        %v2442 = vadd.f32 0.0, %v2441
        %2443 = vmatprep.mubr.f32.mxu0 0.0
        %v2444 = vand.u32 %v908, 4294901760
        %v2445 = vsub.f32 %v908, %v2444
        %v2446 = vand.u32 %v2445, 4294901760
        %v2447 = vsub.f32 %v2445, %v2446
        %v2448 = vand.u32 %v2447, 4294901760
        %2449 = vmatmul.mubr.f32.gmra.mrb[0].mxu0 %v2448
        %v2450 = vpop.f32.mrb[0].mxu0
        %v2451 = vadd.f32 0.0, %v2450
        %v2452 = vpop.f32.mrb[0].mxu0
        %v2453 = vadd.f32 0.0, %v2452
        %2454 = vmatprep.mubr.f32.mxu0 0.0
        %v2455 = vand.u32 %v911, 4294901760
        %v2456 = vsub.f32 %v911, %v2455
        %v2457 = vand.u32 %v2456, 4294901760
        %v2458 = vsub.f32 %v2456, %v2457
        %v2459 = vand.u32 %v2458, 4294901760
        %2460 = vmatmul.mubr.f32.gmra.mrb[0].mxu0 %v2459
        %v2461 = vpop.f32.mrb[0].mxu0
        %v2462 = vadd.f32 0.0, %v2461
        %v2463 = vpop.f32.mrb[0].mxu0
        %v2464 = vadd.f32 0.0, %v2463
        %2465 = vmatprep.mubr.f32.mxu0 0.0
        %v2466 = vand.u32 %v914, 4294901760
        %v2467 = vsub.f32 %v914, %v2466
        %v2468 = vand.u32 %v2467, 4294901760
        %v2469 = vsub.f32 %v2467, %v2468
        %v2470 = vand.u32 %v2469, 4294901760
        %2471 = vmatmul.mubr.f32.gmra.mrb[0].mxu0 %v2470
        %v2472 = vpop.f32.mrb[0].mxu0
        %v2473 = vadd.f32 0.0, %v2472
        %v2474 = vpop.f32.mrb[0].mxu0
        %v2475 = vadd.f32 0.0, %v2474
        %2476 = vmatprep.mubr.f32.mxu0 0.0
        %v2477 = vand.u32 %v917, 4294901760
        %v2478 = vsub.f32 %v917, %v2477
        %v2479 = vand.u32 %v2478, 4294901760
        %v2480 = vsub.f32 %v2478, %v2479
        %v2481 = vand.u32 %v2480, 4294901760
        %2482 = vmatmul.mubr.f32.gmra.mrb[0].mxu0 %v2481
        %v2483 = vpop.f32.mrb[0].mxu0
        %v2484 = vadd.f32 0.0, %v2483
        %v2485 = vpop.f32.mrb[0].mxu0
        %v2486 = vadd.f32 0.0, %v2485
        %2487 = vmatprep.mubr.f32.mxu0 0.0
        %v2488 = vand.u32 %v920, 4294901760
        %v2489 = vsub.f32 %v920, %v2488
        %v2490 = vand.u32 %v2489, 4294901760
        %v2491 = vsub.f32 %v2489, %v2490
        %v2492 = vand.u32 %v2491, 4294901760
        %2493 = vmatmul.mubr.f32.gmra.mrb[0].mxu0 %v2492
        %v2494 = vpop.f32.mrb[0].mxu0
        %v2495 = vadd.f32 0.0, %v2494
        %v2496 = vpop.f32.mrb[0].mxu0
        %v2497 = vadd.f32 0.0, %v2496
        %2498 = vmatprep.mubr.f32.mxu0 0.0
        %v2499 = vand.u32 %v923, 4294901760
        %v2500 = vsub.f32 %v923, %v2499
        %v2501 = vand.u32 %v2500, 4294901760
        %v2502 = vsub.f32 %v2500, %v2501
        %v2503 = vand.u32 %v2502, 4294901760
        %2504 = vmatmul.mubr.f32.gmra.mrb[0].mxu0 %v2503
        %v2505 = vpop.f32.mrb[0].mxu0
        %v2506 = vadd.f32 0.0, %v2505
        %v2507 = vpop.f32.mrb[0].mxu0
        %v2508 = vadd.f32 0.0, %v2507
        %2509 = vmatprep.mubr.f32.mxu0 0.0
        %v2510 = vand.u32 %v926, 4294901760
        %v2511 = vsub.f32 %v926, %v2510
        %v2512 = vand.u32 %v2511, 4294901760
        %v2513 = vsub.f32 %v2511, %v2512
        %v2514 = vand.u32 %v2513, 4294901760
        %2515 = vmatmul.mubr.f32.gmra.mrb[0].mxu0 %v2514
        %v2516 = vpop.f32.mrb[0].mxu0
        %v2517 = vadd.f32 0.0, %v2516
        %v2518 = vpop.f32.mrb[0].mxu0
        %v2519 = vadd.f32 0.0, %v2518
        %2520 = vmatprep.mubr.f32.mxu0 0.0
        %v2521 = vand.u32 %v929, 4294901760
        %v2522 = vsub.f32 %v929, %v2521
        %v2523 = vand.u32 %v2522, 4294901760
        %v2524 = vsub.f32 %v2522, %v2523
        %v2525 = vand.u32 %v2524, 4294901760
        %2526 = vmatmul.mubr.f32.gmra.mrb[0].mxu0 %v2525
        %v2527 = vpop.f32.mrb[0].mxu0
        %v2528 = vadd.f32 0.0, %v2527
        %v2529 = vpop.f32.mrb[0].mxu0
        %v2530 = vadd.f32 0.0, %v2529
        %2531 = vdwg.mxu0
        %2532 = vmatprep.subr.mxu0 0.0
        %v2533 = vand.u32 %v932, 4294901760
        %v2534 = vsub.f32 %v932, %v2533
        %v2535 = vand.u32 %v2534, 4294901760
        %v2536 = vsub.f32 %v2534, %v2535
        %v2537 = vand.u32 %v2536, 4294901760
        %2538 = vmatpush1.xpose.msra.mxu0 %v2537
        %2539 = vmatprep.subr.mxu0 0.0
        %v2540 = vand.u32 %v935, 4294901760
        %v2541 = vsub.f32 %v935, %v2540
        %v2542 = vand.u32 %v2541, 4294901760
        %v2543 = vsub.f32 %v2541, %v2542
        %v2544 = vand.u32 %v2543, 4294901760
        %2545 = vmatpush1.xpose.msra.mxu0 %v2544
        %2546 = vmatprep.subr.mxu0 0.0
        %v2547 = vand.u32 %v938, 4294901760
        %v2548 = vsub.f32 %v938, %v2547
        %v2549 = vand.u32 %v2548, 4294901760
        %v2550 = vsub.f32 %v2548, %v2549
        %v2551 = vand.u32 %v2550, 4294901760
        %2552 = vmatpush1.xpose.msra.mxu0 %v2551
        %2553 = vmatprep.subr.mxu0 0.0
        %v2554 = vand.u32 %v941, 4294901760
        %v2555 = vsub.f32 %v941, %v2554
        %v2556 = vand.u32 %v2555, 4294901760
        %v2557 = vsub.f32 %v2555, %v2556
        %v2558 = vand.u32 %v2557, 4294901760
        %2559 = vmatpush1.xpose.msra.mxu0 %v2558
        %2560 = vmatprep.subr.mxu0 0.0
        %v2561 = vand.u32 %v944, 4294901760
        %v2562 = vsub.f32 %v944, %v2561
        %v2563 = vand.u32 %v2562, 4294901760
        %v2564 = vsub.f32 %v2562, %v2563
        %v2565 = vand.u32 %v2564, 4294901760
        %2566 = vmatpush1.xpose.msra.mxu0 %v2565
        %2567 = vmatprep.subr.mxu0 0.0
        %v2568 = vand.u32 %v947, 4294901760
        %v2569 = vsub.f32 %v947, %v2568
        %v2570 = vand.u32 %v2569, 4294901760
        %v2571 = vsub.f32 %v2569, %v2570
        %v2572 = vand.u32 %v2571, 4294901760
        %2573 = vmatpush1.xpose.msra.mxu0 %v2572
        %2574 = vmatprep.subr.mxu0 0.0
        %v2575 = vand.u32 %v950, 4294901760
        %v2576 = vsub.f32 %v950, %v2575
        %v2577 = vand.u32 %v2576, 4294901760
        %v2578 = vsub.f32 %v2576, %v2577
        %v2579 = vand.u32 %v2578, 4294901760
        %2580 = vmatpush1.xpose.msra.mxu0 %v2579
        %2581 = vmatprep.subr.mxu0 0.0
        %v2582 = vand.u32 %v953, 4294901760
        %v2583 = vsub.f32 %v953, %v2582
        %v2584 = vand.u32 %v2583, 4294901760
        %v2585 = vsub.f32 %v2583, %v2584
        %v2586 = vand.u32 %v2585, 4294901760
        %2587 = vmatpush1.xpose.msra.mxu0 %v2586
        %2588 = vmatprep.subr.mxu0 0.0
        %v2589 = vand.u32 %v956, 4294901760
        %v2590 = vsub.f32 %v956, %v2589
        %v2591 = vand.u32 %v2590, 4294901760
        %v2592 = vsub.f32 %v2590, %v2591
        %v2593 = vand.u32 %v2592, 4294901760
        %2594 = vmatpush1.xpose.msra.mxu0 %v2593
        %2595 = vmatprep.subr.mxu0 0.0
        %v2596 = vand.u32 %v959, 4294901760
        %v2597 = vsub.f32 %v959, %v2596
        %v2598 = vand.u32 %v2597, 4294901760
        %v2599 = vsub.f32 %v2597, %v2598
        %v2600 = vand.u32 %v2599, 4294901760
        %2601 = vmatpush1.xpose.msra.mxu0 %v2600
        %2602 = vmatprep.subr.mxu0 0.0
        %v2603 = vand.u32 %v962, 4294901760
        %v2604 = vsub.f32 %v962, %v2603
        %v2605 = vand.u32 %v2604, 4294901760
        %v2606 = vsub.f32 %v2604, %v2605
        %v2607 = vand.u32 %v2606, 4294901760
        %2608 = vmatpush1.xpose.msra.mxu0 %v2607
        %2609 = vmatprep.subr.mxu0 0.0
        %v2610 = vand.u32 %v965, 4294901760
        %v2611 = vsub.f32 %v965, %v2610
        %v2612 = vand.u32 %v2611, 4294901760
        %v2613 = vsub.f32 %v2611, %v2612
        %v2614 = vand.u32 %v2613, 4294901760
        %2615 = vmatpush1.xpose.msra.mxu0 %v2614
        %2616 = vmatprep.subr.mxu0 0.0
        %v2617 = vand.u32 %v968, 4294901760
        %v2618 = vsub.f32 %v968, %v2617
        %v2619 = vand.u32 %v2618, 4294901760
        %v2620 = vsub.f32 %v2618, %v2619
        %v2621 = vand.u32 %v2620, 4294901760
        %2622 = vmatpush1.xpose.msra.mxu0 %v2621
        %2623 = vmatprep.subr.mxu0 0.0
        %v2624 = vand.u32 %v971, 4294901760
        %v2625 = vsub.f32 %v971, %v2624
        %v2626 = vand.u32 %v2625, 4294901760
        %v2627 = vsub.f32 %v2625, %v2626
        %v2628 = vand.u32 %v2627, 4294901760
        %2629 = vmatpush1.xpose.msra.mxu0 %v2628
        %2630 = vmatprep.subr.mxu0 0.0
        %v2631 = vand.u32 %v974, 4294901760
        %v2632 = vsub.f32 %v974, %v2631
        %v2633 = vand.u32 %v2632, 4294901760
        %v2634 = vsub.f32 %v2632, %v2633
        %v2635 = vand.u32 %v2634, 4294901760
        %2636 = vmatpush1.xpose.msra.mxu0 %v2635
        %2637 = vmatprep.subr.mxu0 0.0
        %v2638 = vand.u32 %v977, 4294901760
        %v2639 = vsub.f32 %v977, %v2638
        %v2640 = vand.u32 %v2639, 4294901760
        %v2641 = vsub.f32 %v2639, %v2640
        %v2642 = vand.u32 %v2641, 4294901760
        %2643 = vmatpush1.xpose.msra.mxu0 %v2642
        %2644 = vmatprep.subr.mxu0 0.0
        %v2645 = vand.u32 %v980, 4294901760
        %v2646 = vsub.f32 %v980, %v2645
        %v2647 = vand.u32 %v2646, 4294901760
        %v2648 = vsub.f32 %v2646, %v2647
        %v2649 = vand.u32 %v2648, 4294901760
        %2650 = vmatpush1.xpose.msra.mxu0 %v2649
        %2651 = vmatprep.subr.mxu0 0.0
        %v2652 = vand.u32 %v983, 4294901760
        %v2653 = vsub.f32 %v983, %v2652
        %v2654 = vand.u32 %v2653, 4294901760
        %v2655 = vsub.f32 %v2653, %v2654
        %v2656 = vand.u32 %v2655, 4294901760
        %2657 = vmatpush1.xpose.msra.mxu0 %v2656
        %2658 = vmatprep.subr.mxu0 0.0
        %v2659 = vand.u32 %v986, 4294901760
        %v2660 = vsub.f32 %v986, %v2659
        %v2661 = vand.u32 %v2660, 4294901760
        %v2662 = vsub.f32 %v2660, %v2661
        %v2663 = vand.u32 %v2662, 4294901760
        %2664 = vmatpush1.xpose.msra.mxu0 %v2663
        %2665 = vmatprep.subr.mxu0 0.0
        %v2666 = vand.u32 %v989, 4294901760
        %v2667 = vsub.f32 %v989, %v2666
        %v2668 = vand.u32 %v2667, 4294901760
        %v2669 = vsub.f32 %v2667, %v2668
        %v2670 = vand.u32 %v2669, 4294901760
        %2671 = vmatpush1.xpose.msra.mxu0 %v2670
        %2672 = vmatprep.subr.mxu0 0.0
        %v2673 = vand.u32 %v992, 4294901760
        %v2674 = vsub.f32 %v992, %v2673
        %v2675 = vand.u32 %v2674, 4294901760
        %v2676 = vsub.f32 %v2674, %v2675
        %v2677 = vand.u32 %v2676, 4294901760
        %2678 = vmatpush1.xpose.msra.mxu0 %v2677
        %2679 = vmatprep.subr.mxu0 0.0
        %v2680 = vand.u32 %v995, 4294901760
        %v2681 = vsub.f32 %v995, %v2680
        %v2682 = vand.u32 %v2681, 4294901760
        %v2683 = vsub.f32 %v2681, %v2682
        %v2684 = vand.u32 %v2683, 4294901760
        %2685 = vmatpush1.xpose.msra.mxu0 %v2684
        %2686 = vmatprep.subr.mxu0 0.0
        %v2687 = vand.u32 %v998, 4294901760
        %v2688 = vsub.f32 %v998, %v2687
        %v2689 = vand.u32 %v2688, 4294901760
        %v2690 = vsub.f32 %v2688, %v2689
        %v2691 = vand.u32 %v2690, 4294901760
        %2692 = vmatpush1.xpose.msra.mxu0 %v2691
        %2693 = vmatprep.subr.mxu0 0.0
        %v2694 = vand.u32 %v1001, 4294901760
        %v2695 = vsub.f32 %v1001, %v2694
        %v2696 = vand.u32 %v2695, 4294901760
        %v2697 = vsub.f32 %v2695, %v2696
        %v2698 = vand.u32 %v2697, 4294901760
        %2699 = vmatpush1.xpose.msra.mxu0 %v2698
        %2700 = vmatprep.subr.mxu0 0.0
        %v2701 = vand.u32 %v1004, 4294901760
        %v2702 = vsub.f32 %v1004, %v2701
        %v2703 = vand.u32 %v2702, 4294901760
        %v2704 = vsub.f32 %v2702, %v2703
        %v2705 = vand.u32 %v2704, 4294901760
        %2706 = vmatpush1.xpose.msra.mxu0 %v2705
        %2707 = vmatprep.subr.mxu0 0.0
        %v2708 = vand.u32 %v1007, 4294901760
        %v2709 = vsub.f32 %v1007, %v2708
        %v2710 = vand.u32 %v2709, 4294901760
        %v2711 = vsub.f32 %v2709, %v2710
        %v2712 = vand.u32 %v2711, 4294901760
        %2713 = vmatpush1.xpose.msra.mxu0 %v2712
        %2714 = vmatprep.subr.mxu0 0.0
        %v2715 = vand.u32 %v1010, 4294901760
        %v2716 = vsub.f32 %v1010, %v2715
        %v2717 = vand.u32 %v2716, 4294901760
        %v2718 = vsub.f32 %v2716, %v2717
        %v2719 = vand.u32 %v2718, 4294901760
        %2720 = vmatpush1.xpose.msra.mxu0 %v2719
        %2721 = vmatprep.subr.mxu0 0.0
        %v2722 = vand.u32 %v1013, 4294901760
        %v2723 = vsub.f32 %v1013, %v2722
        %v2724 = vand.u32 %v2723, 4294901760
        %v2725 = vsub.f32 %v2723, %v2724
        %v2726 = vand.u32 %v2725, 4294901760
        %2727 = vmatpush1.xpose.msra.mxu0 %v2726
        %2728 = vmatprep.subr.mxu0 0.0
        %v2729 = vand.u32 %v1016, 4294901760
        %v2730 = vsub.f32 %v1016, %v2729
        %v2731 = vand.u32 %v2730, 4294901760
        %v2732 = vsub.f32 %v2730, %v2731
        %v2733 = vand.u32 %v2732, 4294901760
        %2734 = vmatpush1.xpose.msra.mxu0 %v2733
        %2735 = vmatprep.subr.mxu0 0.0
        %v2736 = vand.u32 %v1019, 4294901760
        %v2737 = vsub.f32 %v1019, %v2736
        %v2738 = vand.u32 %v2737, 4294901760
        %v2739 = vsub.f32 %v2737, %v2738
        %v2740 = vand.u32 %v2739, 4294901760
        %2741 = vmatpush1.xpose.msra.mxu0 %v2740
        %2742 = vmatprep.subr.mxu0 0.0
        %v2743 = vand.u32 %v1022, 4294901760
        %v2744 = vsub.f32 %v1022, %v2743
        %v2745 = vand.u32 %v2744, 4294901760
        %v2746 = vsub.f32 %v2744, %v2745
        %v2747 = vand.u32 %v2746, 4294901760
        %2748 = vmatpush1.xpose.msra.mxu0 %v2747
        %2749 = vmatprep.subr.mxu0 0.0
        %v2750 = vand.u32 %v1025, 4294901760
        %v2751 = vsub.f32 %v1025, %v2750
        %v2752 = vand.u32 %v2751, 4294901760
        %v2753 = vsub.f32 %v2751, %v2752
        %v2754 = vand.u32 %v2753, 4294901760
        %2755 = vmatpush1.xpose.msra.mxu0 %v2754
        %2756 = vmatprep.mubr.f32.mxu0 0.0
        %v2757 = vand.u32 %v548, 4294901760
        %2758 = vmatmul.mubr.f32.gmra.mrb[0].mxu0 %v2757
        %v2759 = vpop.f32.mrb[0].mxu0
        %v2760 = vadd.f32 %v1131, %v2759
        %v2761 = vpop.f32.mrb[0].mxu0
        %v2762 = vadd.f32 %v1133, %v2761
        %2763 = vmatprep.mubr.f32.mxu0 0.0
        %v2764 = vand.u32 %v551, 4294901760
        %2765 = vmatmul.mubr.f32.gmra.mrb[0].mxu0 %v2764
        %v2766 = vpop.f32.mrb[0].mxu0
        %v2767 = vadd.f32 %v1142, %v2766
        %v2768 = vpop.f32.mrb[0].mxu0
        %v2769 = vadd.f32 %v1144, %v2768
        %2770 = vmatprep.mubr.f32.mxu0 0.0
        %v2771 = vand.u32 %v554, 4294901760
        %2772 = vmatmul.mubr.f32.gmra.mrb[0].mxu0 %v2771
        %v2773 = vpop.f32.mrb[0].mxu0
        %v2774 = vadd.f32 %v1153, %v2773
        %v2775 = vpop.f32.mrb[0].mxu0
        %v2776 = vadd.f32 %v1155, %v2775
        %2777 = vmatprep.mubr.f32.mxu0 0.0
        %v2778 = vand.u32 %v557, 4294901760
        %2779 = vmatmul.mubr.f32.gmra.mrb[0].mxu0 %v2778
        %v2780 = vpop.f32.mrb[0].mxu0
        %v2781 = vadd.f32 %v1164, %v2780
        %v2782 = vpop.f32.mrb[0].mxu0
        %v2783 = vadd.f32 %v1166, %v2782
        %2784 = vmatprep.mubr.f32.mxu0 0.0
        %v2785 = vand.u32 %v560, 4294901760
        %2786 = vmatmul.mubr.f32.gmra.mrb[0].mxu0 %v2785
        %v2787 = vpop.f32.mrb[0].mxu0
        %v2788 = vadd.f32 %v1175, %v2787
        %v2789 = vpop.f32.mrb[0].mxu0
        %v2790 = vadd.f32 %v1177, %v2789
        %2791 = vmatprep.mubr.f32.mxu0 0.0
        %v2792 = vand.u32 %v563, 4294901760
        %2793 = vmatmul.mubr.f32.gmra.mrb[0].mxu0 %v2792
        %v2794 = vpop.f32.mrb[0].mxu0
        %v2795 = vadd.f32 %v1186, %v2794
        %v2796 = vpop.f32.mrb[0].mxu0
        %v2797 = vadd.f32 %v1188, %v2796
        %2798 = vmatprep.mubr.f32.mxu0 0.0
        %v2799 = vand.u32 %v566, 4294901760
        %2800 = vmatmul.mubr.f32.gmra.mrb[0].mxu0 %v2799
        %v2801 = vpop.f32.mrb[0].mxu0
        %v2802 = vadd.f32 %v1197, %v2801
        %v2803 = vpop.f32.mrb[0].mxu0
        %v2804 = vadd.f32 %v1199, %v2803
        %2805 = vmatprep.mubr.f32.mxu0 0.0
        %v2806 = vand.u32 %v569, 4294901760
        %2807 = vmatmul.mubr.f32.gmra.mrb[0].mxu0 %v2806
        %v2808 = vpop.f32.mrb[0].mxu0
        %v2809 = vadd.f32 %v1208, %v2808
        %v2810 = vpop.f32.mrb[0].mxu0
        %v2811 = vadd.f32 %v1210, %v2810
        %2812 = vmatprep.mubr.f32.mxu0 0.0
        %v2813 = vand.u32 %v572, 4294901760
        %2814 = vmatmul.mubr.f32.gmra.mrb[0].mxu0 %v2813
        %v2815 = vpop.f32.mrb[0].mxu0
        %v2816 = vadd.f32 %v1219, %v2815
        %v2817 = vpop.f32.mrb[0].mxu0
        %v2818 = vadd.f32 %v1221, %v2817
        %2819 = vmatprep.mubr.f32.mxu0 0.0
        %v2820 = vand.u32 %v575, 4294901760
        %2821 = vmatmul.mubr.f32.gmra.mrb[0].mxu0 %v2820
        %v2822 = vpop.f32.mrb[0].mxu0
        %v2823 = vadd.f32 %v1230, %v2822
        %v2824 = vpop.f32.mrb[0].mxu0
        %v2825 = vadd.f32 %v1232, %v2824
        %2826 = vmatprep.mubr.f32.mxu0 0.0
        %v2827 = vand.u32 %v578, 4294901760
        %2828 = vmatmul.mubr.f32.gmra.mrb[0].mxu0 %v2827
        %v2829 = vpop.f32.mrb[0].mxu0
        %v2830 = vadd.f32 %v1241, %v2829
        %v2831 = vpop.f32.mrb[0].mxu0
        %v2832 = vadd.f32 %v1243, %v2831
        %2833 = vmatprep.mubr.f32.mxu0 0.0
        %v2834 = vand.u32 %v581, 4294901760
        %2835 = vmatmul.mubr.f32.gmra.mrb[0].mxu0 %v2834
        %v2836 = vpop.f32.mrb[0].mxu0
        %v2837 = vadd.f32 %v1252, %v2836
        %v2838 = vpop.f32.mrb[0].mxu0
        %v2839 = vadd.f32 %v1254, %v2838
        %2840 = vmatprep.mubr.f32.mxu0 0.0
        %v2841 = vand.u32 %v584, 4294901760
        %2842 = vmatmul.mubr.f32.gmra.mrb[0].mxu0 %v2841
        %v2843 = vpop.f32.mrb[0].mxu0
        %v2844 = vadd.f32 %v1263, %v2843
        %v2845 = vpop.f32.mrb[0].mxu0
        %v2846 = vadd.f32 %v1265, %v2845
        %2847 = vmatprep.mubr.f32.mxu0 0.0
        %v2848 = vand.u32 %v587, 4294901760
        %2849 = vmatmul.mubr.f32.gmra.mrb[0].mxu0 %v2848
        %v2850 = vpop.f32.mrb[0].mxu0
        %v2851 = vadd.f32 %v1274, %v2850
        %v2852 = vpop.f32.mrb[0].mxu0
        %v2853 = vadd.f32 %v1276, %v2852
        %2854 = vmatprep.mubr.f32.mxu0 0.0
        %v2855 = vand.u32 %v590, 4294901760
        %2856 = vmatmul.mubr.f32.gmra.mrb[0].mxu0 %v2855
        %v2857 = vpop.f32.mrb[0].mxu0
        %v2858 = vadd.f32 %v1285, %v2857
        %v2859 = vpop.f32.mrb[0].mxu0
        %v2860 = vadd.f32 %v1287, %v2859
        %2861 = vmatprep.mubr.f32.mxu0 0.0
        %v2862 = vand.u32 %v593, 4294901760
        %2863 = vmatmul.mubr.f32.gmra.mrb[0].mxu0 %v2862
        %v2864 = vpop.f32.mrb[0].mxu0
        %v2865 = vadd.f32 %v1296, %v2864
        %v2866 = vpop.f32.mrb[0].mxu0
        %v2867 = vadd.f32 %v1298, %v2866
        %2868 = vmatprep.mubr.f32.mxu0 0.0
        %v2869 = vand.u32 %v596, 4294901760
        %2870 = vmatmul.mubr.f32.gmra.mrb[0].mxu0 %v2869
        %v2871 = vpop.f32.mrb[0].mxu0
        %v2872 = vadd.f32 %v1307, %v2871
        %v2873 = vpop.f32.mrb[0].mxu0
        %v2874 = vadd.f32 %v1309, %v2873
        %2875 = vmatprep.mubr.f32.mxu0 0.0
        %v2876 = vand.u32 %v599, 4294901760
        %2877 = vmatmul.mubr.f32.gmra.mrb[0].mxu0 %v2876
        %v2878 = vpop.f32.mrb[0].mxu0
        %v2879 = vadd.f32 %v1318, %v2878
        %v2880 = vpop.f32.mrb[0].mxu0
        %v2881 = vadd.f32 %v1320, %v2880
        %2882 = vmatprep.mubr.f32.mxu0 0.0
        %v2883 = vand.u32 %v602, 4294901760
        %2884 = vmatmul.mubr.f32.gmra.mrb[0].mxu0 %v2883
        %v2885 = vpop.f32.mrb[0].mxu0
        %v2886 = vadd.f32 %v1329, %v2885
        %v2887 = vpop.f32.mrb[0].mxu0
        %v2888 = vadd.f32 %v1331, %v2887
        %2889 = vmatprep.mubr.f32.mxu0 0.0
        %v2890 = vand.u32 %v605, 4294901760
        %2891 = vmatmul.mubr.f32.gmra.mrb[0].mxu0 %v2890
        %v2892 = vpop.f32.mrb[0].mxu0
        %v2893 = vadd.f32 %v1340, %v2892
        %v2894 = vpop.f32.mrb[0].mxu0
        %v2895 = vadd.f32 %v1342, %v2894
        %2896 = vmatprep.mubr.f32.mxu0 0.0
        %v2897 = vand.u32 %v608, 4294901760
        %2898 = vmatmul.mubr.f32.gmra.mrb[0].mxu0 %v2897
        %v2899 = vpop.f32.mrb[0].mxu0
        %v2900 = vadd.f32 %v1351, %v2899
        %v2901 = vpop.f32.mrb[0].mxu0
        %v2902 = vadd.f32 %v1353, %v2901
        %2903 = vmatprep.mubr.f32.mxu0 0.0
        %v2904 = vand.u32 %v611, 4294901760
        %2905 = vmatmul.mubr.f32.gmra.mrb[0].mxu0 %v2904
        %v2906 = vpop.f32.mrb[0].mxu0
        %v2907 = vadd.f32 %v1362, %v2906
        %v2908 = vpop.f32.mrb[0].mxu0
        %v2909 = vadd.f32 %v1364, %v2908
        %2910 = vmatprep.mubr.f32.mxu0 0.0
        %v2911 = vand.u32 %v614, 4294901760
        %2912 = vmatmul.mubr.f32.gmra.mrb[0].mxu0 %v2911
        %v2913 = vpop.f32.mrb[0].mxu0
        %v2914 = vadd.f32 %v1373, %v2913
        %v2915 = vpop.f32.mrb[0].mxu0
        %v2916 = vadd.f32 %v1375, %v2915
        %2917 = vmatprep.mubr.f32.mxu0 0.0
        %v2918 = vand.u32 %v617, 4294901760
        %2919 = vmatmul.mubr.f32.gmra.mrb[0].mxu0 %v2918
        %v2920 = vpop.f32.mrb[0].mxu0
        %v2921 = vadd.f32 %v1384, %v2920
        %v2922 = vpop.f32.mrb[0].mxu0
        %v2923 = vadd.f32 %v1386, %v2922
        %2924 = vmatprep.mubr.f32.mxu0 0.0
        %v2925 = vand.u32 %v620, 4294901760
        %2926 = vmatmul.mubr.f32.gmra.mrb[0].mxu0 %v2925
        %v2927 = vpop.f32.mrb[0].mxu0
        %v2928 = vadd.f32 %v1395, %v2927
        %v2929 = vpop.f32.mrb[0].mxu0
        %v2930 = vadd.f32 %v1397, %v2929
        %2931 = vmatprep.mubr.f32.mxu0 0.0
        %v2932 = vand.u32 %v623, 4294901760
        %2933 = vmatmul.mubr.f32.gmra.mrb[0].mxu0 %v2932
        %v2934 = vpop.f32.mrb[0].mxu0
        %v2935 = vadd.f32 %v1406, %v2934
        %v2936 = vpop.f32.mrb[0].mxu0
        %v2937 = vadd.f32 %v1408, %v2936
        %2938 = vmatprep.mubr.f32.mxu0 0.0
        %v2939 = vand.u32 %v626, 4294901760
        %2940 = vmatmul.mubr.f32.gmra.mrb[0].mxu0 %v2939
        %v2941 = vpop.f32.mrb[0].mxu0
        %v2942 = vadd.f32 %v1417, %v2941
        %v2943 = vpop.f32.mrb[0].mxu0
        %v2944 = vadd.f32 %v1419, %v2943
        %2945 = vmatprep.mubr.f32.mxu0 0.0
        %v2946 = vand.u32 %v629, 4294901760
        %2947 = vmatmul.mubr.f32.gmra.mrb[0].mxu0 %v2946
        %v2948 = vpop.f32.mrb[0].mxu0
        %v2949 = vadd.f32 %v1428, %v2948
        %v2950 = vpop.f32.mrb[0].mxu0
        %v2951 = vadd.f32 %v1430, %v2950
        %2952 = vmatprep.mubr.f32.mxu0 0.0
        %v2953 = vand.u32 %v632, 4294901760
        %2954 = vmatmul.mubr.f32.gmra.mrb[0].mxu0 %v2953
        %v2955 = vpop.f32.mrb[0].mxu0
        %v2956 = vadd.f32 %v1439, %v2955
        %v2957 = vpop.f32.mrb[0].mxu0
        %v2958 = vadd.f32 %v1441, %v2957
        %2959 = vmatprep.mubr.f32.mxu0 0.0
        %v2960 = vand.u32 %v635, 4294901760
        %2961 = vmatmul.mubr.f32.gmra.mrb[0].mxu0 %v2960
        %v2962 = vpop.f32.mrb[0].mxu0
        %v2963 = vadd.f32 %v1450, %v2962
        %v2964 = vpop.f32.mrb[0].mxu0
        %v2965 = vadd.f32 %v1452, %v2964
        %2966 = vmatprep.mubr.f32.mxu0 0.0
        %v2967 = vand.u32 %v638, 4294901760
        %2968 = vmatmul.mubr.f32.gmra.mrb[0].mxu0 %v2967
        %v2969 = vpop.f32.mrb[0].mxu0
        %v2970 = vadd.f32 %v1461, %v2969
        %v2971 = vpop.f32.mrb[0].mxu0
        %v2972 = vadd.f32 %v1463, %v2971
        %2973 = vmatprep.mubr.f32.mxu0 0.0
        %v2974 = vand.u32 %v641, 4294901760
        %2975 = vmatmul.mubr.f32.gmra.mrb[0].mxu0 %v2974
        %v2976 = vpop.f32.mrb[0].mxu0
        %v2977 = vadd.f32 %v1472, %v2976
        %v2978 = vpop.f32.mrb[0].mxu0
        %v2979 = vadd.f32 %v1474, %v2978
        %2980 = vmatprep.mubr.f32.mxu0 0.0
        %v2981 = vand.u32 %v644, 4294901760
        %2982 = vmatmul.mubr.f32.gmra.mrb[0].mxu0 %v2981
        %v2983 = vpop.f32.mrb[0].mxu0
        %v2984 = vadd.f32 %v1483, %v2983
        %v2985 = vpop.f32.mrb[0].mxu0
        %v2986 = vadd.f32 %v1485, %v2985
        %2987 = vmatprep.mubr.f32.mxu0 0.0
        %v2988 = vand.u32 %v647, 4294901760
        %2989 = vmatmul.mubr.f32.gmra.mrb[0].mxu0 %v2988
        %v2990 = vpop.f32.mrb[0].mxu0
        %v2991 = vadd.f32 %v1494, %v2990
        %v2992 = vpop.f32.mrb[0].mxu0
        %v2993 = vadd.f32 %v1496, %v2992
        %2994 = vmatprep.mubr.f32.mxu0 0.0
        %v2995 = vand.u32 %v650, 4294901760
        %2996 = vmatmul.mubr.f32.gmra.mrb[0].mxu0 %v2995
        %v2997 = vpop.f32.mrb[0].mxu0
        %v2998 = vadd.f32 %v1505, %v2997
        %v2999 = vpop.f32.mrb[0].mxu0
        %v3000 = vadd.f32 %v1507, %v2999
        %3001 = vmatprep.mubr.f32.mxu0 0.0
        %v3002 = vand.u32 %v653, 4294901760
        %3003 = vmatmul.mubr.f32.gmra.mrb[0].mxu0 %v3002
        %v3004 = vpop.f32.mrb[0].mxu0
        %v3005 = vadd.f32 %v1516, %v3004
        %v3006 = vpop.f32.mrb[0].mxu0
        %v3007 = vadd.f32 %v1518, %v3006
        %3008 = vmatprep.mubr.f32.mxu0 0.0
        %v3009 = vand.u32 %v656, 4294901760
        %3010 = vmatmul.mubr.f32.gmra.mrb[0].mxu0 %v3009
        %v3011 = vpop.f32.mrb[0].mxu0
        %v3012 = vadd.f32 %v1527, %v3011
        %v3013 = vpop.f32.mrb[0].mxu0
        %v3014 = vadd.f32 %v1529, %v3013
        %3015 = vmatprep.mubr.f32.mxu0 0.0
        %v3016 = vand.u32 %v659, 4294901760
        %3017 = vmatmul.mubr.f32.gmra.mrb[0].mxu0 %v3016
        %v3018 = vpop.f32.mrb[0].mxu0
        %v3019 = vadd.f32 %v1538, %v3018
        %v3020 = vpop.f32.mrb[0].mxu0
        %v3021 = vadd.f32 %v1540, %v3020
        %3022 = vmatprep.mubr.f32.mxu0 0.0
        %v3023 = vand.u32 %v662, 4294901760
        %3024 = vmatmul.mubr.f32.gmra.mrb[0].mxu0 %v3023
        %v3025 = vpop.f32.mrb[0].mxu0
        %v3026 = vadd.f32 %v1549, %v3025
        %v3027 = vpop.f32.mrb[0].mxu0
        %v3028 = vadd.f32 %v1551, %v3027
        %3029 = vmatprep.mubr.f32.mxu0 0.0
        %v3030 = vand.u32 %v665, 4294901760
        %3031 = vmatmul.mubr.f32.gmra.mrb[0].mxu0 %v3030
        %v3032 = vpop.f32.mrb[0].mxu0
        %v3033 = vadd.f32 %v1560, %v3032
        %v3034 = vpop.f32.mrb[0].mxu0
        %v3035 = vadd.f32 %v1562, %v3034
        %3036 = vmatprep.mubr.f32.mxu0 0.0
        %v3037 = vand.u32 %v668, 4294901760
        %3038 = vmatmul.mubr.f32.gmra.mrb[0].mxu0 %v3037
        %v3039 = vpop.f32.mrb[0].mxu0
        %v3040 = vadd.f32 %v1571, %v3039
        %v3041 = vpop.f32.mrb[0].mxu0
        %v3042 = vadd.f32 %v1573, %v3041
        %3043 = vmatprep.mubr.f32.mxu0 0.0
        %v3044 = vand.u32 %v671, 4294901760
        %3045 = vmatmul.mubr.f32.gmra.mrb[0].mxu0 %v3044
        %v3046 = vpop.f32.mrb[0].mxu0
        %v3047 = vadd.f32 %v1582, %v3046
        %v3048 = vpop.f32.mrb[0].mxu0
        %v3049 = vadd.f32 %v1584, %v3048
        %3050 = vmatprep.mubr.f32.mxu0 0.0
        %v3051 = vand.u32 %v674, 4294901760
        %3052 = vmatmul.mubr.f32.gmra.mrb[0].mxu0 %v3051
        %v3053 = vpop.f32.mrb[0].mxu0
        %v3054 = vadd.f32 %v1593, %v3053
        %v3055 = vpop.f32.mrb[0].mxu0
        %v3056 = vadd.f32 %v1595, %v3055
        %3057 = vmatprep.mubr.f32.mxu0 0.0
        %v3058 = vand.u32 %v677, 4294901760
        %3059 = vmatmul.mubr.f32.gmra.mrb[0].mxu0 %v3058
        %v3060 = vpop.f32.mrb[0].mxu0
        %v3061 = vadd.f32 %v1604, %v3060
        %v3062 = vpop.f32.mrb[0].mxu0
        %v3063 = vadd.f32 %v1606, %v3062
        %3064 = vmatprep.mubr.f32.mxu0 0.0
        %v3065 = vand.u32 %v680, 4294901760
        %3066 = vmatmul.mubr.f32.gmra.mrb[0].mxu0 %v3065
        %v3067 = vpop.f32.mrb[0].mxu0
        %v3068 = vadd.f32 %v1615, %v3067
        %v3069 = vpop.f32.mrb[0].mxu0
        %v3070 = vadd.f32 %v1617, %v3069
        %3071 = vmatprep.mubr.f32.mxu0 0.0
        %v3072 = vand.u32 %v683, 4294901760
        %3073 = vmatmul.mubr.f32.gmra.mrb[0].mxu0 %v3072
        %v3074 = vpop.f32.mrb[0].mxu0
        %v3075 = vadd.f32 %v1626, %v3074
        %v3076 = vpop.f32.mrb[0].mxu0
        %v3077 = vadd.f32 %v1628, %v3076
        %3078 = vmatprep.mubr.f32.mxu0 0.0
        %v3079 = vand.u32 %v686, 4294901760
        %3080 = vmatmul.mubr.f32.gmra.mrb[0].mxu0 %v3079
        %v3081 = vpop.f32.mrb[0].mxu0
        %v3082 = vadd.f32 %v1637, %v3081
        %v3083 = vpop.f32.mrb[0].mxu0
        %v3084 = vadd.f32 %v1639, %v3083
        %3085 = vmatprep.mubr.f32.mxu0 0.0
        %v3086 = vand.u32 %v689, 4294901760
        %3087 = vmatmul.mubr.f32.gmra.mrb[0].mxu0 %v3086
        %v3088 = vpop.f32.mrb[0].mxu0
        %v3089 = vadd.f32 %v1648, %v3088
        %v3090 = vpop.f32.mrb[0].mxu0
        %v3091 = vadd.f32 %v1650, %v3090
        %3092 = vmatprep.mubr.f32.mxu0 0.0
        %v3093 = vand.u32 %v692, 4294901760
        %3094 = vmatmul.mubr.f32.gmra.mrb[0].mxu0 %v3093
        %v3095 = vpop.f32.mrb[0].mxu0
        %v3096 = vadd.f32 %v1659, %v3095
        %v3097 = vpop.f32.mrb[0].mxu0
        %v3098 = vadd.f32 %v1661, %v3097
        %3099 = vmatprep.mubr.f32.mxu0 0.0
        %v3100 = vand.u32 %v695, 4294901760
        %3101 = vmatmul.mubr.f32.gmra.mrb[0].mxu0 %v3100
        %v3102 = vpop.f32.mrb[0].mxu0
        %v3103 = vadd.f32 %v1670, %v3102
        %v3104 = vpop.f32.mrb[0].mxu0
        %v3105 = vadd.f32 %v1672, %v3104
        %3106 = vmatprep.mubr.f32.mxu0 0.0
        %v3107 = vand.u32 %v698, 4294901760
        %3108 = vmatmul.mubr.f32.gmra.mrb[0].mxu0 %v3107
        %v3109 = vpop.f32.mrb[0].mxu0
        %v3110 = vadd.f32 %v1681, %v3109
        %v3111 = vpop.f32.mrb[0].mxu0
        %v3112 = vadd.f32 %v1683, %v3111
        %3113 = vmatprep.mubr.f32.mxu0 0.0
        %v3114 = vand.u32 %v701, 4294901760
        %3115 = vmatmul.mubr.f32.gmra.mrb[0].mxu0 %v3114
        %v3116 = vpop.f32.mrb[0].mxu0
        %v3117 = vadd.f32 %v1692, %v3116
        %v3118 = vpop.f32.mrb[0].mxu0
        %v3119 = vadd.f32 %v1694, %v3118
        %3120 = vmatprep.mubr.f32.mxu0 0.0
        %v3121 = vand.u32 %v704, 4294901760
        %3122 = vmatmul.mubr.f32.gmra.mrb[0].mxu0 %v3121
        %v3123 = vpop.f32.mrb[0].mxu0
        %v3124 = vadd.f32 %v1703, %v3123
        %v3125 = vpop.f32.mrb[0].mxu0
        %v3126 = vadd.f32 %v1705, %v3125
        %3127 = vmatprep.mubr.f32.mxu0 0.0
        %v3128 = vand.u32 %v707, 4294901760
        %3129 = vmatmul.mubr.f32.gmra.mrb[0].mxu0 %v3128
        %v3130 = vpop.f32.mrb[0].mxu0
        %v3131 = vadd.f32 %v1714, %v3130
        %v3132 = vpop.f32.mrb[0].mxu0
        %v3133 = vadd.f32 %v1716, %v3132
        %3134 = vmatprep.mubr.f32.mxu0 0.0
        %v3135 = vand.u32 %v710, 4294901760
        %3136 = vmatmul.mubr.f32.gmra.mrb[0].mxu0 %v3135
        %v3137 = vpop.f32.mrb[0].mxu0
        %v3138 = vadd.f32 %v1725, %v3137
        %v3139 = vpop.f32.mrb[0].mxu0
        %v3140 = vadd.f32 %v1727, %v3139
        %3141 = vmatprep.mubr.f32.mxu0 0.0
        %v3142 = vand.u32 %v713, 4294901760
        %3143 = vmatmul.mubr.f32.gmra.mrb[0].mxu0 %v3142
        %v3144 = vpop.f32.mrb[0].mxu0
        %v3145 = vadd.f32 %v1736, %v3144
        %v3146 = vpop.f32.mrb[0].mxu0
        %v3147 = vadd.f32 %v1738, %v3146
        %3148 = vmatprep.mubr.f32.mxu0 0.0
        %v3149 = vand.u32 %v716, 4294901760
        %3150 = vmatmul.mubr.f32.gmra.mrb[0].mxu0 %v3149
        %v3151 = vpop.f32.mrb[0].mxu0
        %v3152 = vadd.f32 %v1747, %v3151
        %v3153 = vpop.f32.mrb[0].mxu0
        %v3154 = vadd.f32 %v1749, %v3153
        %3155 = vmatprep.mubr.f32.mxu0 0.0
        %v3156 = vand.u32 %v719, 4294901760
        %3157 = vmatmul.mubr.f32.gmra.mrb[0].mxu0 %v3156
        %v3158 = vpop.f32.mrb[0].mxu0
        %v3159 = vadd.f32 %v1758, %v3158
        %v3160 = vpop.f32.mrb[0].mxu0
        %v3161 = vadd.f32 %v1760, %v3160
        %3162 = vmatprep.mubr.f32.mxu0 0.0
        %v3163 = vand.u32 %v722, 4294901760
        %3164 = vmatmul.mubr.f32.gmra.mrb[0].mxu0 %v3163
        %v3165 = vpop.f32.mrb[0].mxu0
        %v3166 = vadd.f32 %v1769, %v3165
        %v3167 = vpop.f32.mrb[0].mxu0
        %v3168 = vadd.f32 %v1771, %v3167
        %3169 = vmatprep.mubr.f32.mxu0 0.0
        %v3170 = vand.u32 %v725, 4294901760
        %3171 = vmatmul.mubr.f32.gmra.mrb[0].mxu0 %v3170
        %v3172 = vpop.f32.mrb[0].mxu0
        %v3173 = vadd.f32 %v1780, %v3172
        %v3174 = vpop.f32.mrb[0].mxu0
        %v3175 = vadd.f32 %v1782, %v3174
        %3176 = vmatprep.mubr.f32.mxu0 0.0
        %v3177 = vand.u32 %v728, 4294901760
        %3178 = vmatmul.mubr.f32.gmra.mrb[0].mxu0 %v3177
        %v3179 = vpop.f32.mrb[0].mxu0
        %v3180 = vadd.f32 %v1791, %v3179
        %v3181 = vpop.f32.mrb[0].mxu0
        %v3182 = vadd.f32 %v1793, %v3181
        %3183 = vmatprep.mubr.f32.mxu0 0.0
        %v3184 = vand.u32 %v731, 4294901760
        %3185 = vmatmul.mubr.f32.gmra.mrb[0].mxu0 %v3184
        %v3186 = vpop.f32.mrb[0].mxu0
        %v3187 = vadd.f32 %v1802, %v3186
        %v3188 = vpop.f32.mrb[0].mxu0
        %v3189 = vadd.f32 %v1804, %v3188
        %3190 = vmatprep.mubr.f32.mxu0 0.0
        %v3191 = vand.u32 %v734, 4294901760
        %3192 = vmatmul.mubr.f32.gmra.mrb[0].mxu0 %v3191
        %v3193 = vpop.f32.mrb[0].mxu0
        %v3194 = vadd.f32 %v1813, %v3193
        %v3195 = vpop.f32.mrb[0].mxu0
        %v3196 = vadd.f32 %v1815, %v3195
        %3197 = vmatprep.mubr.f32.mxu0 0.0
        %v3198 = vand.u32 %v737, 4294901760
        %3199 = vmatmul.mubr.f32.gmra.mrb[0].mxu0 %v3198
        %v3200 = vpop.f32.mrb[0].mxu0
        %v3201 = vadd.f32 %v1824, %v3200
        %v3202 = vpop.f32.mrb[0].mxu0
        %v3203 = vadd.f32 %v1826, %v3202
        %3204 = vmatprep.mubr.f32.mxu0 0.0
        %v3205 = vand.u32 %v740, 4294901760
        %3206 = vmatmul.mubr.f32.gmra.mrb[0].mxu0 %v3205
        %v3207 = vpop.f32.mrb[0].mxu0
        %v3208 = vadd.f32 %v1835, %v3207
        %v3209 = vpop.f32.mrb[0].mxu0
        %v3210 = vadd.f32 %v1837, %v3209
        %3211 = vmatprep.mubr.f32.mxu0 0.0
        %v3212 = vand.u32 %v743, 4294901760
        %3213 = vmatmul.mubr.f32.gmra.mrb[0].mxu0 %v3212
        %v3214 = vpop.f32.mrb[0].mxu0
        %v3215 = vadd.f32 %v1846, %v3214
        %v3216 = vpop.f32.mrb[0].mxu0
        %v3217 = vadd.f32 %v1848, %v3216
        %3218 = vmatprep.mubr.f32.mxu0 0.0
        %v3219 = vand.u32 %v746, 4294901760
        %3220 = vmatmul.mubr.f32.gmra.mrb[0].mxu0 %v3219
        %v3221 = vpop.f32.mrb[0].mxu0
        %v3222 = vadd.f32 %v1857, %v3221
        %v3223 = vpop.f32.mrb[0].mxu0
        %v3224 = vadd.f32 %v1859, %v3223
        %3225 = vmatprep.mubr.f32.mxu0 0.0
        %v3226 = vand.u32 %v749, 4294901760
        %3227 = vmatmul.mubr.f32.gmra.mrb[0].mxu0 %v3226
        %v3228 = vpop.f32.mrb[0].mxu0
        %v3229 = vadd.f32 %v1868, %v3228
        %v3230 = vpop.f32.mrb[0].mxu0
        %v3231 = vadd.f32 %v1870, %v3230
        %3232 = vmatprep.mubr.f32.mxu0 0.0
        %v3233 = vand.u32 %v752, 4294901760
        %3234 = vmatmul.mubr.f32.gmra.mrb[0].mxu0 %v3233
        %v3235 = vpop.f32.mrb[0].mxu0
        %v3236 = vadd.f32 %v1879, %v3235
        %v3237 = vpop.f32.mrb[0].mxu0
        %v3238 = vadd.f32 %v1881, %v3237
        %3239 = vmatprep.mubr.f32.mxu0 0.0
        %v3240 = vand.u32 %v755, 4294901760
        %3241 = vmatmul.mubr.f32.gmra.mrb[0].mxu0 %v3240
        %v3242 = vpop.f32.mrb[0].mxu0
        %v3243 = vadd.f32 %v1890, %v3242
        %v3244 = vpop.f32.mrb[0].mxu0
        %v3245 = vadd.f32 %v1892, %v3244
        %3246 = vmatprep.mubr.f32.mxu0 0.0
        %v3247 = vand.u32 %v758, 4294901760
        %3248 = vmatmul.mubr.f32.gmra.mrb[0].mxu0 %v3247
        %v3249 = vpop.f32.mrb[0].mxu0
        %v3250 = vadd.f32 %v1901, %v3249
        %v3251 = vpop.f32.mrb[0].mxu0
        %v3252 = vadd.f32 %v1903, %v3251
        %3253 = vmatprep.mubr.f32.mxu0 0.0
        %v3254 = vand.u32 %v761, 4294901760
        %3255 = vmatmul.mubr.f32.gmra.mrb[0].mxu0 %v3254
        %v3256 = vpop.f32.mrb[0].mxu0
        %v3257 = vadd.f32 %v1912, %v3256
        %v3258 = vpop.f32.mrb[0].mxu0
        %v3259 = vadd.f32 %v1914, %v3258
        %3260 = vmatprep.mubr.f32.mxu0 0.0
        %v3261 = vand.u32 %v764, 4294901760
        %3262 = vmatmul.mubr.f32.gmra.mrb[0].mxu0 %v3261
        %v3263 = vpop.f32.mrb[0].mxu0
        %v3264 = vadd.f32 %v1923, %v3263
        %v3265 = vpop.f32.mrb[0].mxu0
        %v3266 = vadd.f32 %v1925, %v3265
        %3267 = vmatprep.mubr.f32.mxu0 0.0
        %v3268 = vand.u32 %v767, 4294901760
        %3269 = vmatmul.mubr.f32.gmra.mrb[0].mxu0 %v3268
        %v3270 = vpop.f32.mrb[0].mxu0
        %v3271 = vadd.f32 %v1934, %v3270
        %v3272 = vpop.f32.mrb[0].mxu0
        %v3273 = vadd.f32 %v1936, %v3272
        %3274 = vmatprep.mubr.f32.mxu0 0.0
        %v3275 = vand.u32 %v770, 4294901760
        %3276 = vmatmul.mubr.f32.gmra.mrb[0].mxu0 %v3275
        %v3277 = vpop.f32.mrb[0].mxu0
        %v3278 = vadd.f32 %v1945, %v3277
        %v3279 = vpop.f32.mrb[0].mxu0
        %v3280 = vadd.f32 %v1947, %v3279
        %3281 = vmatprep.mubr.f32.mxu0 0.0
        %v3282 = vand.u32 %v773, 4294901760
        %3283 = vmatmul.mubr.f32.gmra.mrb[0].mxu0 %v3282
        %v3284 = vpop.f32.mrb[0].mxu0
        %v3285 = vadd.f32 %v1956, %v3284
        %v3286 = vpop.f32.mrb[0].mxu0
        %v3287 = vadd.f32 %v1958, %v3286
        %3288 = vmatprep.mubr.f32.mxu0 0.0
        %v3289 = vand.u32 %v776, 4294901760
        %3290 = vmatmul.mubr.f32.gmra.mrb[0].mxu0 %v3289
        %v3291 = vpop.f32.mrb[0].mxu0
        %v3292 = vadd.f32 %v1967, %v3291
        %v3293 = vpop.f32.mrb[0].mxu0
        %v3294 = vadd.f32 %v1969, %v3293
        %3295 = vmatprep.mubr.f32.mxu0 0.0
        %v3296 = vand.u32 %v779, 4294901760
        %3297 = vmatmul.mubr.f32.gmra.mrb[0].mxu0 %v3296
        %v3298 = vpop.f32.mrb[0].mxu0
        %v3299 = vadd.f32 %v1978, %v3298
        %v3300 = vpop.f32.mrb[0].mxu0
        %v3301 = vadd.f32 %v1980, %v3300
        %3302 = vmatprep.mubr.f32.mxu0 0.0
        %v3303 = vand.u32 %v782, 4294901760
        %3304 = vmatmul.mubr.f32.gmra.mrb[0].mxu0 %v3303
        %v3305 = vpop.f32.mrb[0].mxu0
        %v3306 = vadd.f32 %v1989, %v3305
        %v3307 = vpop.f32.mrb[0].mxu0
        %v3308 = vadd.f32 %v1991, %v3307
        %3309 = vmatprep.mubr.f32.mxu0 0.0
        %v3310 = vand.u32 %v785, 4294901760
        %3311 = vmatmul.mubr.f32.gmra.mrb[0].mxu0 %v3310
        %v3312 = vpop.f32.mrb[0].mxu0
        %v3313 = vadd.f32 %v2000, %v3312
        %v3314 = vpop.f32.mrb[0].mxu0
        %v3315 = vadd.f32 %v2002, %v3314
        %3316 = vmatprep.mubr.f32.mxu0 0.0
        %v3317 = vand.u32 %v788, 4294901760
        %3318 = vmatmul.mubr.f32.gmra.mrb[0].mxu0 %v3317
        %v3319 = vpop.f32.mrb[0].mxu0
        %v3320 = vadd.f32 %v2011, %v3319
        %v3321 = vpop.f32.mrb[0].mxu0
        %v3322 = vadd.f32 %v2013, %v3321
        %3323 = vmatprep.mubr.f32.mxu0 0.0
        %v3324 = vand.u32 %v791, 4294901760
        %3325 = vmatmul.mubr.f32.gmra.mrb[0].mxu0 %v3324
        %v3326 = vpop.f32.mrb[0].mxu0
        %v3327 = vadd.f32 %v2022, %v3326
        %v3328 = vpop.f32.mrb[0].mxu0
        %v3329 = vadd.f32 %v2024, %v3328
        %3330 = vmatprep.mubr.f32.mxu0 0.0
        %v3331 = vand.u32 %v794, 4294901760
        %3332 = vmatmul.mubr.f32.gmra.mrb[0].mxu0 %v3331
        %v3333 = vpop.f32.mrb[0].mxu0
        %v3334 = vadd.f32 %v2033, %v3333
        %v3335 = vpop.f32.mrb[0].mxu0
        %v3336 = vadd.f32 %v2035, %v3335
        %3337 = vmatprep.mubr.f32.mxu0 0.0
        %v3338 = vand.u32 %v797, 4294901760
        %3339 = vmatmul.mubr.f32.gmra.mrb[0].mxu0 %v3338
        %v3340 = vpop.f32.mrb[0].mxu0
        %v3341 = vadd.f32 %v2044, %v3340
        %v3342 = vpop.f32.mrb[0].mxu0
        %v3343 = vadd.f32 %v2046, %v3342
        %3344 = vmatprep.mubr.f32.mxu0 0.0
        %v3345 = vand.u32 %v800, 4294901760
        %3346 = vmatmul.mubr.f32.gmra.mrb[0].mxu0 %v3345
        %v3347 = vpop.f32.mrb[0].mxu0
        %v3348 = vadd.f32 %v2055, %v3347
        %v3349 = vpop.f32.mrb[0].mxu0
        %v3350 = vadd.f32 %v2057, %v3349
        %3351 = vmatprep.mubr.f32.mxu0 0.0
        %v3352 = vand.u32 %v803, 4294901760
        %3353 = vmatmul.mubr.f32.gmra.mrb[0].mxu0 %v3352
        %v3354 = vpop.f32.mrb[0].mxu0
        %v3355 = vadd.f32 %v2066, %v3354
        %v3356 = vpop.f32.mrb[0].mxu0
        %v3357 = vadd.f32 %v2068, %v3356
        %3358 = vmatprep.mubr.f32.mxu0 0.0
        %v3359 = vand.u32 %v806, 4294901760
        %3360 = vmatmul.mubr.f32.gmra.mrb[0].mxu0 %v3359
        %v3361 = vpop.f32.mrb[0].mxu0
        %v3362 = vadd.f32 %v2077, %v3361
        %v3363 = vpop.f32.mrb[0].mxu0
        %v3364 = vadd.f32 %v2079, %v3363
        %3365 = vmatprep.mubr.f32.mxu0 0.0
        %v3366 = vand.u32 %v809, 4294901760
        %3367 = vmatmul.mubr.f32.gmra.mrb[0].mxu0 %v3366
        %v3368 = vpop.f32.mrb[0].mxu0
        %v3369 = vadd.f32 %v2088, %v3368
        %v3370 = vpop.f32.mrb[0].mxu0
        %v3371 = vadd.f32 %v2090, %v3370
        %3372 = vmatprep.mubr.f32.mxu0 0.0
        %v3373 = vand.u32 %v812, 4294901760
        %3374 = vmatmul.mubr.f32.gmra.mrb[0].mxu0 %v3373
        %v3375 = vpop.f32.mrb[0].mxu0
        %v3376 = vadd.f32 %v2099, %v3375
        %v3377 = vpop.f32.mrb[0].mxu0
        %v3378 = vadd.f32 %v2101, %v3377
        %3379 = vmatprep.mubr.f32.mxu0 0.0
        %v3380 = vand.u32 %v815, 4294901760
        %3381 = vmatmul.mubr.f32.gmra.mrb[0].mxu0 %v3380
        %v3382 = vpop.f32.mrb[0].mxu0
        %v3383 = vadd.f32 %v2110, %v3382
        %v3384 = vpop.f32.mrb[0].mxu0
        %v3385 = vadd.f32 %v2112, %v3384
        %3386 = vmatprep.mubr.f32.mxu0 0.0
        %v3387 = vand.u32 %v818, 4294901760
        %3388 = vmatmul.mubr.f32.gmra.mrb[0].mxu0 %v3387
        %v3389 = vpop.f32.mrb[0].mxu0
        %v3390 = vadd.f32 %v2121, %v3389
        %v3391 = vpop.f32.mrb[0].mxu0
        %v3392 = vadd.f32 %v2123, %v3391
        %3393 = vmatprep.mubr.f32.mxu0 0.0
        %v3394 = vand.u32 %v821, 4294901760
        %3395 = vmatmul.mubr.f32.gmra.mrb[0].mxu0 %v3394
        %v3396 = vpop.f32.mrb[0].mxu0
        %v3397 = vadd.f32 %v2132, %v3396
        %v3398 = vpop.f32.mrb[0].mxu0
        %v3399 = vadd.f32 %v2134, %v3398
        %3400 = vmatprep.mubr.f32.mxu0 0.0
        %v3401 = vand.u32 %v824, 4294901760
        %3402 = vmatmul.mubr.f32.gmra.mrb[0].mxu0 %v3401
        %v3403 = vpop.f32.mrb[0].mxu0
        %v3404 = vadd.f32 %v2143, %v3403
        %v3405 = vpop.f32.mrb[0].mxu0
        %v3406 = vadd.f32 %v2145, %v3405
        %3407 = vmatprep.mubr.f32.mxu0 0.0
        %v3408 = vand.u32 %v827, 4294901760
        %3409 = vmatmul.mubr.f32.gmra.mrb[0].mxu0 %v3408
        %v3410 = vpop.f32.mrb[0].mxu0
        %v3411 = vadd.f32 %v2154, %v3410
        %v3412 = vpop.f32.mrb[0].mxu0
        %v3413 = vadd.f32 %v2156, %v3412
        %3414 = vmatprep.mubr.f32.mxu0 0.0
        %v3415 = vand.u32 %v830, 4294901760
        %3416 = vmatmul.mubr.f32.gmra.mrb[0].mxu0 %v3415
        %v3417 = vpop.f32.mrb[0].mxu0
        %v3418 = vadd.f32 %v2165, %v3417
        %v3419 = vpop.f32.mrb[0].mxu0
        %v3420 = vadd.f32 %v2167, %v3419
        %3421 = vmatprep.mubr.f32.mxu0 0.0
        %v3422 = vand.u32 %v833, 4294901760
        %3423 = vmatmul.mubr.f32.gmra.mrb[0].mxu0 %v3422
        %v3424 = vpop.f32.mrb[0].mxu0
        %v3425 = vadd.f32 %v2176, %v3424
        %v3426 = vpop.f32.mrb[0].mxu0
        %v3427 = vadd.f32 %v2178, %v3426
        %3428 = vmatprep.mubr.f32.mxu0 0.0
        %v3429 = vand.u32 %v836, 4294901760
        %3430 = vmatmul.mubr.f32.gmra.mrb[0].mxu0 %v3429
        %v3431 = vpop.f32.mrb[0].mxu0
        %v3432 = vadd.f32 %v2187, %v3431
        %v3433 = vpop.f32.mrb[0].mxu0
        %v3434 = vadd.f32 %v2189, %v3433
        %3435 = vmatprep.mubr.f32.mxu0 0.0
        %v3436 = vand.u32 %v839, 4294901760
        %3437 = vmatmul.mubr.f32.gmra.mrb[0].mxu0 %v3436
        %v3438 = vpop.f32.mrb[0].mxu0
        %v3439 = vadd.f32 %v2198, %v3438
        %v3440 = vpop.f32.mrb[0].mxu0
        %v3441 = vadd.f32 %v2200, %v3440
        %3442 = vmatprep.mubr.f32.mxu0 0.0
        %v3443 = vand.u32 %v842, 4294901760
        %3444 = vmatmul.mubr.f32.gmra.mrb[0].mxu0 %v3443
        %v3445 = vpop.f32.mrb[0].mxu0
        %v3446 = vadd.f32 %v2209, %v3445
        %v3447 = vpop.f32.mrb[0].mxu0
        %v3448 = vadd.f32 %v2211, %v3447
        %3449 = vmatprep.mubr.f32.mxu0 0.0
        %v3450 = vand.u32 %v845, 4294901760
        %3451 = vmatmul.mubr.f32.gmra.mrb[0].mxu0 %v3450
        %v3452 = vpop.f32.mrb[0].mxu0
        %v3453 = vadd.f32 %v2220, %v3452
        %v3454 = vpop.f32.mrb[0].mxu0
        %v3455 = vadd.f32 %v2222, %v3454
        %3456 = vmatprep.mubr.f32.mxu0 0.0
        %v3457 = vand.u32 %v848, 4294901760
        %3458 = vmatmul.mubr.f32.gmra.mrb[0].mxu0 %v3457
        %v3459 = vpop.f32.mrb[0].mxu0
        %v3460 = vadd.f32 %v2231, %v3459
        %v3461 = vpop.f32.mrb[0].mxu0
        %v3462 = vadd.f32 %v2233, %v3461
        %3463 = vmatprep.mubr.f32.mxu0 0.0
        %v3464 = vand.u32 %v851, 4294901760
        %3465 = vmatmul.mubr.f32.gmra.mrb[0].mxu0 %v3464
        %v3466 = vpop.f32.mrb[0].mxu0
        %v3467 = vadd.f32 %v2242, %v3466
        %v3468 = vpop.f32.mrb[0].mxu0
        %v3469 = vadd.f32 %v2244, %v3468
        %3470 = vmatprep.mubr.f32.mxu0 0.0
        %v3471 = vand.u32 %v854, 4294901760
        %3472 = vmatmul.mubr.f32.gmra.mrb[0].mxu0 %v3471
        %v3473 = vpop.f32.mrb[0].mxu0
        %v3474 = vadd.f32 %v2253, %v3473
        %v3475 = vpop.f32.mrb[0].mxu0
        %v3476 = vadd.f32 %v2255, %v3475
        %3477 = vmatprep.mubr.f32.mxu0 0.0
        %v3478 = vand.u32 %v857, 4294901760
        %3479 = vmatmul.mubr.f32.gmra.mrb[0].mxu0 %v3478
        %v3480 = vpop.f32.mrb[0].mxu0
        %v3481 = vadd.f32 %v2264, %v3480
        %v3482 = vpop.f32.mrb[0].mxu0
        %v3483 = vadd.f32 %v2266, %v3482
        %3484 = vmatprep.mubr.f32.mxu0 0.0
        %v3485 = vand.u32 %v860, 4294901760
        %3486 = vmatmul.mubr.f32.gmra.mrb[0].mxu0 %v3485
        %v3487 = vpop.f32.mrb[0].mxu0
        %v3488 = vadd.f32 %v2275, %v3487
        %v3489 = vpop.f32.mrb[0].mxu0
        %v3490 = vadd.f32 %v2277, %v3489
        %3491 = vmatprep.mubr.f32.mxu0 0.0
        %v3492 = vand.u32 %v863, 4294901760
        %3493 = vmatmul.mubr.f32.gmra.mrb[0].mxu0 %v3492
        %v3494 = vpop.f32.mrb[0].mxu0
        %v3495 = vadd.f32 %v2286, %v3494
        %v3496 = vpop.f32.mrb[0].mxu0
        %v3497 = vadd.f32 %v2288, %v3496
        %3498 = vmatprep.mubr.f32.mxu0 0.0
        %v3499 = vand.u32 %v866, 4294901760
        %3500 = vmatmul.mubr.f32.gmra.mrb[0].mxu0 %v3499
        %v3501 = vpop.f32.mrb[0].mxu0
        %v3502 = vadd.f32 %v2297, %v3501
        %v3503 = vpop.f32.mrb[0].mxu0
        %v3504 = vadd.f32 %v2299, %v3503
        %3505 = vmatprep.mubr.f32.mxu0 0.0
        %v3506 = vand.u32 %v869, 4294901760
        %3507 = vmatmul.mubr.f32.gmra.mrb[0].mxu0 %v3506
        %v3508 = vpop.f32.mrb[0].mxu0
        %v3509 = vadd.f32 %v2308, %v3508
        %v3510 = vpop.f32.mrb[0].mxu0
        %v3511 = vadd.f32 %v2310, %v3510
        %3512 = vmatprep.mubr.f32.mxu0 0.0
        %v3513 = vand.u32 %v872, 4294901760
        %3514 = vmatmul.mubr.f32.gmra.mrb[0].mxu0 %v3513
        %v3515 = vpop.f32.mrb[0].mxu0
        %v3516 = vadd.f32 %v2319, %v3515
        %v3517 = vpop.f32.mrb[0].mxu0
        %v3518 = vadd.f32 %v2321, %v3517
        %3519 = vmatprep.mubr.f32.mxu0 0.0
        %v3520 = vand.u32 %v875, 4294901760
        %3521 = vmatmul.mubr.f32.gmra.mrb[0].mxu0 %v3520
        %v3522 = vpop.f32.mrb[0].mxu0
        %v3523 = vadd.f32 %v2330, %v3522
        %v3524 = vpop.f32.mrb[0].mxu0
        %v3525 = vadd.f32 %v2332, %v3524
        %3526 = vmatprep.mubr.f32.mxu0 0.0
        %v3527 = vand.u32 %v878, 4294901760
        %3528 = vmatmul.mubr.f32.gmra.mrb[0].mxu0 %v3527
        %v3529 = vpop.f32.mrb[0].mxu0
        %v3530 = vadd.f32 %v2341, %v3529
        %v3531 = vpop.f32.mrb[0].mxu0
        %v3532 = vadd.f32 %v2343, %v3531
        %3533 = vmatprep.mubr.f32.mxu0 0.0
        %v3534 = vand.u32 %v881, 4294901760
        %3535 = vmatmul.mubr.f32.gmra.mrb[0].mxu0 %v3534
        %v3536 = vpop.f32.mrb[0].mxu0
        %v3537 = vadd.f32 %v2352, %v3536
        %v3538 = vpop.f32.mrb[0].mxu0
        %v3539 = vadd.f32 %v2354, %v3538
        %3540 = vmatprep.mubr.f32.mxu0 0.0
        %v3541 = vand.u32 %v884, 4294901760
        %3542 = vmatmul.mubr.f32.gmra.mrb[0].mxu0 %v3541
        %v3543 = vpop.f32.mrb[0].mxu0
        %v3544 = vadd.f32 %v2363, %v3543
        %v3545 = vpop.f32.mrb[0].mxu0
        %v3546 = vadd.f32 %v2365, %v3545
        %3547 = vmatprep.mubr.f32.mxu0 0.0
        %v3548 = vand.u32 %v887, 4294901760
        %3549 = vmatmul.mubr.f32.gmra.mrb[0].mxu0 %v3548
        %v3550 = vpop.f32.mrb[0].mxu0
        %v3551 = vadd.f32 %v2374, %v3550
        %v3552 = vpop.f32.mrb[0].mxu0
        %v3553 = vadd.f32 %v2376, %v3552
        %3554 = vmatprep.mubr.f32.mxu0 0.0
        %v3555 = vand.u32 %v890, 4294901760
        %3556 = vmatmul.mubr.f32.gmra.mrb[0].mxu0 %v3555
        %v3557 = vpop.f32.mrb[0].mxu0
        %v3558 = vadd.f32 %v2385, %v3557
        %v3559 = vpop.f32.mrb[0].mxu0
        %v3560 = vadd.f32 %v2387, %v3559
        %3561 = vmatprep.mubr.f32.mxu0 0.0
        %v3562 = vand.u32 %v893, 4294901760
        %3563 = vmatmul.mubr.f32.gmra.mrb[0].mxu0 %v3562
        %v3564 = vpop.f32.mrb[0].mxu0
        %v3565 = vadd.f32 %v2396, %v3564
        %v3566 = vpop.f32.mrb[0].mxu0
        %v3567 = vadd.f32 %v2398, %v3566
        %3568 = vmatprep.mubr.f32.mxu0 0.0
        %v3569 = vand.u32 %v896, 4294901760
        %3570 = vmatmul.mubr.f32.gmra.mrb[0].mxu0 %v3569
        %v3571 = vpop.f32.mrb[0].mxu0
        %v3572 = vadd.f32 %v2407, %v3571
        %v3573 = vpop.f32.mrb[0].mxu0
        %v3574 = vadd.f32 %v2409, %v3573
        %3575 = vmatprep.mubr.f32.mxu0 0.0
        %v3576 = vand.u32 %v899, 4294901760
        %3577 = vmatmul.mubr.f32.gmra.mrb[0].mxu0 %v3576
        %v3578 = vpop.f32.mrb[0].mxu0
        %v3579 = vadd.f32 %v2418, %v3578
        %v3580 = vpop.f32.mrb[0].mxu0
        %v3581 = vadd.f32 %v2420, %v3580
        %3582 = vmatprep.mubr.f32.mxu0 0.0
        %v3583 = vand.u32 %v902, 4294901760
        %3584 = vmatmul.mubr.f32.gmra.mrb[0].mxu0 %v3583
        %v3585 = vpop.f32.mrb[0].mxu0
        %v3586 = vadd.f32 %v2429, %v3585
        %v3587 = vpop.f32.mrb[0].mxu0
        %v3588 = vadd.f32 %v2431, %v3587
        %3589 = vmatprep.mubr.f32.mxu0 0.0
        %v3590 = vand.u32 %v905, 4294901760
        %3591 = vmatmul.mubr.f32.gmra.mrb[0].mxu0 %v3590
        %v3592 = vpop.f32.mrb[0].mxu0
        %v3593 = vadd.f32 %v2440, %v3592
        %v3594 = vpop.f32.mrb[0].mxu0
        %v3595 = vadd.f32 %v2442, %v3594
        %3596 = vmatprep.mubr.f32.mxu0 0.0
        %v3597 = vand.u32 %v908, 4294901760
        %3598 = vmatmul.mubr.f32.gmra.mrb[0].mxu0 %v3597
        %v3599 = vpop.f32.mrb[0].mxu0
        %v3600 = vadd.f32 %v2451, %v3599
        %v3601 = vpop.f32.mrb[0].mxu0
        %v3602 = vadd.f32 %v2453, %v3601
        %3603 = vmatprep.mubr.f32.mxu0 0.0
        %v3604 = vand.u32 %v911, 4294901760
        %3605 = vmatmul.mubr.f32.gmra.mrb[0].mxu0 %v3604
        %v3606 = vpop.f32.mrb[0].mxu0
        %v3607 = vadd.f32 %v2462, %v3606
        %v3608 = vpop.f32.mrb[0].mxu0
        %v3609 = vadd.f32 %v2464, %v3608
        %3610 = vmatprep.mubr.f32.mxu0 0.0
        %v3611 = vand.u32 %v914, 4294901760
        %3612 = vmatmul.mubr.f32.gmra.mrb[0].mxu0 %v3611
        %v3613 = vpop.f32.mrb[0].mxu0
        %v3614 = vadd.f32 %v2473, %v3613
        %v3615 = vpop.f32.mrb[0].mxu0
        %v3616 = vadd.f32 %v2475, %v3615
        %3617 = vmatprep.mubr.f32.mxu0 0.0
        %v3618 = vand.u32 %v917, 4294901760
        %3619 = vmatmul.mubr.f32.gmra.mrb[0].mxu0 %v3618
        %v3620 = vpop.f32.mrb[0].mxu0
        %v3621 = vadd.f32 %v2484, %v3620
        %v3622 = vpop.f32.mrb[0].mxu0
        %v3623 = vadd.f32 %v2486, %v3622
        %3624 = vmatprep.mubr.f32.mxu0 0.0
        %v3625 = vand.u32 %v920, 4294901760
        %3626 = vmatmul.mubr.f32.gmra.mrb[0].mxu0 %v3625
        %v3627 = vpop.f32.mrb[0].mxu0
        %v3628 = vadd.f32 %v2495, %v3627
        %v3629 = vpop.f32.mrb[0].mxu0
        %v3630 = vadd.f32 %v2497, %v3629
        %3631 = vmatprep.mubr.f32.mxu0 0.0
        %v3632 = vand.u32 %v923, 4294901760
        %3633 = vmatmul.mubr.f32.gmra.mrb[0].mxu0 %v3632
        %v3634 = vpop.f32.mrb[0].mxu0
        %v3635 = vadd.f32 %v2506, %v3634
        %v3636 = vpop.f32.mrb[0].mxu0
        %v3637 = vadd.f32 %v2508, %v3636
        %3638 = vmatprep.mubr.f32.mxu0 0.0
        %v3639 = vand.u32 %v926, 4294901760
        %3640 = vmatmul.mubr.f32.gmra.mrb[0].mxu0 %v3639
        %v3641 = vpop.f32.mrb[0].mxu0
        %v3642 = vadd.f32 %v2517, %v3641
        %v3643 = vpop.f32.mrb[0].mxu0
        %v3644 = vadd.f32 %v2519, %v3643
        %3645 = vmatprep.mubr.f32.mxu0 0.0
        %v3646 = vand.u32 %v929, 4294901760
        %3647 = vmatmul.mubr.f32.gmra.mrb[0].mxu0 %v3646
        %v3648 = vpop.f32.mrb[0].mxu0
        %v3649 = vadd.f32 %v2528, %v3648
        %v3650 = vpop.f32.mrb[0].mxu0
        %v3651 = vadd.f32 %v2530, %v3650
        %3652 = vdwg.mxu0
        %3653 = vmatprep.subr.mxu0 0.0
        %v3654 = vand.u32 %v932, 4294901760
        %v3655 = vsub.f32 %v932, %v3654
        %3656 = vmatpush1.xpose.msra.mxu0 %v3655
        %3657 = vmatprep.subr.mxu0 0.0
        %v3658 = vand.u32 %v935, 4294901760
        %v3659 = vsub.f32 %v935, %v3658
        %3660 = vmatpush1.xpose.msra.mxu0 %v3659
        %3661 = vmatprep.subr.mxu0 0.0
        %v3662 = vand.u32 %v938, 4294901760
        %v3663 = vsub.f32 %v938, %v3662
        %3664 = vmatpush1.xpose.msra.mxu0 %v3663
        %3665 = vmatprep.subr.mxu0 0.0
        %v3666 = vand.u32 %v941, 4294901760
        %v3667 = vsub.f32 %v941, %v3666
        %3668 = vmatpush1.xpose.msra.mxu0 %v3667
        %3669 = vmatprep.subr.mxu0 0.0
        %v3670 = vand.u32 %v944, 4294901760
        %v3671 = vsub.f32 %v944, %v3670
        %3672 = vmatpush1.xpose.msra.mxu0 %v3671
        %3673 = vmatprep.subr.mxu0 0.0
        %v3674 = vand.u32 %v947, 4294901760
        %v3675 = vsub.f32 %v947, %v3674
        %3676 = vmatpush1.xpose.msra.mxu0 %v3675
        %3677 = vmatprep.subr.mxu0 0.0
        %v3678 = vand.u32 %v950, 4294901760
        %v3679 = vsub.f32 %v950, %v3678
        %3680 = vmatpush1.xpose.msra.mxu0 %v3679
        %3681 = vmatprep.subr.mxu0 0.0
        %v3682 = vand.u32 %v953, 4294901760
        %v3683 = vsub.f32 %v953, %v3682
        %3684 = vmatpush1.xpose.msra.mxu0 %v3683
        %3685 = vmatprep.subr.mxu0 0.0
        %v3686 = vand.u32 %v956, 4294901760
        %v3687 = vsub.f32 %v956, %v3686
        %3688 = vmatpush1.xpose.msra.mxu0 %v3687
        %3689 = vmatprep.subr.mxu0 0.0
        %v3690 = vand.u32 %v959, 4294901760
        %v3691 = vsub.f32 %v959, %v3690
        %3692 = vmatpush1.xpose.msra.mxu0 %v3691
        %3693 = vmatprep.subr.mxu0 0.0
        %v3694 = vand.u32 %v962, 4294901760
        %v3695 = vsub.f32 %v962, %v3694
        %3696 = vmatpush1.xpose.msra.mxu0 %v3695
        %3697 = vmatprep.subr.mxu0 0.0
        %v3698 = vand.u32 %v965, 4294901760
        %v3699 = vsub.f32 %v965, %v3698
        %3700 = vmatpush1.xpose.msra.mxu0 %v3699
        %3701 = vmatprep.subr.mxu0 0.0
        %v3702 = vand.u32 %v968, 4294901760
        %v3703 = vsub.f32 %v968, %v3702
        %3704 = vmatpush1.xpose.msra.mxu0 %v3703
        %3705 = vmatprep.subr.mxu0 0.0
        %v3706 = vand.u32 %v971, 4294901760
        %v3707 = vsub.f32 %v971, %v3706
        %3708 = vmatpush1.xpose.msra.mxu0 %v3707
        %3709 = vmatprep.subr.mxu0 0.0
        %v3710 = vand.u32 %v974, 4294901760
        %v3711 = vsub.f32 %v974, %v3710
        %3712 = vmatpush1.xpose.msra.mxu0 %v3711
        %3713 = vmatprep.subr.mxu0 0.0
        %v3714 = vand.u32 %v977, 4294901760
        %v3715 = vsub.f32 %v977, %v3714
        %3716 = vmatpush1.xpose.msra.mxu0 %v3715
        %3717 = vmatprep.subr.mxu0 0.0
        %v3718 = vand.u32 %v980, 4294901760
        %v3719 = vsub.f32 %v980, %v3718
        %3720 = vmatpush1.xpose.msra.mxu0 %v3719
        %3721 = vmatprep.subr.mxu0 0.0
        %v3722 = vand.u32 %v983, 4294901760
        %v3723 = vsub.f32 %v983, %v3722
        %3724 = vmatpush1.xpose.msra.mxu0 %v3723
        %3725 = vmatprep.subr.mxu0 0.0
        %v3726 = vand.u32 %v986, 4294901760
        %v3727 = vsub.f32 %v986, %v3726
        %3728 = vmatpush1.xpose.msra.mxu0 %v3727
        %3729 = vmatprep.subr.mxu0 0.0
        %v3730 = vand.u32 %v989, 4294901760
        %v3731 = vsub.f32 %v989, %v3730
        %3732 = vmatpush1.xpose.msra.mxu0 %v3731
        %3733 = vmatprep.subr.mxu0 0.0
        %v3734 = vand.u32 %v992, 4294901760
        %v3735 = vsub.f32 %v992, %v3734
        %3736 = vmatpush1.xpose.msra.mxu0 %v3735
        %3737 = vmatprep.subr.mxu0 0.0
        %v3738 = vand.u32 %v995, 4294901760
        %v3739 = vsub.f32 %v995, %v3738
        %3740 = vmatpush1.xpose.msra.mxu0 %v3739
        %3741 = vmatprep.subr.mxu0 0.0
        %v3742 = vand.u32 %v998, 4294901760
        %v3743 = vsub.f32 %v998, %v3742
        %3744 = vmatpush1.xpose.msra.mxu0 %v3743
        %3745 = vmatprep.subr.mxu0 0.0
        %v3746 = vand.u32 %v1001, 4294901760
        %v3747 = vsub.f32 %v1001, %v3746
        %3748 = vmatpush1.xpose.msra.mxu0 %v3747
        %3749 = vmatprep.subr.mxu0 0.0
        %v3750 = vand.u32 %v1004, 4294901760
        %v3751 = vsub.f32 %v1004, %v3750
        %3752 = vmatpush1.xpose.msra.mxu0 %v3751
        %3753 = vmatprep.subr.mxu0 0.0
        %v3754 = vand.u32 %v1007, 4294901760
        %v3755 = vsub.f32 %v1007, %v3754
        %3756 = vmatpush1.xpose.msra.mxu0 %v3755
        %3757 = vmatprep.subr.mxu0 0.0
        %v3758 = vand.u32 %v1010, 4294901760
        %v3759 = vsub.f32 %v1010, %v3758
        %3760 = vmatpush1.xpose.msra.mxu0 %v3759
        %3761 = vmatprep.subr.mxu0 0.0
        %v3762 = vand.u32 %v1013, 4294901760
        %v3763 = vsub.f32 %v1013, %v3762
        %3764 = vmatpush1.xpose.msra.mxu0 %v3763
        %3765 = vmatprep.subr.mxu0 0.0
        %v3766 = vand.u32 %v1016, 4294901760
        %v3767 = vsub.f32 %v1016, %v3766
        %3768 = vmatpush1.xpose.msra.mxu0 %v3767
        %3769 = vmatprep.subr.mxu0 0.0
        %v3770 = vand.u32 %v1019, 4294901760
        %v3771 = vsub.f32 %v1019, %v3770
        %3772 = vmatpush1.xpose.msra.mxu0 %v3771
        %3773 = vmatprep.subr.mxu0 0.0
        %v3774 = vand.u32 %v1022, 4294901760
        %v3775 = vsub.f32 %v1022, %v3774
        %3776 = vmatpush1.xpose.msra.mxu0 %v3775
        %3777 = vmatprep.subr.mxu0 0.0
        %v3778 = vand.u32 %v1025, 4294901760
        %v3779 = vsub.f32 %v1025, %v3778
        %3780 = vmatpush1.xpose.msra.mxu0 %v3779
        %3781 = vmatprep.mubr.f32.mxu0 0.0
        %v3782 = vand.u32 %v548, 4294901760
        %v3783 = vsub.f32 %v548, %v3782
        %3784 = vmatmul.mubr.f32.gmra.mrb[0].mxu0 %v3783
        %v3785 = vpop.f32.mrb[0].mxu0
        %v3786 = vadd.f32 %v2760, %v3785
        %v3787 = vpop.f32.mrb[0].mxu0
        %v3788 = vadd.f32 %v2762, %v3787
        %3789 = vmatprep.mubr.f32.mxu0 0.0
        %v3790 = vand.u32 %v551, 4294901760
        %v3791 = vsub.f32 %v551, %v3790
        %3792 = vmatmul.mubr.f32.gmra.mrb[0].mxu0 %v3791
        %v3793 = vpop.f32.mrb[0].mxu0
        %v3794 = vadd.f32 %v2767, %v3793
        %v3795 = vpop.f32.mrb[0].mxu0
        %v3796 = vadd.f32 %v2769, %v3795
        %3797 = vmatprep.mubr.f32.mxu0 0.0
        %v3798 = vand.u32 %v554, 4294901760
        %v3799 = vsub.f32 %v554, %v3798
        %3800 = vmatmul.mubr.f32.gmra.mrb[0].mxu0 %v3799
        %v3801 = vpop.f32.mrb[0].mxu0
        %v3802 = vadd.f32 %v2774, %v3801
        %v3803 = vpop.f32.mrb[0].mxu0
        %v3804 = vadd.f32 %v2776, %v3803
        %3805 = vmatprep.mubr.f32.mxu0 0.0
        %v3806 = vand.u32 %v557, 4294901760
        %v3807 = vsub.f32 %v557, %v3806
        %3808 = vmatmul.mubr.f32.gmra.mrb[0].mxu0 %v3807
        %v3809 = vpop.f32.mrb[0].mxu0
        %v3810 = vadd.f32 %v2781, %v3809
        %v3811 = vpop.f32.mrb[0].mxu0
        %v3812 = vadd.f32 %v2783, %v3811
        %3813 = vmatprep.mubr.f32.mxu0 0.0
        %v3814 = vand.u32 %v560, 4294901760
        %v3815 = vsub.f32 %v560, %v3814
        %3816 = vmatmul.mubr.f32.gmra.mrb[0].mxu0 %v3815
        %v3817 = vpop.f32.mrb[0].mxu0
        %v3818 = vadd.f32 %v2788, %v3817
        %v3819 = vpop.f32.mrb[0].mxu0
        %v3820 = vadd.f32 %v2790, %v3819
        %3821 = vmatprep.mubr.f32.mxu0 0.0
        %v3822 = vand.u32 %v563, 4294901760
        %v3823 = vsub.f32 %v563, %v3822
        %3824 = vmatmul.mubr.f32.gmra.mrb[0].mxu0 %v3823
        %v3825 = vpop.f32.mrb[0].mxu0
        %v3826 = vadd.f32 %v2795, %v3825
        %v3827 = vpop.f32.mrb[0].mxu0
        %v3828 = vadd.f32 %v2797, %v3827
        %3829 = vmatprep.mubr.f32.mxu0 0.0
        %v3830 = vand.u32 %v566, 4294901760
        %v3831 = vsub.f32 %v566, %v3830
        %3832 = vmatmul.mubr.f32.gmra.mrb[0].mxu0 %v3831
        %v3833 = vpop.f32.mrb[0].mxu0
        %v3834 = vadd.f32 %v2802, %v3833
        %v3835 = vpop.f32.mrb[0].mxu0
        %v3836 = vadd.f32 %v2804, %v3835
        %3837 = vmatprep.mubr.f32.mxu0 0.0
        %v3838 = vand.u32 %v569, 4294901760
        %v3839 = vsub.f32 %v569, %v3838
        %3840 = vmatmul.mubr.f32.gmra.mrb[0].mxu0 %v3839
        %v3841 = vpop.f32.mrb[0].mxu0
        %v3842 = vadd.f32 %v2809, %v3841
        %v3843 = vpop.f32.mrb[0].mxu0
        %v3844 = vadd.f32 %v2811, %v3843
        %3845 = vmatprep.mubr.f32.mxu0 0.0
        %v3846 = vand.u32 %v572, 4294901760
        %v3847 = vsub.f32 %v572, %v3846
        %3848 = vmatmul.mubr.f32.gmra.mrb[0].mxu0 %v3847
        %v3849 = vpop.f32.mrb[0].mxu0
        %v3850 = vadd.f32 %v2816, %v3849
        %v3851 = vpop.f32.mrb[0].mxu0
        %v3852 = vadd.f32 %v2818, %v3851
        %3853 = vmatprep.mubr.f32.mxu0 0.0
        %v3854 = vand.u32 %v575, 4294901760
        %v3855 = vsub.f32 %v575, %v3854
        %3856 = vmatmul.mubr.f32.gmra.mrb[0].mxu0 %v3855
        %v3857 = vpop.f32.mrb[0].mxu0
        %v3858 = vadd.f32 %v2823, %v3857
        %v3859 = vpop.f32.mrb[0].mxu0
        %v3860 = vadd.f32 %v2825, %v3859
        %3861 = vmatprep.mubr.f32.mxu0 0.0
        %v3862 = vand.u32 %v578, 4294901760
        %v3863 = vsub.f32 %v578, %v3862
        %3864 = vmatmul.mubr.f32.gmra.mrb[0].mxu0 %v3863
        %v3865 = vpop.f32.mrb[0].mxu0
        %v3866 = vadd.f32 %v2830, %v3865
        %v3867 = vpop.f32.mrb[0].mxu0
        %v3868 = vadd.f32 %v2832, %v3867
        %3869 = vmatprep.mubr.f32.mxu0 0.0
        %v3870 = vand.u32 %v581, 4294901760
        %v3871 = vsub.f32 %v581, %v3870
        %3872 = vmatmul.mubr.f32.gmra.mrb[0].mxu0 %v3871
        %v3873 = vpop.f32.mrb[0].mxu0
        %v3874 = vadd.f32 %v2837, %v3873
        %v3875 = vpop.f32.mrb[0].mxu0
        %v3876 = vadd.f32 %v2839, %v3875
        %3877 = vmatprep.mubr.f32.mxu0 0.0
        %v3878 = vand.u32 %v584, 4294901760
        %v3879 = vsub.f32 %v584, %v3878
        %3880 = vmatmul.mubr.f32.gmra.mrb[0].mxu0 %v3879
        %v3881 = vpop.f32.mrb[0].mxu0
        %v3882 = vadd.f32 %v2844, %v3881
        %v3883 = vpop.f32.mrb[0].mxu0
        %v3884 = vadd.f32 %v2846, %v3883
        %3885 = vmatprep.mubr.f32.mxu0 0.0
        %v3886 = vand.u32 %v587, 4294901760
        %v3887 = vsub.f32 %v587, %v3886
        %3888 = vmatmul.mubr.f32.gmra.mrb[0].mxu0 %v3887
        %v3889 = vpop.f32.mrb[0].mxu0
        %v3890 = vadd.f32 %v2851, %v3889
        %v3891 = vpop.f32.mrb[0].mxu0
        %v3892 = vadd.f32 %v2853, %v3891
        %3893 = vmatprep.mubr.f32.mxu0 0.0
        %v3894 = vand.u32 %v590, 4294901760
        %v3895 = vsub.f32 %v590, %v3894
        %3896 = vmatmul.mubr.f32.gmra.mrb[0].mxu0 %v3895
        %v3897 = vpop.f32.mrb[0].mxu0
        %v3898 = vadd.f32 %v2858, %v3897
        %v3899 = vpop.f32.mrb[0].mxu0
        %v3900 = vadd.f32 %v2860, %v3899
        %3901 = vmatprep.mubr.f32.mxu0 0.0
        %v3902 = vand.u32 %v593, 4294901760
        %v3903 = vsub.f32 %v593, %v3902
        %3904 = vmatmul.mubr.f32.gmra.mrb[0].mxu0 %v3903
        %v3905 = vpop.f32.mrb[0].mxu0
        %v3906 = vadd.f32 %v2865, %v3905
        %v3907 = vpop.f32.mrb[0].mxu0
        %v3908 = vadd.f32 %v2867, %v3907
        %3909 = vmatprep.mubr.f32.mxu0 0.0
        %v3910 = vand.u32 %v596, 4294901760
        %v3911 = vsub.f32 %v596, %v3910
        %3912 = vmatmul.mubr.f32.gmra.mrb[0].mxu0 %v3911
        %v3913 = vpop.f32.mrb[0].mxu0
        %v3914 = vadd.f32 %v2872, %v3913
        %v3915 = vpop.f32.mrb[0].mxu0
        %v3916 = vadd.f32 %v2874, %v3915
        %3917 = vmatprep.mubr.f32.mxu0 0.0
        %v3918 = vand.u32 %v599, 4294901760
        %v3919 = vsub.f32 %v599, %v3918
        %3920 = vmatmul.mubr.f32.gmra.mrb[0].mxu0 %v3919
        %v3921 = vpop.f32.mrb[0].mxu0
        %v3922 = vadd.f32 %v2879, %v3921
        %v3923 = vpop.f32.mrb[0].mxu0
        %v3924 = vadd.f32 %v2881, %v3923
        %3925 = vmatprep.mubr.f32.mxu0 0.0
        %v3926 = vand.u32 %v602, 4294901760
        %v3927 = vsub.f32 %v602, %v3926
        %3928 = vmatmul.mubr.f32.gmra.mrb[0].mxu0 %v3927
        %v3929 = vpop.f32.mrb[0].mxu0
        %v3930 = vadd.f32 %v2886, %v3929
        %v3931 = vpop.f32.mrb[0].mxu0
        %v3932 = vadd.f32 %v2888, %v3931
        %3933 = vmatprep.mubr.f32.mxu0 0.0
        %v3934 = vand.u32 %v605, 4294901760
        %v3935 = vsub.f32 %v605, %v3934
        %3936 = vmatmul.mubr.f32.gmra.mrb[0].mxu0 %v3935
        %v3937 = vpop.f32.mrb[0].mxu0
        %v3938 = vadd.f32 %v2893, %v3937
        %v3939 = vpop.f32.mrb[0].mxu0
        %v3940 = vadd.f32 %v2895, %v3939
        %3941 = vmatprep.mubr.f32.mxu0 0.0
        %v3942 = vand.u32 %v608, 4294901760
        %v3943 = vsub.f32 %v608, %v3942
        %3944 = vmatmul.mubr.f32.gmra.mrb[0].mxu0 %v3943
        %v3945 = vpop.f32.mrb[0].mxu0
        %v3946 = vadd.f32 %v2900, %v3945
        %v3947 = vpop.f32.mrb[0].mxu0
        %v3948 = vadd.f32 %v2902, %v3947
        %3949 = vmatprep.mubr.f32.mxu0 0.0
        %v3950 = vand.u32 %v611, 4294901760
        %v3951 = vsub.f32 %v611, %v3950
        %3952 = vmatmul.mubr.f32.gmra.mrb[0].mxu0 %v3951
        %v3953 = vpop.f32.mrb[0].mxu0
        %v3954 = vadd.f32 %v2907, %v3953
        %v3955 = vpop.f32.mrb[0].mxu0
        %v3956 = vadd.f32 %v2909, %v3955
        %3957 = vmatprep.mubr.f32.mxu0 0.0
        %v3958 = vand.u32 %v614, 4294901760
        %v3959 = vsub.f32 %v614, %v3958
        %3960 = vmatmul.mubr.f32.gmra.mrb[0].mxu0 %v3959
        %v3961 = vpop.f32.mrb[0].mxu0
        %v3962 = vadd.f32 %v2914, %v3961
        %v3963 = vpop.f32.mrb[0].mxu0
        %v3964 = vadd.f32 %v2916, %v3963
        %3965 = vmatprep.mubr.f32.mxu0 0.0
        %v3966 = vand.u32 %v617, 4294901760
        %v3967 = vsub.f32 %v617, %v3966
        %3968 = vmatmul.mubr.f32.gmra.mrb[0].mxu0 %v3967
        %v3969 = vpop.f32.mrb[0].mxu0
        %v3970 = vadd.f32 %v2921, %v3969
        %v3971 = vpop.f32.mrb[0].mxu0
        %v3972 = vadd.f32 %v2923, %v3971
        %3973 = vmatprep.mubr.f32.mxu0 0.0
        %v3974 = vand.u32 %v620, 4294901760
        %v3975 = vsub.f32 %v620, %v3974
        %3976 = vmatmul.mubr.f32.gmra.mrb[0].mxu0 %v3975
        %v3977 = vpop.f32.mrb[0].mxu0
        %v3978 = vadd.f32 %v2928, %v3977
        %v3979 = vpop.f32.mrb[0].mxu0
        %v3980 = vadd.f32 %v2930, %v3979
        %3981 = vmatprep.mubr.f32.mxu0 0.0
        %v3982 = vand.u32 %v623, 4294901760
        %v3983 = vsub.f32 %v623, %v3982
        %3984 = vmatmul.mubr.f32.gmra.mrb[0].mxu0 %v3983
        %v3985 = vpop.f32.mrb[0].mxu0
        %v3986 = vadd.f32 %v2935, %v3985
        %v3987 = vpop.f32.mrb[0].mxu0
        %v3988 = vadd.f32 %v2937, %v3987
        %3989 = vmatprep.mubr.f32.mxu0 0.0
        %v3990 = vand.u32 %v626, 4294901760
        %v3991 = vsub.f32 %v626, %v3990
        %3992 = vmatmul.mubr.f32.gmra.mrb[0].mxu0 %v3991
        %v3993 = vpop.f32.mrb[0].mxu0
        %v3994 = vadd.f32 %v2942, %v3993
        %v3995 = vpop.f32.mrb[0].mxu0
        %v3996 = vadd.f32 %v2944, %v3995
        %3997 = vmatprep.mubr.f32.mxu0 0.0
        %v3998 = vand.u32 %v629, 4294901760
        %v3999 = vsub.f32 %v629, %v3998
        %4000 = vmatmul.mubr.f32.gmra.mrb[0].mxu0 %v3999
        %v4001 = vpop.f32.mrb[0].mxu0
        %v4002 = vadd.f32 %v2949, %v4001
        %v4003 = vpop.f32.mrb[0].mxu0
        %v4004 = vadd.f32 %v2951, %v4003
        %4005 = vmatprep.mubr.f32.mxu0 0.0
        %v4006 = vand.u32 %v632, 4294901760
        %v4007 = vsub.f32 %v632, %v4006
        %4008 = vmatmul.mubr.f32.gmra.mrb[0].mxu0 %v4007
        %v4009 = vpop.f32.mrb[0].mxu0
        %v4010 = vadd.f32 %v2956, %v4009
        %v4011 = vpop.f32.mrb[0].mxu0
        %v4012 = vadd.f32 %v2958, %v4011
        %4013 = vmatprep.mubr.f32.mxu0 0.0
        %v4014 = vand.u32 %v635, 4294901760
        %v4015 = vsub.f32 %v635, %v4014
        %4016 = vmatmul.mubr.f32.gmra.mrb[0].mxu0 %v4015
        %v4017 = vpop.f32.mrb[0].mxu0
        %v4018 = vadd.f32 %v2963, %v4017
        %v4019 = vpop.f32.mrb[0].mxu0
        %v4020 = vadd.f32 %v2965, %v4019
        %4021 = vmatprep.mubr.f32.mxu0 0.0
        %v4022 = vand.u32 %v638, 4294901760
        %v4023 = vsub.f32 %v638, %v4022
        %4024 = vmatmul.mubr.f32.gmra.mrb[0].mxu0 %v4023
        %v4025 = vpop.f32.mrb[0].mxu0
        %v4026 = vadd.f32 %v2970, %v4025
        %v4027 = vpop.f32.mrb[0].mxu0
        %v4028 = vadd.f32 %v2972, %v4027
        %4029 = vmatprep.mubr.f32.mxu0 0.0
        %v4030 = vand.u32 %v641, 4294901760
        %v4031 = vsub.f32 %v641, %v4030
        %4032 = vmatmul.mubr.f32.gmra.mrb[0].mxu0 %v4031
        %v4033 = vpop.f32.mrb[0].mxu0
        %v4034 = vadd.f32 %v2977, %v4033
        %v4035 = vpop.f32.mrb[0].mxu0
        %v4036 = vadd.f32 %v2979, %v4035
        %4037 = vmatprep.mubr.f32.mxu0 0.0
        %v4038 = vand.u32 %v644, 4294901760
        %v4039 = vsub.f32 %v644, %v4038
        %4040 = vmatmul.mubr.f32.gmra.mrb[0].mxu0 %v4039
        %v4041 = vpop.f32.mrb[0].mxu0
        %v4042 = vadd.f32 %v2984, %v4041
        %v4043 = vpop.f32.mrb[0].mxu0
        %v4044 = vadd.f32 %v2986, %v4043
        %4045 = vmatprep.mubr.f32.mxu0 0.0
        %v4046 = vand.u32 %v647, 4294901760
        %v4047 = vsub.f32 %v647, %v4046
        %4048 = vmatmul.mubr.f32.gmra.mrb[0].mxu0 %v4047
        %v4049 = vpop.f32.mrb[0].mxu0
        %v4050 = vadd.f32 %v2991, %v4049
        %v4051 = vpop.f32.mrb[0].mxu0
        %v4052 = vadd.f32 %v2993, %v4051
        %4053 = vmatprep.mubr.f32.mxu0 0.0
        %v4054 = vand.u32 %v650, 4294901760
        %v4055 = vsub.f32 %v650, %v4054
        %4056 = vmatmul.mubr.f32.gmra.mrb[0].mxu0 %v4055
        %v4057 = vpop.f32.mrb[0].mxu0
        %v4058 = vadd.f32 %v2998, %v4057
        %v4059 = vpop.f32.mrb[0].mxu0
        %v4060 = vadd.f32 %v3000, %v4059
        %4061 = vmatprep.mubr.f32.mxu0 0.0
        %v4062 = vand.u32 %v653, 4294901760
        %v4063 = vsub.f32 %v653, %v4062
        %4064 = vmatmul.mubr.f32.gmra.mrb[0].mxu0 %v4063
        %v4065 = vpop.f32.mrb[0].mxu0
        %v4066 = vadd.f32 %v3005, %v4065
        %v4067 = vpop.f32.mrb[0].mxu0
        %v4068 = vadd.f32 %v3007, %v4067
        %4069 = vmatprep.mubr.f32.mxu0 0.0
        %v4070 = vand.u32 %v656, 4294901760
        %v4071 = vsub.f32 %v656, %v4070
        %4072 = vmatmul.mubr.f32.gmra.mrb[0].mxu0 %v4071
        %v4073 = vpop.f32.mrb[0].mxu0
        %v4074 = vadd.f32 %v3012, %v4073
        %v4075 = vpop.f32.mrb[0].mxu0
        %v4076 = vadd.f32 %v3014, %v4075
        %4077 = vmatprep.mubr.f32.mxu0 0.0
        %v4078 = vand.u32 %v659, 4294901760
        %v4079 = vsub.f32 %v659, %v4078
        %4080 = vmatmul.mubr.f32.gmra.mrb[0].mxu0 %v4079
        %v4081 = vpop.f32.mrb[0].mxu0
        %v4082 = vadd.f32 %v3019, %v4081
        %v4083 = vpop.f32.mrb[0].mxu0
        %v4084 = vadd.f32 %v3021, %v4083
        %4085 = vmatprep.mubr.f32.mxu0 0.0
        %v4086 = vand.u32 %v662, 4294901760
        %v4087 = vsub.f32 %v662, %v4086
        %4088 = vmatmul.mubr.f32.gmra.mrb[0].mxu0 %v4087
        %v4089 = vpop.f32.mrb[0].mxu0
        %v4090 = vadd.f32 %v3026, %v4089
        %v4091 = vpop.f32.mrb[0].mxu0
        %v4092 = vadd.f32 %v3028, %v4091
        %4093 = vmatprep.mubr.f32.mxu0 0.0
        %v4094 = vand.u32 %v665, 4294901760
        %v4095 = vsub.f32 %v665, %v4094
        %4096 = vmatmul.mubr.f32.gmra.mrb[0].mxu0 %v4095
        %v4097 = vpop.f32.mrb[0].mxu0
        %v4098 = vadd.f32 %v3033, %v4097
        %v4099 = vpop.f32.mrb[0].mxu0
        %v4100 = vadd.f32 %v3035, %v4099
        %4101 = vmatprep.mubr.f32.mxu0 0.0
        %v4102 = vand.u32 %v668, 4294901760
        %v4103 = vsub.f32 %v668, %v4102
        %4104 = vmatmul.mubr.f32.gmra.mrb[0].mxu0 %v4103
        %v4105 = vpop.f32.mrb[0].mxu0
        %v4106 = vadd.f32 %v3040, %v4105
        %v4107 = vpop.f32.mrb[0].mxu0
        %v4108 = vadd.f32 %v3042, %v4107
        %4109 = vmatprep.mubr.f32.mxu0 0.0
        %v4110 = vand.u32 %v671, 4294901760
        %v4111 = vsub.f32 %v671, %v4110
        %4112 = vmatmul.mubr.f32.gmra.mrb[0].mxu0 %v4111
        %v4113 = vpop.f32.mrb[0].mxu0
        %v4114 = vadd.f32 %v3047, %v4113
        %v4115 = vpop.f32.mrb[0].mxu0
        %v4116 = vadd.f32 %v3049, %v4115
        %4117 = vmatprep.mubr.f32.mxu0 0.0
        %v4118 = vand.u32 %v674, 4294901760
        %v4119 = vsub.f32 %v674, %v4118
        %4120 = vmatmul.mubr.f32.gmra.mrb[0].mxu0 %v4119
        %v4121 = vpop.f32.mrb[0].mxu0
        %v4122 = vadd.f32 %v3054, %v4121
        %v4123 = vpop.f32.mrb[0].mxu0
        %v4124 = vadd.f32 %v3056, %v4123
        %4125 = vmatprep.mubr.f32.mxu0 0.0
        %v4126 = vand.u32 %v677, 4294901760
        %v4127 = vsub.f32 %v677, %v4126
        %4128 = vmatmul.mubr.f32.gmra.mrb[0].mxu0 %v4127
        %v4129 = vpop.f32.mrb[0].mxu0
        %v4130 = vadd.f32 %v3061, %v4129
        %v4131 = vpop.f32.mrb[0].mxu0
        %v4132 = vadd.f32 %v3063, %v4131
        %4133 = vmatprep.mubr.f32.mxu0 0.0
        %v4134 = vand.u32 %v680, 4294901760
        %v4135 = vsub.f32 %v680, %v4134
        %4136 = vmatmul.mubr.f32.gmra.mrb[0].mxu0 %v4135
        %v4137 = vpop.f32.mrb[0].mxu0
        %v4138 = vadd.f32 %v3068, %v4137
        %v4139 = vpop.f32.mrb[0].mxu0
        %v4140 = vadd.f32 %v3070, %v4139
        %4141 = vmatprep.mubr.f32.mxu0 0.0
        %v4142 = vand.u32 %v683, 4294901760
        %v4143 = vsub.f32 %v683, %v4142
        %4144 = vmatmul.mubr.f32.gmra.mrb[0].mxu0 %v4143
        %v4145 = vpop.f32.mrb[0].mxu0
        %v4146 = vadd.f32 %v3075, %v4145
        %v4147 = vpop.f32.mrb[0].mxu0
        %v4148 = vadd.f32 %v3077, %v4147
        %4149 = vmatprep.mubr.f32.mxu0 0.0
        %v4150 = vand.u32 %v686, 4294901760
        %v4151 = vsub.f32 %v686, %v4150
        %4152 = vmatmul.mubr.f32.gmra.mrb[0].mxu0 %v4151
        %v4153 = vpop.f32.mrb[0].mxu0
        %v4154 = vadd.f32 %v3082, %v4153
        %v4155 = vpop.f32.mrb[0].mxu0
        %v4156 = vadd.f32 %v3084, %v4155
        %4157 = vmatprep.mubr.f32.mxu0 0.0
        %v4158 = vand.u32 %v689, 4294901760
        %v4159 = vsub.f32 %v689, %v4158
        %4160 = vmatmul.mubr.f32.gmra.mrb[0].mxu0 %v4159
        %v4161 = vpop.f32.mrb[0].mxu0
        %v4162 = vadd.f32 %v3089, %v4161
        %v4163 = vpop.f32.mrb[0].mxu0
        %v4164 = vadd.f32 %v3091, %v4163
        %4165 = vmatprep.mubr.f32.mxu0 0.0
        %v4166 = vand.u32 %v692, 4294901760
        %v4167 = vsub.f32 %v692, %v4166
        %4168 = vmatmul.mubr.f32.gmra.mrb[0].mxu0 %v4167
        %v4169 = vpop.f32.mrb[0].mxu0
        %v4170 = vadd.f32 %v3096, %v4169
        %v4171 = vpop.f32.mrb[0].mxu0
        %v4172 = vadd.f32 %v3098, %v4171
        %4173 = vmatprep.mubr.f32.mxu0 0.0
        %v4174 = vand.u32 %v695, 4294901760
        %v4175 = vsub.f32 %v695, %v4174
        %4176 = vmatmul.mubr.f32.gmra.mrb[0].mxu0 %v4175
        %v4177 = vpop.f32.mrb[0].mxu0
        %v4178 = vadd.f32 %v3103, %v4177
        %v4179 = vpop.f32.mrb[0].mxu0
        %v4180 = vadd.f32 %v3105, %v4179
        %4181 = vmatprep.mubr.f32.mxu0 0.0
        %v4182 = vand.u32 %v698, 4294901760
        %v4183 = vsub.f32 %v698, %v4182
        %4184 = vmatmul.mubr.f32.gmra.mrb[0].mxu0 %v4183
        %v4185 = vpop.f32.mrb[0].mxu0
        %v4186 = vadd.f32 %v3110, %v4185
        %v4187 = vpop.f32.mrb[0].mxu0
        %v4188 = vadd.f32 %v3112, %v4187
        %4189 = vmatprep.mubr.f32.mxu0 0.0
        %v4190 = vand.u32 %v701, 4294901760
        %v4191 = vsub.f32 %v701, %v4190
        %4192 = vmatmul.mubr.f32.gmra.mrb[0].mxu0 %v4191
        %v4193 = vpop.f32.mrb[0].mxu0
        %v4194 = vadd.f32 %v3117, %v4193
        %v4195 = vpop.f32.mrb[0].mxu0
        %v4196 = vadd.f32 %v3119, %v4195
        %4197 = vmatprep.mubr.f32.mxu0 0.0
        %v4198 = vand.u32 %v704, 4294901760
        %v4199 = vsub.f32 %v704, %v4198
        %4200 = vmatmul.mubr.f32.gmra.mrb[0].mxu0 %v4199
        %v4201 = vpop.f32.mrb[0].mxu0
        %v4202 = vadd.f32 %v3124, %v4201
        %v4203 = vpop.f32.mrb[0].mxu0
        %v4204 = vadd.f32 %v3126, %v4203
        %4205 = vmatprep.mubr.f32.mxu0 0.0
        %v4206 = vand.u32 %v707, 4294901760
        %v4207 = vsub.f32 %v707, %v4206
        %4208 = vmatmul.mubr.f32.gmra.mrb[0].mxu0 %v4207
        %v4209 = vpop.f32.mrb[0].mxu0
        %v4210 = vadd.f32 %v3131, %v4209
        %v4211 = vpop.f32.mrb[0].mxu0
        %v4212 = vadd.f32 %v3133, %v4211
        %4213 = vmatprep.mubr.f32.mxu0 0.0
        %v4214 = vand.u32 %v710, 4294901760
        %v4215 = vsub.f32 %v710, %v4214
        %4216 = vmatmul.mubr.f32.gmra.mrb[0].mxu0 %v4215
        %v4217 = vpop.f32.mrb[0].mxu0
        %v4218 = vadd.f32 %v3138, %v4217
        %v4219 = vpop.f32.mrb[0].mxu0
        %v4220 = vadd.f32 %v3140, %v4219
        %4221 = vmatprep.mubr.f32.mxu0 0.0
        %v4222 = vand.u32 %v713, 4294901760
        %v4223 = vsub.f32 %v713, %v4222
        %4224 = vmatmul.mubr.f32.gmra.mrb[0].mxu0 %v4223
        %v4225 = vpop.f32.mrb[0].mxu0
        %v4226 = vadd.f32 %v3145, %v4225
        %v4227 = vpop.f32.mrb[0].mxu0
        %v4228 = vadd.f32 %v3147, %v4227
        %4229 = vmatprep.mubr.f32.mxu0 0.0
        %v4230 = vand.u32 %v716, 4294901760
        %v4231 = vsub.f32 %v716, %v4230
        %4232 = vmatmul.mubr.f32.gmra.mrb[0].mxu0 %v4231
        %v4233 = vpop.f32.mrb[0].mxu0
        %v4234 = vadd.f32 %v3152, %v4233
        %v4235 = vpop.f32.mrb[0].mxu0
        %v4236 = vadd.f32 %v3154, %v4235
        %4237 = vmatprep.mubr.f32.mxu0 0.0
        %v4238 = vand.u32 %v719, 4294901760
        %v4239 = vsub.f32 %v719, %v4238
        %4240 = vmatmul.mubr.f32.gmra.mrb[0].mxu0 %v4239
        %v4241 = vpop.f32.mrb[0].mxu0
        %v4242 = vadd.f32 %v3159, %v4241
        %v4243 = vpop.f32.mrb[0].mxu0
        %v4244 = vadd.f32 %v3161, %v4243
        %4245 = vmatprep.mubr.f32.mxu0 0.0
        %v4246 = vand.u32 %v722, 4294901760
        %v4247 = vsub.f32 %v722, %v4246
        %4248 = vmatmul.mubr.f32.gmra.mrb[0].mxu0 %v4247
        %v4249 = vpop.f32.mrb[0].mxu0
        %v4250 = vadd.f32 %v3166, %v4249
        %v4251 = vpop.f32.mrb[0].mxu0
        %v4252 = vadd.f32 %v3168, %v4251
        %4253 = vmatprep.mubr.f32.mxu0 0.0
        %v4254 = vand.u32 %v725, 4294901760
        %v4255 = vsub.f32 %v725, %v4254
        %4256 = vmatmul.mubr.f32.gmra.mrb[0].mxu0 %v4255
        %v4257 = vpop.f32.mrb[0].mxu0
        %v4258 = vadd.f32 %v3173, %v4257
        %v4259 = vpop.f32.mrb[0].mxu0
        %v4260 = vadd.f32 %v3175, %v4259
        %4261 = vmatprep.mubr.f32.mxu0 0.0
        %v4262 = vand.u32 %v728, 4294901760
        %v4263 = vsub.f32 %v728, %v4262
        %4264 = vmatmul.mubr.f32.gmra.mrb[0].mxu0 %v4263
        %v4265 = vpop.f32.mrb[0].mxu0
        %v4266 = vadd.f32 %v3180, %v4265
        %v4267 = vpop.f32.mrb[0].mxu0
        %v4268 = vadd.f32 %v3182, %v4267
        %4269 = vmatprep.mubr.f32.mxu0 0.0
        %v4270 = vand.u32 %v731, 4294901760
        %v4271 = vsub.f32 %v731, %v4270
        %4272 = vmatmul.mubr.f32.gmra.mrb[0].mxu0 %v4271
        %v4273 = vpop.f32.mrb[0].mxu0
        %v4274 = vadd.f32 %v3187, %v4273
        %v4275 = vpop.f32.mrb[0].mxu0
        %v4276 = vadd.f32 %v3189, %v4275
        %4277 = vmatprep.mubr.f32.mxu0 0.0
        %v4278 = vand.u32 %v734, 4294901760
        %v4279 = vsub.f32 %v734, %v4278
        %4280 = vmatmul.mubr.f32.gmra.mrb[0].mxu0 %v4279
        %v4281 = vpop.f32.mrb[0].mxu0
        %v4282 = vadd.f32 %v3194, %v4281
        %v4283 = vpop.f32.mrb[0].mxu0
        %v4284 = vadd.f32 %v3196, %v4283
        %4285 = vmatprep.mubr.f32.mxu0 0.0
        %v4286 = vand.u32 %v737, 4294901760
        %v4287 = vsub.f32 %v737, %v4286
        %4288 = vmatmul.mubr.f32.gmra.mrb[0].mxu0 %v4287
        %v4289 = vpop.f32.mrb[0].mxu0
        %v4290 = vadd.f32 %v3201, %v4289
        %v4291 = vpop.f32.mrb[0].mxu0
        %v4292 = vadd.f32 %v3203, %v4291
        %4293 = vmatprep.mubr.f32.mxu0 0.0
        %v4294 = vand.u32 %v740, 4294901760
        %v4295 = vsub.f32 %v740, %v4294
        %4296 = vmatmul.mubr.f32.gmra.mrb[0].mxu0 %v4295
        %v4297 = vpop.f32.mrb[0].mxu0
        %v4298 = vadd.f32 %v3208, %v4297
        %v4299 = vpop.f32.mrb[0].mxu0
        %v4300 = vadd.f32 %v3210, %v4299
        %4301 = vmatprep.mubr.f32.mxu0 0.0
        %v4302 = vand.u32 %v743, 4294901760
        %v4303 = vsub.f32 %v743, %v4302
        %4304 = vmatmul.mubr.f32.gmra.mrb[0].mxu0 %v4303
        %v4305 = vpop.f32.mrb[0].mxu0
        %v4306 = vadd.f32 %v3215, %v4305
        %v4307 = vpop.f32.mrb[0].mxu0
        %v4308 = vadd.f32 %v3217, %v4307
        %4309 = vmatprep.mubr.f32.mxu0 0.0
        %v4310 = vand.u32 %v746, 4294901760
        %v4311 = vsub.f32 %v746, %v4310
        %4312 = vmatmul.mubr.f32.gmra.mrb[0].mxu0 %v4311
        %v4313 = vpop.f32.mrb[0].mxu0
        %v4314 = vadd.f32 %v3222, %v4313
        %v4315 = vpop.f32.mrb[0].mxu0
        %v4316 = vadd.f32 %v3224, %v4315
        %4317 = vmatprep.mubr.f32.mxu0 0.0
        %v4318 = vand.u32 %v749, 4294901760
        %v4319 = vsub.f32 %v749, %v4318
        %4320 = vmatmul.mubr.f32.gmra.mrb[0].mxu0 %v4319
        %v4321 = vpop.f32.mrb[0].mxu0
        %v4322 = vadd.f32 %v3229, %v4321
        %v4323 = vpop.f32.mrb[0].mxu0
        %v4324 = vadd.f32 %v3231, %v4323
        %4325 = vmatprep.mubr.f32.mxu0 0.0
        %v4326 = vand.u32 %v752, 4294901760
        %v4327 = vsub.f32 %v752, %v4326
        %4328 = vmatmul.mubr.f32.gmra.mrb[0].mxu0 %v4327
        %v4329 = vpop.f32.mrb[0].mxu0
        %v4330 = vadd.f32 %v3236, %v4329
        %v4331 = vpop.f32.mrb[0].mxu0
        %v4332 = vadd.f32 %v3238, %v4331
        %4333 = vmatprep.mubr.f32.mxu0 0.0
        %v4334 = vand.u32 %v755, 4294901760
        %v4335 = vsub.f32 %v755, %v4334
        %4336 = vmatmul.mubr.f32.gmra.mrb[0].mxu0 %v4335
        %v4337 = vpop.f32.mrb[0].mxu0
        %v4338 = vadd.f32 %v3243, %v4337
        %v4339 = vpop.f32.mrb[0].mxu0
        %v4340 = vadd.f32 %v3245, %v4339
        %4341 = vmatprep.mubr.f32.mxu0 0.0
        %v4342 = vand.u32 %v758, 4294901760
        %v4343 = vsub.f32 %v758, %v4342
        %4344 = vmatmul.mubr.f32.gmra.mrb[0].mxu0 %v4343
        %v4345 = vpop.f32.mrb[0].mxu0
        %v4346 = vadd.f32 %v3250, %v4345
        %v4347 = vpop.f32.mrb[0].mxu0
        %v4348 = vadd.f32 %v3252, %v4347
        %4349 = vmatprep.mubr.f32.mxu0 0.0
        %v4350 = vand.u32 %v761, 4294901760
        %v4351 = vsub.f32 %v761, %v4350
        %4352 = vmatmul.mubr.f32.gmra.mrb[0].mxu0 %v4351
        %v4353 = vpop.f32.mrb[0].mxu0
        %v4354 = vadd.f32 %v3257, %v4353
        %v4355 = vpop.f32.mrb[0].mxu0
        %v4356 = vadd.f32 %v3259, %v4355
        %4357 = vmatprep.mubr.f32.mxu0 0.0
        %v4358 = vand.u32 %v764, 4294901760
        %v4359 = vsub.f32 %v764, %v4358
        %4360 = vmatmul.mubr.f32.gmra.mrb[0].mxu0 %v4359
        %v4361 = vpop.f32.mrb[0].mxu0
        %v4362 = vadd.f32 %v3264, %v4361
        %v4363 = vpop.f32.mrb[0].mxu0
        %v4364 = vadd.f32 %v3266, %v4363
        %4365 = vmatprep.mubr.f32.mxu0 0.0
        %v4366 = vand.u32 %v767, 4294901760
        %v4367 = vsub.f32 %v767, %v4366
        %4368 = vmatmul.mubr.f32.gmra.mrb[0].mxu0 %v4367
        %v4369 = vpop.f32.mrb[0].mxu0
        %v4370 = vadd.f32 %v3271, %v4369
        %v4371 = vpop.f32.mrb[0].mxu0
        %v4372 = vadd.f32 %v3273, %v4371
        %4373 = vmatprep.mubr.f32.mxu0 0.0
        %v4374 = vand.u32 %v770, 4294901760
        %v4375 = vsub.f32 %v770, %v4374
        %4376 = vmatmul.mubr.f32.gmra.mrb[0].mxu0 %v4375
        %v4377 = vpop.f32.mrb[0].mxu0
        %v4378 = vadd.f32 %v3278, %v4377
        %v4379 = vpop.f32.mrb[0].mxu0
        %v4380 = vadd.f32 %v3280, %v4379
        %4381 = vmatprep.mubr.f32.mxu0 0.0
        %v4382 = vand.u32 %v773, 4294901760
        %v4383 = vsub.f32 %v773, %v4382
        %4384 = vmatmul.mubr.f32.gmra.mrb[0].mxu0 %v4383
        %v4385 = vpop.f32.mrb[0].mxu0
        %v4386 = vadd.f32 %v3285, %v4385
        %v4387 = vpop.f32.mrb[0].mxu0
        %v4388 = vadd.f32 %v3287, %v4387
        %4389 = vmatprep.mubr.f32.mxu0 0.0
        %v4390 = vand.u32 %v776, 4294901760
        %v4391 = vsub.f32 %v776, %v4390
        %4392 = vmatmul.mubr.f32.gmra.mrb[0].mxu0 %v4391
        %v4393 = vpop.f32.mrb[0].mxu0
        %v4394 = vadd.f32 %v3292, %v4393
        %v4395 = vpop.f32.mrb[0].mxu0
        %v4396 = vadd.f32 %v3294, %v4395
        %4397 = vmatprep.mubr.f32.mxu0 0.0
        %v4398 = vand.u32 %v779, 4294901760
        %v4399 = vsub.f32 %v779, %v4398
        %4400 = vmatmul.mubr.f32.gmra.mrb[0].mxu0 %v4399
        %v4401 = vpop.f32.mrb[0].mxu0
        %v4402 = vadd.f32 %v3299, %v4401
        %v4403 = vpop.f32.mrb[0].mxu0
        %v4404 = vadd.f32 %v3301, %v4403
        %4405 = vmatprep.mubr.f32.mxu0 0.0
        %v4406 = vand.u32 %v782, 4294901760
        %v4407 = vsub.f32 %v782, %v4406
        %4408 = vmatmul.mubr.f32.gmra.mrb[0].mxu0 %v4407
        %v4409 = vpop.f32.mrb[0].mxu0
        %v4410 = vadd.f32 %v3306, %v4409
        %v4411 = vpop.f32.mrb[0].mxu0
        %v4412 = vadd.f32 %v3308, %v4411
        %4413 = vmatprep.mubr.f32.mxu0 0.0
        %v4414 = vand.u32 %v785, 4294901760
        %v4415 = vsub.f32 %v785, %v4414
        %4416 = vmatmul.mubr.f32.gmra.mrb[0].mxu0 %v4415
        %v4417 = vpop.f32.mrb[0].mxu0
        %v4418 = vadd.f32 %v3313, %v4417
        %v4419 = vpop.f32.mrb[0].mxu0
        %v4420 = vadd.f32 %v3315, %v4419
        %4421 = vmatprep.mubr.f32.mxu0 0.0
        %v4422 = vand.u32 %v788, 4294901760
        %v4423 = vsub.f32 %v788, %v4422
        %4424 = vmatmul.mubr.f32.gmra.mrb[0].mxu0 %v4423
        %v4425 = vpop.f32.mrb[0].mxu0
        %v4426 = vadd.f32 %v3320, %v4425
        %v4427 = vpop.f32.mrb[0].mxu0
        %v4428 = vadd.f32 %v3322, %v4427
        %4429 = vmatprep.mubr.f32.mxu0 0.0
        %v4430 = vand.u32 %v791, 4294901760
        %v4431 = vsub.f32 %v791, %v4430
        %4432 = vmatmul.mubr.f32.gmra.mrb[0].mxu0 %v4431
        %v4433 = vpop.f32.mrb[0].mxu0
        %v4434 = vadd.f32 %v3327, %v4433
        %v4435 = vpop.f32.mrb[0].mxu0
        %v4436 = vadd.f32 %v3329, %v4435
        %4437 = vmatprep.mubr.f32.mxu0 0.0
        %v4438 = vand.u32 %v794, 4294901760
        %v4439 = vsub.f32 %v794, %v4438
        %4440 = vmatmul.mubr.f32.gmra.mrb[0].mxu0 %v4439
        %v4441 = vpop.f32.mrb[0].mxu0
        %v4442 = vadd.f32 %v3334, %v4441
        %v4443 = vpop.f32.mrb[0].mxu0
        %v4444 = vadd.f32 %v3336, %v4443
        %4445 = vmatprep.mubr.f32.mxu0 0.0
        %v4446 = vand.u32 %v797, 4294901760
        %v4447 = vsub.f32 %v797, %v4446
        %4448 = vmatmul.mubr.f32.gmra.mrb[0].mxu0 %v4447
        %v4449 = vpop.f32.mrb[0].mxu0
        %v4450 = vadd.f32 %v3341, %v4449
        %v4451 = vpop.f32.mrb[0].mxu0
        %v4452 = vadd.f32 %v3343, %v4451
        %4453 = vmatprep.mubr.f32.mxu0 0.0
        %v4454 = vand.u32 %v800, 4294901760
        %v4455 = vsub.f32 %v800, %v4454
        %4456 = vmatmul.mubr.f32.gmra.mrb[0].mxu0 %v4455
        %v4457 = vpop.f32.mrb[0].mxu0
        %v4458 = vadd.f32 %v3348, %v4457
        %v4459 = vpop.f32.mrb[0].mxu0
        %v4460 = vadd.f32 %v3350, %v4459
        %4461 = vmatprep.mubr.f32.mxu0 0.0
        %v4462 = vand.u32 %v803, 4294901760
        %v4463 = vsub.f32 %v803, %v4462
        %4464 = vmatmul.mubr.f32.gmra.mrb[0].mxu0 %v4463
        %v4465 = vpop.f32.mrb[0].mxu0
        %v4466 = vadd.f32 %v3355, %v4465
        %v4467 = vpop.f32.mrb[0].mxu0
        %v4468 = vadd.f32 %v3357, %v4467
        %4469 = vmatprep.mubr.f32.mxu0 0.0
        %v4470 = vand.u32 %v806, 4294901760
        %v4471 = vsub.f32 %v806, %v4470
        %4472 = vmatmul.mubr.f32.gmra.mrb[0].mxu0 %v4471
        %v4473 = vpop.f32.mrb[0].mxu0
        %v4474 = vadd.f32 %v3362, %v4473
        %v4475 = vpop.f32.mrb[0].mxu0
        %v4476 = vadd.f32 %v3364, %v4475
        %4477 = vmatprep.mubr.f32.mxu0 0.0
        %v4478 = vand.u32 %v809, 4294901760
        %v4479 = vsub.f32 %v809, %v4478
        %4480 = vmatmul.mubr.f32.gmra.mrb[0].mxu0 %v4479
        %v4481 = vpop.f32.mrb[0].mxu0
        %v4482 = vadd.f32 %v3369, %v4481
        %v4483 = vpop.f32.mrb[0].mxu0
        %v4484 = vadd.f32 %v3371, %v4483
        %4485 = vmatprep.mubr.f32.mxu0 0.0
        %v4486 = vand.u32 %v812, 4294901760
        %v4487 = vsub.f32 %v812, %v4486
        %4488 = vmatmul.mubr.f32.gmra.mrb[0].mxu0 %v4487
        %v4489 = vpop.f32.mrb[0].mxu0
        %v4490 = vadd.f32 %v3376, %v4489
        %v4491 = vpop.f32.mrb[0].mxu0
        %v4492 = vadd.f32 %v3378, %v4491
        %4493 = vmatprep.mubr.f32.mxu0 0.0
        %v4494 = vand.u32 %v815, 4294901760
        %v4495 = vsub.f32 %v815, %v4494
        %4496 = vmatmul.mubr.f32.gmra.mrb[0].mxu0 %v4495
        %v4497 = vpop.f32.mrb[0].mxu0
        %v4498 = vadd.f32 %v3383, %v4497
        %v4499 = vpop.f32.mrb[0].mxu0
        %v4500 = vadd.f32 %v3385, %v4499
        %4501 = vmatprep.mubr.f32.mxu0 0.0
        %v4502 = vand.u32 %v818, 4294901760
        %v4503 = vsub.f32 %v818, %v4502
        %4504 = vmatmul.mubr.f32.gmra.mrb[0].mxu0 %v4503
        %v4505 = vpop.f32.mrb[0].mxu0
        %v4506 = vadd.f32 %v3390, %v4505
        %v4507 = vpop.f32.mrb[0].mxu0
        %v4508 = vadd.f32 %v3392, %v4507
        %4509 = vmatprep.mubr.f32.mxu0 0.0
        %v4510 = vand.u32 %v821, 4294901760
        %v4511 = vsub.f32 %v821, %v4510
        %4512 = vmatmul.mubr.f32.gmra.mrb[0].mxu0 %v4511
        %v4513 = vpop.f32.mrb[0].mxu0
        %v4514 = vadd.f32 %v3397, %v4513
        %v4515 = vpop.f32.mrb[0].mxu0
        %v4516 = vadd.f32 %v3399, %v4515
        %4517 = vmatprep.mubr.f32.mxu0 0.0
        %v4518 = vand.u32 %v824, 4294901760
        %v4519 = vsub.f32 %v824, %v4518
        %4520 = vmatmul.mubr.f32.gmra.mrb[0].mxu0 %v4519
        %v4521 = vpop.f32.mrb[0].mxu0
        %v4522 = vadd.f32 %v3404, %v4521
        %v4523 = vpop.f32.mrb[0].mxu0
        %v4524 = vadd.f32 %v3406, %v4523
        %4525 = vmatprep.mubr.f32.mxu0 0.0
        %v4526 = vand.u32 %v827, 4294901760
        %v4527 = vsub.f32 %v827, %v4526
        %4528 = vmatmul.mubr.f32.gmra.mrb[0].mxu0 %v4527
        %v4529 = vpop.f32.mrb[0].mxu0
        %v4530 = vadd.f32 %v3411, %v4529
        %v4531 = vpop.f32.mrb[0].mxu0
        %v4532 = vadd.f32 %v3413, %v4531
        %4533 = vmatprep.mubr.f32.mxu0 0.0
        %v4534 = vand.u32 %v830, 4294901760
        %v4535 = vsub.f32 %v830, %v4534
        %4536 = vmatmul.mubr.f32.gmra.mrb[0].mxu0 %v4535
        %v4537 = vpop.f32.mrb[0].mxu0
        %v4538 = vadd.f32 %v3418, %v4537
        %v4539 = vpop.f32.mrb[0].mxu0
        %v4540 = vadd.f32 %v3420, %v4539
        %4541 = vmatprep.mubr.f32.mxu0 0.0
        %v4542 = vand.u32 %v833, 4294901760
        %v4543 = vsub.f32 %v833, %v4542
        %4544 = vmatmul.mubr.f32.gmra.mrb[0].mxu0 %v4543
        %v4545 = vpop.f32.mrb[0].mxu0
        %v4546 = vadd.f32 %v3425, %v4545
        %v4547 = vpop.f32.mrb[0].mxu0
        %v4548 = vadd.f32 %v3427, %v4547
        %4549 = vmatprep.mubr.f32.mxu0 0.0
        %v4550 = vand.u32 %v836, 4294901760
        %v4551 = vsub.f32 %v836, %v4550
        %4552 = vmatmul.mubr.f32.gmra.mrb[0].mxu0 %v4551
        %v4553 = vpop.f32.mrb[0].mxu0
        %v4554 = vadd.f32 %v3432, %v4553
        %v4555 = vpop.f32.mrb[0].mxu0
        %v4556 = vadd.f32 %v3434, %v4555
        %4557 = vmatprep.mubr.f32.mxu0 0.0
        %v4558 = vand.u32 %v839, 4294901760
        %v4559 = vsub.f32 %v839, %v4558
        %4560 = vmatmul.mubr.f32.gmra.mrb[0].mxu0 %v4559
        %v4561 = vpop.f32.mrb[0].mxu0
        %v4562 = vadd.f32 %v3439, %v4561
        %v4563 = vpop.f32.mrb[0].mxu0
        %v4564 = vadd.f32 %v3441, %v4563
        %4565 = vmatprep.mubr.f32.mxu0 0.0
        %v4566 = vand.u32 %v842, 4294901760
        %v4567 = vsub.f32 %v842, %v4566
        %4568 = vmatmul.mubr.f32.gmra.mrb[0].mxu0 %v4567
        %v4569 = vpop.f32.mrb[0].mxu0
        %v4570 = vadd.f32 %v3446, %v4569
        %v4571 = vpop.f32.mrb[0].mxu0
        %v4572 = vadd.f32 %v3448, %v4571
        %4573 = vmatprep.mubr.f32.mxu0 0.0
        %v4574 = vand.u32 %v845, 4294901760
        %v4575 = vsub.f32 %v845, %v4574
        %4576 = vmatmul.mubr.f32.gmra.mrb[0].mxu0 %v4575
        %v4577 = vpop.f32.mrb[0].mxu0
        %v4578 = vadd.f32 %v3453, %v4577
        %v4579 = vpop.f32.mrb[0].mxu0
        %v4580 = vadd.f32 %v3455, %v4579
        %4581 = vmatprep.mubr.f32.mxu0 0.0
        %v4582 = vand.u32 %v848, 4294901760
        %v4583 = vsub.f32 %v848, %v4582
        %4584 = vmatmul.mubr.f32.gmra.mrb[0].mxu0 %v4583
        %v4585 = vpop.f32.mrb[0].mxu0
        %v4586 = vadd.f32 %v3460, %v4585
        %v4587 = vpop.f32.mrb[0].mxu0
        %v4588 = vadd.f32 %v3462, %v4587
        %4589 = vmatprep.mubr.f32.mxu0 0.0
        %v4590 = vand.u32 %v851, 4294901760
        %v4591 = vsub.f32 %v851, %v4590
        %4592 = vmatmul.mubr.f32.gmra.mrb[0].mxu0 %v4591
        %v4593 = vpop.f32.mrb[0].mxu0
        %v4594 = vadd.f32 %v3467, %v4593
        %v4595 = vpop.f32.mrb[0].mxu0
        %v4596 = vadd.f32 %v3469, %v4595
        %4597 = vmatprep.mubr.f32.mxu0 0.0
        %v4598 = vand.u32 %v854, 4294901760
        %v4599 = vsub.f32 %v854, %v4598
        %4600 = vmatmul.mubr.f32.gmra.mrb[0].mxu0 %v4599
        %v4601 = vpop.f32.mrb[0].mxu0
        %v4602 = vadd.f32 %v3474, %v4601
        %v4603 = vpop.f32.mrb[0].mxu0
        %v4604 = vadd.f32 %v3476, %v4603
        %4605 = vmatprep.mubr.f32.mxu0 0.0
        %v4606 = vand.u32 %v857, 4294901760
        %v4607 = vsub.f32 %v857, %v4606
        %4608 = vmatmul.mubr.f32.gmra.mrb[0].mxu0 %v4607
        %v4609 = vpop.f32.mrb[0].mxu0
        %v4610 = vadd.f32 %v3481, %v4609
        %v4611 = vpop.f32.mrb[0].mxu0
        %v4612 = vadd.f32 %v3483, %v4611
        %4613 = vmatprep.mubr.f32.mxu0 0.0
        %v4614 = vand.u32 %v860, 4294901760
        %v4615 = vsub.f32 %v860, %v4614
        %4616 = vmatmul.mubr.f32.gmra.mrb[0].mxu0 %v4615
        %v4617 = vpop.f32.mrb[0].mxu0
        %v4618 = vadd.f32 %v3488, %v4617
        %v4619 = vpop.f32.mrb[0].mxu0
        %v4620 = vadd.f32 %v3490, %v4619
        %4621 = vmatprep.mubr.f32.mxu0 0.0
        %v4622 = vand.u32 %v863, 4294901760
        %v4623 = vsub.f32 %v863, %v4622
        %4624 = vmatmul.mubr.f32.gmra.mrb[0].mxu0 %v4623
        %v4625 = vpop.f32.mrb[0].mxu0
        %v4626 = vadd.f32 %v3495, %v4625
        %v4627 = vpop.f32.mrb[0].mxu0
        %v4628 = vadd.f32 %v3497, %v4627
        %4629 = vmatprep.mubr.f32.mxu0 0.0
        %v4630 = vand.u32 %v866, 4294901760
        %v4631 = vsub.f32 %v866, %v4630
        %4632 = vmatmul.mubr.f32.gmra.mrb[0].mxu0 %v4631
        %v4633 = vpop.f32.mrb[0].mxu0
        %v4634 = vadd.f32 %v3502, %v4633
        %v4635 = vpop.f32.mrb[0].mxu0
        %v4636 = vadd.f32 %v3504, %v4635
        %4637 = vmatprep.mubr.f32.mxu0 0.0
        %v4638 = vand.u32 %v869, 4294901760
        %v4639 = vsub.f32 %v869, %v4638
        %4640 = vmatmul.mubr.f32.gmra.mrb[0].mxu0 %v4639
        %v4641 = vpop.f32.mrb[0].mxu0
        %v4642 = vadd.f32 %v3509, %v4641
        %v4643 = vpop.f32.mrb[0].mxu0
        %v4644 = vadd.f32 %v3511, %v4643
        %4645 = vmatprep.mubr.f32.mxu0 0.0
        %v4646 = vand.u32 %v872, 4294901760
        %v4647 = vsub.f32 %v872, %v4646
        %4648 = vmatmul.mubr.f32.gmra.mrb[0].mxu0 %v4647
        %v4649 = vpop.f32.mrb[0].mxu0
        %v4650 = vadd.f32 %v3516, %v4649
        %v4651 = vpop.f32.mrb[0].mxu0
        %v4652 = vadd.f32 %v3518, %v4651
        %4653 = vmatprep.mubr.f32.mxu0 0.0
        %v4654 = vand.u32 %v875, 4294901760
        %v4655 = vsub.f32 %v875, %v4654
        %4656 = vmatmul.mubr.f32.gmra.mrb[0].mxu0 %v4655
        %v4657 = vpop.f32.mrb[0].mxu0
        %v4658 = vadd.f32 %v3523, %v4657
        %v4659 = vpop.f32.mrb[0].mxu0
        %v4660 = vadd.f32 %v3525, %v4659
        %4661 = vmatprep.mubr.f32.mxu0 0.0
        %v4662 = vand.u32 %v878, 4294901760
        %v4663 = vsub.f32 %v878, %v4662
        %4664 = vmatmul.mubr.f32.gmra.mrb[0].mxu0 %v4663
        %v4665 = vpop.f32.mrb[0].mxu0
        %v4666 = vadd.f32 %v3530, %v4665
        %v4667 = vpop.f32.mrb[0].mxu0
        %v4668 = vadd.f32 %v3532, %v4667
        %4669 = vmatprep.mubr.f32.mxu0 0.0
        %v4670 = vand.u32 %v881, 4294901760
        %v4671 = vsub.f32 %v881, %v4670
        %4672 = vmatmul.mubr.f32.gmra.mrb[0].mxu0 %v4671
        %v4673 = vpop.f32.mrb[0].mxu0
        %v4674 = vadd.f32 %v3537, %v4673
        %v4675 = vpop.f32.mrb[0].mxu0
        %v4676 = vadd.f32 %v3539, %v4675
        %4677 = vmatprep.mubr.f32.mxu0 0.0
        %v4678 = vand.u32 %v884, 4294901760
        %v4679 = vsub.f32 %v884, %v4678
        %4680 = vmatmul.mubr.f32.gmra.mrb[0].mxu0 %v4679
        %v4681 = vpop.f32.mrb[0].mxu0
        %v4682 = vadd.f32 %v3544, %v4681
        %v4683 = vpop.f32.mrb[0].mxu0
        %v4684 = vadd.f32 %v3546, %v4683
        %4685 = vmatprep.mubr.f32.mxu0 0.0
        %v4686 = vand.u32 %v887, 4294901760
        %v4687 = vsub.f32 %v887, %v4686
        %4688 = vmatmul.mubr.f32.gmra.mrb[0].mxu0 %v4687
        %v4689 = vpop.f32.mrb[0].mxu0
        %v4690 = vadd.f32 %v3551, %v4689
        %v4691 = vpop.f32.mrb[0].mxu0
        %v4692 = vadd.f32 %v3553, %v4691
        %4693 = vmatprep.mubr.f32.mxu0 0.0
        %v4694 = vand.u32 %v890, 4294901760
        %v4695 = vsub.f32 %v890, %v4694
        %4696 = vmatmul.mubr.f32.gmra.mrb[0].mxu0 %v4695
        %v4697 = vpop.f32.mrb[0].mxu0
        %v4698 = vadd.f32 %v3558, %v4697
        %v4699 = vpop.f32.mrb[0].mxu0
        %v4700 = vadd.f32 %v3560, %v4699
        %4701 = vmatprep.mubr.f32.mxu0 0.0
        %v4702 = vand.u32 %v893, 4294901760
        %v4703 = vsub.f32 %v893, %v4702
        %4704 = vmatmul.mubr.f32.gmra.mrb[0].mxu0 %v4703
        %v4705 = vpop.f32.mrb[0].mxu0
        %v4706 = vadd.f32 %v3565, %v4705
        %v4707 = vpop.f32.mrb[0].mxu0
        %v4708 = vadd.f32 %v3567, %v4707
        %4709 = vmatprep.mubr.f32.mxu0 0.0
        %v4710 = vand.u32 %v896, 4294901760
        %v4711 = vsub.f32 %v896, %v4710
        %4712 = vmatmul.mubr.f32.gmra.mrb[0].mxu0 %v4711
        %v4713 = vpop.f32.mrb[0].mxu0
        %v4714 = vadd.f32 %v3572, %v4713
        %v4715 = vpop.f32.mrb[0].mxu0
        %v4716 = vadd.f32 %v3574, %v4715
        %4717 = vmatprep.mubr.f32.mxu0 0.0
        %v4718 = vand.u32 %v899, 4294901760
        %v4719 = vsub.f32 %v899, %v4718
        %4720 = vmatmul.mubr.f32.gmra.mrb[0].mxu0 %v4719
        %v4721 = vpop.f32.mrb[0].mxu0
        %v4722 = vadd.f32 %v3579, %v4721
        %v4723 = vpop.f32.mrb[0].mxu0
        %v4724 = vadd.f32 %v3581, %v4723
        %4725 = vmatprep.mubr.f32.mxu0 0.0
        %v4726 = vand.u32 %v902, 4294901760
        %v4727 = vsub.f32 %v902, %v4726
        %4728 = vmatmul.mubr.f32.gmra.mrb[0].mxu0 %v4727
        %v4729 = vpop.f32.mrb[0].mxu0
        %v4730 = vadd.f32 %v3586, %v4729
        %v4731 = vpop.f32.mrb[0].mxu0
        %v4732 = vadd.f32 %v3588, %v4731
        %4733 = vmatprep.mubr.f32.mxu0 0.0
        %v4734 = vand.u32 %v905, 4294901760
        %v4735 = vsub.f32 %v905, %v4734
        %4736 = vmatmul.mubr.f32.gmra.mrb[0].mxu0 %v4735
        %v4737 = vpop.f32.mrb[0].mxu0
        %v4738 = vadd.f32 %v3593, %v4737
        %v4739 = vpop.f32.mrb[0].mxu0
        %v4740 = vadd.f32 %v3595, %v4739
        %4741 = vmatprep.mubr.f32.mxu0 0.0
        %v4742 = vand.u32 %v908, 4294901760
        %v4743 = vsub.f32 %v908, %v4742
        %4744 = vmatmul.mubr.f32.gmra.mrb[0].mxu0 %v4743
        %v4745 = vpop.f32.mrb[0].mxu0
        %v4746 = vadd.f32 %v3600, %v4745
        %v4747 = vpop.f32.mrb[0].mxu0
        %v4748 = vadd.f32 %v3602, %v4747
        %4749 = vmatprep.mubr.f32.mxu0 0.0
        %v4750 = vand.u32 %v911, 4294901760
        %v4751 = vsub.f32 %v911, %v4750
        %4752 = vmatmul.mubr.f32.gmra.mrb[0].mxu0 %v4751
        %v4753 = vpop.f32.mrb[0].mxu0
        %v4754 = vadd.f32 %v3607, %v4753
        %v4755 = vpop.f32.mrb[0].mxu0
        %v4756 = vadd.f32 %v3609, %v4755
        %4757 = vmatprep.mubr.f32.mxu0 0.0
        %v4758 = vand.u32 %v914, 4294901760
        %v4759 = vsub.f32 %v914, %v4758
        %4760 = vmatmul.mubr.f32.gmra.mrb[0].mxu0 %v4759
        %v4761 = vpop.f32.mrb[0].mxu0
        %v4762 = vadd.f32 %v3614, %v4761
        %v4763 = vpop.f32.mrb[0].mxu0
        %v4764 = vadd.f32 %v3616, %v4763
        %4765 = vmatprep.mubr.f32.mxu0 0.0
        %v4766 = vand.u32 %v917, 4294901760
        %v4767 = vsub.f32 %v917, %v4766
        %4768 = vmatmul.mubr.f32.gmra.mrb[0].mxu0 %v4767
        %v4769 = vpop.f32.mrb[0].mxu0
        %v4770 = vadd.f32 %v3621, %v4769
        %v4771 = vpop.f32.mrb[0].mxu0
        %v4772 = vadd.f32 %v3623, %v4771
        %4773 = vmatprep.mubr.f32.mxu0 0.0
        %v4774 = vand.u32 %v920, 4294901760
        %v4775 = vsub.f32 %v920, %v4774
        %4776 = vmatmul.mubr.f32.gmra.mrb[0].mxu0 %v4775
        %v4777 = vpop.f32.mrb[0].mxu0
        %v4778 = vadd.f32 %v3628, %v4777
        %v4779 = vpop.f32.mrb[0].mxu0
        %v4780 = vadd.f32 %v3630, %v4779
        %4781 = vmatprep.mubr.f32.mxu0 0.0
        %v4782 = vand.u32 %v923, 4294901760
        %v4783 = vsub.f32 %v923, %v4782
        %4784 = vmatmul.mubr.f32.gmra.mrb[0].mxu0 %v4783
        %v4785 = vpop.f32.mrb[0].mxu0
        %v4786 = vadd.f32 %v3635, %v4785
        %v4787 = vpop.f32.mrb[0].mxu0
        %v4788 = vadd.f32 %v3637, %v4787
        %4789 = vmatprep.mubr.f32.mxu0 0.0
        %v4790 = vand.u32 %v926, 4294901760
        %v4791 = vsub.f32 %v926, %v4790
        %4792 = vmatmul.mubr.f32.gmra.mrb[0].mxu0 %v4791
        %v4793 = vpop.f32.mrb[0].mxu0
        %v4794 = vadd.f32 %v3642, %v4793
        %v4795 = vpop.f32.mrb[0].mxu0
        %v4796 = vadd.f32 %v3644, %v4795
        %4797 = vmatprep.mubr.f32.mxu0 0.0
        %v4798 = vand.u32 %v929, 4294901760
        %v4799 = vsub.f32 %v929, %v4798
        %4800 = vmatmul.mubr.f32.gmra.mrb[0].mxu0 %v4799
        %v4801 = vpop.f32.mrb[0].mxu0
        %v4802 = vadd.f32 %v3649, %v4801
        %v4803 = vpop.f32.mrb[0].mxu0
        %v4804 = vadd.f32 %v3651, %v4803
        %4805 = vdwg.mxu0
        %4806 = vmatprep.subr.mxu0 0.0
        %v4807 = vand.u32 %v932, 4294901760
        %4808 = vmatpush1.xpose.msra.mxu0 %v4807
        %4809 = vmatprep.subr.mxu0 0.0
        %v4810 = vand.u32 %v935, 4294901760
        %4811 = vmatpush1.xpose.msra.mxu0 %v4810
        %4812 = vmatprep.subr.mxu0 0.0
        %v4813 = vand.u32 %v938, 4294901760
        %4814 = vmatpush1.xpose.msra.mxu0 %v4813
        %4815 = vmatprep.subr.mxu0 0.0
        %v4816 = vand.u32 %v941, 4294901760
        %4817 = vmatpush1.xpose.msra.mxu0 %v4816
        %4818 = vmatprep.subr.mxu0 0.0
        %v4819 = vand.u32 %v944, 4294901760
        %4820 = vmatpush1.xpose.msra.mxu0 %v4819
        %4821 = vmatprep.subr.mxu0 0.0
        %v4822 = vand.u32 %v947, 4294901760
        %4823 = vmatpush1.xpose.msra.mxu0 %v4822
        %4824 = vmatprep.subr.mxu0 0.0
        %v4825 = vand.u32 %v950, 4294901760
        %4826 = vmatpush1.xpose.msra.mxu0 %v4825
        %4827 = vmatprep.subr.mxu0 0.0
        %v4828 = vand.u32 %v953, 4294901760
        %4829 = vmatpush1.xpose.msra.mxu0 %v4828
        %4830 = vmatprep.subr.mxu0 0.0
        %v4831 = vand.u32 %v956, 4294901760
        %4832 = vmatpush1.xpose.msra.mxu0 %v4831
        %4833 = vmatprep.subr.mxu0 0.0
        %v4834 = vand.u32 %v959, 4294901760
        %4835 = vmatpush1.xpose.msra.mxu0 %v4834
        %4836 = vmatprep.subr.mxu0 0.0
        %v4837 = vand.u32 %v962, 4294901760
        %4838 = vmatpush1.xpose.msra.mxu0 %v4837
        %4839 = vmatprep.subr.mxu0 0.0
        %v4840 = vand.u32 %v965, 4294901760
        %4841 = vmatpush1.xpose.msra.mxu0 %v4840
        %4842 = vmatprep.subr.mxu0 0.0
        %v4843 = vand.u32 %v968, 4294901760
        %4844 = vmatpush1.xpose.msra.mxu0 %v4843
        %4845 = vmatprep.subr.mxu0 0.0
        %v4846 = vand.u32 %v971, 4294901760
        %4847 = vmatpush1.xpose.msra.mxu0 %v4846
        %4848 = vmatprep.subr.mxu0 0.0
        %v4849 = vand.u32 %v974, 4294901760
        %4850 = vmatpush1.xpose.msra.mxu0 %v4849
        %4851 = vmatprep.subr.mxu0 0.0
        %v4852 = vand.u32 %v977, 4294901760
        %4853 = vmatpush1.xpose.msra.mxu0 %v4852
        %4854 = vmatprep.subr.mxu0 0.0
        %v4855 = vand.u32 %v980, 4294901760
        %4856 = vmatpush1.xpose.msra.mxu0 %v4855
        %4857 = vmatprep.subr.mxu0 0.0
        %v4858 = vand.u32 %v983, 4294901760
        %4859 = vmatpush1.xpose.msra.mxu0 %v4858
        %4860 = vmatprep.subr.mxu0 0.0
        %v4861 = vand.u32 %v986, 4294901760
        %4862 = vmatpush1.xpose.msra.mxu0 %v4861
        %4863 = vmatprep.subr.mxu0 0.0
        %v4864 = vand.u32 %v989, 4294901760
        %4865 = vmatpush1.xpose.msra.mxu0 %v4864
        %4866 = vmatprep.subr.mxu0 0.0
        %v4867 = vand.u32 %v992, 4294901760
        %4868 = vmatpush1.xpose.msra.mxu0 %v4867
        %4869 = vmatprep.subr.mxu0 0.0
        %v4870 = vand.u32 %v995, 4294901760
        %4871 = vmatpush1.xpose.msra.mxu0 %v4870
        %4872 = vmatprep.subr.mxu0 0.0
        %v4873 = vand.u32 %v998, 4294901760
        %4874 = vmatpush1.xpose.msra.mxu0 %v4873
        %4875 = vmatprep.subr.mxu0 0.0
        %v4876 = vand.u32 %v1001, 4294901760
        %4877 = vmatpush1.xpose.msra.mxu0 %v4876
        %4878 = vmatprep.subr.mxu0 0.0
        %v4879 = vand.u32 %v1004, 4294901760
        %4880 = vmatpush1.xpose.msra.mxu0 %v4879
        %4881 = vmatprep.subr.mxu0 0.0
        %v4882 = vand.u32 %v1007, 4294901760
        %4883 = vmatpush1.xpose.msra.mxu0 %v4882
        %4884 = vmatprep.subr.mxu0 0.0
        %v4885 = vand.u32 %v1010, 4294901760
        %4886 = vmatpush1.xpose.msra.mxu0 %v4885
        %4887 = vmatprep.subr.mxu0 0.0
        %v4888 = vand.u32 %v1013, 4294901760
        %4889 = vmatpush1.xpose.msra.mxu0 %v4888
        %4890 = vmatprep.subr.mxu0 0.0
        %v4891 = vand.u32 %v1016, 4294901760
        %4892 = vmatpush1.xpose.msra.mxu0 %v4891
        %4893 = vmatprep.subr.mxu0 0.0
        %v4894 = vand.u32 %v1019, 4294901760
        %4895 = vmatpush1.xpose.msra.mxu0 %v4894
        %4896 = vmatprep.subr.mxu0 0.0
        %v4897 = vand.u32 %v1022, 4294901760
        %4898 = vmatpush1.xpose.msra.mxu0 %v4897
        %4899 = vmatprep.subr.mxu0 0.0
        %v4900 = vand.u32 %v1025, 4294901760
        %4901 = vmatpush1.xpose.msra.mxu0 %v4900
        %4902 = vmatprep.mubr.f32.mxu0 0.0
        %v4903 = vand.u32 %v548, 4294901760
        %v4904 = vsub.f32 %v548, %v4903
        %v4905 = vand.u32 %v4904, 4294901760
        %4906 = vmatmul.mubr.f32.gmra.mrb[0].mxu0 %v4905
        %v4907 = vpop.f32.mrb[0].mxu0
        %v4908 = vadd.f32 %v3786, %v4907
        %v4909 = vpop.f32.mrb[0].mxu0
        %v4910 = vadd.f32 %v3788, %v4909
        %4911 = vmatprep.mubr.f32.mxu0 0.0
        %v4912 = vand.u32 %v551, 4294901760
        %v4913 = vsub.f32 %v551, %v4912
        %v4914 = vand.u32 %v4913, 4294901760
        %4915 = vmatmul.mubr.f32.gmra.mrb[0].mxu0 %v4914
        %v4916 = vpop.f32.mrb[0].mxu0
        %v4917 = vadd.f32 %v3794, %v4916
        %v4918 = vpop.f32.mrb[0].mxu0
        %v4919 = vadd.f32 %v3796, %v4918
        %4920 = vmatprep.mubr.f32.mxu0 0.0
        %v4921 = vand.u32 %v554, 4294901760
        %v4922 = vsub.f32 %v554, %v4921
        %v4923 = vand.u32 %v4922, 4294901760
        %4924 = vmatmul.mubr.f32.gmra.mrb[0].mxu0 %v4923
        %v4925 = vpop.f32.mrb[0].mxu0
        %v4926 = vadd.f32 %v3802, %v4925
        %v4927 = vpop.f32.mrb[0].mxu0
        %v4928 = vadd.f32 %v3804, %v4927
        %4929 = vmatprep.mubr.f32.mxu0 0.0
        %v4930 = vand.u32 %v557, 4294901760
        %v4931 = vsub.f32 %v557, %v4930
        %v4932 = vand.u32 %v4931, 4294901760
        %4933 = vmatmul.mubr.f32.gmra.mrb[0].mxu0 %v4932
        %v4934 = vpop.f32.mrb[0].mxu0
        %v4935 = vadd.f32 %v3810, %v4934
        %v4936 = vpop.f32.mrb[0].mxu0
        %v4937 = vadd.f32 %v3812, %v4936
        %4938 = vmatprep.mubr.f32.mxu0 0.0
        %v4939 = vand.u32 %v560, 4294901760
        %v4940 = vsub.f32 %v560, %v4939
        %v4941 = vand.u32 %v4940, 4294901760
        %4942 = vmatmul.mubr.f32.gmra.mrb[0].mxu0 %v4941
        %v4943 = vpop.f32.mrb[0].mxu0
        %v4944 = vadd.f32 %v3818, %v4943
        %v4945 = vpop.f32.mrb[0].mxu0
        %v4946 = vadd.f32 %v3820, %v4945
        %4947 = vmatprep.mubr.f32.mxu0 0.0
        %v4948 = vand.u32 %v563, 4294901760
        %v4949 = vsub.f32 %v563, %v4948
        %v4950 = vand.u32 %v4949, 4294901760
        %4951 = vmatmul.mubr.f32.gmra.mrb[0].mxu0 %v4950
        %v4952 = vpop.f32.mrb[0].mxu0
        %v4953 = vadd.f32 %v3826, %v4952
        %v4954 = vpop.f32.mrb[0].mxu0
        %v4955 = vadd.f32 %v3828, %v4954
        %4956 = vmatprep.mubr.f32.mxu0 0.0
        %v4957 = vand.u32 %v566, 4294901760
        %v4958 = vsub.f32 %v566, %v4957
        %v4959 = vand.u32 %v4958, 4294901760
        %4960 = vmatmul.mubr.f32.gmra.mrb[0].mxu0 %v4959
        %v4961 = vpop.f32.mrb[0].mxu0
        %v4962 = vadd.f32 %v3834, %v4961
        %v4963 = vpop.f32.mrb[0].mxu0
        %v4964 = vadd.f32 %v3836, %v4963
        %4965 = vmatprep.mubr.f32.mxu0 0.0
        %v4966 = vand.u32 %v569, 4294901760
        %v4967 = vsub.f32 %v569, %v4966
        %v4968 = vand.u32 %v4967, 4294901760
        %4969 = vmatmul.mubr.f32.gmra.mrb[0].mxu0 %v4968
        %v4970 = vpop.f32.mrb[0].mxu0
        %v4971 = vadd.f32 %v3842, %v4970
        %v4972 = vpop.f32.mrb[0].mxu0
        %v4973 = vadd.f32 %v3844, %v4972
        %4974 = vmatprep.mubr.f32.mxu0 0.0
        %v4975 = vand.u32 %v572, 4294901760
        %v4976 = vsub.f32 %v572, %v4975
        %v4977 = vand.u32 %v4976, 4294901760
        %4978 = vmatmul.mubr.f32.gmra.mrb[0].mxu0 %v4977
        %v4979 = vpop.f32.mrb[0].mxu0
        %v4980 = vadd.f32 %v3850, %v4979
        %v4981 = vpop.f32.mrb[0].mxu0
        %v4982 = vadd.f32 %v3852, %v4981
        %4983 = vmatprep.mubr.f32.mxu0 0.0
        %v4984 = vand.u32 %v575, 4294901760
        %v4985 = vsub.f32 %v575, %v4984
        %v4986 = vand.u32 %v4985, 4294901760
        %4987 = vmatmul.mubr.f32.gmra.mrb[0].mxu0 %v4986
        %v4988 = vpop.f32.mrb[0].mxu0
        %v4989 = vadd.f32 %v3858, %v4988
        %v4990 = vpop.f32.mrb[0].mxu0
        %v4991 = vadd.f32 %v3860, %v4990
        %4992 = vmatprep.mubr.f32.mxu0 0.0
        %v4993 = vand.u32 %v578, 4294901760
        %v4994 = vsub.f32 %v578, %v4993
        %v4995 = vand.u32 %v4994, 4294901760
        %4996 = vmatmul.mubr.f32.gmra.mrb[0].mxu0 %v4995
        %v4997 = vpop.f32.mrb[0].mxu0
        %v4998 = vadd.f32 %v3866, %v4997
        %v4999 = vpop.f32.mrb[0].mxu0
        %v5000 = vadd.f32 %v3868, %v4999
        %5001 = vmatprep.mubr.f32.mxu0 0.0
        %v5002 = vand.u32 %v581, 4294901760
        %v5003 = vsub.f32 %v581, %v5002
        %v5004 = vand.u32 %v5003, 4294901760
        %5005 = vmatmul.mubr.f32.gmra.mrb[0].mxu0 %v5004
        %v5006 = vpop.f32.mrb[0].mxu0
        %v5007 = vadd.f32 %v3874, %v5006
        %v5008 = vpop.f32.mrb[0].mxu0
        %v5009 = vadd.f32 %v3876, %v5008
        %5010 = vmatprep.mubr.f32.mxu0 0.0
        %v5011 = vand.u32 %v584, 4294901760
        %v5012 = vsub.f32 %v584, %v5011
        %v5013 = vand.u32 %v5012, 4294901760
        %5014 = vmatmul.mubr.f32.gmra.mrb[0].mxu0 %v5013
        %v5015 = vpop.f32.mrb[0].mxu0
        %v5016 = vadd.f32 %v3882, %v5015
        %v5017 = vpop.f32.mrb[0].mxu0
        %v5018 = vadd.f32 %v3884, %v5017
        %5019 = vmatprep.mubr.f32.mxu0 0.0
        %v5020 = vand.u32 %v587, 4294901760
        %v5021 = vsub.f32 %v587, %v5020
        %v5022 = vand.u32 %v5021, 4294901760
        %5023 = vmatmul.mubr.f32.gmra.mrb[0].mxu0 %v5022
        %v5024 = vpop.f32.mrb[0].mxu0
        %v5025 = vadd.f32 %v3890, %v5024
        %v5026 = vpop.f32.mrb[0].mxu0
        %v5027 = vadd.f32 %v3892, %v5026
        %5028 = vmatprep.mubr.f32.mxu0 0.0
        %v5029 = vand.u32 %v590, 4294901760
        %v5030 = vsub.f32 %v590, %v5029
        %v5031 = vand.u32 %v5030, 4294901760
        %5032 = vmatmul.mubr.f32.gmra.mrb[0].mxu0 %v5031
        %v5033 = vpop.f32.mrb[0].mxu0
        %v5034 = vadd.f32 %v3898, %v5033
        %v5035 = vpop.f32.mrb[0].mxu0
        %v5036 = vadd.f32 %v3900, %v5035
        %5037 = vmatprep.mubr.f32.mxu0 0.0
        %v5038 = vand.u32 %v593, 4294901760
        %v5039 = vsub.f32 %v593, %v5038
        %v5040 = vand.u32 %v5039, 4294901760
        %5041 = vmatmul.mubr.f32.gmra.mrb[0].mxu0 %v5040
        %v5042 = vpop.f32.mrb[0].mxu0
        %v5043 = vadd.f32 %v3906, %v5042
        %v5044 = vpop.f32.mrb[0].mxu0
        %v5045 = vadd.f32 %v3908, %v5044
        %5046 = vmatprep.mubr.f32.mxu0 0.0
        %v5047 = vand.u32 %v596, 4294901760
        %v5048 = vsub.f32 %v596, %v5047
        %v5049 = vand.u32 %v5048, 4294901760
        %5050 = vmatmul.mubr.f32.gmra.mrb[0].mxu0 %v5049
        %v5051 = vpop.f32.mrb[0].mxu0
        %v5052 = vadd.f32 %v3914, %v5051
        %v5053 = vpop.f32.mrb[0].mxu0
        %v5054 = vadd.f32 %v3916, %v5053
        %5055 = vmatprep.mubr.f32.mxu0 0.0
        %v5056 = vand.u32 %v599, 4294901760
        %v5057 = vsub.f32 %v599, %v5056
        %v5058 = vand.u32 %v5057, 4294901760
        %5059 = vmatmul.mubr.f32.gmra.mrb[0].mxu0 %v5058
        %v5060 = vpop.f32.mrb[0].mxu0
        %v5061 = vadd.f32 %v3922, %v5060
        %v5062 = vpop.f32.mrb[0].mxu0
        %v5063 = vadd.f32 %v3924, %v5062
        %5064 = vmatprep.mubr.f32.mxu0 0.0
        %v5065 = vand.u32 %v602, 4294901760
        %v5066 = vsub.f32 %v602, %v5065
        %v5067 = vand.u32 %v5066, 4294901760
        %5068 = vmatmul.mubr.f32.gmra.mrb[0].mxu0 %v5067
        %v5069 = vpop.f32.mrb[0].mxu0
        %v5070 = vadd.f32 %v3930, %v5069
        %v5071 = vpop.f32.mrb[0].mxu0
        %v5072 = vadd.f32 %v3932, %v5071
        %5073 = vmatprep.mubr.f32.mxu0 0.0
        %v5074 = vand.u32 %v605, 4294901760
        %v5075 = vsub.f32 %v605, %v5074
        %v5076 = vand.u32 %v5075, 4294901760
        %5077 = vmatmul.mubr.f32.gmra.mrb[0].mxu0 %v5076
        %v5078 = vpop.f32.mrb[0].mxu0
        %v5079 = vadd.f32 %v3938, %v5078
        %v5080 = vpop.f32.mrb[0].mxu0
        %v5081 = vadd.f32 %v3940, %v5080
        %5082 = vmatprep.mubr.f32.mxu0 0.0
        %v5083 = vand.u32 %v608, 4294901760
        %v5084 = vsub.f32 %v608, %v5083
        %v5085 = vand.u32 %v5084, 4294901760
        %5086 = vmatmul.mubr.f32.gmra.mrb[0].mxu0 %v5085
        %v5087 = vpop.f32.mrb[0].mxu0
        %v5088 = vadd.f32 %v3946, %v5087
        %v5089 = vpop.f32.mrb[0].mxu0
        %v5090 = vadd.f32 %v3948, %v5089
        %5091 = vmatprep.mubr.f32.mxu0 0.0
        %v5092 = vand.u32 %v611, 4294901760
        %v5093 = vsub.f32 %v611, %v5092
        %v5094 = vand.u32 %v5093, 4294901760
        %5095 = vmatmul.mubr.f32.gmra.mrb[0].mxu0 %v5094
        %v5096 = vpop.f32.mrb[0].mxu0
        %v5097 = vadd.f32 %v3954, %v5096
        %v5098 = vpop.f32.mrb[0].mxu0
        %v5099 = vadd.f32 %v3956, %v5098
        %5100 = vmatprep.mubr.f32.mxu0 0.0
        %v5101 = vand.u32 %v614, 4294901760
        %v5102 = vsub.f32 %v614, %v5101
        %v5103 = vand.u32 %v5102, 4294901760
        %5104 = vmatmul.mubr.f32.gmra.mrb[0].mxu0 %v5103
        %v5105 = vpop.f32.mrb[0].mxu0
        %v5106 = vadd.f32 %v3962, %v5105
        %v5107 = vpop.f32.mrb[0].mxu0
        %v5108 = vadd.f32 %v3964, %v5107
        %5109 = vmatprep.mubr.f32.mxu0 0.0
        %v5110 = vand.u32 %v617, 4294901760
        %v5111 = vsub.f32 %v617, %v5110
        %v5112 = vand.u32 %v5111, 4294901760
        %5113 = vmatmul.mubr.f32.gmra.mrb[0].mxu0 %v5112
        %v5114 = vpop.f32.mrb[0].mxu0
        %v5115 = vadd.f32 %v3970, %v5114
        %v5116 = vpop.f32.mrb[0].mxu0
        %v5117 = vadd.f32 %v3972, %v5116
        %5118 = vmatprep.mubr.f32.mxu0 0.0
        %v5119 = vand.u32 %v620, 4294901760
        %v5120 = vsub.f32 %v620, %v5119
        %v5121 = vand.u32 %v5120, 4294901760
        %5122 = vmatmul.mubr.f32.gmra.mrb[0].mxu0 %v5121
        %v5123 = vpop.f32.mrb[0].mxu0
        %v5124 = vadd.f32 %v3978, %v5123
        %v5125 = vpop.f32.mrb[0].mxu0
        %v5126 = vadd.f32 %v3980, %v5125
        %5127 = vmatprep.mubr.f32.mxu0 0.0
        %v5128 = vand.u32 %v623, 4294901760
        %v5129 = vsub.f32 %v623, %v5128
        %v5130 = vand.u32 %v5129, 4294901760
        %5131 = vmatmul.mubr.f32.gmra.mrb[0].mxu0 %v5130
        %v5132 = vpop.f32.mrb[0].mxu0
        %v5133 = vadd.f32 %v3986, %v5132
        %v5134 = vpop.f32.mrb[0].mxu0
        %v5135 = vadd.f32 %v3988, %v5134
        %5136 = vmatprep.mubr.f32.mxu0 0.0
        %v5137 = vand.u32 %v626, 4294901760
        %v5138 = vsub.f32 %v626, %v5137
        %v5139 = vand.u32 %v5138, 4294901760
        %5140 = vmatmul.mubr.f32.gmra.mrb[0].mxu0 %v5139
        %v5141 = vpop.f32.mrb[0].mxu0
        %v5142 = vadd.f32 %v3994, %v5141
        %v5143 = vpop.f32.mrb[0].mxu0
        %v5144 = vadd.f32 %v3996, %v5143
        %5145 = vmatprep.mubr.f32.mxu0 0.0
        %v5146 = vand.u32 %v629, 4294901760
        %v5147 = vsub.f32 %v629, %v5146
        %v5148 = vand.u32 %v5147, 4294901760
        %5149 = vmatmul.mubr.f32.gmra.mrb[0].mxu0 %v5148
        %v5150 = vpop.f32.mrb[0].mxu0
        %v5151 = vadd.f32 %v4002, %v5150
        %v5152 = vpop.f32.mrb[0].mxu0
        %v5153 = vadd.f32 %v4004, %v5152
        %5154 = vmatprep.mubr.f32.mxu0 0.0
        %v5155 = vand.u32 %v632, 4294901760
        %v5156 = vsub.f32 %v632, %v5155
        %v5157 = vand.u32 %v5156, 4294901760
        %5158 = vmatmul.mubr.f32.gmra.mrb[0].mxu0 %v5157
        %v5159 = vpop.f32.mrb[0].mxu0
        %v5160 = vadd.f32 %v4010, %v5159
        %v5161 = vpop.f32.mrb[0].mxu0
        %v5162 = vadd.f32 %v4012, %v5161
        %5163 = vmatprep.mubr.f32.mxu0 0.0
        %v5164 = vand.u32 %v635, 4294901760
        %v5165 = vsub.f32 %v635, %v5164
        %v5166 = vand.u32 %v5165, 4294901760
        %5167 = vmatmul.mubr.f32.gmra.mrb[0].mxu0 %v5166
        %v5168 = vpop.f32.mrb[0].mxu0
        %v5169 = vadd.f32 %v4018, %v5168
        %v5170 = vpop.f32.mrb[0].mxu0
        %v5171 = vadd.f32 %v4020, %v5170
        %5172 = vmatprep.mubr.f32.mxu0 0.0
        %v5173 = vand.u32 %v638, 4294901760
        %v5174 = vsub.f32 %v638, %v5173
        %v5175 = vand.u32 %v5174, 4294901760
        %5176 = vmatmul.mubr.f32.gmra.mrb[0].mxu0 %v5175
        %v5177 = vpop.f32.mrb[0].mxu0
        %v5178 = vadd.f32 %v4026, %v5177
        %v5179 = vpop.f32.mrb[0].mxu0
        %v5180 = vadd.f32 %v4028, %v5179
        %5181 = vmatprep.mubr.f32.mxu0 0.0
        %v5182 = vand.u32 %v641, 4294901760
        %v5183 = vsub.f32 %v641, %v5182
        %v5184 = vand.u32 %v5183, 4294901760
        %5185 = vmatmul.mubr.f32.gmra.mrb[0].mxu0 %v5184
        %v5186 = vpop.f32.mrb[0].mxu0
        %v5187 = vadd.f32 %v4034, %v5186
        %v5188 = vpop.f32.mrb[0].mxu0
        %v5189 = vadd.f32 %v4036, %v5188
        %5190 = vmatprep.mubr.f32.mxu0 0.0
        %v5191 = vand.u32 %v644, 4294901760
        %v5192 = vsub.f32 %v644, %v5191
        %v5193 = vand.u32 %v5192, 4294901760
        %5194 = vmatmul.mubr.f32.gmra.mrb[0].mxu0 %v5193
        %v5195 = vpop.f32.mrb[0].mxu0
        %v5196 = vadd.f32 %v4042, %v5195
        %v5197 = vpop.f32.mrb[0].mxu0
        %v5198 = vadd.f32 %v4044, %v5197
        %5199 = vmatprep.mubr.f32.mxu0 0.0
        %v5200 = vand.u32 %v647, 4294901760
        %v5201 = vsub.f32 %v647, %v5200
        %v5202 = vand.u32 %v5201, 4294901760
        %5203 = vmatmul.mubr.f32.gmra.mrb[0].mxu0 %v5202
        %v5204 = vpop.f32.mrb[0].mxu0
        %v5205 = vadd.f32 %v4050, %v5204
        %v5206 = vpop.f32.mrb[0].mxu0
        %v5207 = vadd.f32 %v4052, %v5206
        %5208 = vmatprep.mubr.f32.mxu0 0.0
        %v5209 = vand.u32 %v650, 4294901760
        %v5210 = vsub.f32 %v650, %v5209
        %v5211 = vand.u32 %v5210, 4294901760
        %5212 = vmatmul.mubr.f32.gmra.mrb[0].mxu0 %v5211
        %v5213 = vpop.f32.mrb[0].mxu0
        %v5214 = vadd.f32 %v4058, %v5213
        %v5215 = vpop.f32.mrb[0].mxu0
        %v5216 = vadd.f32 %v4060, %v5215
        %5217 = vmatprep.mubr.f32.mxu0 0.0
        %v5218 = vand.u32 %v653, 4294901760
        %v5219 = vsub.f32 %v653, %v5218
        %v5220 = vand.u32 %v5219, 4294901760
        %5221 = vmatmul.mubr.f32.gmra.mrb[0].mxu0 %v5220
        %v5222 = vpop.f32.mrb[0].mxu0
        %v5223 = vadd.f32 %v4066, %v5222
        %v5224 = vpop.f32.mrb[0].mxu0
        %v5225 = vadd.f32 %v4068, %v5224
        %5226 = vmatprep.mubr.f32.mxu0 0.0
        %v5227 = vand.u32 %v656, 4294901760
        %v5228 = vsub.f32 %v656, %v5227
        %v5229 = vand.u32 %v5228, 4294901760
        %5230 = vmatmul.mubr.f32.gmra.mrb[0].mxu0 %v5229
        %v5231 = vpop.f32.mrb[0].mxu0
        %v5232 = vadd.f32 %v4074, %v5231
        %v5233 = vpop.f32.mrb[0].mxu0
        %v5234 = vadd.f32 %v4076, %v5233
        %5235 = vmatprep.mubr.f32.mxu0 0.0
        %v5236 = vand.u32 %v659, 4294901760
        %v5237 = vsub.f32 %v659, %v5236
        %v5238 = vand.u32 %v5237, 4294901760
        %5239 = vmatmul.mubr.f32.gmra.mrb[0].mxu0 %v5238
        %v5240 = vpop.f32.mrb[0].mxu0
        %v5241 = vadd.f32 %v4082, %v5240
        %v5242 = vpop.f32.mrb[0].mxu0
        %v5243 = vadd.f32 %v4084, %v5242
        %5244 = vmatprep.mubr.f32.mxu0 0.0
        %v5245 = vand.u32 %v662, 4294901760
        %v5246 = vsub.f32 %v662, %v5245
        %v5247 = vand.u32 %v5246, 4294901760
        %5248 = vmatmul.mubr.f32.gmra.mrb[0].mxu0 %v5247
        %v5249 = vpop.f32.mrb[0].mxu0
        %v5250 = vadd.f32 %v4090, %v5249
        %v5251 = vpop.f32.mrb[0].mxu0
        %v5252 = vadd.f32 %v4092, %v5251
        %5253 = vmatprep.mubr.f32.mxu0 0.0
        %v5254 = vand.u32 %v665, 4294901760
        %v5255 = vsub.f32 %v665, %v5254
        %v5256 = vand.u32 %v5255, 4294901760
        %5257 = vmatmul.mubr.f32.gmra.mrb[0].mxu0 %v5256
        %v5258 = vpop.f32.mrb[0].mxu0
        %v5259 = vadd.f32 %v4098, %v5258
        %v5260 = vpop.f32.mrb[0].mxu0
        %v5261 = vadd.f32 %v4100, %v5260
        %5262 = vmatprep.mubr.f32.mxu0 0.0
        %v5263 = vand.u32 %v668, 4294901760
        %v5264 = vsub.f32 %v668, %v5263
        %v5265 = vand.u32 %v5264, 4294901760
        %5266 = vmatmul.mubr.f32.gmra.mrb[0].mxu0 %v5265
        %v5267 = vpop.f32.mrb[0].mxu0
        %v5268 = vadd.f32 %v4106, %v5267
        %v5269 = vpop.f32.mrb[0].mxu0
        %v5270 = vadd.f32 %v4108, %v5269
        %5271 = vmatprep.mubr.f32.mxu0 0.0
        %v5272 = vand.u32 %v671, 4294901760
        %v5273 = vsub.f32 %v671, %v5272
        %v5274 = vand.u32 %v5273, 4294901760
        %5275 = vmatmul.mubr.f32.gmra.mrb[0].mxu0 %v5274
        %v5276 = vpop.f32.mrb[0].mxu0
        %v5277 = vadd.f32 %v4114, %v5276
        %v5278 = vpop.f32.mrb[0].mxu0
        %v5279 = vadd.f32 %v4116, %v5278
        %5280 = vmatprep.mubr.f32.mxu0 0.0
        %v5281 = vand.u32 %v674, 4294901760
        %v5282 = vsub.f32 %v674, %v5281
        %v5283 = vand.u32 %v5282, 4294901760
        %5284 = vmatmul.mubr.f32.gmra.mrb[0].mxu0 %v5283
        %v5285 = vpop.f32.mrb[0].mxu0
        %v5286 = vadd.f32 %v4122, %v5285
        %v5287 = vpop.f32.mrb[0].mxu0
        %v5288 = vadd.f32 %v4124, %v5287
        %5289 = vmatprep.mubr.f32.mxu0 0.0
        %v5290 = vand.u32 %v677, 4294901760
        %v5291 = vsub.f32 %v677, %v5290
        %v5292 = vand.u32 %v5291, 4294901760
        %5293 = vmatmul.mubr.f32.gmra.mrb[0].mxu0 %v5292
        %v5294 = vpop.f32.mrb[0].mxu0
        %v5295 = vadd.f32 %v4130, %v5294
        %v5296 = vpop.f32.mrb[0].mxu0
        %v5297 = vadd.f32 %v4132, %v5296
        %5298 = vmatprep.mubr.f32.mxu0 0.0
        %v5299 = vand.u32 %v680, 4294901760
        %v5300 = vsub.f32 %v680, %v5299
        %v5301 = vand.u32 %v5300, 4294901760
        %5302 = vmatmul.mubr.f32.gmra.mrb[0].mxu0 %v5301
        %v5303 = vpop.f32.mrb[0].mxu0
        %v5304 = vadd.f32 %v4138, %v5303
        %v5305 = vpop.f32.mrb[0].mxu0
        %v5306 = vadd.f32 %v4140, %v5305
        %5307 = vmatprep.mubr.f32.mxu0 0.0
        %v5308 = vand.u32 %v683, 4294901760
        %v5309 = vsub.f32 %v683, %v5308
        %v5310 = vand.u32 %v5309, 4294901760
        %5311 = vmatmul.mubr.f32.gmra.mrb[0].mxu0 %v5310
        %v5312 = vpop.f32.mrb[0].mxu0
        %v5313 = vadd.f32 %v4146, %v5312
        %v5314 = vpop.f32.mrb[0].mxu0
        %v5315 = vadd.f32 %v4148, %v5314
        %5316 = vmatprep.mubr.f32.mxu0 0.0
        %v5317 = vand.u32 %v686, 4294901760
        %v5318 = vsub.f32 %v686, %v5317
        %v5319 = vand.u32 %v5318, 4294901760
        %5320 = vmatmul.mubr.f32.gmra.mrb[0].mxu0 %v5319
        %v5321 = vpop.f32.mrb[0].mxu0
        %v5322 = vadd.f32 %v4154, %v5321
        %v5323 = vpop.f32.mrb[0].mxu0
        %v5324 = vadd.f32 %v4156, %v5323
        %5325 = vmatprep.mubr.f32.mxu0 0.0
        %v5326 = vand.u32 %v689, 4294901760
        %v5327 = vsub.f32 %v689, %v5326
        %v5328 = vand.u32 %v5327, 4294901760
        %5329 = vmatmul.mubr.f32.gmra.mrb[0].mxu0 %v5328
        %v5330 = vpop.f32.mrb[0].mxu0
        %v5331 = vadd.f32 %v4162, %v5330
        %v5332 = vpop.f32.mrb[0].mxu0
        %v5333 = vadd.f32 %v4164, %v5332
        %5334 = vmatprep.mubr.f32.mxu0 0.0
        %v5335 = vand.u32 %v692, 4294901760
        %v5336 = vsub.f32 %v692, %v5335
        %v5337 = vand.u32 %v5336, 4294901760
        %5338 = vmatmul.mubr.f32.gmra.mrb[0].mxu0 %v5337
        %v5339 = vpop.f32.mrb[0].mxu0
        %v5340 = vadd.f32 %v4170, %v5339
        %v5341 = vpop.f32.mrb[0].mxu0
        %v5342 = vadd.f32 %v4172, %v5341
        %5343 = vmatprep.mubr.f32.mxu0 0.0
        %v5344 = vand.u32 %v695, 4294901760
        %v5345 = vsub.f32 %v695, %v5344
        %v5346 = vand.u32 %v5345, 4294901760
        %5347 = vmatmul.mubr.f32.gmra.mrb[0].mxu0 %v5346
        %v5348 = vpop.f32.mrb[0].mxu0
        %v5349 = vadd.f32 %v4178, %v5348
        %v5350 = vpop.f32.mrb[0].mxu0
        %v5351 = vadd.f32 %v4180, %v5350
        %5352 = vmatprep.mubr.f32.mxu0 0.0
        %v5353 = vand.u32 %v698, 4294901760
        %v5354 = vsub.f32 %v698, %v5353
        %v5355 = vand.u32 %v5354, 4294901760
        %5356 = vmatmul.mubr.f32.gmra.mrb[0].mxu0 %v5355
        %v5357 = vpop.f32.mrb[0].mxu0
        %v5358 = vadd.f32 %v4186, %v5357
        %v5359 = vpop.f32.mrb[0].mxu0
        %v5360 = vadd.f32 %v4188, %v5359
        %5361 = vmatprep.mubr.f32.mxu0 0.0
        %v5362 = vand.u32 %v701, 4294901760
        %v5363 = vsub.f32 %v701, %v5362
        %v5364 = vand.u32 %v5363, 4294901760
        %5365 = vmatmul.mubr.f32.gmra.mrb[0].mxu0 %v5364
        %v5366 = vpop.f32.mrb[0].mxu0
        %v5367 = vadd.f32 %v4194, %v5366
        %v5368 = vpop.f32.mrb[0].mxu0
        %v5369 = vadd.f32 %v4196, %v5368
        %5370 = vmatprep.mubr.f32.mxu0 0.0
        %v5371 = vand.u32 %v704, 4294901760
        %v5372 = vsub.f32 %v704, %v5371
        %v5373 = vand.u32 %v5372, 4294901760
        %5374 = vmatmul.mubr.f32.gmra.mrb[0].mxu0 %v5373
        %v5375 = vpop.f32.mrb[0].mxu0
        %v5376 = vadd.f32 %v4202, %v5375
        %v5377 = vpop.f32.mrb[0].mxu0
        %v5378 = vadd.f32 %v4204, %v5377
        %5379 = vmatprep.mubr.f32.mxu0 0.0
        %v5380 = vand.u32 %v707, 4294901760
        %v5381 = vsub.f32 %v707, %v5380
        %v5382 = vand.u32 %v5381, 4294901760
        %5383 = vmatmul.mubr.f32.gmra.mrb[0].mxu0 %v5382
        %v5384 = vpop.f32.mrb[0].mxu0
        %v5385 = vadd.f32 %v4210, %v5384
        %v5386 = vpop.f32.mrb[0].mxu0
        %v5387 = vadd.f32 %v4212, %v5386
        %5388 = vmatprep.mubr.f32.mxu0 0.0
        %v5389 = vand.u32 %v710, 4294901760
        %v5390 = vsub.f32 %v710, %v5389
        %v5391 = vand.u32 %v5390, 4294901760
        %5392 = vmatmul.mubr.f32.gmra.mrb[0].mxu0 %v5391
        %v5393 = vpop.f32.mrb[0].mxu0
        %v5394 = vadd.f32 %v4218, %v5393
        %v5395 = vpop.f32.mrb[0].mxu0
        %v5396 = vadd.f32 %v4220, %v5395
        %5397 = vmatprep.mubr.f32.mxu0 0.0
        %v5398 = vand.u32 %v713, 4294901760
        %v5399 = vsub.f32 %v713, %v5398
        %v5400 = vand.u32 %v5399, 4294901760
        %5401 = vmatmul.mubr.f32.gmra.mrb[0].mxu0 %v5400
        %v5402 = vpop.f32.mrb[0].mxu0
        %v5403 = vadd.f32 %v4226, %v5402
        %v5404 = vpop.f32.mrb[0].mxu0
        %v5405 = vadd.f32 %v4228, %v5404
        %5406 = vmatprep.mubr.f32.mxu0 0.0
        %v5407 = vand.u32 %v716, 4294901760
        %v5408 = vsub.f32 %v716, %v5407
        %v5409 = vand.u32 %v5408, 4294901760
        %5410 = vmatmul.mubr.f32.gmra.mrb[0].mxu0 %v5409
        %v5411 = vpop.f32.mrb[0].mxu0
        %v5412 = vadd.f32 %v4234, %v5411
        %v5413 = vpop.f32.mrb[0].mxu0
        %v5414 = vadd.f32 %v4236, %v5413
        %5415 = vmatprep.mubr.f32.mxu0 0.0
        %v5416 = vand.u32 %v719, 4294901760
        %v5417 = vsub.f32 %v719, %v5416
        %v5418 = vand.u32 %v5417, 4294901760
        %5419 = vmatmul.mubr.f32.gmra.mrb[0].mxu0 %v5418
        %v5420 = vpop.f32.mrb[0].mxu0
        %v5421 = vadd.f32 %v4242, %v5420
        %v5422 = vpop.f32.mrb[0].mxu0
        %v5423 = vadd.f32 %v4244, %v5422
        %5424 = vmatprep.mubr.f32.mxu0 0.0
        %v5425 = vand.u32 %v722, 4294901760
        %v5426 = vsub.f32 %v722, %v5425
        %v5427 = vand.u32 %v5426, 4294901760
        %5428 = vmatmul.mubr.f32.gmra.mrb[0].mxu0 %v5427
        %v5429 = vpop.f32.mrb[0].mxu0
        %v5430 = vadd.f32 %v4250, %v5429
        %v5431 = vpop.f32.mrb[0].mxu0
        %v5432 = vadd.f32 %v4252, %v5431
        %5433 = vmatprep.mubr.f32.mxu0 0.0
        %v5434 = vand.u32 %v725, 4294901760
        %v5435 = vsub.f32 %v725, %v5434
        %v5436 = vand.u32 %v5435, 4294901760
        %5437 = vmatmul.mubr.f32.gmra.mrb[0].mxu0 %v5436
        %v5438 = vpop.f32.mrb[0].mxu0
        %v5439 = vadd.f32 %v4258, %v5438
        %v5440 = vpop.f32.mrb[0].mxu0
        %v5441 = vadd.f32 %v4260, %v5440
        %5442 = vmatprep.mubr.f32.mxu0 0.0
        %v5443 = vand.u32 %v728, 4294901760
        %v5444 = vsub.f32 %v728, %v5443
        %v5445 = vand.u32 %v5444, 4294901760
        %5446 = vmatmul.mubr.f32.gmra.mrb[0].mxu0 %v5445
        %v5447 = vpop.f32.mrb[0].mxu0
        %v5448 = vadd.f32 %v4266, %v5447
        %v5449 = vpop.f32.mrb[0].mxu0
        %v5450 = vadd.f32 %v4268, %v5449
        %5451 = vmatprep.mubr.f32.mxu0 0.0
        %v5452 = vand.u32 %v731, 4294901760
        %v5453 = vsub.f32 %v731, %v5452
        %v5454 = vand.u32 %v5453, 4294901760
        %5455 = vmatmul.mubr.f32.gmra.mrb[0].mxu0 %v5454
        %v5456 = vpop.f32.mrb[0].mxu0
        %v5457 = vadd.f32 %v4274, %v5456
        %v5458 = vpop.f32.mrb[0].mxu0
        %v5459 = vadd.f32 %v4276, %v5458
        %5460 = vmatprep.mubr.f32.mxu0 0.0
        %v5461 = vand.u32 %v734, 4294901760
        %v5462 = vsub.f32 %v734, %v5461
        %v5463 = vand.u32 %v5462, 4294901760
        %5464 = vmatmul.mubr.f32.gmra.mrb[0].mxu0 %v5463
        %v5465 = vpop.f32.mrb[0].mxu0
        %v5466 = vadd.f32 %v4282, %v5465
        %v5467 = vpop.f32.mrb[0].mxu0
        %v5468 = vadd.f32 %v4284, %v5467
        %5469 = vmatprep.mubr.f32.mxu0 0.0
        %v5470 = vand.u32 %v737, 4294901760
        %v5471 = vsub.f32 %v737, %v5470
        %v5472 = vand.u32 %v5471, 4294901760
        %5473 = vmatmul.mubr.f32.gmra.mrb[0].mxu0 %v5472
        %v5474 = vpop.f32.mrb[0].mxu0
        %v5475 = vadd.f32 %v4290, %v5474
        %v5476 = vpop.f32.mrb[0].mxu0
        %v5477 = vadd.f32 %v4292, %v5476
        %5478 = vmatprep.mubr.f32.mxu0 0.0
        %v5479 = vand.u32 %v740, 4294901760
        %v5480 = vsub.f32 %v740, %v5479
        %v5481 = vand.u32 %v5480, 4294901760
        %5482 = vmatmul.mubr.f32.gmra.mrb[0].mxu0 %v5481
        %v5483 = vpop.f32.mrb[0].mxu0
        %v5484 = vadd.f32 %v4298, %v5483
        %v5485 = vpop.f32.mrb[0].mxu0
        %v5486 = vadd.f32 %v4300, %v5485
        %5487 = vmatprep.mubr.f32.mxu0 0.0
        %v5488 = vand.u32 %v743, 4294901760
        %v5489 = vsub.f32 %v743, %v5488
        %v5490 = vand.u32 %v5489, 4294901760
        %5491 = vmatmul.mubr.f32.gmra.mrb[0].mxu0 %v5490
        %v5492 = vpop.f32.mrb[0].mxu0
        %v5493 = vadd.f32 %v4306, %v5492
        %v5494 = vpop.f32.mrb[0].mxu0
        %v5495 = vadd.f32 %v4308, %v5494
        %5496 = vmatprep.mubr.f32.mxu0 0.0
        %v5497 = vand.u32 %v746, 4294901760
        %v5498 = vsub.f32 %v746, %v5497
        %v5499 = vand.u32 %v5498, 4294901760
        %5500 = vmatmul.mubr.f32.gmra.mrb[0].mxu0 %v5499
        %v5501 = vpop.f32.mrb[0].mxu0
        %v5502 = vadd.f32 %v4314, %v5501
        %v5503 = vpop.f32.mrb[0].mxu0
        %v5504 = vadd.f32 %v4316, %v5503
        %5505 = vmatprep.mubr.f32.mxu0 0.0
        %v5506 = vand.u32 %v749, 4294901760
        %v5507 = vsub.f32 %v749, %v5506
        %v5508 = vand.u32 %v5507, 4294901760
        %5509 = vmatmul.mubr.f32.gmra.mrb[0].mxu0 %v5508
        %v5510 = vpop.f32.mrb[0].mxu0
        %v5511 = vadd.f32 %v4322, %v5510
        %v5512 = vpop.f32.mrb[0].mxu0
        %v5513 = vadd.f32 %v4324, %v5512
        %5514 = vmatprep.mubr.f32.mxu0 0.0
        %v5515 = vand.u32 %v752, 4294901760
        %v5516 = vsub.f32 %v752, %v5515
        %v5517 = vand.u32 %v5516, 4294901760
        %5518 = vmatmul.mubr.f32.gmra.mrb[0].mxu0 %v5517
        %v5519 = vpop.f32.mrb[0].mxu0
        %v5520 = vadd.f32 %v4330, %v5519
        %v5521 = vpop.f32.mrb[0].mxu0
        %v5522 = vadd.f32 %v4332, %v5521
        %5523 = vmatprep.mubr.f32.mxu0 0.0
        %v5524 = vand.u32 %v755, 4294901760
        %v5525 = vsub.f32 %v755, %v5524
        %v5526 = vand.u32 %v5525, 4294901760
        %5527 = vmatmul.mubr.f32.gmra.mrb[0].mxu0 %v5526
        %v5528 = vpop.f32.mrb[0].mxu0
        %v5529 = vadd.f32 %v4338, %v5528
        %v5530 = vpop.f32.mrb[0].mxu0
        %v5531 = vadd.f32 %v4340, %v5530
        %5532 = vmatprep.mubr.f32.mxu0 0.0
        %v5533 = vand.u32 %v758, 4294901760
        %v5534 = vsub.f32 %v758, %v5533
        %v5535 = vand.u32 %v5534, 4294901760
        %5536 = vmatmul.mubr.f32.gmra.mrb[0].mxu0 %v5535
        %v5537 = vpop.f32.mrb[0].mxu0
        %v5538 = vadd.f32 %v4346, %v5537
        %v5539 = vpop.f32.mrb[0].mxu0
        %v5540 = vadd.f32 %v4348, %v5539
        %5541 = vmatprep.mubr.f32.mxu0 0.0
        %v5542 = vand.u32 %v761, 4294901760
        %v5543 = vsub.f32 %v761, %v5542
        %v5544 = vand.u32 %v5543, 4294901760
        %5545 = vmatmul.mubr.f32.gmra.mrb[0].mxu0 %v5544
        %v5546 = vpop.f32.mrb[0].mxu0
        %v5547 = vadd.f32 %v4354, %v5546
        %v5548 = vpop.f32.mrb[0].mxu0
        %v5549 = vadd.f32 %v4356, %v5548
        %5550 = vmatprep.mubr.f32.mxu0 0.0
        %v5551 = vand.u32 %v764, 4294901760
        %v5552 = vsub.f32 %v764, %v5551
        %v5553 = vand.u32 %v5552, 4294901760
        %5554 = vmatmul.mubr.f32.gmra.mrb[0].mxu0 %v5553
        %v5555 = vpop.f32.mrb[0].mxu0
        %v5556 = vadd.f32 %v4362, %v5555
        %v5557 = vpop.f32.mrb[0].mxu0
        %v5558 = vadd.f32 %v4364, %v5557
        %5559 = vmatprep.mubr.f32.mxu0 0.0
        %v5560 = vand.u32 %v767, 4294901760
        %v5561 = vsub.f32 %v767, %v5560
        %v5562 = vand.u32 %v5561, 4294901760
        %5563 = vmatmul.mubr.f32.gmra.mrb[0].mxu0 %v5562
        %v5564 = vpop.f32.mrb[0].mxu0
        %v5565 = vadd.f32 %v4370, %v5564
        %v5566 = vpop.f32.mrb[0].mxu0
        %v5567 = vadd.f32 %v4372, %v5566
        %5568 = vmatprep.mubr.f32.mxu0 0.0
        %v5569 = vand.u32 %v770, 4294901760
        %v5570 = vsub.f32 %v770, %v5569
        %v5571 = vand.u32 %v5570, 4294901760
        %5572 = vmatmul.mubr.f32.gmra.mrb[0].mxu0 %v5571
        %v5573 = vpop.f32.mrb[0].mxu0
        %v5574 = vadd.f32 %v4378, %v5573
        %v5575 = vpop.f32.mrb[0].mxu0
        %v5576 = vadd.f32 %v4380, %v5575
        %5577 = vmatprep.mubr.f32.mxu0 0.0
        %v5578 = vand.u32 %v773, 4294901760
        %v5579 = vsub.f32 %v773, %v5578
        %v5580 = vand.u32 %v5579, 4294901760
        %5581 = vmatmul.mubr.f32.gmra.mrb[0].mxu0 %v5580
        %v5582 = vpop.f32.mrb[0].mxu0
        %v5583 = vadd.f32 %v4386, %v5582
        %v5584 = vpop.f32.mrb[0].mxu0
        %v5585 = vadd.f32 %v4388, %v5584
        %5586 = vmatprep.mubr.f32.mxu0 0.0
        %v5587 = vand.u32 %v776, 4294901760
        %v5588 = vsub.f32 %v776, %v5587
        %v5589 = vand.u32 %v5588, 4294901760
        %5590 = vmatmul.mubr.f32.gmra.mrb[0].mxu0 %v5589
        %v5591 = vpop.f32.mrb[0].mxu0
        %v5592 = vadd.f32 %v4394, %v5591
        %v5593 = vpop.f32.mrb[0].mxu0
        %v5594 = vadd.f32 %v4396, %v5593
        %5595 = vmatprep.mubr.f32.mxu0 0.0
        %v5596 = vand.u32 %v779, 4294901760
        %v5597 = vsub.f32 %v779, %v5596
        %v5598 = vand.u32 %v5597, 4294901760
        %5599 = vmatmul.mubr.f32.gmra.mrb[0].mxu0 %v5598
        %v5600 = vpop.f32.mrb[0].mxu0
        %v5601 = vadd.f32 %v4402, %v5600
        %v5602 = vpop.f32.mrb[0].mxu0
        %v5603 = vadd.f32 %v4404, %v5602
        %5604 = vmatprep.mubr.f32.mxu0 0.0
        %v5605 = vand.u32 %v782, 4294901760
        %v5606 = vsub.f32 %v782, %v5605
        %v5607 = vand.u32 %v5606, 4294901760
        %5608 = vmatmul.mubr.f32.gmra.mrb[0].mxu0 %v5607
        %v5609 = vpop.f32.mrb[0].mxu0
        %v5610 = vadd.f32 %v4410, %v5609
        %v5611 = vpop.f32.mrb[0].mxu0
        %v5612 = vadd.f32 %v4412, %v5611
        %5613 = vmatprep.mubr.f32.mxu0 0.0
        %v5614 = vand.u32 %v785, 4294901760
        %v5615 = vsub.f32 %v785, %v5614
        %v5616 = vand.u32 %v5615, 4294901760
        %5617 = vmatmul.mubr.f32.gmra.mrb[0].mxu0 %v5616
        %v5618 = vpop.f32.mrb[0].mxu0
        %v5619 = vadd.f32 %v4418, %v5618
        %v5620 = vpop.f32.mrb[0].mxu0
        %v5621 = vadd.f32 %v4420, %v5620
        %5622 = vmatprep.mubr.f32.mxu0 0.0
        %v5623 = vand.u32 %v788, 4294901760
        %v5624 = vsub.f32 %v788, %v5623
        %v5625 = vand.u32 %v5624, 4294901760
        %5626 = vmatmul.mubr.f32.gmra.mrb[0].mxu0 %v5625
        %v5627 = vpop.f32.mrb[0].mxu0
        %v5628 = vadd.f32 %v4426, %v5627
        %v5629 = vpop.f32.mrb[0].mxu0
        %v5630 = vadd.f32 %v4428, %v5629
        %5631 = vmatprep.mubr.f32.mxu0 0.0
        %v5632 = vand.u32 %v791, 4294901760
        %v5633 = vsub.f32 %v791, %v5632
        %v5634 = vand.u32 %v5633, 4294901760
        %5635 = vmatmul.mubr.f32.gmra.mrb[0].mxu0 %v5634
        %v5636 = vpop.f32.mrb[0].mxu0
        %v5637 = vadd.f32 %v4434, %v5636
        %v5638 = vpop.f32.mrb[0].mxu0
        %v5639 = vadd.f32 %v4436, %v5638
        %5640 = vmatprep.mubr.f32.mxu0 0.0
        %v5641 = vand.u32 %v794, 4294901760
        %v5642 = vsub.f32 %v794, %v5641
        %v5643 = vand.u32 %v5642, 4294901760
        %5644 = vmatmul.mubr.f32.gmra.mrb[0].mxu0 %v5643
        %v5645 = vpop.f32.mrb[0].mxu0
        %v5646 = vadd.f32 %v4442, %v5645
        %v5647 = vpop.f32.mrb[0].mxu0
        %v5648 = vadd.f32 %v4444, %v5647
        %5649 = vmatprep.mubr.f32.mxu0 0.0
        %v5650 = vand.u32 %v797, 4294901760
        %v5651 = vsub.f32 %v797, %v5650
        %v5652 = vand.u32 %v5651, 4294901760
        %5653 = vmatmul.mubr.f32.gmra.mrb[0].mxu0 %v5652
        %v5654 = vpop.f32.mrb[0].mxu0
        %v5655 = vadd.f32 %v4450, %v5654
        %v5656 = vpop.f32.mrb[0].mxu0
        %v5657 = vadd.f32 %v4452, %v5656
        %5658 = vmatprep.mubr.f32.mxu0 0.0
        %v5659 = vand.u32 %v800, 4294901760
        %v5660 = vsub.f32 %v800, %v5659
        %v5661 = vand.u32 %v5660, 4294901760
        %5662 = vmatmul.mubr.f32.gmra.mrb[0].mxu0 %v5661
        %v5663 = vpop.f32.mrb[0].mxu0
        %v5664 = vadd.f32 %v4458, %v5663
        %v5665 = vpop.f32.mrb[0].mxu0
        %v5666 = vadd.f32 %v4460, %v5665
        %5667 = vmatprep.mubr.f32.mxu0 0.0
        %v5668 = vand.u32 %v803, 4294901760
        %v5669 = vsub.f32 %v803, %v5668
        %v5670 = vand.u32 %v5669, 4294901760
        %5671 = vmatmul.mubr.f32.gmra.mrb[0].mxu0 %v5670
        %v5672 = vpop.f32.mrb[0].mxu0
        %v5673 = vadd.f32 %v4466, %v5672
        %v5674 = vpop.f32.mrb[0].mxu0
        %v5675 = vadd.f32 %v4468, %v5674
        %5676 = vmatprep.mubr.f32.mxu0 0.0
        %v5677 = vand.u32 %v806, 4294901760
        %v5678 = vsub.f32 %v806, %v5677
        %v5679 = vand.u32 %v5678, 4294901760
        %5680 = vmatmul.mubr.f32.gmra.mrb[0].mxu0 %v5679
        %v5681 = vpop.f32.mrb[0].mxu0
        %v5682 = vadd.f32 %v4474, %v5681
        %v5683 = vpop.f32.mrb[0].mxu0
        %v5684 = vadd.f32 %v4476, %v5683
        %5685 = vmatprep.mubr.f32.mxu0 0.0
        %v5686 = vand.u32 %v809, 4294901760
        %v5687 = vsub.f32 %v809, %v5686
        %v5688 = vand.u32 %v5687, 4294901760
        %5689 = vmatmul.mubr.f32.gmra.mrb[0].mxu0 %v5688
        %v5690 = vpop.f32.mrb[0].mxu0
        %v5691 = vadd.f32 %v4482, %v5690
        %v5692 = vpop.f32.mrb[0].mxu0
        %v5693 = vadd.f32 %v4484, %v5692
        %5694 = vmatprep.mubr.f32.mxu0 0.0
        %v5695 = vand.u32 %v812, 4294901760
        %v5696 = vsub.f32 %v812, %v5695
        %v5697 = vand.u32 %v5696, 4294901760
        %5698 = vmatmul.mubr.f32.gmra.mrb[0].mxu0 %v5697
        %v5699 = vpop.f32.mrb[0].mxu0
        %v5700 = vadd.f32 %v4490, %v5699
        %v5701 = vpop.f32.mrb[0].mxu0
        %v5702 = vadd.f32 %v4492, %v5701
        %5703 = vmatprep.mubr.f32.mxu0 0.0
        %v5704 = vand.u32 %v815, 4294901760
        %v5705 = vsub.f32 %v815, %v5704
        %v5706 = vand.u32 %v5705, 4294901760
        %5707 = vmatmul.mubr.f32.gmra.mrb[0].mxu0 %v5706
        %v5708 = vpop.f32.mrb[0].mxu0
        %v5709 = vadd.f32 %v4498, %v5708
        %v5710 = vpop.f32.mrb[0].mxu0
        %v5711 = vadd.f32 %v4500, %v5710
        %5712 = vmatprep.mubr.f32.mxu0 0.0
        %v5713 = vand.u32 %v818, 4294901760
        %v5714 = vsub.f32 %v818, %v5713
        %v5715 = vand.u32 %v5714, 4294901760
        %5716 = vmatmul.mubr.f32.gmra.mrb[0].mxu0 %v5715
        %v5717 = vpop.f32.mrb[0].mxu0
        %v5718 = vadd.f32 %v4506, %v5717
        %v5719 = vpop.f32.mrb[0].mxu0
        %v5720 = vadd.f32 %v4508, %v5719
        %5721 = vmatprep.mubr.f32.mxu0 0.0
        %v5722 = vand.u32 %v821, 4294901760
        %v5723 = vsub.f32 %v821, %v5722
        %v5724 = vand.u32 %v5723, 4294901760
        %5725 = vmatmul.mubr.f32.gmra.mrb[0].mxu0 %v5724
        %v5726 = vpop.f32.mrb[0].mxu0
        %v5727 = vadd.f32 %v4514, %v5726
        %v5728 = vpop.f32.mrb[0].mxu0
        %v5729 = vadd.f32 %v4516, %v5728
        %5730 = vmatprep.mubr.f32.mxu0 0.0
        %v5731 = vand.u32 %v824, 4294901760
        %v5732 = vsub.f32 %v824, %v5731
        %v5733 = vand.u32 %v5732, 4294901760
        %5734 = vmatmul.mubr.f32.gmra.mrb[0].mxu0 %v5733
        %v5735 = vpop.f32.mrb[0].mxu0
        %v5736 = vadd.f32 %v4522, %v5735
        %v5737 = vpop.f32.mrb[0].mxu0
        %v5738 = vadd.f32 %v4524, %v5737
        %5739 = vmatprep.mubr.f32.mxu0 0.0
        %v5740 = vand.u32 %v827, 4294901760
        %v5741 = vsub.f32 %v827, %v5740
        %v5742 = vand.u32 %v5741, 4294901760
        %5743 = vmatmul.mubr.f32.gmra.mrb[0].mxu0 %v5742
        %v5744 = vpop.f32.mrb[0].mxu0
        %v5745 = vadd.f32 %v4530, %v5744
        %v5746 = vpop.f32.mrb[0].mxu0
        %v5747 = vadd.f32 %v4532, %v5746
        %5748 = vmatprep.mubr.f32.mxu0 0.0
        %v5749 = vand.u32 %v830, 4294901760
        %v5750 = vsub.f32 %v830, %v5749
        %v5751 = vand.u32 %v5750, 4294901760
        %5752 = vmatmul.mubr.f32.gmra.mrb[0].mxu0 %v5751
        %v5753 = vpop.f32.mrb[0].mxu0
        %v5754 = vadd.f32 %v4538, %v5753
        %v5755 = vpop.f32.mrb[0].mxu0
        %v5756 = vadd.f32 %v4540, %v5755
        %5757 = vmatprep.mubr.f32.mxu0 0.0
        %v5758 = vand.u32 %v833, 4294901760
        %v5759 = vsub.f32 %v833, %v5758
        %v5760 = vand.u32 %v5759, 4294901760
        %5761 = vmatmul.mubr.f32.gmra.mrb[0].mxu0 %v5760
        %v5762 = vpop.f32.mrb[0].mxu0
        %v5763 = vadd.f32 %v4546, %v5762
        %v5764 = vpop.f32.mrb[0].mxu0
        %v5765 = vadd.f32 %v4548, %v5764
        %5766 = vmatprep.mubr.f32.mxu0 0.0
        %v5767 = vand.u32 %v836, 4294901760
        %v5768 = vsub.f32 %v836, %v5767
        %v5769 = vand.u32 %v5768, 4294901760
        %5770 = vmatmul.mubr.f32.gmra.mrb[0].mxu0 %v5769
        %v5771 = vpop.f32.mrb[0].mxu0
        %v5772 = vadd.f32 %v4554, %v5771
        %v5773 = vpop.f32.mrb[0].mxu0
        %v5774 = vadd.f32 %v4556, %v5773
        %5775 = vmatprep.mubr.f32.mxu0 0.0
        %v5776 = vand.u32 %v839, 4294901760
        %v5777 = vsub.f32 %v839, %v5776
        %v5778 = vand.u32 %v5777, 4294901760
        %5779 = vmatmul.mubr.f32.gmra.mrb[0].mxu0 %v5778
        %v5780 = vpop.f32.mrb[0].mxu0
        %v5781 = vadd.f32 %v4562, %v5780
        %v5782 = vpop.f32.mrb[0].mxu0
        %v5783 = vadd.f32 %v4564, %v5782
        %5784 = vmatprep.mubr.f32.mxu0 0.0
        %v5785 = vand.u32 %v842, 4294901760
        %v5786 = vsub.f32 %v842, %v5785
        %v5787 = vand.u32 %v5786, 4294901760
        %5788 = vmatmul.mubr.f32.gmra.mrb[0].mxu0 %v5787
        %v5789 = vpop.f32.mrb[0].mxu0
        %v5790 = vadd.f32 %v4570, %v5789
        %v5791 = vpop.f32.mrb[0].mxu0
        %v5792 = vadd.f32 %v4572, %v5791
        %5793 = vmatprep.mubr.f32.mxu0 0.0
        %v5794 = vand.u32 %v845, 4294901760
        %v5795 = vsub.f32 %v845, %v5794
        %v5796 = vand.u32 %v5795, 4294901760
        %5797 = vmatmul.mubr.f32.gmra.mrb[0].mxu0 %v5796
        %v5798 = vpop.f32.mrb[0].mxu0
        %v5799 = vadd.f32 %v4578, %v5798
        %v5800 = vpop.f32.mrb[0].mxu0
        %v5801 = vadd.f32 %v4580, %v5800
        %5802 = vmatprep.mubr.f32.mxu0 0.0
        %v5803 = vand.u32 %v848, 4294901760
        %v5804 = vsub.f32 %v848, %v5803
        %v5805 = vand.u32 %v5804, 4294901760
        %5806 = vmatmul.mubr.f32.gmra.mrb[0].mxu0 %v5805
        %v5807 = vpop.f32.mrb[0].mxu0
        %v5808 = vadd.f32 %v4586, %v5807
        %v5809 = vpop.f32.mrb[0].mxu0
        %v5810 = vadd.f32 %v4588, %v5809
        %5811 = vmatprep.mubr.f32.mxu0 0.0
        %v5812 = vand.u32 %v851, 4294901760
        %v5813 = vsub.f32 %v851, %v5812
        %v5814 = vand.u32 %v5813, 4294901760
        %5815 = vmatmul.mubr.f32.gmra.mrb[0].mxu0 %v5814
        %v5816 = vpop.f32.mrb[0].mxu0
        %v5817 = vadd.f32 %v4594, %v5816
        %v5818 = vpop.f32.mrb[0].mxu0
        %v5819 = vadd.f32 %v4596, %v5818
        %5820 = vmatprep.mubr.f32.mxu0 0.0
        %v5821 = vand.u32 %v854, 4294901760
        %v5822 = vsub.f32 %v854, %v5821
        %v5823 = vand.u32 %v5822, 4294901760
        %5824 = vmatmul.mubr.f32.gmra.mrb[0].mxu0 %v5823
        %v5825 = vpop.f32.mrb[0].mxu0
        %v5826 = vadd.f32 %v4602, %v5825
        %v5827 = vpop.f32.mrb[0].mxu0
        %v5828 = vadd.f32 %v4604, %v5827
        %5829 = vmatprep.mubr.f32.mxu0 0.0
        %v5830 = vand.u32 %v857, 4294901760
        %v5831 = vsub.f32 %v857, %v5830
        %v5832 = vand.u32 %v5831, 4294901760
        %5833 = vmatmul.mubr.f32.gmra.mrb[0].mxu0 %v5832
        %v5834 = vpop.f32.mrb[0].mxu0
        %v5835 = vadd.f32 %v4610, %v5834
        %v5836 = vpop.f32.mrb[0].mxu0
        %v5837 = vadd.f32 %v4612, %v5836
        %5838 = vmatprep.mubr.f32.mxu0 0.0
        %v5839 = vand.u32 %v860, 4294901760
        %v5840 = vsub.f32 %v860, %v5839
        %v5841 = vand.u32 %v5840, 4294901760
        %5842 = vmatmul.mubr.f32.gmra.mrb[0].mxu0 %v5841
        %v5843 = vpop.f32.mrb[0].mxu0
        %v5844 = vadd.f32 %v4618, %v5843
        %v5845 = vpop.f32.mrb[0].mxu0
        %v5846 = vadd.f32 %v4620, %v5845
        %5847 = vmatprep.mubr.f32.mxu0 0.0
        %v5848 = vand.u32 %v863, 4294901760
        %v5849 = vsub.f32 %v863, %v5848
        %v5850 = vand.u32 %v5849, 4294901760
        %5851 = vmatmul.mubr.f32.gmra.mrb[0].mxu0 %v5850
        %v5852 = vpop.f32.mrb[0].mxu0
        %v5853 = vadd.f32 %v4626, %v5852
        %v5854 = vpop.f32.mrb[0].mxu0
        %v5855 = vadd.f32 %v4628, %v5854
        %5856 = vmatprep.mubr.f32.mxu0 0.0
        %v5857 = vand.u32 %v866, 4294901760
        %v5858 = vsub.f32 %v866, %v5857
        %v5859 = vand.u32 %v5858, 4294901760
        %5860 = vmatmul.mubr.f32.gmra.mrb[0].mxu0 %v5859
        %v5861 = vpop.f32.mrb[0].mxu0
        %v5862 = vadd.f32 %v4634, %v5861
        %v5863 = vpop.f32.mrb[0].mxu0
        %v5864 = vadd.f32 %v4636, %v5863
        %5865 = vmatprep.mubr.f32.mxu0 0.0
        %v5866 = vand.u32 %v869, 4294901760
        %v5867 = vsub.f32 %v869, %v5866
        %v5868 = vand.u32 %v5867, 4294901760
        %5869 = vmatmul.mubr.f32.gmra.mrb[0].mxu0 %v5868
        %v5870 = vpop.f32.mrb[0].mxu0
        %v5871 = vadd.f32 %v4642, %v5870
        %v5872 = vpop.f32.mrb[0].mxu0
        %v5873 = vadd.f32 %v4644, %v5872
        %5874 = vmatprep.mubr.f32.mxu0 0.0
        %v5875 = vand.u32 %v872, 4294901760
        %v5876 = vsub.f32 %v872, %v5875
        %v5877 = vand.u32 %v5876, 4294901760
        %5878 = vmatmul.mubr.f32.gmra.mrb[0].mxu0 %v5877
        %v5879 = vpop.f32.mrb[0].mxu0
        %v5880 = vadd.f32 %v4650, %v5879
        %v5881 = vpop.f32.mrb[0].mxu0
        %v5882 = vadd.f32 %v4652, %v5881
        %5883 = vmatprep.mubr.f32.mxu0 0.0
        %v5884 = vand.u32 %v875, 4294901760
        %v5885 = vsub.f32 %v875, %v5884
        %v5886 = vand.u32 %v5885, 4294901760
        %5887 = vmatmul.mubr.f32.gmra.mrb[0].mxu0 %v5886
        %v5888 = vpop.f32.mrb[0].mxu0
        %v5889 = vadd.f32 %v4658, %v5888
        %v5890 = vpop.f32.mrb[0].mxu0
        %v5891 = vadd.f32 %v4660, %v5890
        %5892 = vmatprep.mubr.f32.mxu0 0.0
        %v5893 = vand.u32 %v878, 4294901760
        %v5894 = vsub.f32 %v878, %v5893
        %v5895 = vand.u32 %v5894, 4294901760
        %5896 = vmatmul.mubr.f32.gmra.mrb[0].mxu0 %v5895
        %v5897 = vpop.f32.mrb[0].mxu0
        %v5898 = vadd.f32 %v4666, %v5897
        %v5899 = vpop.f32.mrb[0].mxu0
        %v5900 = vadd.f32 %v4668, %v5899
        %5901 = vmatprep.mubr.f32.mxu0 0.0
        %v5902 = vand.u32 %v881, 4294901760
        %v5903 = vsub.f32 %v881, %v5902
        %v5904 = vand.u32 %v5903, 4294901760
        %5905 = vmatmul.mubr.f32.gmra.mrb[0].mxu0 %v5904
        %v5906 = vpop.f32.mrb[0].mxu0
        %v5907 = vadd.f32 %v4674, %v5906
        %v5908 = vpop.f32.mrb[0].mxu0
        %v5909 = vadd.f32 %v4676, %v5908
        %5910 = vmatprep.mubr.f32.mxu0 0.0
        %v5911 = vand.u32 %v884, 4294901760
        %v5912 = vsub.f32 %v884, %v5911
        %v5913 = vand.u32 %v5912, 4294901760
        %5914 = vmatmul.mubr.f32.gmra.mrb[0].mxu0 %v5913
        %v5915 = vpop.f32.mrb[0].mxu0
        %v5916 = vadd.f32 %v4682, %v5915
        %v5917 = vpop.f32.mrb[0].mxu0
        %v5918 = vadd.f32 %v4684, %v5917
        %5919 = vmatprep.mubr.f32.mxu0 0.0
        %v5920 = vand.u32 %v887, 4294901760
        %v5921 = vsub.f32 %v887, %v5920
        %v5922 = vand.u32 %v5921, 4294901760
        %5923 = vmatmul.mubr.f32.gmra.mrb[0].mxu0 %v5922
        %v5924 = vpop.f32.mrb[0].mxu0
        %v5925 = vadd.f32 %v4690, %v5924
        %v5926 = vpop.f32.mrb[0].mxu0
        %v5927 = vadd.f32 %v4692, %v5926
        %5928 = vmatprep.mubr.f32.mxu0 0.0
        %v5929 = vand.u32 %v890, 4294901760
        %v5930 = vsub.f32 %v890, %v5929
        %v5931 = vand.u32 %v5930, 4294901760
        %5932 = vmatmul.mubr.f32.gmra.mrb[0].mxu0 %v5931
        %v5933 = vpop.f32.mrb[0].mxu0
        %v5934 = vadd.f32 %v4698, %v5933
        %v5935 = vpop.f32.mrb[0].mxu0
        %v5936 = vadd.f32 %v4700, %v5935
        %5937 = vmatprep.mubr.f32.mxu0 0.0
        %v5938 = vand.u32 %v893, 4294901760
        %v5939 = vsub.f32 %v893, %v5938
        %v5940 = vand.u32 %v5939, 4294901760
        %5941 = vmatmul.mubr.f32.gmra.mrb[0].mxu0 %v5940
        %v5942 = vpop.f32.mrb[0].mxu0
        %v5943 = vadd.f32 %v4706, %v5942
        %v5944 = vpop.f32.mrb[0].mxu0
        %v5945 = vadd.f32 %v4708, %v5944
        %5946 = vmatprep.mubr.f32.mxu0 0.0
        %v5947 = vand.u32 %v896, 4294901760
        %v5948 = vsub.f32 %v896, %v5947
        %v5949 = vand.u32 %v5948, 4294901760
        %5950 = vmatmul.mubr.f32.gmra.mrb[0].mxu0 %v5949
        %v5951 = vpop.f32.mrb[0].mxu0
        %v5952 = vadd.f32 %v4714, %v5951
        %v5953 = vpop.f32.mrb[0].mxu0
        %v5954 = vadd.f32 %v4716, %v5953
        %5955 = vmatprep.mubr.f32.mxu0 0.0
        %v5956 = vand.u32 %v899, 4294901760
        %v5957 = vsub.f32 %v899, %v5956
        %v5958 = vand.u32 %v5957, 4294901760
        %5959 = vmatmul.mubr.f32.gmra.mrb[0].mxu0 %v5958
        %v5960 = vpop.f32.mrb[0].mxu0
        %v5961 = vadd.f32 %v4722, %v5960
        %v5962 = vpop.f32.mrb[0].mxu0
        %v5963 = vadd.f32 %v4724, %v5962
        %5964 = vmatprep.mubr.f32.mxu0 0.0
        %v5965 = vand.u32 %v902, 4294901760
        %v5966 = vsub.f32 %v902, %v5965
        %v5967 = vand.u32 %v5966, 4294901760
        %5968 = vmatmul.mubr.f32.gmra.mrb[0].mxu0 %v5967
        %v5969 = vpop.f32.mrb[0].mxu0
        %v5970 = vadd.f32 %v4730, %v5969
        %v5971 = vpop.f32.mrb[0].mxu0
        %v5972 = vadd.f32 %v4732, %v5971
        %5973 = vmatprep.mubr.f32.mxu0 0.0
        %v5974 = vand.u32 %v905, 4294901760
        %v5975 = vsub.f32 %v905, %v5974
        %v5976 = vand.u32 %v5975, 4294901760
        %5977 = vmatmul.mubr.f32.gmra.mrb[0].mxu0 %v5976
        %v5978 = vpop.f32.mrb[0].mxu0
        %v5979 = vadd.f32 %v4738, %v5978
        %v5980 = vpop.f32.mrb[0].mxu0
        %v5981 = vadd.f32 %v4740, %v5980
        %5982 = vmatprep.mubr.f32.mxu0 0.0
        %v5983 = vand.u32 %v908, 4294901760
        %v5984 = vsub.f32 %v908, %v5983
        %v5985 = vand.u32 %v5984, 4294901760
        %5986 = vmatmul.mubr.f32.gmra.mrb[0].mxu0 %v5985
        %v5987 = vpop.f32.mrb[0].mxu0
        %v5988 = vadd.f32 %v4746, %v5987
        %v5989 = vpop.f32.mrb[0].mxu0
        %v5990 = vadd.f32 %v4748, %v5989
        %5991 = vmatprep.mubr.f32.mxu0 0.0
        %v5992 = vand.u32 %v911, 4294901760
        %v5993 = vsub.f32 %v911, %v5992
        %v5994 = vand.u32 %v5993, 4294901760
        %5995 = vmatmul.mubr.f32.gmra.mrb[0].mxu0 %v5994
        %v5996 = vpop.f32.mrb[0].mxu0
        %v5997 = vadd.f32 %v4754, %v5996
        %v5998 = vpop.f32.mrb[0].mxu0
        %v5999 = vadd.f32 %v4756, %v5998
        %6000 = vmatprep.mubr.f32.mxu0 0.0
        %v6001 = vand.u32 %v914, 4294901760
        %v6002 = vsub.f32 %v914, %v6001
        %v6003 = vand.u32 %v6002, 4294901760
        %6004 = vmatmul.mubr.f32.gmra.mrb[0].mxu0 %v6003
        %v6005 = vpop.f32.mrb[0].mxu0
        %v6006 = vadd.f32 %v4762, %v6005
        %v6007 = vpop.f32.mrb[0].mxu0
        %v6008 = vadd.f32 %v4764, %v6007
        %6009 = vmatprep.mubr.f32.mxu0 0.0
        %v6010 = vand.u32 %v917, 4294901760
        %v6011 = vsub.f32 %v917, %v6010
        %v6012 = vand.u32 %v6011, 4294901760
        %6013 = vmatmul.mubr.f32.gmra.mrb[0].mxu0 %v6012
        %v6014 = vpop.f32.mrb[0].mxu0
        %v6015 = vadd.f32 %v4770, %v6014
        %v6016 = vpop.f32.mrb[0].mxu0
        %v6017 = vadd.f32 %v4772, %v6016
        %6018 = vmatprep.mubr.f32.mxu0 0.0
        %v6019 = vand.u32 %v920, 4294901760
        %v6020 = vsub.f32 %v920, %v6019
        %v6021 = vand.u32 %v6020, 4294901760
        %6022 = vmatmul.mubr.f32.gmra.mrb[0].mxu0 %v6021
        %v6023 = vpop.f32.mrb[0].mxu0
        %v6024 = vadd.f32 %v4778, %v6023
        %v6025 = vpop.f32.mrb[0].mxu0
        %v6026 = vadd.f32 %v4780, %v6025
        %6027 = vmatprep.mubr.f32.mxu0 0.0
        %v6028 = vand.u32 %v923, 4294901760
        %v6029 = vsub.f32 %v923, %v6028
        %v6030 = vand.u32 %v6029, 4294901760
        %6031 = vmatmul.mubr.f32.gmra.mrb[0].mxu0 %v6030
        %v6032 = vpop.f32.mrb[0].mxu0
        %v6033 = vadd.f32 %v4786, %v6032
        %v6034 = vpop.f32.mrb[0].mxu0
        %v6035 = vadd.f32 %v4788, %v6034
        %6036 = vmatprep.mubr.f32.mxu0 0.0
        %v6037 = vand.u32 %v926, 4294901760
        %v6038 = vsub.f32 %v926, %v6037
        %v6039 = vand.u32 %v6038, 4294901760
        %6040 = vmatmul.mubr.f32.gmra.mrb[0].mxu0 %v6039
        %v6041 = vpop.f32.mrb[0].mxu0
        %v6042 = vadd.f32 %v4794, %v6041
        %v6043 = vpop.f32.mrb[0].mxu0
        %v6044 = vadd.f32 %v4796, %v6043
        %6045 = vmatprep.mubr.f32.mxu0 0.0
        %v6046 = vand.u32 %v929, 4294901760
        %v6047 = vsub.f32 %v929, %v6046
        %v6048 = vand.u32 %v6047, 4294901760
        %6049 = vmatmul.mubr.f32.gmra.mrb[0].mxu0 %v6048
        %v6050 = vpop.f32.mrb[0].mxu0
        %v6051 = vadd.f32 %v4802, %v6050
        %v6052 = vpop.f32.mrb[0].mxu0
        %v6053 = vadd.f32 %v4804, %v6052
        %6054 = vdwg.mxu0
        %6055 = vmatprep.subr.mxu0 0.0
        %v6056 = vand.u32 %v932, 4294901760
        %v6057 = vsub.f32 %v932, %v6056
        %v6058 = vand.u32 %v6057, 4294901760
        %6059 = vmatpush1.xpose.msra.mxu0 %v6058
        %6060 = vmatprep.subr.mxu0 0.0
        %v6061 = vand.u32 %v935, 4294901760
        %v6062 = vsub.f32 %v935, %v6061
        %v6063 = vand.u32 %v6062, 4294901760
        %6064 = vmatpush1.xpose.msra.mxu0 %v6063
        %6065 = vmatprep.subr.mxu0 0.0
        %v6066 = vand.u32 %v938, 4294901760
        %v6067 = vsub.f32 %v938, %v6066
        %v6068 = vand.u32 %v6067, 4294901760
        %6069 = vmatpush1.xpose.msra.mxu0 %v6068
        %6070 = vmatprep.subr.mxu0 0.0
        %v6071 = vand.u32 %v941, 4294901760
        %v6072 = vsub.f32 %v941, %v6071
        %v6073 = vand.u32 %v6072, 4294901760
        %6074 = vmatpush1.xpose.msra.mxu0 %v6073
        %6075 = vmatprep.subr.mxu0 0.0
        %v6076 = vand.u32 %v944, 4294901760
        %v6077 = vsub.f32 %v944, %v6076
        %v6078 = vand.u32 %v6077, 4294901760
        %6079 = vmatpush1.xpose.msra.mxu0 %v6078
        %6080 = vmatprep.subr.mxu0 0.0
        %v6081 = vand.u32 %v947, 4294901760
        %v6082 = vsub.f32 %v947, %v6081
        %v6083 = vand.u32 %v6082, 4294901760
        %6084 = vmatpush1.xpose.msra.mxu0 %v6083
        %6085 = vmatprep.subr.mxu0 0.0
        %v6086 = vand.u32 %v950, 4294901760
        %v6087 = vsub.f32 %v950, %v6086
        %v6088 = vand.u32 %v6087, 4294901760
        %6089 = vmatpush1.xpose.msra.mxu0 %v6088
        %6090 = vmatprep.subr.mxu0 0.0
        %v6091 = vand.u32 %v953, 4294901760
        %v6092 = vsub.f32 %v953, %v6091
        %v6093 = vand.u32 %v6092, 4294901760
        %6094 = vmatpush1.xpose.msra.mxu0 %v6093
        %6095 = vmatprep.subr.mxu0 0.0
        %v6096 = vand.u32 %v956, 4294901760
        %v6097 = vsub.f32 %v956, %v6096
        %v6098 = vand.u32 %v6097, 4294901760
        %6099 = vmatpush1.xpose.msra.mxu0 %v6098
        %6100 = vmatprep.subr.mxu0 0.0
        %v6101 = vand.u32 %v959, 4294901760
        %v6102 = vsub.f32 %v959, %v6101
        %v6103 = vand.u32 %v6102, 4294901760
        %6104 = vmatpush1.xpose.msra.mxu0 %v6103
        %6105 = vmatprep.subr.mxu0 0.0
        %v6106 = vand.u32 %v962, 4294901760
        %v6107 = vsub.f32 %v962, %v6106
        %v6108 = vand.u32 %v6107, 4294901760
        %6109 = vmatpush1.xpose.msra.mxu0 %v6108
        %6110 = vmatprep.subr.mxu0 0.0
        %v6111 = vand.u32 %v965, 4294901760
        %v6112 = vsub.f32 %v965, %v6111
        %v6113 = vand.u32 %v6112, 4294901760
        %6114 = vmatpush1.xpose.msra.mxu0 %v6113
        %6115 = vmatprep.subr.mxu0 0.0
        %v6116 = vand.u32 %v968, 4294901760
        %v6117 = vsub.f32 %v968, %v6116
        %v6118 = vand.u32 %v6117, 4294901760
        %6119 = vmatpush1.xpose.msra.mxu0 %v6118
        %6120 = vmatprep.subr.mxu0 0.0
        %v6121 = vand.u32 %v971, 4294901760
        %v6122 = vsub.f32 %v971, %v6121
        %v6123 = vand.u32 %v6122, 4294901760
        %6124 = vmatpush1.xpose.msra.mxu0 %v6123
        %6125 = vmatprep.subr.mxu0 0.0
        %v6126 = vand.u32 %v974, 4294901760
        %v6127 = vsub.f32 %v974, %v6126
        %v6128 = vand.u32 %v6127, 4294901760
        %6129 = vmatpush1.xpose.msra.mxu0 %v6128
        %6130 = vmatprep.subr.mxu0 0.0
        %v6131 = vand.u32 %v977, 4294901760
        %v6132 = vsub.f32 %v977, %v6131
        %v6133 = vand.u32 %v6132, 4294901760
        %6134 = vmatpush1.xpose.msra.mxu0 %v6133
        %6135 = vmatprep.subr.mxu0 0.0
        %v6136 = vand.u32 %v980, 4294901760
        %v6137 = vsub.f32 %v980, %v6136
        %v6138 = vand.u32 %v6137, 4294901760
        %6139 = vmatpush1.xpose.msra.mxu0 %v6138
        %6140 = vmatprep.subr.mxu0 0.0
        %v6141 = vand.u32 %v983, 4294901760
        %v6142 = vsub.f32 %v983, %v6141
        %v6143 = vand.u32 %v6142, 4294901760
        %6144 = vmatpush1.xpose.msra.mxu0 %v6143
        %6145 = vmatprep.subr.mxu0 0.0
        %v6146 = vand.u32 %v986, 4294901760
        %v6147 = vsub.f32 %v986, %v6146
        %v6148 = vand.u32 %v6147, 4294901760
        %6149 = vmatpush1.xpose.msra.mxu0 %v6148
        %6150 = vmatprep.subr.mxu0 0.0
        %v6151 = vand.u32 %v989, 4294901760
        %v6152 = vsub.f32 %v989, %v6151
        %v6153 = vand.u32 %v6152, 4294901760
        %6154 = vmatpush1.xpose.msra.mxu0 %v6153
        %6155 = vmatprep.subr.mxu0 0.0
        %v6156 = vand.u32 %v992, 4294901760
        %v6157 = vsub.f32 %v992, %v6156
        %v6158 = vand.u32 %v6157, 4294901760
        %6159 = vmatpush1.xpose.msra.mxu0 %v6158
        %6160 = vmatprep.subr.mxu0 0.0
        %v6161 = vand.u32 %v995, 4294901760
        %v6162 = vsub.f32 %v995, %v6161
        %v6163 = vand.u32 %v6162, 4294901760
        %6164 = vmatpush1.xpose.msra.mxu0 %v6163
        %6165 = vmatprep.subr.mxu0 0.0
        %v6166 = vand.u32 %v998, 4294901760
        %v6167 = vsub.f32 %v998, %v6166
        %v6168 = vand.u32 %v6167, 4294901760
        %6169 = vmatpush1.xpose.msra.mxu0 %v6168
        %6170 = vmatprep.subr.mxu0 0.0
        %v6171 = vand.u32 %v1001, 4294901760
        %v6172 = vsub.f32 %v1001, %v6171
        %v6173 = vand.u32 %v6172, 4294901760
        %6174 = vmatpush1.xpose.msra.mxu0 %v6173
        %6175 = vmatprep.subr.mxu0 0.0
        %v6176 = vand.u32 %v1004, 4294901760
        %v6177 = vsub.f32 %v1004, %v6176
        %v6178 = vand.u32 %v6177, 4294901760
        %6179 = vmatpush1.xpose.msra.mxu0 %v6178
        %6180 = vmatprep.subr.mxu0 0.0
        %v6181 = vand.u32 %v1007, 4294901760
        %v6182 = vsub.f32 %v1007, %v6181
        %v6183 = vand.u32 %v6182, 4294901760
        %6184 = vmatpush1.xpose.msra.mxu0 %v6183
        %6185 = vmatprep.subr.mxu0 0.0
        %v6186 = vand.u32 %v1010, 4294901760
        %v6187 = vsub.f32 %v1010, %v6186
        %v6188 = vand.u32 %v6187, 4294901760
        %6189 = vmatpush1.xpose.msra.mxu0 %v6188
        %6190 = vmatprep.subr.mxu0 0.0
        %v6191 = vand.u32 %v1013, 4294901760
        %v6192 = vsub.f32 %v1013, %v6191
        %v6193 = vand.u32 %v6192, 4294901760
        %6194 = vmatpush1.xpose.msra.mxu0 %v6193
        %6195 = vmatprep.subr.mxu0 0.0
        %v6196 = vand.u32 %v1016, 4294901760
        %v6197 = vsub.f32 %v1016, %v6196
        %v6198 = vand.u32 %v6197, 4294901760
        %6199 = vmatpush1.xpose.msra.mxu0 %v6198
        %6200 = vmatprep.subr.mxu0 0.0
        %v6201 = vand.u32 %v1019, 4294901760
        %v6202 = vsub.f32 %v1019, %v6201
        %v6203 = vand.u32 %v6202, 4294901760
        %6204 = vmatpush1.xpose.msra.mxu0 %v6203
        %6205 = vmatprep.subr.mxu0 0.0
        %v6206 = vand.u32 %v1022, 4294901760
        %v6207 = vsub.f32 %v1022, %v6206
        %v6208 = vand.u32 %v6207, 4294901760
        %6209 = vmatpush1.xpose.msra.mxu0 %v6208
        %6210 = vmatprep.subr.mxu0 0.0
        %v6211 = vand.u32 %v1025, 4294901760
        %v6212 = vsub.f32 %v1025, %v6211
        %v6213 = vand.u32 %v6212, 4294901760
        %6214 = vmatpush1.xpose.msra.mxu0 %v6213
        %6215 = vmatprep.mubr.f32.mxu0 0.0
        %v6216 = vand.u32 %v548, 4294901760
        %6217 = vmatmul.mubr.f32.gmra.mrb[0].mxu0 %v6216
        %v6218 = vpop.f32.mrb[0].mxu0
        %v6219 = vadd.f32 %v4908, %v6218
        %v6220 = vpop.f32.mrb[0].mxu0
        %v6221 = vadd.f32 %v4910, %v6220
        %6222 = vmatprep.mubr.f32.mxu0 0.0
        %v6223 = vand.u32 %v551, 4294901760
        %6224 = vmatmul.mubr.f32.gmra.mrb[0].mxu0 %v6223
        %v6225 = vpop.f32.mrb[0].mxu0
        %v6226 = vadd.f32 %v4917, %v6225
        %v6227 = vpop.f32.mrb[0].mxu0
        %v6228 = vadd.f32 %v4919, %v6227
        %6229 = vmatprep.mubr.f32.mxu0 0.0
        %v6230 = vand.u32 %v554, 4294901760
        %6231 = vmatmul.mubr.f32.gmra.mrb[0].mxu0 %v6230
        %v6232 = vpop.f32.mrb[0].mxu0
        %v6233 = vadd.f32 %v4926, %v6232
        %v6234 = vpop.f32.mrb[0].mxu0
        %v6235 = vadd.f32 %v4928, %v6234
        %6236 = vmatprep.mubr.f32.mxu0 0.0
        %v6237 = vand.u32 %v557, 4294901760
        %6238 = vmatmul.mubr.f32.gmra.mrb[0].mxu0 %v6237
        %v6239 = vpop.f32.mrb[0].mxu0
        %v6240 = vadd.f32 %v4935, %v6239
        %v6241 = vpop.f32.mrb[0].mxu0
        %v6242 = vadd.f32 %v4937, %v6241
        %6243 = vmatprep.mubr.f32.mxu0 0.0
        %v6244 = vand.u32 %v560, 4294901760
        %6245 = vmatmul.mubr.f32.gmra.mrb[0].mxu0 %v6244
        %v6246 = vpop.f32.mrb[0].mxu0
        %v6247 = vadd.f32 %v4944, %v6246
        %v6248 = vpop.f32.mrb[0].mxu0
        %v6249 = vadd.f32 %v4946, %v6248
        %6250 = vmatprep.mubr.f32.mxu0 0.0
        %v6251 = vand.u32 %v563, 4294901760
        %6252 = vmatmul.mubr.f32.gmra.mrb[0].mxu0 %v6251
        %v6253 = vpop.f32.mrb[0].mxu0
        %v6254 = vadd.f32 %v4953, %v6253
        %v6255 = vpop.f32.mrb[0].mxu0
        %v6256 = vadd.f32 %v4955, %v6255
        %6257 = vmatprep.mubr.f32.mxu0 0.0
        %v6258 = vand.u32 %v566, 4294901760
        %6259 = vmatmul.mubr.f32.gmra.mrb[0].mxu0 %v6258
        %v6260 = vpop.f32.mrb[0].mxu0
        %v6261 = vadd.f32 %v4962, %v6260
        %v6262 = vpop.f32.mrb[0].mxu0
        %v6263 = vadd.f32 %v4964, %v6262
        %6264 = vmatprep.mubr.f32.mxu0 0.0
        %v6265 = vand.u32 %v569, 4294901760
        %6266 = vmatmul.mubr.f32.gmra.mrb[0].mxu0 %v6265
        %v6267 = vpop.f32.mrb[0].mxu0
        %v6268 = vadd.f32 %v4971, %v6267
        %v6269 = vpop.f32.mrb[0].mxu0
        %v6270 = vadd.f32 %v4973, %v6269
        %6271 = vmatprep.mubr.f32.mxu0 0.0
        %v6272 = vand.u32 %v572, 4294901760
        %6273 = vmatmul.mubr.f32.gmra.mrb[0].mxu0 %v6272
        %v6274 = vpop.f32.mrb[0].mxu0
        %v6275 = vadd.f32 %v4980, %v6274
        %v6276 = vpop.f32.mrb[0].mxu0
        %v6277 = vadd.f32 %v4982, %v6276
        %6278 = vmatprep.mubr.f32.mxu0 0.0
        %v6279 = vand.u32 %v575, 4294901760
        %6280 = vmatmul.mubr.f32.gmra.mrb[0].mxu0 %v6279
        %v6281 = vpop.f32.mrb[0].mxu0
        %v6282 = vadd.f32 %v4989, %v6281
        %v6283 = vpop.f32.mrb[0].mxu0
        %v6284 = vadd.f32 %v4991, %v6283
        %6285 = vmatprep.mubr.f32.mxu0 0.0
        %v6286 = vand.u32 %v578, 4294901760
        %6287 = vmatmul.mubr.f32.gmra.mrb[0].mxu0 %v6286
        %v6288 = vpop.f32.mrb[0].mxu0
        %v6289 = vadd.f32 %v4998, %v6288
        %v6290 = vpop.f32.mrb[0].mxu0
        %v6291 = vadd.f32 %v5000, %v6290
        %6292 = vmatprep.mubr.f32.mxu0 0.0
        %v6293 = vand.u32 %v581, 4294901760
        %6294 = vmatmul.mubr.f32.gmra.mrb[0].mxu0 %v6293
        %v6295 = vpop.f32.mrb[0].mxu0
        %v6296 = vadd.f32 %v5007, %v6295
        %v6297 = vpop.f32.mrb[0].mxu0
        %v6298 = vadd.f32 %v5009, %v6297
        %6299 = vmatprep.mubr.f32.mxu0 0.0
        %v6300 = vand.u32 %v584, 4294901760
        %6301 = vmatmul.mubr.f32.gmra.mrb[0].mxu0 %v6300
        %v6302 = vpop.f32.mrb[0].mxu0
        %v6303 = vadd.f32 %v5016, %v6302
        %v6304 = vpop.f32.mrb[0].mxu0
        %v6305 = vadd.f32 %v5018, %v6304
        %6306 = vmatprep.mubr.f32.mxu0 0.0
        %v6307 = vand.u32 %v587, 4294901760
        %6308 = vmatmul.mubr.f32.gmra.mrb[0].mxu0 %v6307
        %v6309 = vpop.f32.mrb[0].mxu0
        %v6310 = vadd.f32 %v5025, %v6309
        %v6311 = vpop.f32.mrb[0].mxu0
        %v6312 = vadd.f32 %v5027, %v6311
        %6313 = vmatprep.mubr.f32.mxu0 0.0
        %v6314 = vand.u32 %v590, 4294901760
        %6315 = vmatmul.mubr.f32.gmra.mrb[0].mxu0 %v6314
        %v6316 = vpop.f32.mrb[0].mxu0
        %v6317 = vadd.f32 %v5034, %v6316
        %v6318 = vpop.f32.mrb[0].mxu0
        %v6319 = vadd.f32 %v5036, %v6318
        %6320 = vmatprep.mubr.f32.mxu0 0.0
        %v6321 = vand.u32 %v593, 4294901760
        %6322 = vmatmul.mubr.f32.gmra.mrb[0].mxu0 %v6321
        %v6323 = vpop.f32.mrb[0].mxu0
        %v6324 = vadd.f32 %v5043, %v6323
        %v6325 = vpop.f32.mrb[0].mxu0
        %v6326 = vadd.f32 %v5045, %v6325
        %6327 = vmatprep.mubr.f32.mxu0 0.0
        %v6328 = vand.u32 %v596, 4294901760
        %6329 = vmatmul.mubr.f32.gmra.mrb[0].mxu0 %v6328
        %v6330 = vpop.f32.mrb[0].mxu0
        %v6331 = vadd.f32 %v5052, %v6330
        %v6332 = vpop.f32.mrb[0].mxu0
        %v6333 = vadd.f32 %v5054, %v6332
        %6334 = vmatprep.mubr.f32.mxu0 0.0
        %v6335 = vand.u32 %v599, 4294901760
        %6336 = vmatmul.mubr.f32.gmra.mrb[0].mxu0 %v6335
        %v6337 = vpop.f32.mrb[0].mxu0
        %v6338 = vadd.f32 %v5061, %v6337
        %v6339 = vpop.f32.mrb[0].mxu0
        %v6340 = vadd.f32 %v5063, %v6339
        %6341 = vmatprep.mubr.f32.mxu0 0.0
        %v6342 = vand.u32 %v602, 4294901760
        %6343 = vmatmul.mubr.f32.gmra.mrb[0].mxu0 %v6342
        %v6344 = vpop.f32.mrb[0].mxu0
        %v6345 = vadd.f32 %v5070, %v6344
        %v6346 = vpop.f32.mrb[0].mxu0
        %v6347 = vadd.f32 %v5072, %v6346
        %6348 = vmatprep.mubr.f32.mxu0 0.0
        %v6349 = vand.u32 %v605, 4294901760
        %6350 = vmatmul.mubr.f32.gmra.mrb[0].mxu0 %v6349
        %v6351 = vpop.f32.mrb[0].mxu0
        %v6352 = vadd.f32 %v5079, %v6351
        %v6353 = vpop.f32.mrb[0].mxu0
        %v6354 = vadd.f32 %v5081, %v6353
        %6355 = vmatprep.mubr.f32.mxu0 0.0
        %v6356 = vand.u32 %v608, 4294901760
        %6357 = vmatmul.mubr.f32.gmra.mrb[0].mxu0 %v6356
        %v6358 = vpop.f32.mrb[0].mxu0
        %v6359 = vadd.f32 %v5088, %v6358
        %v6360 = vpop.f32.mrb[0].mxu0
        %v6361 = vadd.f32 %v5090, %v6360
        %6362 = vmatprep.mubr.f32.mxu0 0.0
        %v6363 = vand.u32 %v611, 4294901760
        %6364 = vmatmul.mubr.f32.gmra.mrb[0].mxu0 %v6363
        %v6365 = vpop.f32.mrb[0].mxu0
        %v6366 = vadd.f32 %v5097, %v6365
        %v6367 = vpop.f32.mrb[0].mxu0
        %v6368 = vadd.f32 %v5099, %v6367
        %6369 = vmatprep.mubr.f32.mxu0 0.0
        %v6370 = vand.u32 %v614, 4294901760
        %6371 = vmatmul.mubr.f32.gmra.mrb[0].mxu0 %v6370
        %v6372 = vpop.f32.mrb[0].mxu0
        %v6373 = vadd.f32 %v5106, %v6372
        %v6374 = vpop.f32.mrb[0].mxu0
        %v6375 = vadd.f32 %v5108, %v6374
        %6376 = vmatprep.mubr.f32.mxu0 0.0
        %v6377 = vand.u32 %v617, 4294901760
        %6378 = vmatmul.mubr.f32.gmra.mrb[0].mxu0 %v6377
        %v6379 = vpop.f32.mrb[0].mxu0
        %v6380 = vadd.f32 %v5115, %v6379
        %v6381 = vpop.f32.mrb[0].mxu0
        %v6382 = vadd.f32 %v5117, %v6381
        %6383 = vmatprep.mubr.f32.mxu0 0.0
        %v6384 = vand.u32 %v620, 4294901760
        %6385 = vmatmul.mubr.f32.gmra.mrb[0].mxu0 %v6384
        %v6386 = vpop.f32.mrb[0].mxu0
        %v6387 = vadd.f32 %v5124, %v6386
        %v6388 = vpop.f32.mrb[0].mxu0
        %v6389 = vadd.f32 %v5126, %v6388
        %6390 = vmatprep.mubr.f32.mxu0 0.0
        %v6391 = vand.u32 %v623, 4294901760
        %6392 = vmatmul.mubr.f32.gmra.mrb[0].mxu0 %v6391
        %v6393 = vpop.f32.mrb[0].mxu0
        %v6394 = vadd.f32 %v5133, %v6393
        %v6395 = vpop.f32.mrb[0].mxu0
        %v6396 = vadd.f32 %v5135, %v6395
        %6397 = vmatprep.mubr.f32.mxu0 0.0
        %v6398 = vand.u32 %v626, 4294901760
        %6399 = vmatmul.mubr.f32.gmra.mrb[0].mxu0 %v6398
        %v6400 = vpop.f32.mrb[0].mxu0
        %v6401 = vadd.f32 %v5142, %v6400
        %v6402 = vpop.f32.mrb[0].mxu0
        %v6403 = vadd.f32 %v5144, %v6402
        %6404 = vmatprep.mubr.f32.mxu0 0.0
        %v6405 = vand.u32 %v629, 4294901760
        %6406 = vmatmul.mubr.f32.gmra.mrb[0].mxu0 %v6405
        %v6407 = vpop.f32.mrb[0].mxu0
        %v6408 = vadd.f32 %v5151, %v6407
        %v6409 = vpop.f32.mrb[0].mxu0
        %v6410 = vadd.f32 %v5153, %v6409
        %6411 = vmatprep.mubr.f32.mxu0 0.0
        %v6412 = vand.u32 %v632, 4294901760
        %6413 = vmatmul.mubr.f32.gmra.mrb[0].mxu0 %v6412
        %v6414 = vpop.f32.mrb[0].mxu0
        %v6415 = vadd.f32 %v5160, %v6414
        %v6416 = vpop.f32.mrb[0].mxu0
        %v6417 = vadd.f32 %v5162, %v6416
        %6418 = vmatprep.mubr.f32.mxu0 0.0
        %v6419 = vand.u32 %v635, 4294901760
        %6420 = vmatmul.mubr.f32.gmra.mrb[0].mxu0 %v6419
        %v6421 = vpop.f32.mrb[0].mxu0
        %v6422 = vadd.f32 %v5169, %v6421
        %v6423 = vpop.f32.mrb[0].mxu0
        %v6424 = vadd.f32 %v5171, %v6423
        %6425 = vmatprep.mubr.f32.mxu0 0.0
        %v6426 = vand.u32 %v638, 4294901760
        %6427 = vmatmul.mubr.f32.gmra.mrb[0].mxu0 %v6426
        %v6428 = vpop.f32.mrb[0].mxu0
        %v6429 = vadd.f32 %v5178, %v6428
        %v6430 = vpop.f32.mrb[0].mxu0
        %v6431 = vadd.f32 %v5180, %v6430
        %6432 = vmatprep.mubr.f32.mxu0 0.0
        %v6433 = vand.u32 %v641, 4294901760
        %6434 = vmatmul.mubr.f32.gmra.mrb[0].mxu0 %v6433
        %v6435 = vpop.f32.mrb[0].mxu0
        %v6436 = vadd.f32 %v5187, %v6435
        %v6437 = vpop.f32.mrb[0].mxu0
        %v6438 = vadd.f32 %v5189, %v6437
        %6439 = vmatprep.mubr.f32.mxu0 0.0
        %v6440 = vand.u32 %v644, 4294901760
        %6441 = vmatmul.mubr.f32.gmra.mrb[0].mxu0 %v6440
        %v6442 = vpop.f32.mrb[0].mxu0
        %v6443 = vadd.f32 %v5196, %v6442
        %v6444 = vpop.f32.mrb[0].mxu0
        %v6445 = vadd.f32 %v5198, %v6444
        %6446 = vmatprep.mubr.f32.mxu0 0.0
        %v6447 = vand.u32 %v647, 4294901760
        %6448 = vmatmul.mubr.f32.gmra.mrb[0].mxu0 %v6447
        %v6449 = vpop.f32.mrb[0].mxu0
        %v6450 = vadd.f32 %v5205, %v6449
        %v6451 = vpop.f32.mrb[0].mxu0
        %v6452 = vadd.f32 %v5207, %v6451
        %6453 = vmatprep.mubr.f32.mxu0 0.0
        %v6454 = vand.u32 %v650, 4294901760
        %6455 = vmatmul.mubr.f32.gmra.mrb[0].mxu0 %v6454
        %v6456 = vpop.f32.mrb[0].mxu0
        %v6457 = vadd.f32 %v5214, %v6456
        %v6458 = vpop.f32.mrb[0].mxu0
        %v6459 = vadd.f32 %v5216, %v6458
        %6460 = vmatprep.mubr.f32.mxu0 0.0
        %v6461 = vand.u32 %v653, 4294901760
        %6462 = vmatmul.mubr.f32.gmra.mrb[0].mxu0 %v6461
        %v6463 = vpop.f32.mrb[0].mxu0
        %v6464 = vadd.f32 %v5223, %v6463
        %v6465 = vpop.f32.mrb[0].mxu0
        %v6466 = vadd.f32 %v5225, %v6465
        %6467 = vmatprep.mubr.f32.mxu0 0.0
        %v6468 = vand.u32 %v656, 4294901760
        %6469 = vmatmul.mubr.f32.gmra.mrb[0].mxu0 %v6468
        %v6470 = vpop.f32.mrb[0].mxu0
        %v6471 = vadd.f32 %v5232, %v6470
        %v6472 = vpop.f32.mrb[0].mxu0
        %v6473 = vadd.f32 %v5234, %v6472
        %6474 = vmatprep.mubr.f32.mxu0 0.0
        %v6475 = vand.u32 %v659, 4294901760
        %6476 = vmatmul.mubr.f32.gmra.mrb[0].mxu0 %v6475
        %v6477 = vpop.f32.mrb[0].mxu0
        %v6478 = vadd.f32 %v5241, %v6477
        %v6479 = vpop.f32.mrb[0].mxu0
        %v6480 = vadd.f32 %v5243, %v6479
        %6481 = vmatprep.mubr.f32.mxu0 0.0
        %v6482 = vand.u32 %v662, 4294901760
        %6483 = vmatmul.mubr.f32.gmra.mrb[0].mxu0 %v6482
        %v6484 = vpop.f32.mrb[0].mxu0
        %v6485 = vadd.f32 %v5250, %v6484
        %v6486 = vpop.f32.mrb[0].mxu0
        %v6487 = vadd.f32 %v5252, %v6486
        %6488 = vmatprep.mubr.f32.mxu0 0.0
        %v6489 = vand.u32 %v665, 4294901760
        %6490 = vmatmul.mubr.f32.gmra.mrb[0].mxu0 %v6489
        %v6491 = vpop.f32.mrb[0].mxu0
        %v6492 = vadd.f32 %v5259, %v6491
        %v6493 = vpop.f32.mrb[0].mxu0
        %v6494 = vadd.f32 %v5261, %v6493
        %6495 = vmatprep.mubr.f32.mxu0 0.0
        %v6496 = vand.u32 %v668, 4294901760
        %6497 = vmatmul.mubr.f32.gmra.mrb[0].mxu0 %v6496
        %v6498 = vpop.f32.mrb[0].mxu0
        %v6499 = vadd.f32 %v5268, %v6498
        %v6500 = vpop.f32.mrb[0].mxu0
        %v6501 = vadd.f32 %v5270, %v6500
        %6502 = vmatprep.mubr.f32.mxu0 0.0
        %v6503 = vand.u32 %v671, 4294901760
        %6504 = vmatmul.mubr.f32.gmra.mrb[0].mxu0 %v6503
        %v6505 = vpop.f32.mrb[0].mxu0
        %v6506 = vadd.f32 %v5277, %v6505
        %v6507 = vpop.f32.mrb[0].mxu0
        %v6508 = vadd.f32 %v5279, %v6507
        %6509 = vmatprep.mubr.f32.mxu0 0.0
        %v6510 = vand.u32 %v674, 4294901760
        %6511 = vmatmul.mubr.f32.gmra.mrb[0].mxu0 %v6510
        %v6512 = vpop.f32.mrb[0].mxu0
        %v6513 = vadd.f32 %v5286, %v6512
        %v6514 = vpop.f32.mrb[0].mxu0
        %v6515 = vadd.f32 %v5288, %v6514
        %6516 = vmatprep.mubr.f32.mxu0 0.0
        %v6517 = vand.u32 %v677, 4294901760
        %6518 = vmatmul.mubr.f32.gmra.mrb[0].mxu0 %v6517
        %v6519 = vpop.f32.mrb[0].mxu0
        %v6520 = vadd.f32 %v5295, %v6519
        %v6521 = vpop.f32.mrb[0].mxu0
        %v6522 = vadd.f32 %v5297, %v6521
        %6523 = vmatprep.mubr.f32.mxu0 0.0
        %v6524 = vand.u32 %v680, 4294901760
        %6525 = vmatmul.mubr.f32.gmra.mrb[0].mxu0 %v6524
        %v6526 = vpop.f32.mrb[0].mxu0
        %v6527 = vadd.f32 %v5304, %v6526
        %v6528 = vpop.f32.mrb[0].mxu0
        %v6529 = vadd.f32 %v5306, %v6528
        %6530 = vmatprep.mubr.f32.mxu0 0.0
        %v6531 = vand.u32 %v683, 4294901760
        %6532 = vmatmul.mubr.f32.gmra.mrb[0].mxu0 %v6531
        %v6533 = vpop.f32.mrb[0].mxu0
        %v6534 = vadd.f32 %v5313, %v6533
        %v6535 = vpop.f32.mrb[0].mxu0
        %v6536 = vadd.f32 %v5315, %v6535
        %6537 = vmatprep.mubr.f32.mxu0 0.0
        %v6538 = vand.u32 %v686, 4294901760
        %6539 = vmatmul.mubr.f32.gmra.mrb[0].mxu0 %v6538
        %v6540 = vpop.f32.mrb[0].mxu0
        %v6541 = vadd.f32 %v5322, %v6540
        %v6542 = vpop.f32.mrb[0].mxu0
        %v6543 = vadd.f32 %v5324, %v6542
        %6544 = vmatprep.mubr.f32.mxu0 0.0
        %v6545 = vand.u32 %v689, 4294901760
        %6546 = vmatmul.mubr.f32.gmra.mrb[0].mxu0 %v6545
        %v6547 = vpop.f32.mrb[0].mxu0
        %v6548 = vadd.f32 %v5331, %v6547
        %v6549 = vpop.f32.mrb[0].mxu0
        %v6550 = vadd.f32 %v5333, %v6549
        %6551 = vmatprep.mubr.f32.mxu0 0.0
        %v6552 = vand.u32 %v692, 4294901760
        %6553 = vmatmul.mubr.f32.gmra.mrb[0].mxu0 %v6552
        %v6554 = vpop.f32.mrb[0].mxu0
        %v6555 = vadd.f32 %v5340, %v6554
        %v6556 = vpop.f32.mrb[0].mxu0
        %v6557 = vadd.f32 %v5342, %v6556
        %6558 = vmatprep.mubr.f32.mxu0 0.0
        %v6559 = vand.u32 %v695, 4294901760
        %6560 = vmatmul.mubr.f32.gmra.mrb[0].mxu0 %v6559
        %v6561 = vpop.f32.mrb[0].mxu0
        %v6562 = vadd.f32 %v5349, %v6561
        %v6563 = vpop.f32.mrb[0].mxu0
        %v6564 = vadd.f32 %v5351, %v6563
        %6565 = vmatprep.mubr.f32.mxu0 0.0
        %v6566 = vand.u32 %v698, 4294901760
        %6567 = vmatmul.mubr.f32.gmra.mrb[0].mxu0 %v6566
        %v6568 = vpop.f32.mrb[0].mxu0
        %v6569 = vadd.f32 %v5358, %v6568
        %v6570 = vpop.f32.mrb[0].mxu0
        %v6571 = vadd.f32 %v5360, %v6570
        %6572 = vmatprep.mubr.f32.mxu0 0.0
        %v6573 = vand.u32 %v701, 4294901760
        %6574 = vmatmul.mubr.f32.gmra.mrb[0].mxu0 %v6573
        %v6575 = vpop.f32.mrb[0].mxu0
        %v6576 = vadd.f32 %v5367, %v6575
        %v6577 = vpop.f32.mrb[0].mxu0
        %v6578 = vadd.f32 %v5369, %v6577
        %6579 = vmatprep.mubr.f32.mxu0 0.0
        %v6580 = vand.u32 %v704, 4294901760
        %6581 = vmatmul.mubr.f32.gmra.mrb[0].mxu0 %v6580
        %v6582 = vpop.f32.mrb[0].mxu0
        %v6583 = vadd.f32 %v5376, %v6582
        %v6584 = vpop.f32.mrb[0].mxu0
        %v6585 = vadd.f32 %v5378, %v6584
        %6586 = vmatprep.mubr.f32.mxu0 0.0
        %v6587 = vand.u32 %v707, 4294901760
        %6588 = vmatmul.mubr.f32.gmra.mrb[0].mxu0 %v6587
        %v6589 = vpop.f32.mrb[0].mxu0
        %v6590 = vadd.f32 %v5385, %v6589
        %v6591 = vpop.f32.mrb[0].mxu0
        %v6592 = vadd.f32 %v5387, %v6591
        %6593 = vmatprep.mubr.f32.mxu0 0.0
        %v6594 = vand.u32 %v710, 4294901760
        %6595 = vmatmul.mubr.f32.gmra.mrb[0].mxu0 %v6594
        %v6596 = vpop.f32.mrb[0].mxu0
        %v6597 = vadd.f32 %v5394, %v6596
        %v6598 = vpop.f32.mrb[0].mxu0
        %v6599 = vadd.f32 %v5396, %v6598
        %6600 = vmatprep.mubr.f32.mxu0 0.0
        %v6601 = vand.u32 %v713, 4294901760
        %6602 = vmatmul.mubr.f32.gmra.mrb[0].mxu0 %v6601
        %v6603 = vpop.f32.mrb[0].mxu0
        %v6604 = vadd.f32 %v5403, %v6603
        %v6605 = vpop.f32.mrb[0].mxu0
        %v6606 = vadd.f32 %v5405, %v6605
        %6607 = vmatprep.mubr.f32.mxu0 0.0
        %v6608 = vand.u32 %v716, 4294901760
        %6609 = vmatmul.mubr.f32.gmra.mrb[0].mxu0 %v6608
        %v6610 = vpop.f32.mrb[0].mxu0
        %v6611 = vadd.f32 %v5412, %v6610
        %v6612 = vpop.f32.mrb[0].mxu0
        %v6613 = vadd.f32 %v5414, %v6612
        %6614 = vmatprep.mubr.f32.mxu0 0.0
        %v6615 = vand.u32 %v719, 4294901760
        %6616 = vmatmul.mubr.f32.gmra.mrb[0].mxu0 %v6615
        %v6617 = vpop.f32.mrb[0].mxu0
        %v6618 = vadd.f32 %v5421, %v6617
        %v6619 = vpop.f32.mrb[0].mxu0
        %v6620 = vadd.f32 %v5423, %v6619
        %6621 = vmatprep.mubr.f32.mxu0 0.0
        %v6622 = vand.u32 %v722, 4294901760
        %6623 = vmatmul.mubr.f32.gmra.mrb[0].mxu0 %v6622
        %v6624 = vpop.f32.mrb[0].mxu0
        %v6625 = vadd.f32 %v5430, %v6624
        %v6626 = vpop.f32.mrb[0].mxu0
        %v6627 = vadd.f32 %v5432, %v6626
        %6628 = vmatprep.mubr.f32.mxu0 0.0
        %v6629 = vand.u32 %v725, 4294901760
        %6630 = vmatmul.mubr.f32.gmra.mrb[0].mxu0 %v6629
        %v6631 = vpop.f32.mrb[0].mxu0
        %v6632 = vadd.f32 %v5439, %v6631
        %v6633 = vpop.f32.mrb[0].mxu0
        %v6634 = vadd.f32 %v5441, %v6633
        %6635 = vmatprep.mubr.f32.mxu0 0.0
        %v6636 = vand.u32 %v728, 4294901760
        %6637 = vmatmul.mubr.f32.gmra.mrb[0].mxu0 %v6636
        %v6638 = vpop.f32.mrb[0].mxu0
        %v6639 = vadd.f32 %v5448, %v6638
        %v6640 = vpop.f32.mrb[0].mxu0
        %v6641 = vadd.f32 %v5450, %v6640
        %6642 = vmatprep.mubr.f32.mxu0 0.0
        %v6643 = vand.u32 %v731, 4294901760
        %6644 = vmatmul.mubr.f32.gmra.mrb[0].mxu0 %v6643
        %v6645 = vpop.f32.mrb[0].mxu0
        %v6646 = vadd.f32 %v5457, %v6645
        %v6647 = vpop.f32.mrb[0].mxu0
        %v6648 = vadd.f32 %v5459, %v6647
        %6649 = vmatprep.mubr.f32.mxu0 0.0
        %v6650 = vand.u32 %v734, 4294901760
        %6651 = vmatmul.mubr.f32.gmra.mrb[0].mxu0 %v6650
        %v6652 = vpop.f32.mrb[0].mxu0
        %v6653 = vadd.f32 %v5466, %v6652
        %v6654 = vpop.f32.mrb[0].mxu0
        %v6655 = vadd.f32 %v5468, %v6654
        %6656 = vmatprep.mubr.f32.mxu0 0.0
        %v6657 = vand.u32 %v737, 4294901760
        %6658 = vmatmul.mubr.f32.gmra.mrb[0].mxu0 %v6657
        %v6659 = vpop.f32.mrb[0].mxu0
        %v6660 = vadd.f32 %v5475, %v6659
        %v6661 = vpop.f32.mrb[0].mxu0
        %v6662 = vadd.f32 %v5477, %v6661
        %6663 = vmatprep.mubr.f32.mxu0 0.0
        %v6664 = vand.u32 %v740, 4294901760
        %6665 = vmatmul.mubr.f32.gmra.mrb[0].mxu0 %v6664
        %v6666 = vpop.f32.mrb[0].mxu0
        %v6667 = vadd.f32 %v5484, %v6666
        %v6668 = vpop.f32.mrb[0].mxu0
        %v6669 = vadd.f32 %v5486, %v6668
        %6670 = vmatprep.mubr.f32.mxu0 0.0
        %v6671 = vand.u32 %v743, 4294901760
        %6672 = vmatmul.mubr.f32.gmra.mrb[0].mxu0 %v6671
        %v6673 = vpop.f32.mrb[0].mxu0
        %v6674 = vadd.f32 %v5493, %v6673
        %v6675 = vpop.f32.mrb[0].mxu0
        %v6676 = vadd.f32 %v5495, %v6675
        %6677 = vmatprep.mubr.f32.mxu0 0.0
        %v6678 = vand.u32 %v746, 4294901760
        %6679 = vmatmul.mubr.f32.gmra.mrb[0].mxu0 %v6678
        %v6680 = vpop.f32.mrb[0].mxu0
        %v6681 = vadd.f32 %v5502, %v6680
        %v6682 = vpop.f32.mrb[0].mxu0
        %v6683 = vadd.f32 %v5504, %v6682
        %6684 = vmatprep.mubr.f32.mxu0 0.0
        %v6685 = vand.u32 %v749, 4294901760
        %6686 = vmatmul.mubr.f32.gmra.mrb[0].mxu0 %v6685
        %v6687 = vpop.f32.mrb[0].mxu0
        %v6688 = vadd.f32 %v5511, %v6687
        %v6689 = vpop.f32.mrb[0].mxu0
        %v6690 = vadd.f32 %v5513, %v6689
        %6691 = vmatprep.mubr.f32.mxu0 0.0
        %v6692 = vand.u32 %v752, 4294901760
        %6693 = vmatmul.mubr.f32.gmra.mrb[0].mxu0 %v6692
        %v6694 = vpop.f32.mrb[0].mxu0
        %v6695 = vadd.f32 %v5520, %v6694
        %v6696 = vpop.f32.mrb[0].mxu0
        %v6697 = vadd.f32 %v5522, %v6696
        %6698 = vmatprep.mubr.f32.mxu0 0.0
        %v6699 = vand.u32 %v755, 4294901760
        %6700 = vmatmul.mubr.f32.gmra.mrb[0].mxu0 %v6699
        %v6701 = vpop.f32.mrb[0].mxu0
        %v6702 = vadd.f32 %v5529, %v6701
        %v6703 = vpop.f32.mrb[0].mxu0
        %v6704 = vadd.f32 %v5531, %v6703
        %6705 = vmatprep.mubr.f32.mxu0 0.0
        %v6706 = vand.u32 %v758, 4294901760
        %6707 = vmatmul.mubr.f32.gmra.mrb[0].mxu0 %v6706
        %v6708 = vpop.f32.mrb[0].mxu0
        %v6709 = vadd.f32 %v5538, %v6708
        %v6710 = vpop.f32.mrb[0].mxu0
        %v6711 = vadd.f32 %v5540, %v6710
        %6712 = vmatprep.mubr.f32.mxu0 0.0
        %v6713 = vand.u32 %v761, 4294901760
        %6714 = vmatmul.mubr.f32.gmra.mrb[0].mxu0 %v6713
        %v6715 = vpop.f32.mrb[0].mxu0
        %v6716 = vadd.f32 %v5547, %v6715
        %v6717 = vpop.f32.mrb[0].mxu0
        %v6718 = vadd.f32 %v5549, %v6717
        %6719 = vmatprep.mubr.f32.mxu0 0.0
        %v6720 = vand.u32 %v764, 4294901760
        %6721 = vmatmul.mubr.f32.gmra.mrb[0].mxu0 %v6720
        %v6722 = vpop.f32.mrb[0].mxu0
        %v6723 = vadd.f32 %v5556, %v6722
        %v6724 = vpop.f32.mrb[0].mxu0
        %v6725 = vadd.f32 %v5558, %v6724
        %6726 = vmatprep.mubr.f32.mxu0 0.0
        %v6727 = vand.u32 %v767, 4294901760
        %6728 = vmatmul.mubr.f32.gmra.mrb[0].mxu0 %v6727
        %v6729 = vpop.f32.mrb[0].mxu0
        %v6730 = vadd.f32 %v5565, %v6729
        %v6731 = vpop.f32.mrb[0].mxu0
        %v6732 = vadd.f32 %v5567, %v6731
        %6733 = vmatprep.mubr.f32.mxu0 0.0
        %v6734 = vand.u32 %v770, 4294901760
        %6735 = vmatmul.mubr.f32.gmra.mrb[0].mxu0 %v6734
        %v6736 = vpop.f32.mrb[0].mxu0
        %v6737 = vadd.f32 %v5574, %v6736
        %v6738 = vpop.f32.mrb[0].mxu0
        %v6739 = vadd.f32 %v5576, %v6738
        %6740 = vmatprep.mubr.f32.mxu0 0.0
        %v6741 = vand.u32 %v773, 4294901760
        %6742 = vmatmul.mubr.f32.gmra.mrb[0].mxu0 %v6741
        %v6743 = vpop.f32.mrb[0].mxu0
        %v6744 = vadd.f32 %v5583, %v6743
        %v6745 = vpop.f32.mrb[0].mxu0
        %v6746 = vadd.f32 %v5585, %v6745
        %6747 = vmatprep.mubr.f32.mxu0 0.0
        %v6748 = vand.u32 %v776, 4294901760
        %6749 = vmatmul.mubr.f32.gmra.mrb[0].mxu0 %v6748
        %v6750 = vpop.f32.mrb[0].mxu0
        %v6751 = vadd.f32 %v5592, %v6750
        %v6752 = vpop.f32.mrb[0].mxu0
        %v6753 = vadd.f32 %v5594, %v6752
        %6754 = vmatprep.mubr.f32.mxu0 0.0
        %v6755 = vand.u32 %v779, 4294901760
        %6756 = vmatmul.mubr.f32.gmra.mrb[0].mxu0 %v6755
        %v6757 = vpop.f32.mrb[0].mxu0
        %v6758 = vadd.f32 %v5601, %v6757
        %v6759 = vpop.f32.mrb[0].mxu0
        %v6760 = vadd.f32 %v5603, %v6759
        %6761 = vmatprep.mubr.f32.mxu0 0.0
        %v6762 = vand.u32 %v782, 4294901760
        %6763 = vmatmul.mubr.f32.gmra.mrb[0].mxu0 %v6762
        %v6764 = vpop.f32.mrb[0].mxu0
        %v6765 = vadd.f32 %v5610, %v6764
        %v6766 = vpop.f32.mrb[0].mxu0
        %v6767 = vadd.f32 %v5612, %v6766
        %6768 = vmatprep.mubr.f32.mxu0 0.0
        %v6769 = vand.u32 %v785, 4294901760
        %6770 = vmatmul.mubr.f32.gmra.mrb[0].mxu0 %v6769
        %v6771 = vpop.f32.mrb[0].mxu0
        %v6772 = vadd.f32 %v5619, %v6771
        %v6773 = vpop.f32.mrb[0].mxu0
        %v6774 = vadd.f32 %v5621, %v6773
        %6775 = vmatprep.mubr.f32.mxu0 0.0
        %v6776 = vand.u32 %v788, 4294901760
        %6777 = vmatmul.mubr.f32.gmra.mrb[0].mxu0 %v6776
        %v6778 = vpop.f32.mrb[0].mxu0
        %v6779 = vadd.f32 %v5628, %v6778
        %v6780 = vpop.f32.mrb[0].mxu0
        %v6781 = vadd.f32 %v5630, %v6780
        %6782 = vmatprep.mubr.f32.mxu0 0.0
        %v6783 = vand.u32 %v791, 4294901760
        %6784 = vmatmul.mubr.f32.gmra.mrb[0].mxu0 %v6783
        %v6785 = vpop.f32.mrb[0].mxu0
        %v6786 = vadd.f32 %v5637, %v6785
        %v6787 = vpop.f32.mrb[0].mxu0
        %v6788 = vadd.f32 %v5639, %v6787
        %6789 = vmatprep.mubr.f32.mxu0 0.0
        %v6790 = vand.u32 %v794, 4294901760
        %6791 = vmatmul.mubr.f32.gmra.mrb[0].mxu0 %v6790
        %v6792 = vpop.f32.mrb[0].mxu0
        %v6793 = vadd.f32 %v5646, %v6792
        %v6794 = vpop.f32.mrb[0].mxu0
        %v6795 = vadd.f32 %v5648, %v6794
        %6796 = vmatprep.mubr.f32.mxu0 0.0
        %v6797 = vand.u32 %v797, 4294901760
        %6798 = vmatmul.mubr.f32.gmra.mrb[0].mxu0 %v6797
        %v6799 = vpop.f32.mrb[0].mxu0
        %v6800 = vadd.f32 %v5655, %v6799
        %v6801 = vpop.f32.mrb[0].mxu0
        %v6802 = vadd.f32 %v5657, %v6801
        %6803 = vmatprep.mubr.f32.mxu0 0.0
        %v6804 = vand.u32 %v800, 4294901760
        %6805 = vmatmul.mubr.f32.gmra.mrb[0].mxu0 %v6804
        %v6806 = vpop.f32.mrb[0].mxu0
        %v6807 = vadd.f32 %v5664, %v6806
        %v6808 = vpop.f32.mrb[0].mxu0
        %v6809 = vadd.f32 %v5666, %v6808
        %6810 = vmatprep.mubr.f32.mxu0 0.0
        %v6811 = vand.u32 %v803, 4294901760
        %6812 = vmatmul.mubr.f32.gmra.mrb[0].mxu0 %v6811
        %v6813 = vpop.f32.mrb[0].mxu0
        %v6814 = vadd.f32 %v5673, %v6813
        %v6815 = vpop.f32.mrb[0].mxu0
        %v6816 = vadd.f32 %v5675, %v6815
        %6817 = vmatprep.mubr.f32.mxu0 0.0
        %v6818 = vand.u32 %v806, 4294901760
        %6819 = vmatmul.mubr.f32.gmra.mrb[0].mxu0 %v6818
        %v6820 = vpop.f32.mrb[0].mxu0
        %v6821 = vadd.f32 %v5682, %v6820
        %v6822 = vpop.f32.mrb[0].mxu0
        %v6823 = vadd.f32 %v5684, %v6822
        %6824 = vmatprep.mubr.f32.mxu0 0.0
        %v6825 = vand.u32 %v809, 4294901760
        %6826 = vmatmul.mubr.f32.gmra.mrb[0].mxu0 %v6825
        %v6827 = vpop.f32.mrb[0].mxu0
        %v6828 = vadd.f32 %v5691, %v6827
        %v6829 = vpop.f32.mrb[0].mxu0
        %v6830 = vadd.f32 %v5693, %v6829
        %6831 = vmatprep.mubr.f32.mxu0 0.0
        %v6832 = vand.u32 %v812, 4294901760
        %6833 = vmatmul.mubr.f32.gmra.mrb[0].mxu0 %v6832
        %v6834 = vpop.f32.mrb[0].mxu0
        %v6835 = vadd.f32 %v5700, %v6834
        %v6836 = vpop.f32.mrb[0].mxu0
        %v6837 = vadd.f32 %v5702, %v6836
        %6838 = vmatprep.mubr.f32.mxu0 0.0
        %v6839 = vand.u32 %v815, 4294901760
        %6840 = vmatmul.mubr.f32.gmra.mrb[0].mxu0 %v6839
        %v6841 = vpop.f32.mrb[0].mxu0
        %v6842 = vadd.f32 %v5709, %v6841
        %v6843 = vpop.f32.mrb[0].mxu0
        %v6844 = vadd.f32 %v5711, %v6843
        %6845 = vmatprep.mubr.f32.mxu0 0.0
        %v6846 = vand.u32 %v818, 4294901760
        %6847 = vmatmul.mubr.f32.gmra.mrb[0].mxu0 %v6846
        %v6848 = vpop.f32.mrb[0].mxu0
        %v6849 = vadd.f32 %v5718, %v6848
        %v6850 = vpop.f32.mrb[0].mxu0
        %v6851 = vadd.f32 %v5720, %v6850
        %6852 = vmatprep.mubr.f32.mxu0 0.0
        %v6853 = vand.u32 %v821, 4294901760
        %6854 = vmatmul.mubr.f32.gmra.mrb[0].mxu0 %v6853
        %v6855 = vpop.f32.mrb[0].mxu0
        %v6856 = vadd.f32 %v5727, %v6855
        %v6857 = vpop.f32.mrb[0].mxu0
        %v6858 = vadd.f32 %v5729, %v6857
        %6859 = vmatprep.mubr.f32.mxu0 0.0
        %v6860 = vand.u32 %v824, 4294901760
        %6861 = vmatmul.mubr.f32.gmra.mrb[0].mxu0 %v6860
        %v6862 = vpop.f32.mrb[0].mxu0
        %v6863 = vadd.f32 %v5736, %v6862
        %v6864 = vpop.f32.mrb[0].mxu0
        %v6865 = vadd.f32 %v5738, %v6864
        %6866 = vmatprep.mubr.f32.mxu0 0.0
        %v6867 = vand.u32 %v827, 4294901760
        %6868 = vmatmul.mubr.f32.gmra.mrb[0].mxu0 %v6867
        %v6869 = vpop.f32.mrb[0].mxu0
        %v6870 = vadd.f32 %v5745, %v6869
        %v6871 = vpop.f32.mrb[0].mxu0
        %v6872 = vadd.f32 %v5747, %v6871
        %6873 = vmatprep.mubr.f32.mxu0 0.0
        %v6874 = vand.u32 %v830, 4294901760
        %6875 = vmatmul.mubr.f32.gmra.mrb[0].mxu0 %v6874
        %v6876 = vpop.f32.mrb[0].mxu0
        %v6877 = vadd.f32 %v5754, %v6876
        %v6878 = vpop.f32.mrb[0].mxu0
        %v6879 = vadd.f32 %v5756, %v6878
        %6880 = vmatprep.mubr.f32.mxu0 0.0
        %v6881 = vand.u32 %v833, 4294901760
        %6882 = vmatmul.mubr.f32.gmra.mrb[0].mxu0 %v6881
        %v6883 = vpop.f32.mrb[0].mxu0
        %v6884 = vadd.f32 %v5763, %v6883
        %v6885 = vpop.f32.mrb[0].mxu0
        %v6886 = vadd.f32 %v5765, %v6885
        %6887 = vmatprep.mubr.f32.mxu0 0.0
        %v6888 = vand.u32 %v836, 4294901760
        %6889 = vmatmul.mubr.f32.gmra.mrb[0].mxu0 %v6888
        %v6890 = vpop.f32.mrb[0].mxu0
        %v6891 = vadd.f32 %v5772, %v6890
        %v6892 = vpop.f32.mrb[0].mxu0
        %v6893 = vadd.f32 %v5774, %v6892
        %6894 = vmatprep.mubr.f32.mxu0 0.0
        %v6895 = vand.u32 %v839, 4294901760
        %6896 = vmatmul.mubr.f32.gmra.mrb[0].mxu0 %v6895
        %v6897 = vpop.f32.mrb[0].mxu0
        %v6898 = vadd.f32 %v5781, %v6897
        %v6899 = vpop.f32.mrb[0].mxu0
        %v6900 = vadd.f32 %v5783, %v6899
        %6901 = vmatprep.mubr.f32.mxu0 0.0
        %v6902 = vand.u32 %v842, 4294901760
        %6903 = vmatmul.mubr.f32.gmra.mrb[0].mxu0 %v6902
        %v6904 = vpop.f32.mrb[0].mxu0
        %v6905 = vadd.f32 %v5790, %v6904
        %v6906 = vpop.f32.mrb[0].mxu0
        %v6907 = vadd.f32 %v5792, %v6906
        %6908 = vmatprep.mubr.f32.mxu0 0.0
        %v6909 = vand.u32 %v845, 4294901760
        %6910 = vmatmul.mubr.f32.gmra.mrb[0].mxu0 %v6909
        %v6911 = vpop.f32.mrb[0].mxu0
        %v6912 = vadd.f32 %v5799, %v6911
        %v6913 = vpop.f32.mrb[0].mxu0
        %v6914 = vadd.f32 %v5801, %v6913
        %6915 = vmatprep.mubr.f32.mxu0 0.0
        %v6916 = vand.u32 %v848, 4294901760
        %6917 = vmatmul.mubr.f32.gmra.mrb[0].mxu0 %v6916
        %v6918 = vpop.f32.mrb[0].mxu0
        %v6919 = vadd.f32 %v5808, %v6918
        %v6920 = vpop.f32.mrb[0].mxu0
        %v6921 = vadd.f32 %v5810, %v6920
        %6922 = vmatprep.mubr.f32.mxu0 0.0
        %v6923 = vand.u32 %v851, 4294901760
        %6924 = vmatmul.mubr.f32.gmra.mrb[0].mxu0 %v6923
        %v6925 = vpop.f32.mrb[0].mxu0
        %v6926 = vadd.f32 %v5817, %v6925
        %v6927 = vpop.f32.mrb[0].mxu0
        %v6928 = vadd.f32 %v5819, %v6927
        %6929 = vmatprep.mubr.f32.mxu0 0.0
        %v6930 = vand.u32 %v854, 4294901760
        %6931 = vmatmul.mubr.f32.gmra.mrb[0].mxu0 %v6930
        %v6932 = vpop.f32.mrb[0].mxu0
        %v6933 = vadd.f32 %v5826, %v6932
        %v6934 = vpop.f32.mrb[0].mxu0
        %v6935 = vadd.f32 %v5828, %v6934
        %6936 = vmatprep.mubr.f32.mxu0 0.0
        %v6937 = vand.u32 %v857, 4294901760
        %6938 = vmatmul.mubr.f32.gmra.mrb[0].mxu0 %v6937
        %v6939 = vpop.f32.mrb[0].mxu0
        %v6940 = vadd.f32 %v5835, %v6939
        %v6941 = vpop.f32.mrb[0].mxu0
        %v6942 = vadd.f32 %v5837, %v6941
        %6943 = vmatprep.mubr.f32.mxu0 0.0
        %v6944 = vand.u32 %v860, 4294901760
        %6945 = vmatmul.mubr.f32.gmra.mrb[0].mxu0 %v6944
        %v6946 = vpop.f32.mrb[0].mxu0
        %v6947 = vadd.f32 %v5844, %v6946
        %v6948 = vpop.f32.mrb[0].mxu0
        %v6949 = vadd.f32 %v5846, %v6948
        %6950 = vmatprep.mubr.f32.mxu0 0.0
        %v6951 = vand.u32 %v863, 4294901760
        %6952 = vmatmul.mubr.f32.gmra.mrb[0].mxu0 %v6951
        %v6953 = vpop.f32.mrb[0].mxu0
        %v6954 = vadd.f32 %v5853, %v6953
        %v6955 = vpop.f32.mrb[0].mxu0
        %v6956 = vadd.f32 %v5855, %v6955
        %6957 = vmatprep.mubr.f32.mxu0 0.0
        %v6958 = vand.u32 %v866, 4294901760
        %6959 = vmatmul.mubr.f32.gmra.mrb[0].mxu0 %v6958
        %v6960 = vpop.f32.mrb[0].mxu0
        %v6961 = vadd.f32 %v5862, %v6960
        %v6962 = vpop.f32.mrb[0].mxu0
        %v6963 = vadd.f32 %v5864, %v6962
        %6964 = vmatprep.mubr.f32.mxu0 0.0
        %v6965 = vand.u32 %v869, 4294901760
        %6966 = vmatmul.mubr.f32.gmra.mrb[0].mxu0 %v6965
        %v6967 = vpop.f32.mrb[0].mxu0
        %v6968 = vadd.f32 %v5871, %v6967
        %v6969 = vpop.f32.mrb[0].mxu0
        %v6970 = vadd.f32 %v5873, %v6969
        %6971 = vmatprep.mubr.f32.mxu0 0.0
        %v6972 = vand.u32 %v872, 4294901760
        %6973 = vmatmul.mubr.f32.gmra.mrb[0].mxu0 %v6972
        %v6974 = vpop.f32.mrb[0].mxu0
        %v6975 = vadd.f32 %v5880, %v6974
        %v6976 = vpop.f32.mrb[0].mxu0
        %v6977 = vadd.f32 %v5882, %v6976
        %6978 = vmatprep.mubr.f32.mxu0 0.0
        %v6979 = vand.u32 %v875, 4294901760
        %6980 = vmatmul.mubr.f32.gmra.mrb[0].mxu0 %v6979
        %v6981 = vpop.f32.mrb[0].mxu0
        %v6982 = vadd.f32 %v5889, %v6981
        %v6983 = vpop.f32.mrb[0].mxu0
        %v6984 = vadd.f32 %v5891, %v6983
        %6985 = vmatprep.mubr.f32.mxu0 0.0
        %v6986 = vand.u32 %v878, 4294901760
        %6987 = vmatmul.mubr.f32.gmra.mrb[0].mxu0 %v6986
        %v6988 = vpop.f32.mrb[0].mxu0
        %v6989 = vadd.f32 %v5898, %v6988
        %v6990 = vpop.f32.mrb[0].mxu0
        %v6991 = vadd.f32 %v5900, %v6990
        %6992 = vmatprep.mubr.f32.mxu0 0.0
        %v6993 = vand.u32 %v881, 4294901760
        %6994 = vmatmul.mubr.f32.gmra.mrb[0].mxu0 %v6993
        %v6995 = vpop.f32.mrb[0].mxu0
        %v6996 = vadd.f32 %v5907, %v6995
        %v6997 = vpop.f32.mrb[0].mxu0
        %v6998 = vadd.f32 %v5909, %v6997
        %6999 = vmatprep.mubr.f32.mxu0 0.0
        %v7000 = vand.u32 %v884, 4294901760
        %7001 = vmatmul.mubr.f32.gmra.mrb[0].mxu0 %v7000
        %v7002 = vpop.f32.mrb[0].mxu0
        %v7003 = vadd.f32 %v5916, %v7002
        %v7004 = vpop.f32.mrb[0].mxu0
        %v7005 = vadd.f32 %v5918, %v7004
        %7006 = vmatprep.mubr.f32.mxu0 0.0
        %v7007 = vand.u32 %v887, 4294901760
        %7008 = vmatmul.mubr.f32.gmra.mrb[0].mxu0 %v7007
        %v7009 = vpop.f32.mrb[0].mxu0
        %v7010 = vadd.f32 %v5925, %v7009
        %v7011 = vpop.f32.mrb[0].mxu0
        %v7012 = vadd.f32 %v5927, %v7011
        %7013 = vmatprep.mubr.f32.mxu0 0.0
        %v7014 = vand.u32 %v890, 4294901760
        %7015 = vmatmul.mubr.f32.gmra.mrb[0].mxu0 %v7014
        %v7016 = vpop.f32.mrb[0].mxu0
        %v7017 = vadd.f32 %v5934, %v7016
        %v7018 = vpop.f32.mrb[0].mxu0
        %v7019 = vadd.f32 %v5936, %v7018
        %7020 = vmatprep.mubr.f32.mxu0 0.0
        %v7021 = vand.u32 %v893, 4294901760
        %7022 = vmatmul.mubr.f32.gmra.mrb[0].mxu0 %v7021
        %v7023 = vpop.f32.mrb[0].mxu0
        %v7024 = vadd.f32 %v5943, %v7023
        %v7025 = vpop.f32.mrb[0].mxu0
        %v7026 = vadd.f32 %v5945, %v7025
        %7027 = vmatprep.mubr.f32.mxu0 0.0
        %v7028 = vand.u32 %v896, 4294901760
        %7029 = vmatmul.mubr.f32.gmra.mrb[0].mxu0 %v7028
        %v7030 = vpop.f32.mrb[0].mxu0
        %v7031 = vadd.f32 %v5952, %v7030
        %v7032 = vpop.f32.mrb[0].mxu0
        %v7033 = vadd.f32 %v5954, %v7032
        %7034 = vmatprep.mubr.f32.mxu0 0.0
        %v7035 = vand.u32 %v899, 4294901760
        %7036 = vmatmul.mubr.f32.gmra.mrb[0].mxu0 %v7035
        %v7037 = vpop.f32.mrb[0].mxu0
        %v7038 = vadd.f32 %v5961, %v7037
        %v7039 = vpop.f32.mrb[0].mxu0
        %v7040 = vadd.f32 %v5963, %v7039
        %7041 = vmatprep.mubr.f32.mxu0 0.0
        %v7042 = vand.u32 %v902, 4294901760
        %7043 = vmatmul.mubr.f32.gmra.mrb[0].mxu0 %v7042
        %v7044 = vpop.f32.mrb[0].mxu0
        %v7045 = vadd.f32 %v5970, %v7044
        %v7046 = vpop.f32.mrb[0].mxu0
        %v7047 = vadd.f32 %v5972, %v7046
        %7048 = vmatprep.mubr.f32.mxu0 0.0
        %v7049 = vand.u32 %v905, 4294901760
        %7050 = vmatmul.mubr.f32.gmra.mrb[0].mxu0 %v7049
        %v7051 = vpop.f32.mrb[0].mxu0
        %v7052 = vadd.f32 %v5979, %v7051
        %v7053 = vpop.f32.mrb[0].mxu0
        %v7054 = vadd.f32 %v5981, %v7053
        %7055 = vmatprep.mubr.f32.mxu0 0.0
        %v7056 = vand.u32 %v908, 4294901760
        %7057 = vmatmul.mubr.f32.gmra.mrb[0].mxu0 %v7056
        %v7058 = vpop.f32.mrb[0].mxu0
        %v7059 = vadd.f32 %v5988, %v7058
        %v7060 = vpop.f32.mrb[0].mxu0
        %v7061 = vadd.f32 %v5990, %v7060
        %7062 = vmatprep.mubr.f32.mxu0 0.0
        %v7063 = vand.u32 %v911, 4294901760
        %7064 = vmatmul.mubr.f32.gmra.mrb[0].mxu0 %v7063
        %v7065 = vpop.f32.mrb[0].mxu0
        %v7066 = vadd.f32 %v5997, %v7065
        %v7067 = vpop.f32.mrb[0].mxu0
        %v7068 = vadd.f32 %v5999, %v7067
        %7069 = vmatprep.mubr.f32.mxu0 0.0
        %v7070 = vand.u32 %v914, 4294901760
        %7071 = vmatmul.mubr.f32.gmra.mrb[0].mxu0 %v7070
        %v7072 = vpop.f32.mrb[0].mxu0
        %v7073 = vadd.f32 %v6006, %v7072
        %v7074 = vpop.f32.mrb[0].mxu0
        %v7075 = vadd.f32 %v6008, %v7074
        %7076 = vmatprep.mubr.f32.mxu0 0.0
        %v7077 = vand.u32 %v917, 4294901760
        %7078 = vmatmul.mubr.f32.gmra.mrb[0].mxu0 %v7077
        %v7079 = vpop.f32.mrb[0].mxu0
        %v7080 = vadd.f32 %v6015, %v7079
        %v7081 = vpop.f32.mrb[0].mxu0
        %v7082 = vadd.f32 %v6017, %v7081
        %7083 = vmatprep.mubr.f32.mxu0 0.0
        %v7084 = vand.u32 %v920, 4294901760
        %7085 = vmatmul.mubr.f32.gmra.mrb[0].mxu0 %v7084
        %v7086 = vpop.f32.mrb[0].mxu0
        %v7087 = vadd.f32 %v6024, %v7086
        %v7088 = vpop.f32.mrb[0].mxu0
        %v7089 = vadd.f32 %v6026, %v7088
        %7090 = vmatprep.mubr.f32.mxu0 0.0
        %v7091 = vand.u32 %v923, 4294901760
        %7092 = vmatmul.mubr.f32.gmra.mrb[0].mxu0 %v7091
        %v7093 = vpop.f32.mrb[0].mxu0
        %v7094 = vadd.f32 %v6033, %v7093
        %v7095 = vpop.f32.mrb[0].mxu0
        %v7096 = vadd.f32 %v6035, %v7095
        %7097 = vmatprep.mubr.f32.mxu0 0.0
        %v7098 = vand.u32 %v926, 4294901760
        %7099 = vmatmul.mubr.f32.gmra.mrb[0].mxu0 %v7098
        %v7100 = vpop.f32.mrb[0].mxu0
        %v7101 = vadd.f32 %v6042, %v7100
        %v7102 = vpop.f32.mrb[0].mxu0
        %v7103 = vadd.f32 %v6044, %v7102
        %7104 = vmatprep.mubr.f32.mxu0 0.0
        %v7105 = vand.u32 %v929, 4294901760
        %7106 = vmatmul.mubr.f32.gmra.mrb[0].mxu0 %v7105
        %v7107 = vpop.f32.mrb[0].mxu0
        %v7108 = vadd.f32 %v6051, %v7107
        %v7109 = vpop.f32.mrb[0].mxu0
        %v7110 = vadd.f32 %v6053, %v7109
        %7111 = vdwg.mxu0
        %7112 = vmatprep.subr.mxu0 0.0
        %v7113 = vand.u32 %v932, 4294901760
        %7114 = vmatpush1.xpose.msra.mxu0 %v7113
        %7115 = vmatprep.subr.mxu0 0.0
        %v7116 = vand.u32 %v935, 4294901760
        %7117 = vmatpush1.xpose.msra.mxu0 %v7116
        %7118 = vmatprep.subr.mxu0 0.0
        %v7119 = vand.u32 %v938, 4294901760
        %7120 = vmatpush1.xpose.msra.mxu0 %v7119
        %7121 = vmatprep.subr.mxu0 0.0
        %v7122 = vand.u32 %v941, 4294901760
        %7123 = vmatpush1.xpose.msra.mxu0 %v7122
        %7124 = vmatprep.subr.mxu0 0.0
        %v7125 = vand.u32 %v944, 4294901760
        %7126 = vmatpush1.xpose.msra.mxu0 %v7125
        %7127 = vmatprep.subr.mxu0 0.0
        %v7128 = vand.u32 %v947, 4294901760
        %7129 = vmatpush1.xpose.msra.mxu0 %v7128
        %7130 = vmatprep.subr.mxu0 0.0
        %v7131 = vand.u32 %v950, 4294901760
        %7132 = vmatpush1.xpose.msra.mxu0 %v7131
        %7133 = vmatprep.subr.mxu0 0.0
        %v7134 = vand.u32 %v953, 4294901760
        %7135 = vmatpush1.xpose.msra.mxu0 %v7134
        %7136 = vmatprep.subr.mxu0 0.0
        %v7137 = vand.u32 %v956, 4294901760
        %7138 = vmatpush1.xpose.msra.mxu0 %v7137
        %7139 = vmatprep.subr.mxu0 0.0
        %v7140 = vand.u32 %v959, 4294901760
        %7141 = vmatpush1.xpose.msra.mxu0 %v7140
        %7142 = vmatprep.subr.mxu0 0.0
        %v7143 = vand.u32 %v962, 4294901760
        %7144 = vmatpush1.xpose.msra.mxu0 %v7143
        %7145 = vmatprep.subr.mxu0 0.0
        %v7146 = vand.u32 %v965, 4294901760
        %7147 = vmatpush1.xpose.msra.mxu0 %v7146
        %7148 = vmatprep.subr.mxu0 0.0
        %v7149 = vand.u32 %v968, 4294901760
        %7150 = vmatpush1.xpose.msra.mxu0 %v7149
        %7151 = vmatprep.subr.mxu0 0.0
        %v7152 = vand.u32 %v971, 4294901760
        %7153 = vmatpush1.xpose.msra.mxu0 %v7152
        %7154 = vmatprep.subr.mxu0 0.0
        %v7155 = vand.u32 %v974, 4294901760
        %7156 = vmatpush1.xpose.msra.mxu0 %v7155
        %7157 = vmatprep.subr.mxu0 0.0
        %v7158 = vand.u32 %v977, 4294901760
        %7159 = vmatpush1.xpose.msra.mxu0 %v7158
        %7160 = vmatprep.subr.mxu0 0.0
        %v7161 = vand.u32 %v980, 4294901760
        %7162 = vmatpush1.xpose.msra.mxu0 %v7161
        %7163 = vmatprep.subr.mxu0 0.0
        %v7164 = vand.u32 %v983, 4294901760
        %7165 = vmatpush1.xpose.msra.mxu0 %v7164
        %7166 = vmatprep.subr.mxu0 0.0
        %v7167 = vand.u32 %v986, 4294901760
        %7168 = vmatpush1.xpose.msra.mxu0 %v7167
        %7169 = vmatprep.subr.mxu0 0.0
        %v7170 = vand.u32 %v989, 4294901760
        %7171 = vmatpush1.xpose.msra.mxu0 %v7170
        %7172 = vmatprep.subr.mxu0 0.0
        %v7173 = vand.u32 %v992, 4294901760
        %7174 = vmatpush1.xpose.msra.mxu0 %v7173
        %7175 = vmatprep.subr.mxu0 0.0
        %v7176 = vand.u32 %v995, 4294901760
        %7177 = vmatpush1.xpose.msra.mxu0 %v7176
        %7178 = vmatprep.subr.mxu0 0.0
        %v7179 = vand.u32 %v998, 4294901760
        %7180 = vmatpush1.xpose.msra.mxu0 %v7179
        %7181 = vmatprep.subr.mxu0 0.0
        %v7182 = vand.u32 %v1001, 4294901760
        %7183 = vmatpush1.xpose.msra.mxu0 %v7182
        %7184 = vmatprep.subr.mxu0 0.0
        %v7185 = vand.u32 %v1004, 4294901760
        %7186 = vmatpush1.xpose.msra.mxu0 %v7185
        %7187 = vmatprep.subr.mxu0 0.0
        %v7188 = vand.u32 %v1007, 4294901760
        %7189 = vmatpush1.xpose.msra.mxu0 %v7188
        %7190 = vmatprep.subr.mxu0 0.0
        %v7191 = vand.u32 %v1010, 4294901760
        %7192 = vmatpush1.xpose.msra.mxu0 %v7191
        %7193 = vmatprep.subr.mxu0 0.0
        %v7194 = vand.u32 %v1013, 4294901760
        %7195 = vmatpush1.xpose.msra.mxu0 %v7194
        %7196 = vmatprep.subr.mxu0 0.0
        %v7197 = vand.u32 %v1016, 4294901760
        %7198 = vmatpush1.xpose.msra.mxu0 %v7197
        %7199 = vmatprep.subr.mxu0 0.0
        %v7200 = vand.u32 %v1019, 4294901760
        %7201 = vmatpush1.xpose.msra.mxu0 %v7200
        %7202 = vmatprep.subr.mxu0 0.0
        %v7203 = vand.u32 %v1022, 4294901760
        %7204 = vmatpush1.xpose.msra.mxu0 %v7203
        %7205 = vmatprep.subr.mxu0 0.0
        %v7206 = vand.u32 %v1025, 4294901760
        %7207 = vmatpush1.xpose.msra.mxu0 %v7206
        %7208 = vmatprep.mubr.f32.mxu0 0.0
        %v7209 = vand.u32 %v548, 4294901760
        %7210 = vmatmul.mubr.f32.gmra.mrb[0].mxu0 %v7209
        %v7211 = vpop.f32.mrb[0].mxu0
        %v7212 = vadd.f32 %v6219, %v7211
        %v7213 = vpop.f32.mrb[0].mxu0
        %v7214 = vadd.f32 %v6221, %v7213
        %7215 = vmatprep.mubr.f32.mxu0 0.0
        %v7216 = vand.u32 %v551, 4294901760
        %7217 = vmatmul.mubr.f32.gmra.mrb[0].mxu0 %v7216
        %v7218 = vpop.f32.mrb[0].mxu0
        %v7219 = vadd.f32 %v6226, %v7218
        %v7220 = vpop.f32.mrb[0].mxu0
        %v7221 = vadd.f32 %v6228, %v7220
        %7222 = vmatprep.mubr.f32.mxu0 0.0
        %v7223 = vand.u32 %v554, 4294901760
        %7224 = vmatmul.mubr.f32.gmra.mrb[0].mxu0 %v7223
        %v7225 = vpop.f32.mrb[0].mxu0
        %v7226 = vadd.f32 %v6233, %v7225
        %v7227 = vpop.f32.mrb[0].mxu0
        %v7228 = vadd.f32 %v6235, %v7227
        %7229 = vmatprep.mubr.f32.mxu0 0.0
        %v7230 = vand.u32 %v557, 4294901760
        %7231 = vmatmul.mubr.f32.gmra.mrb[0].mxu0 %v7230
        %v7232 = vpop.f32.mrb[0].mxu0
        %v7233 = vadd.f32 %v6240, %v7232
        %v7234 = vpop.f32.mrb[0].mxu0
        %v7235 = vadd.f32 %v6242, %v7234
        %7236 = vmatprep.mubr.f32.mxu0 0.0
        %v7237 = vand.u32 %v560, 4294901760
        %7238 = vmatmul.mubr.f32.gmra.mrb[0].mxu0 %v7237
        %v7239 = vpop.f32.mrb[0].mxu0
        %v7240 = vadd.f32 %v6247, %v7239
        %v7241 = vpop.f32.mrb[0].mxu0
        %v7242 = vadd.f32 %v6249, %v7241
        %7243 = vmatprep.mubr.f32.mxu0 0.0
        %v7244 = vand.u32 %v563, 4294901760
        %7245 = vmatmul.mubr.f32.gmra.mrb[0].mxu0 %v7244
        %v7246 = vpop.f32.mrb[0].mxu0
        %v7247 = vadd.f32 %v6254, %v7246
        %v7248 = vpop.f32.mrb[0].mxu0
        %v7249 = vadd.f32 %v6256, %v7248
        %7250 = vmatprep.mubr.f32.mxu0 0.0
        %v7251 = vand.u32 %v566, 4294901760
        %7252 = vmatmul.mubr.f32.gmra.mrb[0].mxu0 %v7251
        %v7253 = vpop.f32.mrb[0].mxu0
        %v7254 = vadd.f32 %v6261, %v7253
        %v7255 = vpop.f32.mrb[0].mxu0
        %v7256 = vadd.f32 %v6263, %v7255
        %7257 = vmatprep.mubr.f32.mxu0 0.0
        %v7258 = vand.u32 %v569, 4294901760
        %7259 = vmatmul.mubr.f32.gmra.mrb[0].mxu0 %v7258
        %v7260 = vpop.f32.mrb[0].mxu0
        %v7261 = vadd.f32 %v6268, %v7260
        %v7262 = vpop.f32.mrb[0].mxu0
        %v7263 = vadd.f32 %v6270, %v7262
        %7264 = vmatprep.mubr.f32.mxu0 0.0
        %v7265 = vand.u32 %v572, 4294901760
        %7266 = vmatmul.mubr.f32.gmra.mrb[0].mxu0 %v7265
        %v7267 = vpop.f32.mrb[0].mxu0
        %v7268 = vadd.f32 %v6275, %v7267
        %v7269 = vpop.f32.mrb[0].mxu0
        %v7270 = vadd.f32 %v6277, %v7269
        %7271 = vmatprep.mubr.f32.mxu0 0.0
        %v7272 = vand.u32 %v575, 4294901760
        %7273 = vmatmul.mubr.f32.gmra.mrb[0].mxu0 %v7272
        %v7274 = vpop.f32.mrb[0].mxu0
        %v7275 = vadd.f32 %v6282, %v7274
        %v7276 = vpop.f32.mrb[0].mxu0
        %v7277 = vadd.f32 %v6284, %v7276
        %7278 = vmatprep.mubr.f32.mxu0 0.0
        %v7279 = vand.u32 %v578, 4294901760
        %7280 = vmatmul.mubr.f32.gmra.mrb[0].mxu0 %v7279
        %v7281 = vpop.f32.mrb[0].mxu0
        %v7282 = vadd.f32 %v6289, %v7281
        %v7283 = vpop.f32.mrb[0].mxu0
        %v7284 = vadd.f32 %v6291, %v7283
        %7285 = vmatprep.mubr.f32.mxu0 0.0
        %v7286 = vand.u32 %v581, 4294901760
        %7287 = vmatmul.mubr.f32.gmra.mrb[0].mxu0 %v7286
        %v7288 = vpop.f32.mrb[0].mxu0
        %v7289 = vadd.f32 %v6296, %v7288
        %v7290 = vpop.f32.mrb[0].mxu0
        %v7291 = vadd.f32 %v6298, %v7290
        %7292 = vmatprep.mubr.f32.mxu0 0.0
        %v7293 = vand.u32 %v584, 4294901760
        %7294 = vmatmul.mubr.f32.gmra.mrb[0].mxu0 %v7293
        %v7295 = vpop.f32.mrb[0].mxu0
        %v7296 = vadd.f32 %v6303, %v7295
        %v7297 = vpop.f32.mrb[0].mxu0
        %v7298 = vadd.f32 %v6305, %v7297
        %7299 = vmatprep.mubr.f32.mxu0 0.0
        %v7300 = vand.u32 %v587, 4294901760
        %7301 = vmatmul.mubr.f32.gmra.mrb[0].mxu0 %v7300
        %v7302 = vpop.f32.mrb[0].mxu0
        %v7303 = vadd.f32 %v6310, %v7302
        %v7304 = vpop.f32.mrb[0].mxu0
        %v7305 = vadd.f32 %v6312, %v7304
        %7306 = vmatprep.mubr.f32.mxu0 0.0
        %v7307 = vand.u32 %v590, 4294901760
        %7308 = vmatmul.mubr.f32.gmra.mrb[0].mxu0 %v7307
        %v7309 = vpop.f32.mrb[0].mxu0
        %v7310 = vadd.f32 %v6317, %v7309
        %v7311 = vpop.f32.mrb[0].mxu0
        %v7312 = vadd.f32 %v6319, %v7311
        %7313 = vmatprep.mubr.f32.mxu0 0.0
        %v7314 = vand.u32 %v593, 4294901760
        %7315 = vmatmul.mubr.f32.gmra.mrb[0].mxu0 %v7314
        %v7316 = vpop.f32.mrb[0].mxu0
        %v7317 = vadd.f32 %v6324, %v7316
        %v7318 = vpop.f32.mrb[0].mxu0
        %v7319 = vadd.f32 %v6326, %v7318
        %7320 = vmatprep.mubr.f32.mxu0 0.0
        %v7321 = vand.u32 %v596, 4294901760
        %7322 = vmatmul.mubr.f32.gmra.mrb[0].mxu0 %v7321
        %v7323 = vpop.f32.mrb[0].mxu0
        %v7324 = vadd.f32 %v6331, %v7323
        %v7325 = vpop.f32.mrb[0].mxu0
        %v7326 = vadd.f32 %v6333, %v7325
        %7327 = vmatprep.mubr.f32.mxu0 0.0
        %v7328 = vand.u32 %v599, 4294901760
        %7329 = vmatmul.mubr.f32.gmra.mrb[0].mxu0 %v7328
        %v7330 = vpop.f32.mrb[0].mxu0
        %v7331 = vadd.f32 %v6338, %v7330
        %v7332 = vpop.f32.mrb[0].mxu0
        %v7333 = vadd.f32 %v6340, %v7332
        %7334 = vmatprep.mubr.f32.mxu0 0.0
        %v7335 = vand.u32 %v602, 4294901760
        %7336 = vmatmul.mubr.f32.gmra.mrb[0].mxu0 %v7335
        %v7337 = vpop.f32.mrb[0].mxu0
        %v7338 = vadd.f32 %v6345, %v7337
        %v7339 = vpop.f32.mrb[0].mxu0
        %v7340 = vadd.f32 %v6347, %v7339
        %7341 = vmatprep.mubr.f32.mxu0 0.0
        %v7342 = vand.u32 %v605, 4294901760
        %7343 = vmatmul.mubr.f32.gmra.mrb[0].mxu0 %v7342
        %v7344 = vpop.f32.mrb[0].mxu0
        %v7345 = vadd.f32 %v6352, %v7344
        %v7346 = vpop.f32.mrb[0].mxu0
        %v7347 = vadd.f32 %v6354, %v7346
        %7348 = vmatprep.mubr.f32.mxu0 0.0
        %v7349 = vand.u32 %v608, 4294901760
        %7350 = vmatmul.mubr.f32.gmra.mrb[0].mxu0 %v7349
        %v7351 = vpop.f32.mrb[0].mxu0
        %v7352 = vadd.f32 %v6359, %v7351
        %v7353 = vpop.f32.mrb[0].mxu0
        %v7354 = vadd.f32 %v6361, %v7353
        %7355 = vmatprep.mubr.f32.mxu0 0.0
        %v7356 = vand.u32 %v611, 4294901760
        %7357 = vmatmul.mubr.f32.gmra.mrb[0].mxu0 %v7356
        %v7358 = vpop.f32.mrb[0].mxu0
        %v7359 = vadd.f32 %v6366, %v7358
        %v7360 = vpop.f32.mrb[0].mxu0
        %v7361 = vadd.f32 %v6368, %v7360
        %7362 = vmatprep.mubr.f32.mxu0 0.0
        %v7363 = vand.u32 %v614, 4294901760
        %7364 = vmatmul.mubr.f32.gmra.mrb[0].mxu0 %v7363
        %v7365 = vpop.f32.mrb[0].mxu0
        %v7366 = vadd.f32 %v6373, %v7365
        %v7367 = vpop.f32.mrb[0].mxu0
        %v7368 = vadd.f32 %v6375, %v7367
        %7369 = vmatprep.mubr.f32.mxu0 0.0
        %v7370 = vand.u32 %v617, 4294901760
        %7371 = vmatmul.mubr.f32.gmra.mrb[0].mxu0 %v7370
        %v7372 = vpop.f32.mrb[0].mxu0
        %v7373 = vadd.f32 %v6380, %v7372
        %v7374 = vpop.f32.mrb[0].mxu0
        %v7375 = vadd.f32 %v6382, %v7374
        %7376 = vmatprep.mubr.f32.mxu0 0.0
        %v7377 = vand.u32 %v620, 4294901760
        %7378 = vmatmul.mubr.f32.gmra.mrb[0].mxu0 %v7377
        %v7379 = vpop.f32.mrb[0].mxu0
        %v7380 = vadd.f32 %v6387, %v7379
        %v7381 = vpop.f32.mrb[0].mxu0
        %v7382 = vadd.f32 %v6389, %v7381
        %7383 = vmatprep.mubr.f32.mxu0 0.0
        %v7384 = vand.u32 %v623, 4294901760
        %7385 = vmatmul.mubr.f32.gmra.mrb[0].mxu0 %v7384
        %v7386 = vpop.f32.mrb[0].mxu0
        %v7387 = vadd.f32 %v6394, %v7386
        %v7388 = vpop.f32.mrb[0].mxu0
        %v7389 = vadd.f32 %v6396, %v7388
        %7390 = vmatprep.mubr.f32.mxu0 0.0
        %v7391 = vand.u32 %v626, 4294901760
        %7392 = vmatmul.mubr.f32.gmra.mrb[0].mxu0 %v7391
        %v7393 = vpop.f32.mrb[0].mxu0
        %v7394 = vadd.f32 %v6401, %v7393
        %v7395 = vpop.f32.mrb[0].mxu0
        %v7396 = vadd.f32 %v6403, %v7395
        %7397 = vmatprep.mubr.f32.mxu0 0.0
        %v7398 = vand.u32 %v629, 4294901760
        %7399 = vmatmul.mubr.f32.gmra.mrb[0].mxu0 %v7398
        %v7400 = vpop.f32.mrb[0].mxu0
        %v7401 = vadd.f32 %v6408, %v7400
        %v7402 = vpop.f32.mrb[0].mxu0
        %v7403 = vadd.f32 %v6410, %v7402
        %7404 = vmatprep.mubr.f32.mxu0 0.0
        %v7405 = vand.u32 %v632, 4294901760
        %7406 = vmatmul.mubr.f32.gmra.mrb[0].mxu0 %v7405
        %v7407 = vpop.f32.mrb[0].mxu0
        %v7408 = vadd.f32 %v6415, %v7407
        %v7409 = vpop.f32.mrb[0].mxu0
        %v7410 = vadd.f32 %v6417, %v7409
        %7411 = vmatprep.mubr.f32.mxu0 0.0
        %v7412 = vand.u32 %v635, 4294901760
        %7413 = vmatmul.mubr.f32.gmra.mrb[0].mxu0 %v7412
        %v7414 = vpop.f32.mrb[0].mxu0
        %v7415 = vadd.f32 %v6422, %v7414
        %v7416 = vpop.f32.mrb[0].mxu0
        %v7417 = vadd.f32 %v6424, %v7416
        %7418 = vmatprep.mubr.f32.mxu0 0.0
        %v7419 = vand.u32 %v638, 4294901760
        %7420 = vmatmul.mubr.f32.gmra.mrb[0].mxu0 %v7419
        %v7421 = vpop.f32.mrb[0].mxu0
        %v7422 = vadd.f32 %v6429, %v7421
        %v7423 = vpop.f32.mrb[0].mxu0
        %v7424 = vadd.f32 %v6431, %v7423
        %7425 = vmatprep.mubr.f32.mxu0 0.0
        %v7426 = vand.u32 %v641, 4294901760
        %7427 = vmatmul.mubr.f32.gmra.mrb[0].mxu0 %v7426
        %v7428 = vpop.f32.mrb[0].mxu0
        %v7429 = vadd.f32 %v6436, %v7428
        %v7430 = vpop.f32.mrb[0].mxu0
        %v7431 = vadd.f32 %v6438, %v7430
        %7432 = vmatprep.mubr.f32.mxu0 0.0
        %v7433 = vand.u32 %v644, 4294901760
        %7434 = vmatmul.mubr.f32.gmra.mrb[0].mxu0 %v7433
        %v7435 = vpop.f32.mrb[0].mxu0
        %v7436 = vadd.f32 %v6443, %v7435
        %v7437 = vpop.f32.mrb[0].mxu0
        %v7438 = vadd.f32 %v6445, %v7437
        %7439 = vmatprep.mubr.f32.mxu0 0.0
        %v7440 = vand.u32 %v647, 4294901760
        %7441 = vmatmul.mubr.f32.gmra.mrb[0].mxu0 %v7440
        %v7442 = vpop.f32.mrb[0].mxu0
        %v7443 = vadd.f32 %v6450, %v7442
        %v7444 = vpop.f32.mrb[0].mxu0
        %v7445 = vadd.f32 %v6452, %v7444
        %7446 = vmatprep.mubr.f32.mxu0 0.0
        %v7447 = vand.u32 %v650, 4294901760
        %7448 = vmatmul.mubr.f32.gmra.mrb[0].mxu0 %v7447
        %v7449 = vpop.f32.mrb[0].mxu0
        %v7450 = vadd.f32 %v6457, %v7449
        %v7451 = vpop.f32.mrb[0].mxu0
        %v7452 = vadd.f32 %v6459, %v7451
        %7453 = vmatprep.mubr.f32.mxu0 0.0
        %v7454 = vand.u32 %v653, 4294901760
        %7455 = vmatmul.mubr.f32.gmra.mrb[0].mxu0 %v7454
        %v7456 = vpop.f32.mrb[0].mxu0
        %v7457 = vadd.f32 %v6464, %v7456
        %v7458 = vpop.f32.mrb[0].mxu0
        %v7459 = vadd.f32 %v6466, %v7458
        %7460 = vmatprep.mubr.f32.mxu0 0.0
        %v7461 = vand.u32 %v656, 4294901760
        %7462 = vmatmul.mubr.f32.gmra.mrb[0].mxu0 %v7461
        %v7463 = vpop.f32.mrb[0].mxu0
        %v7464 = vadd.f32 %v6471, %v7463
        %v7465 = vpop.f32.mrb[0].mxu0
        %v7466 = vadd.f32 %v6473, %v7465
        %7467 = vmatprep.mubr.f32.mxu0 0.0
        %v7468 = vand.u32 %v659, 4294901760
        %7469 = vmatmul.mubr.f32.gmra.mrb[0].mxu0 %v7468
        %v7470 = vpop.f32.mrb[0].mxu0
        %v7471 = vadd.f32 %v6478, %v7470
        %v7472 = vpop.f32.mrb[0].mxu0
        %v7473 = vadd.f32 %v6480, %v7472
        %7474 = vmatprep.mubr.f32.mxu0 0.0
        %v7475 = vand.u32 %v662, 4294901760
        %7476 = vmatmul.mubr.f32.gmra.mrb[0].mxu0 %v7475
        %v7477 = vpop.f32.mrb[0].mxu0
        %v7478 = vadd.f32 %v6485, %v7477
        %v7479 = vpop.f32.mrb[0].mxu0
        %v7480 = vadd.f32 %v6487, %v7479
        %7481 = vmatprep.mubr.f32.mxu0 0.0
        %v7482 = vand.u32 %v665, 4294901760
        %7483 = vmatmul.mubr.f32.gmra.mrb[0].mxu0 %v7482
        %v7484 = vpop.f32.mrb[0].mxu0
        %v7485 = vadd.f32 %v6492, %v7484
        %v7486 = vpop.f32.mrb[0].mxu0
        %v7487 = vadd.f32 %v6494, %v7486
        %7488 = vmatprep.mubr.f32.mxu0 0.0
        %v7489 = vand.u32 %v668, 4294901760
        %7490 = vmatmul.mubr.f32.gmra.mrb[0].mxu0 %v7489
        %v7491 = vpop.f32.mrb[0].mxu0
        %v7492 = vadd.f32 %v6499, %v7491
        %v7493 = vpop.f32.mrb[0].mxu0
        %v7494 = vadd.f32 %v6501, %v7493
        %7495 = vmatprep.mubr.f32.mxu0 0.0
        %v7496 = vand.u32 %v671, 4294901760
        %7497 = vmatmul.mubr.f32.gmra.mrb[0].mxu0 %v7496
        %v7498 = vpop.f32.mrb[0].mxu0
        %v7499 = vadd.f32 %v6506, %v7498
        %v7500 = vpop.f32.mrb[0].mxu0
        %v7501 = vadd.f32 %v6508, %v7500
        %7502 = vmatprep.mubr.f32.mxu0 0.0
        %v7503 = vand.u32 %v674, 4294901760
        %7504 = vmatmul.mubr.f32.gmra.mrb[0].mxu0 %v7503
        %v7505 = vpop.f32.mrb[0].mxu0
        %v7506 = vadd.f32 %v6513, %v7505
        %v7507 = vpop.f32.mrb[0].mxu0
        %v7508 = vadd.f32 %v6515, %v7507
        %7509 = vmatprep.mubr.f32.mxu0 0.0
        %v7510 = vand.u32 %v677, 4294901760
        %7511 = vmatmul.mubr.f32.gmra.mrb[0].mxu0 %v7510
        %v7512 = vpop.f32.mrb[0].mxu0
        %v7513 = vadd.f32 %v6520, %v7512
        %v7514 = vpop.f32.mrb[0].mxu0
        %v7515 = vadd.f32 %v6522, %v7514
        %7516 = vmatprep.mubr.f32.mxu0 0.0
        %v7517 = vand.u32 %v680, 4294901760
        %7518 = vmatmul.mubr.f32.gmra.mrb[0].mxu0 %v7517
        %v7519 = vpop.f32.mrb[0].mxu0
        %v7520 = vadd.f32 %v6527, %v7519
        %v7521 = vpop.f32.mrb[0].mxu0
        %v7522 = vadd.f32 %v6529, %v7521
        %7523 = vmatprep.mubr.f32.mxu0 0.0
        %v7524 = vand.u32 %v683, 4294901760
        %7525 = vmatmul.mubr.f32.gmra.mrb[0].mxu0 %v7524
        %v7526 = vpop.f32.mrb[0].mxu0
        %v7527 = vadd.f32 %v6534, %v7526
        %v7528 = vpop.f32.mrb[0].mxu0
        %v7529 = vadd.f32 %v6536, %v7528
        %7530 = vmatprep.mubr.f32.mxu0 0.0
        %v7531 = vand.u32 %v686, 4294901760
        %7532 = vmatmul.mubr.f32.gmra.mrb[0].mxu0 %v7531
        %v7533 = vpop.f32.mrb[0].mxu0
        %v7534 = vadd.f32 %v6541, %v7533
        %v7535 = vpop.f32.mrb[0].mxu0
        %v7536 = vadd.f32 %v6543, %v7535
        %7537 = vmatprep.mubr.f32.mxu0 0.0
        %v7538 = vand.u32 %v689, 4294901760
        %7539 = vmatmul.mubr.f32.gmra.mrb[0].mxu0 %v7538
        %v7540 = vpop.f32.mrb[0].mxu0
        %v7541 = vadd.f32 %v6548, %v7540
        %v7542 = vpop.f32.mrb[0].mxu0
        %v7543 = vadd.f32 %v6550, %v7542
        %7544 = vmatprep.mubr.f32.mxu0 0.0
        %v7545 = vand.u32 %v692, 4294901760
        %7546 = vmatmul.mubr.f32.gmra.mrb[0].mxu0 %v7545
        %v7547 = vpop.f32.mrb[0].mxu0
        %v7548 = vadd.f32 %v6555, %v7547
        %v7549 = vpop.f32.mrb[0].mxu0
        %v7550 = vadd.f32 %v6557, %v7549
        %7551 = vmatprep.mubr.f32.mxu0 0.0
        %v7552 = vand.u32 %v695, 4294901760
        %7553 = vmatmul.mubr.f32.gmra.mrb[0].mxu0 %v7552
        %v7554 = vpop.f32.mrb[0].mxu0
        %v7555 = vadd.f32 %v6562, %v7554
        %v7556 = vpop.f32.mrb[0].mxu0
        %v7557 = vadd.f32 %v6564, %v7556
        %7558 = vmatprep.mubr.f32.mxu0 0.0
        %v7559 = vand.u32 %v698, 4294901760
        %7560 = vmatmul.mubr.f32.gmra.mrb[0].mxu0 %v7559
        %v7561 = vpop.f32.mrb[0].mxu0
        %v7562 = vadd.f32 %v6569, %v7561
        %v7563 = vpop.f32.mrb[0].mxu0
        %v7564 = vadd.f32 %v6571, %v7563
        %7565 = vmatprep.mubr.f32.mxu0 0.0
        %v7566 = vand.u32 %v701, 4294901760
        %7567 = vmatmul.mubr.f32.gmra.mrb[0].mxu0 %v7566
        %v7568 = vpop.f32.mrb[0].mxu0
        %v7569 = vadd.f32 %v6576, %v7568
        %v7570 = vpop.f32.mrb[0].mxu0
        %v7571 = vadd.f32 %v6578, %v7570
        %7572 = vmatprep.mubr.f32.mxu0 0.0
        %v7573 = vand.u32 %v704, 4294901760
        %7574 = vmatmul.mubr.f32.gmra.mrb[0].mxu0 %v7573
        %v7575 = vpop.f32.mrb[0].mxu0
        %v7576 = vadd.f32 %v6583, %v7575
        %v7577 = vpop.f32.mrb[0].mxu0
        %v7578 = vadd.f32 %v6585, %v7577
        %7579 = vmatprep.mubr.f32.mxu0 0.0
        %v7580 = vand.u32 %v707, 4294901760
        %7581 = vmatmul.mubr.f32.gmra.mrb[0].mxu0 %v7580
        %v7582 = vpop.f32.mrb[0].mxu0
        %v7583 = vadd.f32 %v6590, %v7582
        %v7584 = vpop.f32.mrb[0].mxu0
        %v7585 = vadd.f32 %v6592, %v7584
        %7586 = vmatprep.mubr.f32.mxu0 0.0
        %v7587 = vand.u32 %v710, 4294901760
        %7588 = vmatmul.mubr.f32.gmra.mrb[0].mxu0 %v7587
        %v7589 = vpop.f32.mrb[0].mxu0
        %v7590 = vadd.f32 %v6597, %v7589
        %v7591 = vpop.f32.mrb[0].mxu0
        %v7592 = vadd.f32 %v6599, %v7591
        %7593 = vmatprep.mubr.f32.mxu0 0.0
        %v7594 = vand.u32 %v713, 4294901760
        %7595 = vmatmul.mubr.f32.gmra.mrb[0].mxu0 %v7594
        %v7596 = vpop.f32.mrb[0].mxu0
        %v7597 = vadd.f32 %v6604, %v7596
        %v7598 = vpop.f32.mrb[0].mxu0
        %v7599 = vadd.f32 %v6606, %v7598
        %7600 = vmatprep.mubr.f32.mxu0 0.0
        %v7601 = vand.u32 %v716, 4294901760
        %7602 = vmatmul.mubr.f32.gmra.mrb[0].mxu0 %v7601
        %v7603 = vpop.f32.mrb[0].mxu0
        %v7604 = vadd.f32 %v6611, %v7603
        %v7605 = vpop.f32.mrb[0].mxu0
        %v7606 = vadd.f32 %v6613, %v7605
        %7607 = vmatprep.mubr.f32.mxu0 0.0
        %v7608 = vand.u32 %v719, 4294901760
        %7609 = vmatmul.mubr.f32.gmra.mrb[0].mxu0 %v7608
        %v7610 = vpop.f32.mrb[0].mxu0
        %v7611 = vadd.f32 %v6618, %v7610
        %v7612 = vpop.f32.mrb[0].mxu0
        %v7613 = vadd.f32 %v6620, %v7612
        %7614 = vmatprep.mubr.f32.mxu0 0.0
        %v7615 = vand.u32 %v722, 4294901760
        %7616 = vmatmul.mubr.f32.gmra.mrb[0].mxu0 %v7615
        %v7617 = vpop.f32.mrb[0].mxu0
        %v7618 = vadd.f32 %v6625, %v7617
        %v7619 = vpop.f32.mrb[0].mxu0
        %v7620 = vadd.f32 %v6627, %v7619
        %7621 = vmatprep.mubr.f32.mxu0 0.0
        %v7622 = vand.u32 %v725, 4294901760
        %7623 = vmatmul.mubr.f32.gmra.mrb[0].mxu0 %v7622
        %v7624 = vpop.f32.mrb[0].mxu0
        %v7625 = vadd.f32 %v6632, %v7624
        %v7626 = vpop.f32.mrb[0].mxu0
        %v7627 = vadd.f32 %v6634, %v7626
        %7628 = vmatprep.mubr.f32.mxu0 0.0
        %v7629 = vand.u32 %v728, 4294901760
        %7630 = vmatmul.mubr.f32.gmra.mrb[0].mxu0 %v7629
        %v7631 = vpop.f32.mrb[0].mxu0
        %v7632 = vadd.f32 %v6639, %v7631
        %v7633 = vpop.f32.mrb[0].mxu0
        %v7634 = vadd.f32 %v6641, %v7633
        %7635 = vmatprep.mubr.f32.mxu0 0.0
        %v7636 = vand.u32 %v731, 4294901760
        %7637 = vmatmul.mubr.f32.gmra.mrb[0].mxu0 %v7636
        %v7638 = vpop.f32.mrb[0].mxu0
        %v7639 = vadd.f32 %v6646, %v7638
        %v7640 = vpop.f32.mrb[0].mxu0
        %v7641 = vadd.f32 %v6648, %v7640
        %7642 = vmatprep.mubr.f32.mxu0 0.0
        %v7643 = vand.u32 %v734, 4294901760
        %7644 = vmatmul.mubr.f32.gmra.mrb[0].mxu0 %v7643
        %v7645 = vpop.f32.mrb[0].mxu0
        %v7646 = vadd.f32 %v6653, %v7645
        %v7647 = vpop.f32.mrb[0].mxu0
        %v7648 = vadd.f32 %v6655, %v7647
        %7649 = vmatprep.mubr.f32.mxu0 0.0
        %v7650 = vand.u32 %v737, 4294901760
        %7651 = vmatmul.mubr.f32.gmra.mrb[0].mxu0 %v7650
        %v7652 = vpop.f32.mrb[0].mxu0
        %v7653 = vadd.f32 %v6660, %v7652
        %v7654 = vpop.f32.mrb[0].mxu0
        %v7655 = vadd.f32 %v6662, %v7654
        %7656 = vmatprep.mubr.f32.mxu0 0.0
        %v7657 = vand.u32 %v740, 4294901760
        %7658 = vmatmul.mubr.f32.gmra.mrb[0].mxu0 %v7657
        %v7659 = vpop.f32.mrb[0].mxu0
        %v7660 = vadd.f32 %v6667, %v7659
        %v7661 = vpop.f32.mrb[0].mxu0
        %v7662 = vadd.f32 %v6669, %v7661
        %7663 = vmatprep.mubr.f32.mxu0 0.0
        %v7664 = vand.u32 %v743, 4294901760
        %7665 = vmatmul.mubr.f32.gmra.mrb[0].mxu0 %v7664
        %v7666 = vpop.f32.mrb[0].mxu0
        %v7667 = vadd.f32 %v6674, %v7666
        %v7668 = vpop.f32.mrb[0].mxu0
        %v7669 = vadd.f32 %v6676, %v7668
        %7670 = vmatprep.mubr.f32.mxu0 0.0
        %v7671 = vand.u32 %v746, 4294901760
        %7672 = vmatmul.mubr.f32.gmra.mrb[0].mxu0 %v7671
        %v7673 = vpop.f32.mrb[0].mxu0
        %v7674 = vadd.f32 %v6681, %v7673
        %v7675 = vpop.f32.mrb[0].mxu0
        %v7676 = vadd.f32 %v6683, %v7675
        %7677 = vmatprep.mubr.f32.mxu0 0.0
        %v7678 = vand.u32 %v749, 4294901760
        %7679 = vmatmul.mubr.f32.gmra.mrb[0].mxu0 %v7678
        %v7680 = vpop.f32.mrb[0].mxu0
        %v7681 = vadd.f32 %v6688, %v7680
        %v7682 = vpop.f32.mrb[0].mxu0
        %v7683 = vadd.f32 %v6690, %v7682
        %7684 = vmatprep.mubr.f32.mxu0 0.0
        %v7685 = vand.u32 %v752, 4294901760
        %7686 = vmatmul.mubr.f32.gmra.mrb[0].mxu0 %v7685
        %v7687 = vpop.f32.mrb[0].mxu0
        %v7688 = vadd.f32 %v6695, %v7687
        %v7689 = vpop.f32.mrb[0].mxu0
        %v7690 = vadd.f32 %v6697, %v7689
        %7691 = vmatprep.mubr.f32.mxu0 0.0
        %v7692 = vand.u32 %v755, 4294901760
        %7693 = vmatmul.mubr.f32.gmra.mrb[0].mxu0 %v7692
        %v7694 = vpop.f32.mrb[0].mxu0
        %v7695 = vadd.f32 %v6702, %v7694
        %v7696 = vpop.f32.mrb[0].mxu0
        %v7697 = vadd.f32 %v6704, %v7696
        %7698 = vmatprep.mubr.f32.mxu0 0.0
        %v7699 = vand.u32 %v758, 4294901760
        %7700 = vmatmul.mubr.f32.gmra.mrb[0].mxu0 %v7699
        %v7701 = vpop.f32.mrb[0].mxu0
        %v7702 = vadd.f32 %v6709, %v7701
        %v7703 = vpop.f32.mrb[0].mxu0
        %v7704 = vadd.f32 %v6711, %v7703
        %7705 = vmatprep.mubr.f32.mxu0 0.0
        %v7706 = vand.u32 %v761, 4294901760
        %7707 = vmatmul.mubr.f32.gmra.mrb[0].mxu0 %v7706
        %v7708 = vpop.f32.mrb[0].mxu0
        %v7709 = vadd.f32 %v6716, %v7708
        %v7710 = vpop.f32.mrb[0].mxu0
        %v7711 = vadd.f32 %v6718, %v7710
        %7712 = vmatprep.mubr.f32.mxu0 0.0
        %v7713 = vand.u32 %v764, 4294901760
        %7714 = vmatmul.mubr.f32.gmra.mrb[0].mxu0 %v7713
        %v7715 = vpop.f32.mrb[0].mxu0
        %v7716 = vadd.f32 %v6723, %v7715
        %v7717 = vpop.f32.mrb[0].mxu0
        %v7718 = vadd.f32 %v6725, %v7717
        %7719 = vmatprep.mubr.f32.mxu0 0.0
        %v7720 = vand.u32 %v767, 4294901760
        %7721 = vmatmul.mubr.f32.gmra.mrb[0].mxu0 %v7720
        %v7722 = vpop.f32.mrb[0].mxu0
        %v7723 = vadd.f32 %v6730, %v7722
        %v7724 = vpop.f32.mrb[0].mxu0
        %v7725 = vadd.f32 %v6732, %v7724
        %7726 = vmatprep.mubr.f32.mxu0 0.0
        %v7727 = vand.u32 %v770, 4294901760
        %7728 = vmatmul.mubr.f32.gmra.mrb[0].mxu0 %v7727
        %v7729 = vpop.f32.mrb[0].mxu0
        %v7730 = vadd.f32 %v6737, %v7729
        %v7731 = vpop.f32.mrb[0].mxu0
        %v7732 = vadd.f32 %v6739, %v7731
        %7733 = vmatprep.mubr.f32.mxu0 0.0
        %v7734 = vand.u32 %v773, 4294901760
        %7735 = vmatmul.mubr.f32.gmra.mrb[0].mxu0 %v7734
        %v7736 = vpop.f32.mrb[0].mxu0
        %v7737 = vadd.f32 %v6744, %v7736
        %v7738 = vpop.f32.mrb[0].mxu0
        %v7739 = vadd.f32 %v6746, %v7738
        %7740 = vmatprep.mubr.f32.mxu0 0.0
        %v7741 = vand.u32 %v776, 4294901760
        %7742 = vmatmul.mubr.f32.gmra.mrb[0].mxu0 %v7741
        %v7743 = vpop.f32.mrb[0].mxu0
        %v7744 = vadd.f32 %v6751, %v7743
        %v7745 = vpop.f32.mrb[0].mxu0
        %v7746 = vadd.f32 %v6753, %v7745
        %7747 = vmatprep.mubr.f32.mxu0 0.0
        %v7748 = vand.u32 %v779, 4294901760
        %7749 = vmatmul.mubr.f32.gmra.mrb[0].mxu0 %v7748
        %v7750 = vpop.f32.mrb[0].mxu0
        %v7751 = vadd.f32 %v6758, %v7750
        %v7752 = vpop.f32.mrb[0].mxu0
        %v7753 = vadd.f32 %v6760, %v7752
        %7754 = vmatprep.mubr.f32.mxu0 0.0
        %v7755 = vand.u32 %v782, 4294901760
        %7756 = vmatmul.mubr.f32.gmra.mrb[0].mxu0 %v7755
        %v7757 = vpop.f32.mrb[0].mxu0
        %v7758 = vadd.f32 %v6765, %v7757
        %v7759 = vpop.f32.mrb[0].mxu0
        %v7760 = vadd.f32 %v6767, %v7759
        %7761 = vmatprep.mubr.f32.mxu0 0.0
        %v7762 = vand.u32 %v785, 4294901760
        %7763 = vmatmul.mubr.f32.gmra.mrb[0].mxu0 %v7762
        %v7764 = vpop.f32.mrb[0].mxu0
        %v7765 = vadd.f32 %v6772, %v7764
        %v7766 = vpop.f32.mrb[0].mxu0
        %v7767 = vadd.f32 %v6774, %v7766
        %7768 = vmatprep.mubr.f32.mxu0 0.0
        %v7769 = vand.u32 %v788, 4294901760
        %7770 = vmatmul.mubr.f32.gmra.mrb[0].mxu0 %v7769
        %v7771 = vpop.f32.mrb[0].mxu0
        %v7772 = vadd.f32 %v6779, %v7771
        %v7773 = vpop.f32.mrb[0].mxu0
        %v7774 = vadd.f32 %v6781, %v7773
        %7775 = vmatprep.mubr.f32.mxu0 0.0
        %v7776 = vand.u32 %v791, 4294901760
        %7777 = vmatmul.mubr.f32.gmra.mrb[0].mxu0 %v7776
        %v7778 = vpop.f32.mrb[0].mxu0
        %v7779 = vadd.f32 %v6786, %v7778
        %v7780 = vpop.f32.mrb[0].mxu0
        %v7781 = vadd.f32 %v6788, %v7780
        %7782 = vmatprep.mubr.f32.mxu0 0.0
        %v7783 = vand.u32 %v794, 4294901760
        %7784 = vmatmul.mubr.f32.gmra.mrb[0].mxu0 %v7783
        %v7785 = vpop.f32.mrb[0].mxu0
        %v7786 = vadd.f32 %v6793, %v7785
        %v7787 = vpop.f32.mrb[0].mxu0
        %v7788 = vadd.f32 %v6795, %v7787
        %7789 = vmatprep.mubr.f32.mxu0 0.0
        %v7790 = vand.u32 %v797, 4294901760
        %7791 = vmatmul.mubr.f32.gmra.mrb[0].mxu0 %v7790
        %v7792 = vpop.f32.mrb[0].mxu0
        %v7793 = vadd.f32 %v6800, %v7792
        %v7794 = vpop.f32.mrb[0].mxu0
        %v7795 = vadd.f32 %v6802, %v7794
        %7796 = vmatprep.mubr.f32.mxu0 0.0
        %v7797 = vand.u32 %v800, 4294901760
        %7798 = vmatmul.mubr.f32.gmra.mrb[0].mxu0 %v7797
        %v7799 = vpop.f32.mrb[0].mxu0
        %v7800 = vadd.f32 %v6807, %v7799
        %v7801 = vpop.f32.mrb[0].mxu0
        %v7802 = vadd.f32 %v6809, %v7801
        %7803 = vmatprep.mubr.f32.mxu0 0.0
        %v7804 = vand.u32 %v803, 4294901760
        %7805 = vmatmul.mubr.f32.gmra.mrb[0].mxu0 %v7804
        %v7806 = vpop.f32.mrb[0].mxu0
        %v7807 = vadd.f32 %v6814, %v7806
        %v7808 = vpop.f32.mrb[0].mxu0
        %v7809 = vadd.f32 %v6816, %v7808
        %7810 = vmatprep.mubr.f32.mxu0 0.0
        %v7811 = vand.u32 %v806, 4294901760
        %7812 = vmatmul.mubr.f32.gmra.mrb[0].mxu0 %v7811
        %v7813 = vpop.f32.mrb[0].mxu0
        %v7814 = vadd.f32 %v6821, %v7813
        %v7815 = vpop.f32.mrb[0].mxu0
        %v7816 = vadd.f32 %v6823, %v7815
        %7817 = vmatprep.mubr.f32.mxu0 0.0
        %v7818 = vand.u32 %v809, 4294901760
        %7819 = vmatmul.mubr.f32.gmra.mrb[0].mxu0 %v7818
        %v7820 = vpop.f32.mrb[0].mxu0
        %v7821 = vadd.f32 %v6828, %v7820
        %v7822 = vpop.f32.mrb[0].mxu0
        %v7823 = vadd.f32 %v6830, %v7822
        %7824 = vmatprep.mubr.f32.mxu0 0.0
        %v7825 = vand.u32 %v812, 4294901760
        %7826 = vmatmul.mubr.f32.gmra.mrb[0].mxu0 %v7825
        %v7827 = vpop.f32.mrb[0].mxu0
        %v7828 = vadd.f32 %v6835, %v7827
        %v7829 = vpop.f32.mrb[0].mxu0
        %v7830 = vadd.f32 %v6837, %v7829
        %7831 = vmatprep.mubr.f32.mxu0 0.0
        %v7832 = vand.u32 %v815, 4294901760
        %7833 = vmatmul.mubr.f32.gmra.mrb[0].mxu0 %v7832
        %v7834 = vpop.f32.mrb[0].mxu0
        %v7835 = vadd.f32 %v6842, %v7834
        %v7836 = vpop.f32.mrb[0].mxu0
        %v7837 = vadd.f32 %v6844, %v7836
        %7838 = vmatprep.mubr.f32.mxu0 0.0
        %v7839 = vand.u32 %v818, 4294901760
        %7840 = vmatmul.mubr.f32.gmra.mrb[0].mxu0 %v7839
        %v7841 = vpop.f32.mrb[0].mxu0
        %v7842 = vadd.f32 %v6849, %v7841
        %v7843 = vpop.f32.mrb[0].mxu0
        %v7844 = vadd.f32 %v6851, %v7843
        %7845 = vmatprep.mubr.f32.mxu0 0.0
        %v7846 = vand.u32 %v821, 4294901760
        %7847 = vmatmul.mubr.f32.gmra.mrb[0].mxu0 %v7846
        %v7848 = vpop.f32.mrb[0].mxu0
        %v7849 = vadd.f32 %v6856, %v7848
        %v7850 = vpop.f32.mrb[0].mxu0
        %v7851 = vadd.f32 %v6858, %v7850
        %7852 = vmatprep.mubr.f32.mxu0 0.0
        %v7853 = vand.u32 %v824, 4294901760
        %7854 = vmatmul.mubr.f32.gmra.mrb[0].mxu0 %v7853
        %v7855 = vpop.f32.mrb[0].mxu0
        %v7856 = vadd.f32 %v6863, %v7855
        %v7857 = vpop.f32.mrb[0].mxu0
        %v7858 = vadd.f32 %v6865, %v7857
        %7859 = vmatprep.mubr.f32.mxu0 0.0
        %v7860 = vand.u32 %v827, 4294901760
        %7861 = vmatmul.mubr.f32.gmra.mrb[0].mxu0 %v7860
        %v7862 = vpop.f32.mrb[0].mxu0
        %v7863 = vadd.f32 %v6870, %v7862
        %v7864 = vpop.f32.mrb[0].mxu0
        %v7865 = vadd.f32 %v6872, %v7864
        %7866 = vmatprep.mubr.f32.mxu0 0.0
        %v7867 = vand.u32 %v830, 4294901760
        %7868 = vmatmul.mubr.f32.gmra.mrb[0].mxu0 %v7867
        %v7869 = vpop.f32.mrb[0].mxu0
        %v7870 = vadd.f32 %v6877, %v7869
        %v7871 = vpop.f32.mrb[0].mxu0
        %v7872 = vadd.f32 %v6879, %v7871
        %7873 = vmatprep.mubr.f32.mxu0 0.0
        %v7874 = vand.u32 %v833, 4294901760
        %7875 = vmatmul.mubr.f32.gmra.mrb[0].mxu0 %v7874
        %v7876 = vpop.f32.mrb[0].mxu0
        %v7877 = vadd.f32 %v6884, %v7876
        %v7878 = vpop.f32.mrb[0].mxu0
        %v7879 = vadd.f32 %v6886, %v7878
        %7880 = vmatprep.mubr.f32.mxu0 0.0
        %v7881 = vand.u32 %v836, 4294901760
        %7882 = vmatmul.mubr.f32.gmra.mrb[0].mxu0 %v7881
        %v7883 = vpop.f32.mrb[0].mxu0
        %v7884 = vadd.f32 %v6891, %v7883
        %v7885 = vpop.f32.mrb[0].mxu0
        %v7886 = vadd.f32 %v6893, %v7885
        %7887 = vmatprep.mubr.f32.mxu0 0.0
        %v7888 = vand.u32 %v839, 4294901760
        %7889 = vmatmul.mubr.f32.gmra.mrb[0].mxu0 %v7888
        %v7890 = vpop.f32.mrb[0].mxu0
        %v7891 = vadd.f32 %v6898, %v7890
        %v7892 = vpop.f32.mrb[0].mxu0
        %v7893 = vadd.f32 %v6900, %v7892
        %7894 = vmatprep.mubr.f32.mxu0 0.0
        %v7895 = vand.u32 %v842, 4294901760
        %7896 = vmatmul.mubr.f32.gmra.mrb[0].mxu0 %v7895
        %v7897 = vpop.f32.mrb[0].mxu0
        %v7898 = vadd.f32 %v6905, %v7897
        %v7899 = vpop.f32.mrb[0].mxu0
        %v7900 = vadd.f32 %v6907, %v7899
        %7901 = vmatprep.mubr.f32.mxu0 0.0
        %v7902 = vand.u32 %v845, 4294901760
        %7903 = vmatmul.mubr.f32.gmra.mrb[0].mxu0 %v7902
        %v7904 = vpop.f32.mrb[0].mxu0
        %v7905 = vadd.f32 %v6912, %v7904
        %v7906 = vpop.f32.mrb[0].mxu0
        %v7907 = vadd.f32 %v6914, %v7906
        %7908 = vmatprep.mubr.f32.mxu0 0.0
        %v7909 = vand.u32 %v848, 4294901760
        %7910 = vmatmul.mubr.f32.gmra.mrb[0].mxu0 %v7909
        %v7911 = vpop.f32.mrb[0].mxu0
        %v7912 = vadd.f32 %v6919, %v7911
        %v7913 = vpop.f32.mrb[0].mxu0
        %v7914 = vadd.f32 %v6921, %v7913
        %7915 = vmatprep.mubr.f32.mxu0 0.0
        %v7916 = vand.u32 %v851, 4294901760
        %7917 = vmatmul.mubr.f32.gmra.mrb[0].mxu0 %v7916
        %v7918 = vpop.f32.mrb[0].mxu0
        %v7919 = vadd.f32 %v6926, %v7918
        %v7920 = vpop.f32.mrb[0].mxu0
        %v7921 = vadd.f32 %v6928, %v7920
        %7922 = vmatprep.mubr.f32.mxu0 0.0
        %v7923 = vand.u32 %v854, 4294901760
        %7924 = vmatmul.mubr.f32.gmra.mrb[0].mxu0 %v7923
        %v7925 = vpop.f32.mrb[0].mxu0
        %v7926 = vadd.f32 %v6933, %v7925
        %v7927 = vpop.f32.mrb[0].mxu0
        %v7928 = vadd.f32 %v6935, %v7927
        %7929 = vmatprep.mubr.f32.mxu0 0.0
        %v7930 = vand.u32 %v857, 4294901760
        %7931 = vmatmul.mubr.f32.gmra.mrb[0].mxu0 %v7930
        %v7932 = vpop.f32.mrb[0].mxu0
        %v7933 = vadd.f32 %v6940, %v7932
        %v7934 = vpop.f32.mrb[0].mxu0
        %v7935 = vadd.f32 %v6942, %v7934
        %7936 = vmatprep.mubr.f32.mxu0 0.0
        %v7937 = vand.u32 %v860, 4294901760
        %7938 = vmatmul.mubr.f32.gmra.mrb[0].mxu0 %v7937
        %v7939 = vpop.f32.mrb[0].mxu0
        %v7940 = vadd.f32 %v6947, %v7939
        %v7941 = vpop.f32.mrb[0].mxu0
        %v7942 = vadd.f32 %v6949, %v7941
        %7943 = vmatprep.mubr.f32.mxu0 0.0
        %v7944 = vand.u32 %v863, 4294901760
        %7945 = vmatmul.mubr.f32.gmra.mrb[0].mxu0 %v7944
        %v7946 = vpop.f32.mrb[0].mxu0
        %v7947 = vadd.f32 %v6954, %v7946
        %v7948 = vpop.f32.mrb[0].mxu0
        %v7949 = vadd.f32 %v6956, %v7948
        %7950 = vmatprep.mubr.f32.mxu0 0.0
        %v7951 = vand.u32 %v866, 4294901760
        %7952 = vmatmul.mubr.f32.gmra.mrb[0].mxu0 %v7951
        %v7953 = vpop.f32.mrb[0].mxu0
        %v7954 = vadd.f32 %v6961, %v7953
        %v7955 = vpop.f32.mrb[0].mxu0
        %v7956 = vadd.f32 %v6963, %v7955
        %7957 = vmatprep.mubr.f32.mxu0 0.0
        %v7958 = vand.u32 %v869, 4294901760
        %7959 = vmatmul.mubr.f32.gmra.mrb[0].mxu0 %v7958
        %v7960 = vpop.f32.mrb[0].mxu0
        %v7961 = vadd.f32 %v6968, %v7960
        %v7962 = vpop.f32.mrb[0].mxu0
        %v7963 = vadd.f32 %v6970, %v7962
        %7964 = vmatprep.mubr.f32.mxu0 0.0
        %v7965 = vand.u32 %v872, 4294901760
        %7966 = vmatmul.mubr.f32.gmra.mrb[0].mxu0 %v7965
        %v7967 = vpop.f32.mrb[0].mxu0
        %v7968 = vadd.f32 %v6975, %v7967
        %v7969 = vpop.f32.mrb[0].mxu0
        %v7970 = vadd.f32 %v6977, %v7969
        %7971 = vmatprep.mubr.f32.mxu0 0.0
        %v7972 = vand.u32 %v875, 4294901760
        %7973 = vmatmul.mubr.f32.gmra.mrb[0].mxu0 %v7972
        %v7974 = vpop.f32.mrb[0].mxu0
        %v7975 = vadd.f32 %v6982, %v7974
        %v7976 = vpop.f32.mrb[0].mxu0
        %v7977 = vadd.f32 %v6984, %v7976
        %7978 = vmatprep.mubr.f32.mxu0 0.0
        %v7979 = vand.u32 %v878, 4294901760
        %7980 = vmatmul.mubr.f32.gmra.mrb[0].mxu0 %v7979
        %v7981 = vpop.f32.mrb[0].mxu0
        %v7982 = vadd.f32 %v6989, %v7981
        %v7983 = vpop.f32.mrb[0].mxu0
        %v7984 = vadd.f32 %v6991, %v7983
        %7985 = vmatprep.mubr.f32.mxu0 0.0
        %v7986 = vand.u32 %v881, 4294901760
        %7987 = vmatmul.mubr.f32.gmra.mrb[0].mxu0 %v7986
        %v7988 = vpop.f32.mrb[0].mxu0
        %v7989 = vadd.f32 %v6996, %v7988
        %v7990 = vpop.f32.mrb[0].mxu0
        %v7991 = vadd.f32 %v6998, %v7990
        %7992 = vmatprep.mubr.f32.mxu0 0.0
        %v7993 = vand.u32 %v884, 4294901760
        %7994 = vmatmul.mubr.f32.gmra.mrb[0].mxu0 %v7993
        %v7995 = vpop.f32.mrb[0].mxu0
        %v7996 = vadd.f32 %v7003, %v7995
        %v7997 = vpop.f32.mrb[0].mxu0
        %v7998 = vadd.f32 %v7005, %v7997
        %7999 = vmatprep.mubr.f32.mxu0 0.0
        %v8000 = vand.u32 %v887, 4294901760
        %8001 = vmatmul.mubr.f32.gmra.mrb[0].mxu0 %v8000
        %v8002 = vpop.f32.mrb[0].mxu0
        %v8003 = vadd.f32 %v7010, %v8002
        %v8004 = vpop.f32.mrb[0].mxu0
        %v8005 = vadd.f32 %v7012, %v8004
        %8006 = vmatprep.mubr.f32.mxu0 0.0
        %v8007 = vand.u32 %v890, 4294901760
        %8008 = vmatmul.mubr.f32.gmra.mrb[0].mxu0 %v8007
        %v8009 = vpop.f32.mrb[0].mxu0
        %v8010 = vadd.f32 %v7017, %v8009
        %v8011 = vpop.f32.mrb[0].mxu0
        %v8012 = vadd.f32 %v7019, %v8011
        %8013 = vmatprep.mubr.f32.mxu0 0.0
        %v8014 = vand.u32 %v893, 4294901760
        %8015 = vmatmul.mubr.f32.gmra.mrb[0].mxu0 %v8014
        %v8016 = vpop.f32.mrb[0].mxu0
        %v8017 = vadd.f32 %v7024, %v8016
        %v8018 = vpop.f32.mrb[0].mxu0
        %v8019 = vadd.f32 %v7026, %v8018
        %8020 = vmatprep.mubr.f32.mxu0 0.0
        %v8021 = vand.u32 %v896, 4294901760
        %8022 = vmatmul.mubr.f32.gmra.mrb[0].mxu0 %v8021
        %v8023 = vpop.f32.mrb[0].mxu0
        %v8024 = vadd.f32 %v7031, %v8023
        %v8025 = vpop.f32.mrb[0].mxu0
        %v8026 = vadd.f32 %v7033, %v8025
        %8027 = vmatprep.mubr.f32.mxu0 0.0
        %v8028 = vand.u32 %v899, 4294901760
        %8029 = vmatmul.mubr.f32.gmra.mrb[0].mxu0 %v8028
        %v8030 = vpop.f32.mrb[0].mxu0
        %v8031 = vadd.f32 %v7038, %v8030
        %v8032 = vpop.f32.mrb[0].mxu0
        %v8033 = vadd.f32 %v7040, %v8032
        %8034 = vmatprep.mubr.f32.mxu0 0.0
        %v8035 = vand.u32 %v902, 4294901760
        %8036 = vmatmul.mubr.f32.gmra.mrb[0].mxu0 %v8035
        %v8037 = vpop.f32.mrb[0].mxu0
        %v8038 = vadd.f32 %v7045, %v8037
        %v8039 = vpop.f32.mrb[0].mxu0
        %v8040 = vadd.f32 %v7047, %v8039
        %8041 = vmatprep.mubr.f32.mxu0 0.0
        %v8042 = vand.u32 %v905, 4294901760
        %8043 = vmatmul.mubr.f32.gmra.mrb[0].mxu0 %v8042
        %v8044 = vpop.f32.mrb[0].mxu0
        %v8045 = vadd.f32 %v7052, %v8044
        %v8046 = vpop.f32.mrb[0].mxu0
        %v8047 = vadd.f32 %v7054, %v8046
        %8048 = vmatprep.mubr.f32.mxu0 0.0
        %v8049 = vand.u32 %v908, 4294901760
        %8050 = vmatmul.mubr.f32.gmra.mrb[0].mxu0 %v8049
        %v8051 = vpop.f32.mrb[0].mxu0
        %v8052 = vadd.f32 %v7059, %v8051
        %v8053 = vpop.f32.mrb[0].mxu0
        %v8054 = vadd.f32 %v7061, %v8053
        %8055 = vmatprep.mubr.f32.mxu0 0.0
        %v8056 = vand.u32 %v911, 4294901760
        %8057 = vmatmul.mubr.f32.gmra.mrb[0].mxu0 %v8056
        %v8058 = vpop.f32.mrb[0].mxu0
        %v8059 = vadd.f32 %v7066, %v8058
        %v8060 = vpop.f32.mrb[0].mxu0
        %v8061 = vadd.f32 %v7068, %v8060
        %8062 = vmatprep.mubr.f32.mxu0 0.0
        %v8063 = vand.u32 %v914, 4294901760
        %8064 = vmatmul.mubr.f32.gmra.mrb[0].mxu0 %v8063
        %v8065 = vpop.f32.mrb[0].mxu0
        %v8066 = vadd.f32 %v7073, %v8065
        %v8067 = vpop.f32.mrb[0].mxu0
        %v8068 = vadd.f32 %v7075, %v8067
        %8069 = vmatprep.mubr.f32.mxu0 0.0
        %v8070 = vand.u32 %v917, 4294901760
        %8071 = vmatmul.mubr.f32.gmra.mrb[0].mxu0 %v8070
        %v8072 = vpop.f32.mrb[0].mxu0
        %v8073 = vadd.f32 %v7080, %v8072
        %v8074 = vpop.f32.mrb[0].mxu0
        %v8075 = vadd.f32 %v7082, %v8074
        %8076 = vmatprep.mubr.f32.mxu0 0.0
        %v8077 = vand.u32 %v920, 4294901760
        %8078 = vmatmul.mubr.f32.gmra.mrb[0].mxu0 %v8077
        %v8079 = vpop.f32.mrb[0].mxu0
        %v8080 = vadd.f32 %v7087, %v8079
        %v8081 = vpop.f32.mrb[0].mxu0
        %v8082 = vadd.f32 %v7089, %v8081
        %8083 = vmatprep.mubr.f32.mxu0 0.0
        %v8084 = vand.u32 %v923, 4294901760
        %8085 = vmatmul.mubr.f32.gmra.mrb[0].mxu0 %v8084
        %v8086 = vpop.f32.mrb[0].mxu0
        %v8087 = vadd.f32 %v7094, %v8086
        %v8088 = vpop.f32.mrb[0].mxu0
        %v8089 = vadd.f32 %v7096, %v8088
        %8090 = vmatprep.mubr.f32.mxu0 0.0
        %v8091 = vand.u32 %v926, 4294901760
        %8092 = vmatmul.mubr.f32.gmra.mrb[0].mxu0 %v8091
        %v8093 = vpop.f32.mrb[0].mxu0
        %v8094 = vadd.f32 %v7101, %v8093
        %v8095 = vpop.f32.mrb[0].mxu0
        %v8096 = vadd.f32 %v7103, %v8095
        %8097 = vmatprep.mubr.f32.mxu0 0.0
        %v8098 = vand.u32 %v929, 4294901760
        %8099 = vmatmul.mubr.f32.gmra.mrb[0].mxu0 %v8098
        %v8100 = vpop.f32.mrb[0].mxu0
        %v8101 = vadd.f32 %v7108, %v8100
        %v8102 = vpop.f32.mrb[0].mxu0
        %v8103 = vadd.f32 %v7110, %v8102
        %8104 = vdwg.mxu0
        %8105 = vst [vmem:[%s194] sm:$0xff] %v7212
        %8106 = vst [vmem:[%s194 + $0x8] sm:$0xff] %v7214
        %8107 = vst [vmem:[%s194 + $0x10] sm:$0xff] %v7219
        %8108 = vst [vmem:[%s194 + $0x18] sm:$0xff] %v7221
        %8109 = vst [vmem:[%s194 + $0x20] sm:$0xff] %v7226
        %8110 = vst [vmem:[%s194 + $0x28] sm:$0xff] %v7228
        %8111 = vst [vmem:[%s194 + $0x30] sm:$0xff] %v7233
        %8112 = vst [vmem:[%s194 + $0x38] sm:$0xff] %v7235
        %8113 = vst [vmem:[%s194 + $0x40] sm:$0xff] %v7240
        %8114 = vst [vmem:[%s194 + $0x48] sm:$0xff] %v7242
        %8115 = vst [vmem:[%s194 + $0x50] sm:$0xff] %v7247
        %8116 = vst [vmem:[%s194 + $0x58] sm:$0xff] %v7249
        %8117 = vst [vmem:[%s194 + $0x60] sm:$0xff] %v7254
        %8118 = vst [vmem:[%s194 + $0x68] sm:$0xff] %v7256
        %8119 = vst [vmem:[%s194 + $0x70] sm:$0xff] %v7261
        %8120 = vst [vmem:[%s194 + $0x78] sm:$0xff] %v7263
        %8121 = vst [vmem:[%s194 + $0x80] sm:$0xff] %v7268
        %8122 = vst [vmem:[%s194 + $0x88] sm:$0xff] %v7270
        %8123 = vst [vmem:[%s194 + $0x90] sm:$0xff] %v7275
        %8124 = vst [vmem:[%s194 + $0x98] sm:$0xff] %v7277
        %8125 = vst [vmem:[%s194 + $0xa0] sm:$0xff] %v7282
        %8126 = vst [vmem:[%s194 + $0xa8] sm:$0xff] %v7284
        %8127 = vst [vmem:[%s194 + $0xb0] sm:$0xff] %v7289
        %8128 = vst [vmem:[%s194 + $0xb8] sm:$0xff] %v7291
        %8129 = vst [vmem:[%s194 + $0xc0] sm:$0xff] %v7296
        %8130 = vst [vmem:[%s194 + $0xc8] sm:$0xff] %v7298
        %8131 = vst [vmem:[%s194 + $0xd0] sm:$0xff] %v7303
        %8132 = vst [vmem:[%s194 + $0xd8] sm:$0xff] %v7305
        %8133 = vst [vmem:[%s194 + $0xe0] sm:$0xff] %v7310
        %8134 = vst [vmem:[%s194 + $0xe8] sm:$0xff] %v7312
        %8135 = vst [vmem:[%s194 + $0xf0] sm:$0xff] %v7317
        %8136 = vst [vmem:[%s194 + $0xf8] sm:$0xff] %v7319
        %8137 = vst [vmem:[%s194 + $0x100] sm:$0xff] %v7324
        %8138 = vst [vmem:[%s194 + $0x108] sm:$0xff] %v7326
        %8139 = vst [vmem:[%s194 + $0x110] sm:$0xff] %v7331
        %8140 = vst [vmem:[%s194 + $0x118] sm:$0xff] %v7333
        %8141 = vst [vmem:[%s194 + $0x120] sm:$0xff] %v7338
        %8142 = vst [vmem:[%s194 + $0x128] sm:$0xff] %v7340
        %8143 = vst [vmem:[%s194 + $0x130] sm:$0xff] %v7345
        %8144 = vst [vmem:[%s194 + $0x138] sm:$0xff] %v7347
        %8145 = vst [vmem:[%s194 + $0x140] sm:$0xff] %v7352
        %8146 = vst [vmem:[%s194 + $0x148] sm:$0xff] %v7354
        %8147 = vst [vmem:[%s194 + $0x150] sm:$0xff] %v7359
        %8148 = vst [vmem:[%s194 + $0x158] sm:$0xff] %v7361
        %8149 = vst [vmem:[%s194 + $0x160] sm:$0xff] %v7366
        %8150 = vst [vmem:[%s194 + $0x168] sm:$0xff] %v7368
        %8151 = vst [vmem:[%s194 + $0x170] sm:$0xff] %v7373
        %8152 = vst [vmem:[%s194 + $0x178] sm:$0xff] %v7375
        %8153 = vst [vmem:[%s194 + $0x180] sm:$0xff] %v7380
        %8154 = vst [vmem:[%s194 + $0x188] sm:$0xff] %v7382
        %8155 = vst [vmem:[%s194 + $0x190] sm:$0xff] %v7387
        %8156 = vst [vmem:[%s194 + $0x198] sm:$0xff] %v7389
        %8157 = vst [vmem:[%s194 + $0x1a0] sm:$0xff] %v7394
        %8158 = vst [vmem:[%s194 + $0x1a8] sm:$0xff] %v7396
        %8159 = vst [vmem:[%s194 + $0x1b0] sm:$0xff] %v7401
        %8160 = vst [vmem:[%s194 + $0x1b8] sm:$0xff] %v7403
        %8161 = vst [vmem:[%s194 + $0x1c0] sm:$0xff] %v7408
        %8162 = vst [vmem:[%s194 + $0x1c8] sm:$0xff] %v7410
        %8163 = vst [vmem:[%s194 + $0x1d0] sm:$0xff] %v7415
        %8164 = vst [vmem:[%s194 + $0x1d8] sm:$0xff] %v7417
        %8165 = vst [vmem:[%s194 + $0x1e0] sm:$0xff] %v7422
        %8166 = vst [vmem:[%s194 + $0x1e8] sm:$0xff] %v7424
        %8167 = vst [vmem:[%s194 + $0x1f0] sm:$0xff] %v7429
        %8168 = vst [vmem:[%s194 + $0x1f8] sm:$0xff] %v7431
        %8169 = vst [vmem:[%s194 + $0x200] sm:$0xff] %v7436
        %8170 = vst [vmem:[%s194 + $0x208] sm:$0xff] %v7438
        %8171 = vst [vmem:[%s194 + $0x210] sm:$0xff] %v7443
        %8172 = vst [vmem:[%s194 + $0x218] sm:$0xff] %v7445
        %8173 = vst [vmem:[%s194 + $0x220] sm:$0xff] %v7450
        %8174 = vst [vmem:[%s194 + $0x228] sm:$0xff] %v7452
        %8175 = vst [vmem:[%s194 + $0x230] sm:$0xff] %v7457
        %8176 = vst [vmem:[%s194 + $0x238] sm:$0xff] %v7459
        %8177 = vst [vmem:[%s194 + $0x240] sm:$0xff] %v7464
        %8178 = vst [vmem:[%s194 + $0x248] sm:$0xff] %v7466
        %8179 = vst [vmem:[%s194 + $0x250] sm:$0xff] %v7471
        %8180 = vst [vmem:[%s194 + $0x258] sm:$0xff] %v7473
        %8181 = vst [vmem:[%s194 + $0x260] sm:$0xff] %v7478
        %8182 = vst [vmem:[%s194 + $0x268] sm:$0xff] %v7480
        %8183 = vst [vmem:[%s194 + $0x270] sm:$0xff] %v7485
        %8184 = vst [vmem:[%s194 + $0x278] sm:$0xff] %v7487
        %8185 = vst [vmem:[%s194 + $0x280] sm:$0xff] %v7492
        %8186 = vst [vmem:[%s194 + $0x288] sm:$0xff] %v7494
        %8187 = vst [vmem:[%s194 + $0x290] sm:$0xff] %v7499
        %8188 = vst [vmem:[%s194 + $0x298] sm:$0xff] %v7501
        %8189 = vst [vmem:[%s194 + $0x2a0] sm:$0xff] %v7506
        %8190 = vst [vmem:[%s194 + $0x2a8] sm:$0xff] %v7508
        %8191 = vst [vmem:[%s194 + $0x2b0] sm:$0xff] %v7513
        %8192 = vst [vmem:[%s194 + $0x2b8] sm:$0xff] %v7515
        %8193 = vst [vmem:[%s194 + $0x2c0] sm:$0xff] %v7520
        %8194 = vst [vmem:[%s194 + $0x2c8] sm:$0xff] %v7522
        %8195 = vst [vmem:[%s194 + $0x2d0] sm:$0xff] %v7527
        %8196 = vst [vmem:[%s194 + $0x2d8] sm:$0xff] %v7529
        %8197 = vst [vmem:[%s194 + $0x2e0] sm:$0xff] %v7534
        %8198 = vst [vmem:[%s194 + $0x2e8] sm:$0xff] %v7536
        %8199 = vst [vmem:[%s194 + $0x2f0] sm:$0xff] %v7541
        %8200 = vst [vmem:[%s194 + $0x2f8] sm:$0xff] %v7543
        %8201 = vst [vmem:[%s194 + $0x300] sm:$0xff] %v7548
        %8202 = vst [vmem:[%s194 + $0x308] sm:$0xff] %v7550
        %8203 = vst [vmem:[%s194 + $0x310] sm:$0xff] %v7555
        %8204 = vst [vmem:[%s194 + $0x318] sm:$0xff] %v7557
        %8205 = vst [vmem:[%s194 + $0x320] sm:$0xff] %v7562
        %8206 = vst [vmem:[%s194 + $0x328] sm:$0xff] %v7564
        %8207 = vst [vmem:[%s194 + $0x330] sm:$0xff] %v7569
        %8208 = vst [vmem:[%s194 + $0x338] sm:$0xff] %v7571
        %8209 = vst [vmem:[%s194 + $0x340] sm:$0xff] %v7576
        %8210 = vst [vmem:[%s194 + $0x348] sm:$0xff] %v7578
        %8211 = vst [vmem:[%s194 + $0x350] sm:$0xff] %v7583
        %8212 = vst [vmem:[%s194 + $0x358] sm:$0xff] %v7585
        %8213 = vst [vmem:[%s194 + $0x360] sm:$0xff] %v7590
        %8214 = vst [vmem:[%s194 + $0x368] sm:$0xff] %v7592
        %8215 = vst [vmem:[%s194 + $0x370] sm:$0xff] %v7597
        %8216 = vst [vmem:[%s194 + $0x378] sm:$0xff] %v7599
        %8217 = vst [vmem:[%s194 + $0x380] sm:$0xff] %v7604
        %8218 = vst [vmem:[%s194 + $0x388] sm:$0xff] %v7606
        %8219 = vst [vmem:[%s194 + $0x390] sm:$0xff] %v7611
        %8220 = vst [vmem:[%s194 + $0x398] sm:$0xff] %v7613
        %8221 = vst [vmem:[%s194 + $0x3a0] sm:$0xff] %v7618
        %8222 = vst [vmem:[%s194 + $0x3a8] sm:$0xff] %v7620
        %8223 = vst [vmem:[%s194 + $0x3b0] sm:$0xff] %v7625
        %8224 = vst [vmem:[%s194 + $0x3b8] sm:$0xff] %v7627
        %8225 = vst [vmem:[%s194 + $0x3c0] sm:$0xff] %v7632
        %8226 = vst [vmem:[%s194 + $0x3c8] sm:$0xff] %v7634
        %8227 = vst [vmem:[%s194 + $0x3d0] sm:$0xff] %v7639
        %8228 = vst [vmem:[%s194 + $0x3d8] sm:$0xff] %v7641
        %8229 = vst [vmem:[%s194 + $0x3e0] sm:$0xff] %v7646
        %8230 = vst [vmem:[%s194 + $0x3e8] sm:$0xff] %v7648
        %8231 = vst [vmem:[%s194 + $0x3f0] sm:$0xff] %v7653
        %8232 = vst [vmem:[%s194 + $0x3f8] sm:$0xff] %v7655
        %8233 = vst [vmem:[%s194 + $0x400] sm:$0xff] %v7660
        %8234 = vst [vmem:[%s194 + $0x408] sm:$0xff] %v7662
        %8235 = vst [vmem:[%s194 + $0x410] sm:$0xff] %v7667
        %8236 = vst [vmem:[%s194 + $0x418] sm:$0xff] %v7669
        %8237 = vst [vmem:[%s194 + $0x420] sm:$0xff] %v7674
        %8238 = vst [vmem:[%s194 + $0x428] sm:$0xff] %v7676
        %8239 = vst [vmem:[%s194 + $0x430] sm:$0xff] %v7681
        %8240 = vst [vmem:[%s194 + $0x438] sm:$0xff] %v7683
        %8241 = vst [vmem:[%s194 + $0x440] sm:$0xff] %v7688
        %8242 = vst [vmem:[%s194 + $0x448] sm:$0xff] %v7690
        %8243 = vst [vmem:[%s194 + $0x450] sm:$0xff] %v7695
        %8244 = vst [vmem:[%s194 + $0x458] sm:$0xff] %v7697
        %8245 = vst [vmem:[%s194 + $0x460] sm:$0xff] %v7702
        %8246 = vst [vmem:[%s194 + $0x468] sm:$0xff] %v7704
        %8247 = vst [vmem:[%s194 + $0x470] sm:$0xff] %v7709
        %8248 = vst [vmem:[%s194 + $0x478] sm:$0xff] %v7711
        %8249 = vst [vmem:[%s194 + $0x480] sm:$0xff] %v7716
        %8250 = vst [vmem:[%s194 + $0x488] sm:$0xff] %v7718
        %8251 = vst [vmem:[%s194 + $0x490] sm:$0xff] %v7723
        %8252 = vst [vmem:[%s194 + $0x498] sm:$0xff] %v7725
        %8253 = vst [vmem:[%s194 + $0x4a0] sm:$0xff] %v7730
        %8254 = vst [vmem:[%s194 + $0x4a8] sm:$0xff] %v7732
        %8255 = vst [vmem:[%s194 + $0x4b0] sm:$0xff] %v7737
        %8256 = vst [vmem:[%s194 + $0x4b8] sm:$0xff] %v7739
        %8257 = vst [vmem:[%s194 + $0x4c0] sm:$0xff] %v7744
        %8258 = vst [vmem:[%s194 + $0x4c8] sm:$0xff] %v7746
        %8259 = vst [vmem:[%s194 + $0x4d0] sm:$0xff] %v7751
        %8260 = vst [vmem:[%s194 + $0x4d8] sm:$0xff] %v7753
        %8261 = vst [vmem:[%s194 + $0x4e0] sm:$0xff] %v7758
        %8262 = vst [vmem:[%s194 + $0x4e8] sm:$0xff] %v7760
        %8263 = vst [vmem:[%s194 + $0x4f0] sm:$0xff] %v7765
        %8264 = vst [vmem:[%s194 + $0x4f8] sm:$0xff] %v7767
        %8265 = vst [vmem:[%s194 + $0x500] sm:$0xff] %v7772
        %8266 = vst [vmem:[%s194 + $0x508] sm:$0xff] %v7774
        %8267 = vst [vmem:[%s194 + $0x510] sm:$0xff] %v7779
        %8268 = vst [vmem:[%s194 + $0x518] sm:$0xff] %v7781
        %8269 = vst [vmem:[%s194 + $0x520] sm:$0xff] %v7786
        %8270 = vst [vmem:[%s194 + $0x528] sm:$0xff] %v7788
        %8271 = vst [vmem:[%s194 + $0x530] sm:$0xff] %v7793
        %8272 = vst [vmem:[%s194 + $0x538] sm:$0xff] %v7795
        %8273 = vst [vmem:[%s194 + $0x540] sm:$0xff] %v7800
        %8274 = vst [vmem:[%s194 + $0x548] sm:$0xff] %v7802
        %8275 = vst [vmem:[%s194 + $0x550] sm:$0xff] %v7807
        %8276 = vst [vmem:[%s194 + $0x558] sm:$0xff] %v7809
        %8277 = vst [vmem:[%s194 + $0x560] sm:$0xff] %v7814
        %8278 = vst [vmem:[%s194 + $0x568] sm:$0xff] %v7816
        %8279 = vst [vmem:[%s194 + $0x570] sm:$0xff] %v7821
        %8280 = vst [vmem:[%s194 + $0x578] sm:$0xff] %v7823
        %8281 = vst [vmem:[%s194 + $0x580] sm:$0xff] %v7828
        %8282 = vst [vmem:[%s194 + $0x588] sm:$0xff] %v7830
        %8283 = vst [vmem:[%s194 + $0x590] sm:$0xff] %v7835
        %8284 = vst [vmem:[%s194 + $0x598] sm:$0xff] %v7837
        %8285 = vst [vmem:[%s194 + $0x5a0] sm:$0xff] %v7842
        %8286 = vst [vmem:[%s194 + $0x5a8] sm:$0xff] %v7844
        %8287 = vst [vmem:[%s194 + $0x5b0] sm:$0xff] %v7849
        %8288 = vst [vmem:[%s194 + $0x5b8] sm:$0xff] %v7851
        %8289 = vst [vmem:[%s194 + $0x5c0] sm:$0xff] %v7856
        %8290 = vst [vmem:[%s194 + $0x5c8] sm:$0xff] %v7858
        %8291 = vst [vmem:[%s194 + $0x5d0] sm:$0xff] %v7863
        %8292 = vst [vmem:[%s194 + $0x5d8] sm:$0xff] %v7865
        %8293 = vst [vmem:[%s194 + $0x5e0] sm:$0xff] %v7870
        %8294 = vst [vmem:[%s194 + $0x5e8] sm:$0xff] %v7872
        %8295 = vst [vmem:[%s194 + $0x5f0] sm:$0xff] %v7877
        %8296 = vst [vmem:[%s194 + $0x5f8] sm:$0xff] %v7879
        %8297 = vst [vmem:[%s194 + $0x600] sm:$0xff] %v7884
        %8298 = vst [vmem:[%s194 + $0x608] sm:$0xff] %v7886
        %8299 = vst [vmem:[%s194 + $0x610] sm:$0xff] %v7891
        %8300 = vst [vmem:[%s194 + $0x618] sm:$0xff] %v7893
        %8301 = vst [vmem:[%s194 + $0x620] sm:$0xff] %v7898
        %8302 = vst [vmem:[%s194 + $0x628] sm:$0xff] %v7900
        %8303 = vst [vmem:[%s194 + $0x630] sm:$0xff] %v7905
        %8304 = vst [vmem:[%s194 + $0x638] sm:$0xff] %v7907
        %8305 = vst [vmem:[%s194 + $0x640] sm:$0xff] %v7912
        %8306 = vst [vmem:[%s194 + $0x648] sm:$0xff] %v7914
        %8307 = vst [vmem:[%s194 + $0x650] sm:$0xff] %v7919
        %8308 = vst [vmem:[%s194 + $0x658] sm:$0xff] %v7921
        %8309 = vst [vmem:[%s194 + $0x660] sm:$0xff] %v7926
        %8310 = vst [vmem:[%s194 + $0x668] sm:$0xff] %v7928
        %8311 = vst [vmem:[%s194 + $0x670] sm:$0xff] %v7933
        %8312 = vst [vmem:[%s194 + $0x678] sm:$0xff] %v7935
        %8313 = vst [vmem:[%s194 + $0x680] sm:$0xff] %v7940
        %8314 = vst [vmem:[%s194 + $0x688] sm:$0xff] %v7942
        %8315 = vst [vmem:[%s194 + $0x690] sm:$0xff] %v7947
        %8316 = vst [vmem:[%s194 + $0x698] sm:$0xff] %v7949
        %8317 = vst [vmem:[%s194 + $0x6a0] sm:$0xff] %v7954
        %8318 = vst [vmem:[%s194 + $0x6a8] sm:$0xff] %v7956
        %8319 = vst [vmem:[%s194 + $0x6b0] sm:$0xff] %v7961
        %8320 = vst [vmem:[%s194 + $0x6b8] sm:$0xff] %v7963
        %8321 = vst [vmem:[%s194 + $0x6c0] sm:$0xff] %v7968
        %8322 = vst [vmem:[%s194 + $0x6c8] sm:$0xff] %v7970
        %8323 = vst [vmem:[%s194 + $0x6d0] sm:$0xff] %v7975
        %8324 = vst [vmem:[%s194 + $0x6d8] sm:$0xff] %v7977
        %8325 = vst [vmem:[%s194 + $0x6e0] sm:$0xff] %v7982
        %8326 = vst [vmem:[%s194 + $0x6e8] sm:$0xff] %v7984
        %8327 = vst [vmem:[%s194 + $0x6f0] sm:$0xff] %v7989
        %8328 = vst [vmem:[%s194 + $0x6f8] sm:$0xff] %v7991
        %8329 = vst [vmem:[%s194 + $0x700] sm:$0xff] %v7996
        %8330 = vst [vmem:[%s194 + $0x708] sm:$0xff] %v7998
        %8331 = vst [vmem:[%s194 + $0x710] sm:$0xff] %v8003
        %8332 = vst [vmem:[%s194 + $0x718] sm:$0xff] %v8005
        %8333 = vst [vmem:[%s194 + $0x720] sm:$0xff] %v8010
        %8334 = vst [vmem:[%s194 + $0x728] sm:$0xff] %v8012
        %8335 = vst [vmem:[%s194 + $0x730] sm:$0xff] %v8017
        %8336 = vst [vmem:[%s194 + $0x738] sm:$0xff] %v8019
        %8337 = vst [vmem:[%s194 + $0x740] sm:$0xff] %v8024
        %8338 = vst [vmem:[%s194 + $0x748] sm:$0xff] %v8026
        %8339 = vst [vmem:[%s194 + $0x750] sm:$0xff] %v8031
        %8340 = vst [vmem:[%s194 + $0x758] sm:$0xff] %v8033
        %8341 = vst [vmem:[%s194 + $0x760] sm:$0xff] %v8038
        %8342 = vst [vmem:[%s194 + $0x768] sm:$0xff] %v8040
        %8343 = vst [vmem:[%s194 + $0x770] sm:$0xff] %v8045
        %8344 = vst [vmem:[%s194 + $0x778] sm:$0xff] %v8047
        %8345 = vst [vmem:[%s194 + $0x780] sm:$0xff] %v8052
        %8346 = vst [vmem:[%s194 + $0x788] sm:$0xff] %v8054
        %8347 = vst [vmem:[%s194 + $0x790] sm:$0xff] %v8059
        %8348 = vst [vmem:[%s194 + $0x798] sm:$0xff] %v8061
        %8349 = vst [vmem:[%s194 + $0x7a0] sm:$0xff] %v8066
        %8350 = vst [vmem:[%s194 + $0x7a8] sm:$0xff] %v8068
        %8351 = vst [vmem:[%s194 + $0x7b0] sm:$0xff] %v8073
        %8352 = vst [vmem:[%s194 + $0x7b8] sm:$0xff] %v8075
        %8353 = vst [vmem:[%s194 + $0x7c0] sm:$0xff] %v8080
        %8354 = vst [vmem:[%s194 + $0x7c8] sm:$0xff] %v8082
        %8355 = vst [vmem:[%s194 + $0x7d0] sm:$0xff] %v8087
        %8356 = vst [vmem:[%s194 + $0x7d8] sm:$0xff] %v8089
        %8357 = vst [vmem:[%s194 + $0x7e0] sm:$0xff] %v8094
        %8358 = vst [vmem:[%s194 + $0x7e8] sm:$0xff] %v8096
        %8359 = vst [vmem:[%s194 + $0x7f0] sm:$0xff] %v8101
        %8360 = vst [vmem:[%s194 + $0x7f8] sm:$0xff] %v8103
        %s8361 = sand.u32 %s95, 1
        %s8362 = scalar_lea.sflag [#allocation4], %s8361
        %s8363 = sand.u32 %s95, 1
        %s8364 = smul.addr %s8363, 2048
        %s8365 = scalar_lea.vmem [#allocation7], %s8364
        // Predicated region
        $region41: #{tpu_custom_call.1} parent=31 // pred_check
          %p8366 = pneg %p105
        $region42: #{tpu_custom_call.1} parent=31 // pred_check_branch
          %8368 = sbr.rel (%p8366) target = $region44
        $region43: #{tpu_custom_call.1} parent=31 // pred_region
          %s8369 = smul.u32 128, %s19
          %s8371 = ssub.s32 32768, 32768
          %8372 = vsyncadd %s8362, %s8371
          %s8373 = smul.addr %s8369, 2
          %s8374 = smul.addr %s8373, 128
          %s8375 = scalar_lea.hbm %s3, %s8374
          %s8376 = sshll.u32 %s8365, 4
          %s8377 = int_to_ptr.vmem [resolvable:$true] %s8376
          %8382 = dma.vmem_to_hbm [thread:$0]  %s8377, 32768, %s8375, %s8362, 256, 256, 16
        $region44: #{tpu_custom_call.1} parent=31 // pred_fallthru
          _
      $region32: #{tpu_custom_call.1} parent=5 // pred_fallthru
        _
      %p8383 = scmp.le.s32.totalorder 2, %s14
      // Predicated region
      $region45: #{tpu_custom_call.1} parent=5 // pred_check
        %p8384 = pneg %p8383
      $region46: #{tpu_custom_call.1} parent=5 // pred_check_branch
        %8386 = sbr.rel (%p8384) target = $region48
      $region47: #{tpu_custom_call.1} parent=5 // pred_region
        %s8387 = ssub.s32 %s14, 2
        // Predicated region
        $region49: #{tpu_custom_call.1} parent=47 // pred_check
          %p8388 = pneg %p111
        $region50: #{tpu_custom_call.1} parent=47 // pred_check_branch
          %8390 = sbr.rel (%p8388) target = $region52
        $region51: #{tpu_custom_call.1} parent=47 // pred_region
          %s8391 = sand.u32 %s96, 1
          %s8392 = scalar_lea.sflag [#allocation4], %s8391
          %s8393 = sand.u32 %s96, 1
          %s8394 = smul.addr %s8393, 2048
          %s8395 = scalar_lea.vmem [#allocation7], %s8394
          %8396 = dma.done %s8392, 32768
        $region52: #{tpu_custom_call.1} parent=47 // pred_fallthru
          _
      $region48: #{tpu_custom_call.1} parent=5 // pred_fallthru
        _
    $region6: #{tpu_custom_call.1} parent=1 // loop_footer
      %s18 = sadd.s32 1, %s14
    $region7: #{tpu_custom_call.1} parent=1 // loop_footer_branch
      %13 = sbr.rel target = $region3
    $region8: #{tpu_custom_call.1} parent=1 // loop_exit
      _
    %8397 = vsyncpa [#allocation3], 1
    %s8398 = scalar_lea.sflag [#allocation3], 1
    %8399 = vsyncpa %s8398, 1
    %8400 = vsyncpa [#allocation6], 1
    %8401 = vsyncpa [#allocation4], 1
    %s8402 = scalar_lea.sflag [#allocation4], 1
    %8403 = vsyncpa %s8402, 1

</llo_original>
